<compile_context>
chip_gen: v7x
topology: tpu7x:2x2x1
jax: 0.10.0
libtpu: 0.0.40
codegen_flags: <defaults>
</compile_context>

<pallas_src>
import functools

import jax
import jax.numpy as jnp
from jax import lax
from jax.experimental import pallas as pl
from jax.experimental.pallas import tpu as pltpu


def _round_up(x, m):
    return ((x + m - 1) // m) * m


# ---------------------------------------------------------------------------
# Kernel 1: all-VMEM-resident, iteration loop inside the kernel.
# ---------------------------------------------------------------------------
def _ggx_resident_kernel(iterations, unroll,
                         edge_ref,   # (E, Np, Np)        matmul dtype, (dst, src)
                         h_ref,      # (Np, Hp)           f32
                         bias_ref,   # (Np, 3*Hp)         f32, iteration-invariant
                         wbig_ref,   # ((E+1)*Hp, 3*Hp)   matmul dtype
                         uh_ref,     # (Hp, Hp)           matmul dtype
                         out_ref,    # (Np, Hp)           f32
                         h_scr,      # (Np, Hp)           f32 VMEM (carried state)
                         p_scr):     # (Np, (E+1)*Hp)     matmul-dtype VMEM
    f32 = jnp.float32
    E = edge_ref.shape[0]
    Hp = uh_ref.shape[0]
    md = wbig_ref.dtype

    h_scr[...] = h_ref[...]

    def body(_, carry):
        h = h_scr[...]                       # carried state stays f32
        hm = h.astype(md)
        # Edge-first propagation: p_e = edge_T[e] @ h, written to lane-aligned
        # column blocks of the VMEM scratch.  E is small & static -> unrolled.
        for e in range(E):
            p_scr[:, e * Hp:(e + 1) * Hp] = jnp.dot(
                edge_ref[e], hm, preferred_element_type=f32).astype(md)
        # Append h itself so uz/ur fold into the same wide weight matmul.
        p_scr[:, E * Hp:] = hm
        # One wide weight matmul with K = (E+1)*Hp; bias precomputed in the wrapper.
        acc = jnp.dot(p_scr[...], wbig_ref[...],
                      preferred_element_type=f32) + bias_ref[...]
        z = jax.nn.sigmoid(acc[:, :Hp])
        r = jax.nn.sigmoid(acc[:, Hp:2 * Hp])
        ht = jnp.tanh(acc[:, 2 * Hp:]
                      + jnp.dot((r * h).astype(md), uh_ref[...],
                                preferred_element_type=f32))
        h_scr[...] = (1.0 - z) * h + z * ht
        return carry

    lax.fori_loop(0, iterations, body, 0, unroll=unroll)
    out_ref[...] = h_scr[...].astype(out_ref.dtype)


# ---------------------------------------------------------------------------
# Kernel 2: one iteration step, dst-node tiles on a "parallel" grid axis.
# Used when the edge tensor no longer fits VMEM (and to use both v7x TCs).
# ---------------------------------------------------------------------------
def _ggx_step_kernel(edge_ref,   # (E, Tn, Np)        dst tile of edge_T
                     hfull_ref,  # (Np, Hp)           f32, full hidden (resident)
                     htile_ref,  # (Tn, Hp)           f32, this dst tile of hidden
                     bias_ref,   # (Tn, 3*Hp)         f32, this dst tile of the bias
                     wbig_ref,   # ((E+1)*Hp, 3*Hp)   matmul dtype
                     uh_ref,     # (Hp, Hp)           matmul dtype
                     o_ref,      # (Tn, Hp)           f32, this dst tile of new hidden
                     p_scr):     # (Tn, (E+1)*Hp)     matmul-dtype VMEM
    f32 = jnp.float32
    E = edge_ref.shape[0]
    Hp = uh_ref.shape[0]
    md = wbig_ref.dtype

    hm = hfull_ref[...].astype(md)
    for e in range(E):
        p_scr[:, e * Hp:(e + 1) * Hp] = jnp.dot(
            edge_ref[e], hm, preferred_element_type=f32).astype(md)
    h_t = htile_ref[...]
    p_scr[:, E * Hp:] = h_t.astype(md)
    acc = jnp.dot(p_scr[...], wbig_ref[...],
                  preferred_element_type=f32) + bias_ref[...]
    z = jax.nn.sigmoid(acc[:, :Hp])
    r = jax.nn.sigmoid(acc[:, Hp:2 * Hp])
    ht = jnp.tanh(acc[:, 2 * Hp:]
                  + jnp.dot((r * h_t).astype(md), uh_ref[...],
                            preferred_element_type=f32))
    o_ref[...] = ((1.0 - z) * h_t + z * ht).astype(o_ref.dtype)


# ---------------------------------------------------------------------------
# Wrapper-side, iteration-invariant layout plumbing (plain XLA).
# ---------------------------------------------------------------------------
def _pack_operands(x, hidden, edge_matrix, params, Np, Hp, md):
    f32 = jnp.float32
    E, N, _ = edge_matrix.shape
    H = params["uh"].shape[0]

    # (E, src, dst) -> (E, dst, src), zero-padded on both node axes.
    edge_T = jnp.zeros((E, Np, Np), f32).at[:, :N, :N].set(
        jnp.swapaxes(edge_matrix, 1, 2).astype(f32)).astype(md)

    # Big fused weight: rows = (E propagated blocks + 1 raw-h block) x Hp,
    # columns = 3 lane-aligned gate blocks of stride Hp.  Zero padding everywhere else.
    w = params["wz_wr_wh"].astype(f32)       # (E, H, 3H)
    uz_ur = params["uz_ur"].astype(f32)      # (H, 2H)
    w_big = jnp.zeros((E + 1, Hp, 3 * Hp), f32)
    for e in range(E):
        for g in range(3):
            w_big = w_big.at[e, :H, g * Hp:g * Hp + H].set(w[e, :, g * H:(g + 1) * H])
    for g in range(2):                       # uz / ur fold into the z / r gate blocks
        w_big = w_big.at[E, :H, g * Hp:g * Hp + H].set(uz_ur[:, g * H:(g + 1) * H])
    w_big = w_big.reshape((E + 1) * Hp, 3 * Hp).astype(md)

    uh_pad = jnp.zeros((Hp, Hp), f32).at[:H, :H].set(params["uh"].astype(f32)).astype(md)

    # Iteration-invariant bias:  x @ input_wzrh + sum_e ba[e] @ w[e] + E * bw.
    # Padded rows / columns are zero -> padded nodes / features stay exactly zero.
    b_row = (jnp.einsum("eh,ehk->k", params["ba"].astype(f32), w)
             + float(E) * params["bw"].astype(f32))                     # (3H,)
    bias = x[0].astype(f32) @ params["input_wzrh"].astype(f32) + b_row  # (N, 3H)
    bias_p = jnp.zeros((Np, 3 * Hp), f32)
    for g in range(3):
        bias_p = bias_p.at[:N, g * Hp:g * Hp + H].set(bias[:, g * H:(g + 1) * H])

    h0 = jnp.zeros((Np, Hp), f32).at[:N, :H].set(hidden[0].astype(f32))
    return edge_T, h0, bias_p, w_big, uh_pad


def gated_graph_x_bias(x, hidden, edge_matrix, params, iterations=10, *,
                       matmul_dtype=jnp.bfloat16,
                       force_streamed=False, dst_tile=256):
    """x: (1, N, I), hidden: (1, N, H), edge_matrix: (E, N, N) = (type, src, dst)."""
    assert x.shape[0] == 1 and hidden.shape[0] == 1, "simple branch requires batch == 1"
    E, N, _ = edge_matrix.shape
    H = params["uh"].shape[0]
    f32 = jnp.float32
    md = jnp.dtype(matmul_dtype)
    isz = md.itemsize

    # Feature axis padded to a lane multiple -> every per-edge / per-gate slice in the
    # kernel starts on a 128-lane vreg boundary.
    Hp = _round_up(H, 128)
    # Node axis padded to the sublane packing of the matmul dtype (16 for bf16).
    sub = 8 * 4 // isz
    Np = _round_up(N, sub)

    # All-resident VMEM footprint; cut over to the streamed path well before v7x's
    # 64 MiB physical VMEM.
    resident_bytes = (E * Np * Np * isz                 # edge_T
                      + (E + 1) * Hp * 3 * Hp * isz     # w_big
                      + Hp * Hp * isz                   # uh
                      + 3 * Np * Hp * 4                 # h0, h_scr, out
                      + Np * 3 * Hp * 4                 # bias
                      + Np * (E + 1) * Hp * isz)        # p_scr
    use_resident = (not force_streamed) and resident_bytes <= (40 << 20)

    if use_resident:
        edge_T, h0, bias_p, w_big, uh_pad = _pack_operands(
            x, hidden, edge_matrix, params, Np, Hp, md)
        unroll = True if Np * Hp * 4 <= (64 << 10) else 2
        vmem_limit = int(min(max(2 * resident_bytes + (8 << 20), 32 << 20), 48 << 20))
        vspec = pl.BlockSpec(memory_space=pltpu.MemorySpace.VMEM)
        out = pl.pallas_call(
            functools.partial(_ggx_resident_kernel, int(iterations), unroll),
            out_shape=jax.ShapeDtypeStruct((Np, Hp), f32),
            in_specs=[vspec] * 5,
            out_specs=vspec,
            scratch_shapes=[pltpu.VMEM((Np, Hp), f32),
                            pltpu.VMEM((Np, (E + 1) * Hp), md)],
            compiler_params=pltpu.CompilerParams(vmem_limit_bytes=vmem_limit),
        )(edge_T, h0, bias_p, w_big, uh_pad)
        return out[:N, :H].astype(hidden.dtype)[None]

    # ---- streamed path: one pallas_call per iteration, dst-node tiles on a
    #      "parallel" grid axis (both v7x TensorCores; edge_T streamed from HBM). ----
    Tn = _round_up(min(dst_tile, Np), sub)
    Np = _round_up(N, Tn)
    edge_T, h0, bias_p, w_big, uh_pad = _pack_operands(
        x, hidden, edge_matrix, params, Np, Hp, md)
    T = Np // Tn

    step_bytes = (2 * E * Tn * Np * isz                      # edge tile (double-buffered)
                  + 2 * (2 * Tn * Hp * 4 + Tn * 3 * Hp * 4)  # h tile, out tile, bias tile
                  + 2 * Np * Hp * 4                          # full hidden
                  + 2 * ((E + 1) * Hp * 3 * Hp + Hp * Hp) * isz
                  + Tn * (E + 1) * Hp * isz)                 # p_scr
    vmem_limit = int(min(max(step_bytes + (8 << 20), 32 << 20), 48 << 20))

    grid_spec = pltpu.PrefetchScalarGridSpec(
        num_scalar_prefetch=0,
        grid=(T,),
        in_specs=[
            pl.BlockSpec((E, Tn, Np), lambda i: (0, i, 0)),          # edge_T dst tile
            pl.BlockSpec((Np, Hp), lambda i: (0, 0)),                # full hidden
            pl.BlockSpec((Tn, Hp), lambda i: (i, 0)),                # hidden, this tile
            pl.BlockSpec((Tn, 3 * Hp), lambda i: (i, 0)),            # bias, this tile
            pl.BlockSpec(((E + 1) * Hp, 3 * Hp), lambda i: (0, 0)),  # w_big
            pl.BlockSpec((Hp, Hp), lambda i: (0, 0)),                # uh
        ],
        out_specs=pl.BlockSpec((Tn, Hp), lambda i: (i, 0)),
        scratch_shapes=[pltpu.VMEM((Tn, (E + 1) * Hp), md)],
    )
    step = pl.pallas_call(
        _ggx_step_kernel,
        out_shape=jax.ShapeDtypeStruct((Np, Hp), f32),
        grid_spec=grid_spec,
        compiler_params=pltpu.CompilerParams(
            dimension_semantics=("parallel",),
            vmem_limit_bytes=vmem_limit),
    )
    h = h0
    for _ in range(int(iterations)):
        # TODO(synk): alias h into the output (input_output_aliases) once a padding-free
        # shape is guaranteed; currently h round-trips HBM once per iteration.
        h = step(edge_T, h, h, bias_p, w_big, uh_pad)
    return h[:N, :H].astype(hidden.dtype)[None]


def gated_graph_x_bias_ref(x, hidden, edge_matrix, params, iterations=10):
    """Pure-JAX transcription of the PyTorch forward (simple branch)."""
    h = hidden[0]
    x0 = x[0]
    for _ in range(iterations):
        act = jnp.einsum("enm,nh->emh", edge_matrix, h) + params["ba"][:, None, :]
        awzrh = jnp.einsum("enh,ehk->enk", act, params["wz_wr_wh"]) + params["bw"]
        iwzrh = x0 @ params["input_wzrh"]
        awz, awr, awh = jnp.split(awzrh, 3, axis=-1)
        iwz, iwr, iwh = jnp.split(iwzrh, 3, axis=-1)
        awz = awz.sum(0) + iwz
        awr = awr.sum(0) + iwr
        awh = awh.sum(0) + iwh
        uzp, urp = jnp.split(h @ params["uz_ur"], 2, axis=-1)
        z = jax.nn.sigmoid(awz + uzp)
        r = jax.nn.sigmoid(awr + urp)
        ht = jnp.tanh(awh + (r * h) @ params["uh"])
        h = (1.0 - z) * h + z * ht
    return h[None]


def init_params(key, input_size, hidden_size, num_edge_style):
    H, I, E = hidden_size, input_size, num_edge_style
    std_a = (2.0 / (H + H)) ** 0.5
    std_b = (2.0 / (I + H)) ** 0.5
    std_c = (2.0 / (H * E + H)) ** 0.5
    k = jax.random.split(key, 6)
    return {
        # ba / bw are zeros in the PyTorch __init__; small deterministic values are used
        # here so the bias path is actually exercised.
        "ba": 0.01 * jax.random.normal(k[0], (E, H), jnp.float32),
        "bw": 0.01 * jax.random.normal(k[1], (3 * H,), jnp.float32),
        "wz_wr_wh": std_c * jax.random.normal(k[2], (E, H, 3 * H), jnp.float32),
        "uz_ur": std_a * jax.random.normal(k[3], (H, 2 * H), jnp.float32),
        "uh": std_a * jax.random.normal(k[4], (H, H), jnp.float32),
        "input_wzrh": std_b * jax.random.normal(k[5], (I, 3 * H), jnp.float32),
    }


if __name__ == "__main__":
    input_size, hidden_size, num_edge_style = 16, 32, 3
    num_nodes, iterations = 16, 10

    key = jax.random.PRNGKey(0)
    kp, kx, kh, ke = jax.random.split(key, 4)
    params = init_params(kp, input_size, hidden_size, num_edge_style)

    x = jax.random.normal(kx, (1, num_nodes, input_size), jnp.float32)
    hidden = jax.random.normal(kh, (1, num_nodes, hidden_size), jnp.float32)
    edge_matrix = 0.2 * jax.random.normal(
        ke, (num_edge_style, num_nodes, num_nodes), jnp.float32)

    ref = jax.block_until_ready(
        gated_graph_x_bias_ref(x, hidden, edge_matrix, params, iterations))

    # Exact-dtype resident path: tight check against the pure-JAX reference.
    out_f32 = jax.block_until_ready(
        gated_graph_x_bias(x, hidden, edge_matrix, params, iterations,
                           matmul_dtype=jnp.float32))
    assert out_f32.shape == hidden.shape
    err_f32 = float(jnp.max(jnp.abs(out_f32 - ref)))
    assert err_f32 < 2e-3, f"f32 resident kernel mismatch vs reference: {err_f32}"

    # Default production path: bf16 MXU operands, f32 carried state and gate math.
    out_bf16 = jax.block_until_ready(
        gated_graph_x_bias(x, hidden, edge_matrix, params, iterations))
    err_bf16 = float(jnp.max(jnp.abs(out_bf16 - ref)))
    assert err_bf16 < 1e-1, f"bf16 resident kernel mismatch vs reference: {err_bf16}"

    # Streamed / dst-tiled fallback, forced at a small tile so the grid has >1 step.
    out_stream = jax.block_until_ready(
        gated_graph_x_bias(x, hidden, edge_matrix, params, iterations,
                           matmul_dtype=jnp.float32,
                           force_streamed=True, dst_tile=8))
    err_stream = float(jnp.max(jnp.abs(out_stream - ref)))
    assert err_stream < 2e-3, f"f32 streamed kernel mismatch vs reference: {err_stream}"

    print("KERNEL_OK")
</pallas_src>

<mosaic_0001>
module attributes {stable_mosaic.version = 11 : i64} {
  func.func @_ggx_resident_kernel(%arg0: memref<3x16x16xf32, #tpu.memory_space<vmem>>, %arg1: memref<16x128xf32, #tpu.memory_space<vmem>>, %arg2: memref<16x384xf32, #tpu.memory_space<vmem>>, %arg3: memref<512x384xf32, #tpu.memory_space<vmem>>, %arg4: memref<128x128xf32, #tpu.memory_space<vmem>>, %arg5: memref<16x128xf32, #tpu.memory_space<vmem>>, %arg6: memref<16x128xf32, #tpu.memory_space<vmem>>, %arg7: memref<16x512xf32, #tpu.memory_space<vmem>>) attributes {dimension_semantics = [], scalar_prefetch = 0 : i64, scratch_operands = 2 : i64, tpu.core_type = #tpu.core_type<tc>} {
    %c0 = arith.constant 0 : index
    %c0_0 = arith.constant 0 : index
    %0 = vector.load %arg1[%c0, %c0_0] : memref<16x128xf32, #tpu.memory_space<vmem>>, vector<16x128xf32>
    %c0_1 = arith.constant 0 : index
    %c0_2 = arith.constant 0 : index
    %1 = vector.load %arg6[%c0_1, %c0_2] : memref<16x128xf32, #tpu.memory_space<vmem>>, vector<16x128xf32>
    tpu.vector_store %arg6[%c0_1, %c0_2], %0 {strides = array<i32>} : memref<16x128xf32, #tpu.memory_space<vmem>>, vector<16x128xf32>,
    %c0_i32 = arith.constant 0 : i32
    %c0_3 = arith.constant 0 : index
    %c0_4 = arith.constant 0 : index
    %2 = vector.load %arg6[%c0_3, %c0_4] : memref<16x128xf32, #tpu.memory_space<vmem>>, vector<16x128xf32>
    %c0_5 = arith.constant 0 : index
    %c0_6 = arith.constant 0 : index
    %c0_7 = arith.constant 0 : index
    %3 = vector.load %arg0[%c0_5, %c0_6, %c0_7] : memref<3x16x16xf32, #tpu.memory_space<vmem>>, vector<1x16x16xf32>
    %4 = vector.shape_cast %3 : vector<1x16x16xf32> to vector<16x16xf32>
    %cst = arith.constant dense<0.000000e+00> : vector<16x128xf32>
    %5 = tpu.matmul %4, %2, %cst {dimension_numbers = #tpu.dot_dimension_numbers<[1], [0], [0], [1], [0, 0, 1, 1], [], []>} : vector<16x16xf32>, vector<16x128xf32>, vector<16x128xf32> -> vector<16x128xf32>
    %c0_8 = arith.constant 0 : index
    %c0_9 = arith.constant 0 : index
    %6 = vector.load %arg7[%c0_8, %c0_9] : memref<16x512xf32, #tpu.memory_space<vmem>>, vector<16x128xf32>
    tpu.vector_store %arg7[%c0_8, %c0_9], %5 {strides = array<i32>} : memref<16x512xf32, #tpu.memory_space<vmem>>, vector<16x128xf32>,
    %c1 = arith.constant 1 : index
    %c0_10 = arith.constant 0 : index
    %c0_11 = arith.constant 0 : index
    %7 = vector.load %arg0[%c1, %c0_10, %c0_11] : memref<3x16x16xf32, #tpu.memory_space<vmem>>, vector<1x16x16xf32>
    %8 = vector.shape_cast %7 : vector<1x16x16xf32> to vector<16x16xf32>
    %cst_12 = arith.constant dense<0.000000e+00> : vector<16x128xf32>
    %9 = tpu.matmul %8, %2, %cst_12 {dimension_numbers = #tpu.dot_dimension_numbers<[1], [0], [0], [1], [0, 0, 1, 1], [], []>} : vector<16x16xf32>, vector<16x128xf32>, vector<16x128xf32> -> vector<16x128xf32>
    %c0_13 = arith.constant 0 : index
    %c128 = arith.constant 128 : index
    %10 = vector.load %arg7[%c0_13, %c128] : memref<16x512xf32, #tpu.memory_space<vmem>>, vector<16x128xf32>
    tpu.vector_store %arg7[%c0_13, %c128], %9 {strides = array<i32>} : memref<16x512xf32, #tpu.memory_space<vmem>>, vector<16x128xf32>,
    %c2 = arith.constant 2 : index
    %c0_14 = arith.constant 0 : index
    %c0_15 = arith.constant 0 : index
    %11 = vector.load %arg0[%c2, %c0_14, %c0_15] : memref<3x16x16xf32, #tpu.memory_space<vmem>>, vector<1x16x16xf32>
    %12 = vector.shape_cast %11 : vector<1x16x16xf32> to vector<16x16xf32>
    %cst_16 = arith.constant dense<0.000000e+00> : vector<16x128xf32>
    %13 = tpu.matmul %12, %2, %cst_16 {dimension_numbers = #tpu.dot_dimension_numbers<[1], [0], [0], [1], [0, 0, 1, 1], [], []>} : vector<16x16xf32>, vector<16x128xf32>, vector<16x128xf32> -> vector<16x128xf32>
    %c0_17 = arith.constant 0 : index
    %c256 = arith.constant 256 : index
    %14 = vector.load %arg7[%c0_17, %c256] : memref<16x512xf32, #tpu.memory_space<vmem>>, vector<16x128xf32>
    tpu.vector_store %arg7[%c0_17, %c256], %13 {strides = array<i32>} : memref<16x512xf32, #tpu.memory_space<vmem>>, vector<16x128xf32>,
    %c0_18 = arith.constant 0 : index
    %c384 = arith.constant 384 : index
    %15 = vector.load %arg7[%c0_18, %c384] : memref<16x512xf32, #tpu.memory_space<vmem>>, vector<16x128xf32>
    tpu.vector_store %arg7[%c0_18, %c384], %2 {strides = array<i32>} : memref<16x512xf32, #tpu.memory_space<vmem>>, vector<16x128xf32>,
    %c0_19 = arith.constant 0 : index
    %c0_20 = arith.constant 0 : index
    %16 = vector.load %arg7[%c0_19, %c0_20] : memref<16x512xf32, #tpu.memory_space<vmem>>, vector<16x512xf32>
    %c0_21 = arith.constant 0 : index
    %c0_22 = arith.constant 0 : index
    %17 = vector.load %arg3[%c0_21, %c0_22] : memref<512x384xf32, #tpu.memory_space<vmem>>, vector<512x384xf32>
    %cst_23 = arith.constant dense<0.000000e+00> : vector<16x384xf32>
    %18 = tpu.matmul %16, %17, %cst_23 {dimension_numbers = #tpu.dot_dimension_numbers<[1], [0], [0], [1], [0, 0, 1, 1], [], []>} : vector<16x512xf32>, vector<512x384xf32>, vector<16x384xf32> -> vector<16x384xf32>
    %c0_24 = arith.constant 0 : index
    %c0_25 = arith.constant 0 : index
    %19 = vector.load %arg2[%c0_24, %c0_25] : memref<16x384xf32, #tpu.memory_space<vmem>>, vector<16x384xf32>
    %20 = arith.addf %18, %19 : vector<16x384xf32>
    %21 = vector.extract_strided_slice %20 {offsets = [0, 0], sizes = [16, 128], strides = [1, 1]} : vector<16x384xf32> to vector<16x128xf32>
    %22 = arith.negf %21 : vector<16x128xf32>
    %23 = math.exp %22 : vector<16x128xf32>
    %cst_26 = arith.constant 1.000000e+00 : f32
    %24 = vector.broadcast %cst_26 : f32 to vector<16x128xf32>
    %25 = arith.addf %24, %23 : vector<16x128xf32>
    %26 = arith.divf %24, %25 : vector<16x128xf32>
    %27 = vector.extract_strided_slice %20 {offsets = [0, 128], sizes = [16, 128], strides = [1, 1]} : vector<16x384xf32> to vector<16x128xf32>
    %28 = arith.negf %27 : vector<16x128xf32>
    %29 = math.exp %28 : vector<16x128xf32>
    %cst_27 = arith.constant 1.000000e+00 : f32
    %30 = vector.broadcast %cst_27 : f32 to vector<16x128xf32>
    %31 = arith.addf %30, %29 : vector<16x128xf32>
    %32 = arith.divf %30, %31 : vector<16x128xf32>
    %33 = vector.extract_strided_slice %20 {offsets = [0, 256], sizes = [16, 128], strides = [1, 1]} : vector<16x384xf32> to vector<16x128xf32>
    %34 = arith.mulf %32, %2 : vector<16x128xf32>
    %c0_28 = arith.constant 0 : index
    %c0_29 = arith.constant 0 : index
    %35 = vector.load %arg4[%c0_28, %c0_29] : memref<128x128xf32, #tpu.memory_space<vmem>>, vector<128x128xf32>
    %cst_30 = arith.constant dense<0.000000e+00> : vector<16x128xf32>
    %36 = tpu.matmul %34, %35, %cst_30 {dimension_numbers = #tpu.dot_dimension_numbers<[1], [0], [0], [1], [0, 0, 1, 1], [], []>} : vector<16x128xf32>, vector<128x128xf32>, vector<16x128xf32> -> vector<16x128xf32>
    %37 = arith.addf %33, %36 : vector<16x128xf32>
    %38 = math.tanh %37 : vector<16x128xf32>
    %cst_31 = arith.constant 1.000000e+00 : f32
    %39 = vector.broadcast %cst_31 : f32 to vector<16x128xf32>
    %40 = arith.subf %39, %26 : vector<16x128xf32>
    %41 = arith.mulf %40, %2 : vector<16x128xf32>
    %42 = arith.mulf %26, %38 : vector<16x128xf32>
    %43 = arith.addf %41, %42 : vector<16x128xf32>
    %c0_32 = arith.constant 0 : index
    %c0_33 = arith.constant 0 : index
    %44 = vector.load %arg6[%c0_32, %c0_33] : memref<16x128xf32, #tpu.memory_space<vmem>>, vector<16x128xf32>
    tpu.vector_store %arg6[%c0_32, %c0_33], %43 {strides = array<i32>} : memref<16x128xf32, #tpu.memory_space<vmem>>, vector<16x128xf32>,
    %c1_i32 = arith.constant 1 : i32
    %c0_34 = arith.constant 0 : index
    %c0_35 = arith.constant 0 : index
    %45 = vector.load %arg6[%c0_34, %c0_35] : memref<16x128xf32, #tpu.memory_space<vmem>>, vector<16x128xf32>
    %c0_36 = arith.constant 0 : index
    %c0_37 = arith.constant 0 : index
    %c0_38 = arith.constant 0 : index
    %46 = vector.load %arg0[%c0_36, %c0_37, %c0_38] : memref<3x16x16xf32, #tpu.memory_space<vmem>>, vector<1x16x16xf32>
    %47 = vector.shape_cast %46 : vector<1x16x16xf32> to vector<16x16xf32>
    %cst_39 = arith.constant dense<0.000000e+00> : vector<16x128xf32>
    %48 = tpu.matmul %47, %45, %cst_39 {dimension_numbers = #tpu.dot_dimension_numbers<[1], [0], [0], [1], [0, 0, 1, 1], [], []>} : vector<16x16xf32>, vector<16x128xf32>, vector<16x128xf32> -> vector<16x128xf32>
    %c0_40 = arith.constant 0 : index
    %c0_41 = arith.constant 0 : index
    %49 = vector.load %arg7[%c0_40, %c0_41] : memref<16x512xf32, #tpu.memory_space<vmem>>, vector<16x128xf32>
    tpu.vector_store %arg7[%c0_40, %c0_41], %48 {strides = array<i32>} : memref<16x512xf32, #tpu.memory_space<vmem>>, vector<16x128xf32>,
    %c1_42 = arith.constant 1 : index
    %c0_43 = arith.constant 0 : index
    %c0_44 = arith.constant 0 : index
    %50 = vector.load %arg0[%c1_42, %c0_43, %c0_44] : memref<3x16x16xf32, #tpu.memory_space<vmem>>, vector<1x16x16xf32>
    %51 = vector.shape_cast %50 : vector<1x16x16xf32> to vector<16x16xf32>
    %cst_45 = arith.constant dense<0.000000e+00> : vector<16x128xf32>
    %52 = tpu.matmul %51, %45, %cst_45 {dimension_numbers = #tpu.dot_dimension_numbers<[1], [0], [0], [1], [0, 0, 1, 1], [], []>} : vector<16x16xf32>, vector<16x128xf32>, vector<16x128xf32> -> vector<16x128xf32>
    %c0_46 = arith.constant 0 : index
    %c128_47 = arith.constant 128 : index
    %53 = vector.load %arg7[%c0_46, %c128_47] : memref<16x512xf32, #tpu.memory_space<vmem>>, vector<16x128xf32>
    tpu.vector_store %arg7[%c0_46, %c128_47], %52 {strides = array<i32>} : memref<16x512xf32, #tpu.memory_space<vmem>>, vector<16x128xf32>,
    %c2_48 = arith.constant 2 : index
    %c0_49 = arith.constant 0 : index
    %c0_50 = arith.constant 0 : index
    %54 = vector.load %arg0[%c2_48, %c0_49, %c0_50] : memref<3x16x16xf32, #tpu.memory_space<vmem>>, vector<1x16x16xf32>
    %55 = vector.shape_cast %54 : vector<1x16x16xf32> to vector<16x16xf32>
    %cst_51 = arith.constant dense<0.000000e+00> : vector<16x128xf32>
    %56 = tpu.matmul %55, %45, %cst_51 {dimension_numbers = #tpu.dot_dimension_numbers<[1], [0], [0], [1], [0, 0, 1, 1], [], []>} : vector<16x16xf32>, vector<16x128xf32>, vector<16x128xf32> -> vector<16x128xf32>
    %c0_52 = arith.constant 0 : index
    %c256_53 = arith.constant 256 : index
    %57 = vector.load %arg7[%c0_52, %c256_53] : memref<16x512xf32, #tpu.memory_space<vmem>>, vector<16x128xf32>
    tpu.vector_store %arg7[%c0_52, %c256_53], %56 {strides = array<i32>} : memref<16x512xf32, #tpu.memory_space<vmem>>, vector<16x128xf32>,
    %c0_54 = arith.constant 0 : index
    %c384_55 = arith.constant 384 : index
    %58 = vector.load %arg7[%c0_54, %c384_55] : memref<16x512xf32, #tpu.memory_space<vmem>>, vector<16x128xf32>
    tpu.vector_store %arg7[%c0_54, %c384_55], %45 {strides = array<i32>} : memref<16x512xf32, #tpu.memory_space<vmem>>, vector<16x128xf32>,
    %c0_56 = arith.constant 0 : index
    %c0_57 = arith.constant 0 : index
    %59 = vector.load %arg7[%c0_56, %c0_57] : memref<16x512xf32, #tpu.memory_space<vmem>>, vector<16x512xf32>
    %c0_58 = arith.constant 0 : index
    %c0_59 = arith.constant 0 : index
    %60 = vector.load %arg3[%c0_58, %c0_59] : memref<512x384xf32, #tpu.memory_space<vmem>>, vector<512x384xf32>
    %cst_60 = arith.constant dense<0.000000e+00> : vector<16x384xf32>
    %61 = tpu.matmul %59, %60, %cst_60 {dimension_numbers = #tpu.dot_dimension_numbers<[1], [0], [0], [1], [0, 0, 1, 1], [], []>} : vector<16x512xf32>, vector<512x384xf32>, vector<16x384xf32> -> vector<16x384xf32>
    %c0_61 = arith.constant 0 : index
    %c0_62 = arith.constant 0 : index
    %62 = vector.load %arg2[%c0_61, %c0_62] : memref<16x384xf32, #tpu.memory_space<vmem>>, vector<16x384xf32>
    %63 = arith.addf %61, %62 : vector<16x384xf32>
    %64 = vector.extract_strided_slice %63 {offsets = [0, 0], sizes = [16, 128], strides = [1, 1]} : vector<16x384xf32> to vector<16x128xf32>
    %65 = arith.negf %64 : vector<16x128xf32>
    %66 = math.exp %65 : vector<16x128xf32>
    %cst_63 = arith.constant 1.000000e+00 : f32
    %67 = vector.broadcast %cst_63 : f32 to vector<16x128xf32>
    %68 = arith.addf %67, %66 : vector<16x128xf32>
    %69 = arith.divf %67, %68 : vector<16x128xf32>
    %70 = vector.extract_strided_slice %63 {offsets = [0, 128], sizes = [16, 128], strides = [1, 1]} : vector<16x384xf32> to vector<16x128xf32>
    %71 = arith.negf %70 : vector<16x128xf32>
    %72 = math.exp %71 : vector<16x128xf32>
    %cst_64 = arith.constant 1.000000e+00 : f32
    %73 = vector.broadcast %cst_64 : f32 to vector<16x128xf32>
    %74 = arith.addf %73, %72 : vector<16x128xf32>
    %75 = arith.divf %73, %74 : vector<16x128xf32>
    %76 = vector.extract_strided_slice %63 {offsets = [0, 256], sizes = [16, 128], strides = [1, 1]} : vector<16x384xf32> to vector<16x128xf32>
    %77 = arith.mulf %75, %45 : vector<16x128xf32>
    %c0_65 = arith.constant 0 : index
    %c0_66 = arith.constant 0 : index
    %78 = vector.load %arg4[%c0_65, %c0_66] : memref<128x128xf32, #tpu.memory_space<vmem>>, vector<128x128xf32>
    %cst_67 = arith.constant dense<0.000000e+00> : vector<16x128xf32>
    %79 = tpu.matmul %77, %78, %cst_67 {dimension_numbers = #tpu.dot_dimension_numbers<[1], [0], [0], [1], [0, 0, 1, 1], [], []>} : vector<16x128xf32>, vector<128x128xf32>, vector<16x128xf32> -> vector<16x128xf32>
    %80 = arith.addf %76, %79 : vector<16x128xf32>
    %81 = math.tanh %80 : vector<16x128xf32>
    %cst_68 = arith.constant 1.000000e+00 : f32
    %82 = vector.broadcast %cst_68 : f32 to vector<16x128xf32>
    %83 = arith.subf %82, %69 : vector<16x128xf32>
    %84 = arith.mulf %83, %45 : vector<16x128xf32>
    %85 = arith.mulf %69, %81 : vector<16x128xf32>
    %86 = arith.addf %84, %85 : vector<16x128xf32>
    %c0_69 = arith.constant 0 : index
    %c0_70 = arith.constant 0 : index
    %87 = vector.load %arg6[%c0_69, %c0_70] : memref<16x128xf32, #tpu.memory_space<vmem>>, vector<16x128xf32>
    tpu.vector_store %arg6[%c0_69, %c0_70], %86 {strides = array<i32>} : memref<16x128xf32, #tpu.memory_space<vmem>>, vector<16x128xf32>,
    %c2_i32 = arith.constant 2 : i32
    %c0_71 = arith.constant 0 : index
    %c0_72 = arith.constant 0 : index
    %88 = vector.load %arg6[%c0_71, %c0_72] : memref<16x128xf32, #tpu.memory_space<vmem>>, vector<16x128xf32>
    %c0_73 = arith.constant 0 : index
    %c0_74 = arith.constant 0 : index
    %c0_75 = arith.constant 0 : index
    %89 = vector.load %arg0[%c0_73, %c0_74, %c0_75] : memref<3x16x16xf32, #tpu.memory_space<vmem>>, vector<1x16x16xf32>
    %90 = vector.shape_cast %89 : vector<1x16x16xf32> to vector<16x16xf32>
    %cst_76 = arith.constant dense<0.000000e+00> : vector<16x128xf32>
    %91 = tpu.matmul %90, %88, %cst_76 {dimension_numbers = #tpu.dot_dimension_numbers<[1], [0], [0], [1], [0, 0, 1, 1], [], []>} : vector<16x16xf32>, vector<16x128xf32>, vector<16x128xf32> -> vector<16x128xf32>
    %c0_77 = arith.constant 0 : index
    %c0_78 = arith.constant 0 : index
    %92 = vector.load %arg7[%c0_77, %c0_78] : memref<16x512xf32, #tpu.memory_space<vmem>>, vector<16x128xf32>
    tpu.vector_store %arg7[%c0_77, %c0_78], %91 {strides = array<i32>} : memref<16x512xf32, #tpu.memory_space<vmem>>, vector<16x128xf32>,
    %c1_79 = arith.constant 1 : index
    %c0_80 = arith.constant 0 : index
    %c0_81 = arith.constant 0 : index
    %93 = vector.load %arg0[%c1_79, %c0_80, %c0_81] : memref<3x16x16xf32, #tpu.memory_space<vmem>>, vector<1x16x16xf32>
    %94 = vector.shape_cast %93 : vector<1x16x16xf32> to vector<16x16xf32>
    %cst_82 = arith.constant dense<0.000000e+00> : vector<16x128xf32>
    %95 = tpu.matmul %94, %88, %cst_82 {dimension_numbers = #tpu.dot_dimension_numbers<[1], [0], [0], [1], [0, 0, 1, 1], [], []>} : vector<16x16xf32>, vector<16x128xf32>, vector<16x128xf32> -> vector<16x128xf32>
    %c0_83 = arith.constant 0 : index
    %c128_84 = arith.constant 128 : index
    %96 = vector.load %arg7[%c0_83, %c128_84] : memref<16x512xf32, #tpu.memory_space<vmem>>, vector<16x128xf32>
    tpu.vector_store %arg7[%c0_83, %c128_84], %95 {strides = array<i32>} : memref<16x512xf32, #tpu.memory_space<vmem>>, vector<16x128xf32>,
    %c2_85 = arith.constant 2 : index
    %c0_86 = arith.constant 0 : index
    %c0_87 = arith.constant 0 : index
    %97 = vector.load %arg0[%c2_85, %c0_86, %c0_87] : memref<3x16x16xf32, #tpu.memory_space<vmem>>, vector<1x16x16xf32>
    %98 = vector.shape_cast %97 : vector<1x16x16xf32> to vector<16x16xf32>
    %cst_88 = arith.constant dense<0.000000e+00> : vector<16x128xf32>
    %99 = tpu.matmul %98, %88, %cst_88 {dimension_numbers = #tpu.dot_dimension_numbers<[1], [0], [0], [1], [0, 0, 1, 1], [], []>} : vector<16x16xf32>, vector<16x128xf32>, vector<16x128xf32> -> vector<16x128xf32>
    %c0_89 = arith.constant 0 : index
    %c256_90 = arith.constant 256 : index
    %100 = vector.load %arg7[%c0_89, %c256_90] : memref<16x512xf32, #tpu.memory_space<vmem>>, vector<16x128xf32>
    tpu.vector_store %arg7[%c0_89, %c256_90], %99 {strides = array<i32>} : memref<16x512xf32, #tpu.memory_space<vmem>>, vector<16x128xf32>,
    %c0_91 = arith.constant 0 : index
    %c384_92 = arith.constant 384 : index
    %101 = vector.load %arg7[%c0_91, %c384_92] : memref<16x512xf32, #tpu.memory_space<vmem>>, vector<16x128xf32>
    tpu.vector_store %arg7[%c0_91, %c384_92], %88 {strides = array<i32>} : memref<16x512xf32, #tpu.memory_space<vmem>>, vector<16x128xf32>,
    %c0_93 = arith.constant 0 : index
    %c0_94 = arith.constant 0 : index
    %102 = vector.load %arg7[%c0_93, %c0_94] : memref<16x512xf32, #tpu.memory_space<vmem>>, vector<16x512xf32>
    %c0_95 = arith.constant 0 : index
    %c0_96 = arith.constant 0 : index
    %103 = vector.load %arg3[%c0_95, %c0_96] : memref<512x384xf32, #tpu.memory_space<vmem>>, vector<512x384xf32>
    %cst_97 = arith.constant dense<0.000000e+00> : vector<16x384xf32>
    %104 = tpu.matmul %102, %103, %cst_97 {dimension_numbers = #tpu.dot_dimension_numbers<[1], [0], [0], [1], [0, 0, 1, 1], [], []>} : vector<16x512xf32>, vector<512x384xf32>, vector<16x384xf32> -> vector<16x384xf32>
    %c0_98 = arith.constant 0 : index
    %c0_99 = arith.constant 0 : index
    %105 = vector.load %arg2[%c0_98, %c0_99] : memref<16x384xf32, #tpu.memory_space<vmem>>, vector<16x384xf32>
    %106 = arith.addf %104, %105 : vector<16x384xf32>
    %107 = vector.extract_strided_slice %106 {offsets = [0, 0], sizes = [16, 128], strides = [1, 1]} : vector<16x384xf32> to vector<16x128xf32>
    %108 = arith.negf %107 : vector<16x128xf32>
    %109 = math.exp %108 : vector<16x128xf32>
    %cst_100 = arith.constant 1.000000e+00 : f32
    %110 = vector.broadcast %cst_100 : f32 to vector<16x128xf32>
    %111 = arith.addf %110, %109 : vector<16x128xf32>
    %112 = arith.divf %110, %111 : vector<16x128xf32>
    %113 = vector.extract_strided_slice %106 {offsets = [0, 128], sizes = [16, 128], strides = [1, 1]} : vector<16x384xf32> to vector<16x128xf32>
    %114 = arith.negf %113 : vector<16x128xf32>
    %115 = math.exp %114 : vector<16x128xf32>
    %cst_101 = arith.constant 1.000000e+00 : f32
    %116 = vector.broadcast %cst_101 : f32 to vector<16x128xf32>
    %117 = arith.addf %116, %115 : vector<16x128xf32>
    %118 = arith.divf %116, %117 : vector<16x128xf32>
    %119 = vector.extract_strided_slice %106 {offsets = [0, 256], sizes = [16, 128], strides = [1, 1]} : vector<16x384xf32> to vector<16x128xf32>
    %120 = arith.mulf %118, %88 : vector<16x128xf32>
    %c0_102 = arith.constant 0 : index
    %c0_103 = arith.constant 0 : index
    %121 = vector.load %arg4[%c0_102, %c0_103] : memref<128x128xf32, #tpu.memory_space<vmem>>, vector<128x128xf32>
    %cst_104 = arith.constant dense<0.000000e+00> : vector<16x128xf32>
    %122 = tpu.matmul %120, %121, %cst_104 {dimension_numbers = #tpu.dot_dimension_numbers<[1], [0], [0], [1], [0, 0, 1, 1], [], []>} : vector<16x128xf32>, vector<128x128xf32>, vector<16x128xf32> -> vector<16x128xf32>
    %123 = arith.addf %119, %122 : vector<16x128xf32>
    %124 = math.tanh %123 : vector<16x128xf32>
    %cst_105 = arith.constant 1.000000e+00 : f32
    %125 = vector.broadcast %cst_105 : f32 to vector<16x128xf32>
    %126 = arith.subf %125, %112 : vector<16x128xf32>
    %127 = arith.mulf %126, %88 : vector<16x128xf32>
    %128 = arith.mulf %112, %124 : vector<16x128xf32>
    %129 = arith.addf %127, %128 : vector<16x128xf32>
    %c0_106 = arith.constant 0 : index
    %c0_107 = arith.constant 0 : index
    %130 = vector.load %arg6[%c0_106, %c0_107] : memref<16x128xf32, #tpu.memory_space<vmem>>, vector<16x128xf32>
    tpu.vector_store %arg6[%c0_106, %c0_107], %129 {strides = array<i32>} : memref<16x128xf32, #tpu.memory_space<vmem>>, vector<16x128xf32>,
    %c3_i32 = arith.constant 3 : i32
    %c0_108 = arith.constant 0 : index
    %c0_109 = arith.constant 0 : index
    %131 = vector.load %arg6[%c0_108, %c0_109] : memref<16x128xf32, #tpu.memory_space<vmem>>, vector<16x128xf32>
    %c0_110 = arith.constant 0 : index
    %c0_111 = arith.constant 0 : index
    %c0_112 = arith.constant 0 : index
    %132 = vector.load %arg0[%c0_110, %c0_111, %c0_112] : memref<3x16x16xf32, #tpu.memory_space<vmem>>, vector<1x16x16xf32>
    %133 = vector.shape_cast %132 : vector<1x16x16xf32> to vector<16x16xf32>
    %cst_113 = arith.constant dense<0.000000e+00> : vector<16x128xf32>
    %134 = tpu.matmul %133, %131, %cst_113 {dimension_numbers = #tpu.dot_dimension_numbers<[1], [0], [0], [1], [0, 0, 1, 1], [], []>} : vector<16x16xf32>, vector<16x128xf32>, vector<16x128xf32> -> vector<16x128xf32>
    %c0_114 = arith.constant 0 : index
    %c0_115 = arith.constant 0 : index
    %135 = vector.load %arg7[%c0_114, %c0_115] : memref<16x512xf32, #tpu.memory_space<vmem>>, vector<16x128xf32>
    tpu.vector_store %arg7[%c0_114, %c0_115], %134 {strides = array<i32>} : memref<16x512xf32, #tpu.memory_space<vmem>>, vector<16x128xf32>,
    %c1_116 = arith.constant 1 : index
    %c0_117 = arith.constant 0 : index
    %c0_118 = arith.constant 0 : index
    %136 = vector.load %arg0[%c1_116, %c0_117, %c0_118] : memref<3x16x16xf32, #tpu.memory_space<vmem>>, vector<1x16x16xf32>
    %137 = vector.shape_cast %136 : vector<1x16x16xf32> to vector<16x16xf32>
    %cst_119 = arith.constant dense<0.000000e+00> : vector<16x128xf32>
    %138 = tpu.matmul %137, %131, %cst_119 {dimension_numbers = #tpu.dot_dimension_numbers<[1], [0], [0], [1], [0, 0, 1, 1], [], []>} : vector<16x16xf32>, vector<16x128xf32>, vector<16x128xf32> -> vector<16x128xf32>
    %c0_120 = arith.constant 0 : index
    %c128_121 = arith.constant 128 : index
    %139 = vector.load %arg7[%c0_120, %c128_121] : memref<16x512xf32, #tpu.memory_space<vmem>>, vector<16x128xf32>
    tpu.vector_store %arg7[%c0_120, %c128_121], %138 {strides = array<i32>} : memref<16x512xf32, #tpu.memory_space<vmem>>, vector<16x128xf32>,
    %c2_122 = arith.constant 2 : index
    %c0_123 = arith.constant 0 : index
    %c0_124 = arith.constant 0 : index
    %140 = vector.load %arg0[%c2_122, %c0_123, %c0_124] : memref<3x16x16xf32, #tpu.memory_space<vmem>>, vector<1x16x16xf32>
    %141 = vector.shape_cast %140 : vector<1x16x16xf32> to vector<16x16xf32>
    %cst_125 = arith.constant dense<0.000000e+00> : vector<16x128xf32>
    %142 = tpu.matmul %141, %131, %cst_125 {dimension_numbers = #tpu.dot_dimension_numbers<[1], [0], [0], [1], [0, 0, 1, 1], [], []>} : vector<16x16xf32>, vector<16x128xf32>, vector<16x128xf32> -> vector<16x128xf32>
    %c0_126 = arith.constant 0 : index
    %c256_127 = arith.constant 256 : index
    %143 = vector.load %arg7[%c0_126, %c256_127] : memref<16x512xf32, #tpu.memory_space<vmem>>, vector<16x128xf32>
    tpu.vector_store %arg7[%c0_126, %c256_127], %142 {strides = array<i32>} : memref<16x512xf32, #tpu.memory_space<vmem>>, vector<16x128xf32>,
    %c0_128 = arith.constant 0 : index
    %c384_129 = arith.constant 384 : index
    %144 = vector.load %arg7[%c0_128, %c384_129] : memref<16x512xf32, #tpu.memory_space<vmem>>, vector<16x128xf32>
    tpu.vector_store %arg7[%c0_128, %c384_129], %131 {strides = array<i32>} : memref<16x512xf32, #tpu.memory_space<vmem>>, vector<16x128xf32>,
    %c0_130 = arith.constant 0 : index
    %c0_131 = arith.constant 0 : index
    %145 = vector.load %arg7[%c0_130, %c0_131] : memref<16x512xf32, #tpu.memory_space<vmem>>, vector<16x512xf32>
    %c0_132 = arith.constant 0 : index
    %c0_133 = arith.constant 0 : index
    %146 = vector.load %arg3[%c0_132, %c0_133] : memref<512x384xf32, #tpu.memory_space<vmem>>, vector<512x384xf32>
    %cst_134 = arith.constant dense<0.000000e+00> : vector<16x384xf32>
    %147 = tpu.matmul %145, %146, %cst_134 {dimension_numbers = #tpu.dot_dimension_numbers<[1], [0], [0], [1], [0, 0, 1, 1], [], []>} : vector<16x512xf32>, vector<512x384xf32>, vector<16x384xf32> -> vector<16x384xf32>
    %c0_135 = arith.constant 0 : index
    %c0_136 = arith.constant 0 : index
    %148 = vector.load %arg2[%c0_135, %c0_136] : memref<16x384xf32, #tpu.memory_space<vmem>>, vector<16x384xf32>
    %149 = arith.addf %147, %148 : vector<16x384xf32>
    %150 = vector.extract_strided_slice %149 {offsets = [0, 0], sizes = [16, 128], strides = [1, 1]} : vector<16x384xf32> to vector<16x128xf32>
    %151 = arith.negf %150 : vector<16x128xf32>
    %152 = math.exp %151 : vector<16x128xf32>
    %cst_137 = arith.constant 1.000000e+00 : f32
    %153 = vector.broadcast %cst_137 : f32 to vector<16x128xf32>
    %154 = arith.addf %153, %152 : vector<16x128xf32>
    %155 = arith.divf %153, %154 : vector<16x128xf32>
    %156 = vector.extract_strided_slice %149 {offsets = [0, 128], sizes = [16, 128], strides = [1, 1]} : vector<16x384xf32> to vector<16x128xf32>
    %157 = arith.negf %156 : vector<16x128xf32>
    %158 = math.exp %157 : vector<16x128xf32>
    %cst_138 = arith.constant 1.000000e+00 : f32
    %159 = vector.broadcast %cst_138 : f32 to vector<16x128xf32>
    %160 = arith.addf %159, %158 : vector<16x128xf32>
    %161 = arith.divf %159, %160 : vector<16x128xf32>
    %162 = vector.extract_strided_slice %149 {offsets = [0, 256], sizes = [16, 128], strides = [1, 1]} : vector<16x384xf32> to vector<16x128xf32>
    %163 = arith.mulf %161, %131 : vector<16x128xf32>
    %c0_139 = arith.constant 0 : index
    %c0_140 = arith.constant 0 : index
    %164 = vector.load %arg4[%c0_139, %c0_140] : memref<128x128xf32, #tpu.memory_space<vmem>>, vector<128x128xf32>
    %cst_141 = arith.constant dense<0.000000e+00> : vector<16x128xf32>
    %165 = tpu.matmul %163, %164, %cst_141 {dimension_numbers = #tpu.dot_dimension_numbers<[1], [0], [0], [1], [0, 0, 1, 1], [], []>} : vector<16x128xf32>, vector<128x128xf32>, vector<16x128xf32> -> vector<16x128xf32>
    %166 = arith.addf %162, %165 : vector<16x128xf32>
    %167 = math.tanh %166 : vector<16x128xf32>
    %cst_142 = arith.constant 1.000000e+00 : f32
    %168 = vector.broadcast %cst_142 : f32 to vector<16x128xf32>
    %169 = arith.subf %168, %155 : vector<16x128xf32>
    %170 = arith.mulf %169, %131 : vector<16x128xf32>
    %171 = arith.mulf %155, %167 : vector<16x128xf32>
    %172 = arith.addf %170, %171 : vector<16x128xf32>
    %c0_143 = arith.constant 0 : index
    %c0_144 = arith.constant 0 : index
    %173 = vector.load %arg6[%c0_143, %c0_144] : memref<16x128xf32, #tpu.memory_space<vmem>>, vector<16x128xf32>
    tpu.vector_store %arg6[%c0_143, %c0_144], %172 {strides = array<i32>} : memref<16x128xf32, #tpu.memory_space<vmem>>, vector<16x128xf32>,
    %c4_i32 = arith.constant 4 : i32
    %c0_145 = arith.constant 0 : index
    %c0_146 = arith.constant 0 : index
    %174 = vector.load %arg6[%c0_145, %c0_146] : memref<16x128xf32, #tpu.memory_space<vmem>>, vector<16x128xf32>
    %c0_147 = arith.constant 0 : index
    %c0_148 = arith.constant 0 : index
    %c0_149 = arith.constant 0 : index
    %175 = vector.load %arg0[%c0_147, %c0_148, %c0_149] : memref<3x16x16xf32, #tpu.memory_space<vmem>>, vector<1x16x16xf32>
    %176 = vector.shape_cast %175 : vector<1x16x16xf32> to vector<16x16xf32>
    %cst_150 = arith.constant dense<0.000000e+00> : vector<16x128xf32>
    %177 = tpu.matmul %176, %174, %cst_150 {dimension_numbers = #tpu.dot_dimension_numbers<[1], [0], [0], [1], [0, 0, 1, 1], [], []>} : vector<16x16xf32>, vector<16x128xf32>, vector<16x128xf32> -> vector<16x128xf32>
    %c0_151 = arith.constant 0 : index
    %c0_152 = arith.constant 0 : index
    %178 = vector.load %arg7[%c0_151, %c0_152] : memref<16x512xf32, #tpu.memory_space<vmem>>, vector<16x128xf32>
    tpu.vector_store %arg7[%c0_151, %c0_152], %177 {strides = array<i32>} : memref<16x512xf32, #tpu.memory_space<vmem>>, vector<16x128xf32>,
    %c1_153 = arith.constant 1 : index
    %c0_154 = arith.constant 0 : index
    %c0_155 = arith.constant 0 : index
    %179 = vector.load %arg0[%c1_153, %c0_154, %c0_155] : memref<3x16x16xf32, #tpu.memory_space<vmem>>, vector<1x16x16xf32>
    %180 = vector.shape_cast %179 : vector<1x16x16xf32> to vector<16x16xf32>
    %cst_156 = arith.constant dense<0.000000e+00> : vector<16x128xf32>
    %181 = tpu.matmul %180, %174, %cst_156 {dimension_numbers = #tpu.dot_dimension_numbers<[1], [0], [0], [1], [0, 0, 1, 1], [], []>} : vector<16x16xf32>, vector<16x128xf32>, vector<16x128xf32> -> vector<16x128xf32>
    %c0_157 = arith.constant 0 : index
    %c128_158 = arith.constant 128 : index
    %182 = vector.load %arg7[%c0_157, %c128_158] : memref<16x512xf32, #tpu.memory_space<vmem>>, vector<16x128xf32>
    tpu.vector_store %arg7[%c0_157, %c128_158], %181 {strides = array<i32>} : memref<16x512xf32, #tpu.memory_space<vmem>>, vector<16x128xf32>,
    %c2_159 = arith.constant 2 : index
    %c0_160 = arith.constant 0 : index
    %c0_161 = arith.constant 0 : index
    %183 = vector.load %arg0[%c2_159, %c0_160, %c0_161] : memref<3x16x16xf32, #tpu.memory_space<vmem>>, vector<1x16x16xf32>
    %184 = vector.shape_cast %183 : vector<1x16x16xf32> to vector<16x16xf32>
    %cst_162 = arith.constant dense<0.000000e+00> : vector<16x128xf32>
    %185 = tpu.matmul %184, %174, %cst_162 {dimension_numbers = #tpu.dot_dimension_numbers<[1], [0], [0], [1], [0, 0, 1, 1], [], []>} : vector<16x16xf32>, vector<16x128xf32>, vector<16x128xf32> -> vector<16x128xf32>
    %c0_163 = arith.constant 0 : index
    %c256_164 = arith.constant 256 : index
    %186 = vector.load %arg7[%c0_163, %c256_164] : memref<16x512xf32, #tpu.memory_space<vmem>>, vector<16x128xf32>
    tpu.vector_store %arg7[%c0_163, %c256_164], %185 {strides = array<i32>} : memref<16x512xf32, #tpu.memory_space<vmem>>, vector<16x128xf32>,
    %c0_165 = arith.constant 0 : index
    %c384_166 = arith.constant 384 : index
    %187 = vector.load %arg7[%c0_165, %c384_166] : memref<16x512xf32, #tpu.memory_space<vmem>>, vector<16x128xf32>
    tpu.vector_store %arg7[%c0_165, %c384_166], %174 {strides = array<i32>} : memref<16x512xf32, #tpu.memory_space<vmem>>, vector<16x128xf32>,
    %c0_167 = arith.constant 0 : index
    %c0_168 = arith.constant 0 : index
    %188 = vector.load %arg7[%c0_167, %c0_168] : memref<16x512xf32, #tpu.memory_space<vmem>>, vector<16x512xf32>
    %c0_169 = arith.constant 0 : index
    %c0_170 = arith.constant 0 : index
    %189 = vector.load %arg3[%c0_169, %c0_170] : memref<512x384xf32, #tpu.memory_space<vmem>>, vector<512x384xf32>
    %cst_171 = arith.constant dense<0.000000e+00> : vector<16x384xf32>
    %190 = tpu.matmul %188, %189, %cst_171 {dimension_numbers = #tpu.dot_dimension_numbers<[1], [0], [0], [1], [0, 0, 1, 1], [], []>} : vector<16x512xf32>, vector<512x384xf32>, vector<16x384xf32> -> vector<16x384xf32>
    %c0_172 = arith.constant 0 : index
    %c0_173 = arith.constant 0 : index
    %191 = vector.load %arg2[%c0_172, %c0_173] : memref<16x384xf32, #tpu.memory_space<vmem>>, vector<16x384xf32>
    %192 = arith.addf %190, %191 : vector<16x384xf32>
    %193 = vector.extract_strided_slice %192 {offsets = [0, 0], sizes = [16, 128], strides = [1, 1]} : vector<16x384xf32> to vector<16x128xf32>
    %194 = arith.negf %193 : vector<16x128xf32>
    %195 = math.exp %194 : vector<16x128xf32>
    %cst_174 = arith.constant 1.000000e+00 : f32
    %196 = vector.broadcast %cst_174 : f32 to vector<16x128xf32>
    %197 = arith.addf %196, %195 : vector<16x128xf32>
    %198 = arith.divf %196, %197 : vector<16x128xf32>
    %199 = vector.extract_strided_slice %192 {offsets = [0, 128], sizes = [16, 128], strides = [1, 1]} : vector<16x384xf32> to vector<16x128xf32>
    %200 = arith.negf %199 : vector<16x128xf32>
    %201 = math.exp %200 : vector<16x128xf32>
    %cst_175 = arith.constant 1.000000e+00 : f32
    %202 = vector.broadcast %cst_175 : f32 to vector<16x128xf32>
    %203 = arith.addf %202, %201 : vector<16x128xf32>
    %204 = arith.divf %202, %203 : vector<16x128xf32>
    %205 = vector.extract_strided_slice %192 {offsets = [0, 256], sizes = [16, 128], strides = [1, 1]} : vector<16x384xf32> to vector<16x128xf32>
    %206 = arith.mulf %204, %174 : vector<16x128xf32>
    %c0_176 = arith.constant 0 : index
    %c0_177 = arith.constant 0 : index
    %207 = vector.load %arg4[%c0_176, %c0_177] : memref<128x128xf32, #tpu.memory_space<vmem>>, vector<128x128xf32>
    %cst_178 = arith.constant dense<0.000000e+00> : vector<16x128xf32>
    %208 = tpu.matmul %206, %207, %cst_178 {dimension_numbers = #tpu.dot_dimension_numbers<[1], [0], [0], [1], [0, 0, 1, 1], [], []>} : vector<16x128xf32>, vector<128x128xf32>, vector<16x128xf32> -> vector<16x128xf32>
    %209 = arith.addf %205, %208 : vector<16x128xf32>
    %210 = math.tanh %209 : vector<16x128xf32>
    %cst_179 = arith.constant 1.000000e+00 : f32
    %211 = vector.broadcast %cst_179 : f32 to vector<16x128xf32>
    %212 = arith.subf %211, %198 : vector<16x128xf32>
    %213 = arith.mulf %212, %174 : vector<16x128xf32>
    %214 = arith.mulf %198, %210 : vector<16x128xf32>
    %215 = arith.addf %213, %214 : vector<16x128xf32>
    %c0_180 = arith.constant 0 : index
    %c0_181 = arith.constant 0 : index
    %216 = vector.load %arg6[%c0_180, %c0_181] : memref<16x128xf32, #tpu.memory_space<vmem>>, vector<16x128xf32>
    tpu.vector_store %arg6[%c0_180, %c0_181], %215 {strides = array<i32>} : memref<16x128xf32, #tpu.memory_space<vmem>>, vector<16x128xf32>,
    %c5_i32 = arith.constant 5 : i32
    %c0_182 = arith.constant 0 : index
    %c0_183 = arith.constant 0 : index
    %217 = vector.load %arg6[%c0_182, %c0_183] : memref<16x128xf32, #tpu.memory_space<vmem>>, vector<16x128xf32>
    %c0_184 = arith.constant 0 : index
    %c0_185 = arith.constant 0 : index
    %c0_186 = arith.constant 0 : index
    %218 = vector.load %arg0[%c0_184, %c0_185, %c0_186] : memref<3x16x16xf32, #tpu.memory_space<vmem>>, vector<1x16x16xf32>
    %219 = vector.shape_cast %218 : vector<1x16x16xf32> to vector<16x16xf32>
    %cst_187 = arith.constant dense<0.000000e+00> : vector<16x128xf32>
    %220 = tpu.matmul %219, %217, %cst_187 {dimension_numbers = #tpu.dot_dimension_numbers<[1], [0], [0], [1], [0, 0, 1, 1], [], []>} : vector<16x16xf32>, vector<16x128xf32>, vector<16x128xf32> -> vector<16x128xf32>
    %c0_188 = arith.constant 0 : index
    %c0_189 = arith.constant 0 : index
    %221 = vector.load %arg7[%c0_188, %c0_189] : memref<16x512xf32, #tpu.memory_space<vmem>>, vector<16x128xf32>
    tpu.vector_store %arg7[%c0_188, %c0_189], %220 {strides = array<i32>} : memref<16x512xf32, #tpu.memory_space<vmem>>, vector<16x128xf32>,
    %c1_190 = arith.constant 1 : index
    %c0_191 = arith.constant 0 : index
    %c0_192 = arith.constant 0 : index
    %222 = vector.load %arg0[%c1_190, %c0_191, %c0_192] : memref<3x16x16xf32, #tpu.memory_space<vmem>>, vector<1x16x16xf32>
    %223 = vector.shape_cast %222 : vector<1x16x16xf32> to vector<16x16xf32>
    %cst_193 = arith.constant dense<0.000000e+00> : vector<16x128xf32>
    %224 = tpu.matmul %223, %217, %cst_193 {dimension_numbers = #tpu.dot_dimension_numbers<[1], [0], [0], [1], [0, 0, 1, 1], [], []>} : vector<16x16xf32>, vector<16x128xf32>, vector<16x128xf32> -> vector<16x128xf32>
    %c0_194 = arith.constant 0 : index
    %c128_195 = arith.constant 128 : index
    %225 = vector.load %arg7[%c0_194, %c128_195] : memref<16x512xf32, #tpu.memory_space<vmem>>, vector<16x128xf32>
    tpu.vector_store %arg7[%c0_194, %c128_195], %224 {strides = array<i32>} : memref<16x512xf32, #tpu.memory_space<vmem>>, vector<16x128xf32>,
    %c2_196 = arith.constant 2 : index
    %c0_197 = arith.constant 0 : index
    %c0_198 = arith.constant 0 : index
    %226 = vector.load %arg0[%c2_196, %c0_197, %c0_198] : memref<3x16x16xf32, #tpu.memory_space<vmem>>, vector<1x16x16xf32>
    %227 = vector.shape_cast %226 : vector<1x16x16xf32> to vector<16x16xf32>
    %cst_199 = arith.constant dense<0.000000e+00> : vector<16x128xf32>
    %228 = tpu.matmul %227, %217, %cst_199 {dimension_numbers = #tpu.dot_dimension_numbers<[1], [0], [0], [1], [0, 0, 1, 1], [], []>} : vector<16x16xf32>, vector<16x128xf32>, vector<16x128xf32> -> vector<16x128xf32>
    %c0_200 = arith.constant 0 : index
    %c256_201 = arith.constant 256 : index
    %229 = vector.load %arg7[%c0_200, %c256_201] : memref<16x512xf32, #tpu.memory_space<vmem>>, vector<16x128xf32>
    tpu.vector_store %arg7[%c0_200, %c256_201], %228 {strides = array<i32>} : memref<16x512xf32, #tpu.memory_space<vmem>>, vector<16x128xf32>,
    %c0_202 = arith.constant 0 : index
    %c384_203 = arith.constant 384 : index
    %230 = vector.load %arg7[%c0_202, %c384_203] : memref<16x512xf32, #tpu.memory_space<vmem>>, vector<16x128xf32>
    tpu.vector_store %arg7[%c0_202, %c384_203], %217 {strides = array<i32>} : memref<16x512xf32, #tpu.memory_space<vmem>>, vector<16x128xf32>,
    %c0_204 = arith.constant 0 : index
    %c0_205 = arith.constant 0 : index
    %231 = vector.load %arg7[%c0_204, %c0_205] : memref<16x512xf32, #tpu.memory_space<vmem>>, vector<16x512xf32>
    %c0_206 = arith.constant 0 : index
    %c0_207 = arith.constant 0 : index
    %232 = vector.load %arg3[%c0_206, %c0_207] : memref<512x384xf32, #tpu.memory_space<vmem>>, vector<512x384xf32>
    %cst_208 = arith.constant dense<0.000000e+00> : vector<16x384xf32>
    %233 = tpu.matmul %231, %232, %cst_208 {dimension_numbers = #tpu.dot_dimension_numbers<[1], [0], [0], [1], [0, 0, 1, 1], [], []>} : vector<16x512xf32>, vector<512x384xf32>, vector<16x384xf32> -> vector<16x384xf32>
    %c0_209 = arith.constant 0 : index
    %c0_210 = arith.constant 0 : index
    %234 = vector.load %arg2[%c0_209, %c0_210] : memref<16x384xf32, #tpu.memory_space<vmem>>, vector<16x384xf32>
    %235 = arith.addf %233, %234 : vector<16x384xf32>
    %236 = vector.extract_strided_slice %235 {offsets = [0, 0], sizes = [16, 128], strides = [1, 1]} : vector<16x384xf32> to vector<16x128xf32>
    %237 = arith.negf %236 : vector<16x128xf32>
    %238 = math.exp %237 : vector<16x128xf32>
    %cst_211 = arith.constant 1.000000e+00 : f32
    %239 = vector.broadcast %cst_211 : f32 to vector<16x128xf32>
    %240 = arith.addf %239, %238 : vector<16x128xf32>
    %241 = arith.divf %239, %240 : vector<16x128xf32>
    %242 = vector.extract_strided_slice %235 {offsets = [0, 128], sizes = [16, 128], strides = [1, 1]} : vector<16x384xf32> to vector<16x128xf32>
    %243 = arith.negf %242 : vector<16x128xf32>
    %244 = math.exp %243 : vector<16x128xf32>
    %cst_212 = arith.constant 1.000000e+00 : f32
    %245 = vector.broadcast %cst_212 : f32 to vector<16x128xf32>
    %246 = arith.addf %245, %244 : vector<16x128xf32>
    %247 = arith.divf %245, %246 : vector<16x128xf32>
    %248 = vector.extract_strided_slice %235 {offsets = [0, 256], sizes = [16, 128], strides = [1, 1]} : vector<16x384xf32> to vector<16x128xf32>
    %249 = arith.mulf %247, %217 : vector<16x128xf32>
    %c0_213 = arith.constant 0 : index
    %c0_214 = arith.constant 0 : index
    %250 = vector.load %arg4[%c0_213, %c0_214] : memref<128x128xf32, #tpu.memory_space<vmem>>, vector<128x128xf32>
    %cst_215 = arith.constant dense<0.000000e+00> : vector<16x128xf32>
    %251 = tpu.matmul %249, %250, %cst_215 {dimension_numbers = #tpu.dot_dimension_numbers<[1], [0], [0], [1], [0, 0, 1, 1], [], []>} : vector<16x128xf32>, vector<128x128xf32>, vector<16x128xf32> -> vector<16x128xf32>
    %252 = arith.addf %248, %251 : vector<16x128xf32>
    %253 = math.tanh %252 : vector<16x128xf32>
    %cst_216 = arith.constant 1.000000e+00 : f32
    %254 = vector.broadcast %cst_216 : f32 to vector<16x128xf32>
    %255 = arith.subf %254, %241 : vector<16x128xf32>
    %256 = arith.mulf %255, %217 : vector<16x128xf32>
    %257 = arith.mulf %241, %253 : vector<16x128xf32>
    %258 = arith.addf %256, %257 : vector<16x128xf32>
    %c0_217 = arith.constant 0 : index
    %c0_218 = arith.constant 0 : index
    %259 = vector.load %arg6[%c0_217, %c0_218] : memref<16x128xf32, #tpu.memory_space<vmem>>, vector<16x128xf32>
    tpu.vector_store %arg6[%c0_217, %c0_218], %258 {strides = array<i32>} : memref<16x128xf32, #tpu.memory_space<vmem>>, vector<16x128xf32>,
    %c6_i32 = arith.constant 6 : i32
    %c0_219 = arith.constant 0 : index
    %c0_220 = arith.constant 0 : index
    %260 = vector.load %arg6[%c0_219, %c0_220] : memref<16x128xf32, #tpu.memory_space<vmem>>, vector<16x128xf32>
    %c0_221 = arith.constant 0 : index
    %c0_222 = arith.constant 0 : index
    %c0_223 = arith.constant 0 : index
    %261 = vector.load %arg0[%c0_221, %c0_222, %c0_223] : memref<3x16x16xf32, #tpu.memory_space<vmem>>, vector<1x16x16xf32>
    %262 = vector.shape_cast %261 : vector<1x16x16xf32> to vector<16x16xf32>
    %cst_224 = arith.constant dense<0.000000e+00> : vector<16x128xf32>
    %263 = tpu.matmul %262, %260, %cst_224 {dimension_numbers = #tpu.dot_dimension_numbers<[1], [0], [0], [1], [0, 0, 1, 1], [], []>} : vector<16x16xf32>, vector<16x128xf32>, vector<16x128xf32> -> vector<16x128xf32>
    %c0_225 = arith.constant 0 : index
    %c0_226 = arith.constant 0 : index
    %264 = vector.load %arg7[%c0_225, %c0_226] : memref<16x512xf32, #tpu.memory_space<vmem>>, vector<16x128xf32>
    tpu.vector_store %arg7[%c0_225, %c0_226], %263 {strides = array<i32>} : memref<16x512xf32, #tpu.memory_space<vmem>>, vector<16x128xf32>,
    %c1_227 = arith.constant 1 : index
    %c0_228 = arith.constant 0 : index
    %c0_229 = arith.constant 0 : index
    %265 = vector.load %arg0[%c1_227, %c0_228, %c0_229] : memref<3x16x16xf32, #tpu.memory_space<vmem>>, vector<1x16x16xf32>
    %266 = vector.shape_cast %265 : vector<1x16x16xf32> to vector<16x16xf32>
    %cst_230 = arith.constant dense<0.000000e+00> : vector<16x128xf32>
    %267 = tpu.matmul %266, %260, %cst_230 {dimension_numbers = #tpu.dot_dimension_numbers<[1], [0], [0], [1], [0, 0, 1, 1], [], []>} : vector<16x16xf32>, vector<16x128xf32>, vector<16x128xf32> -> vector<16x128xf32>
    %c0_231 = arith.constant 0 : index
    %c128_232 = arith.constant 128 : index
    %268 = vector.load %arg7[%c0_231, %c128_232] : memref<16x512xf32, #tpu.memory_space<vmem>>, vector<16x128xf32>
    tpu.vector_store %arg7[%c0_231, %c128_232], %267 {strides = array<i32>} : memref<16x512xf32, #tpu.memory_space<vmem>>, vector<16x128xf32>,
    %c2_233 = arith.constant 2 : index
    %c0_234 = arith.constant 0 : index
    %c0_235 = arith.constant 0 : index
    %269 = vector.load %arg0[%c2_233, %c0_234, %c0_235] : memref<3x16x16xf32, #tpu.memory_space<vmem>>, vector<1x16x16xf32>
    %270 = vector.shape_cast %269 : vector<1x16x16xf32> to vector<16x16xf32>
    %cst_236 = arith.constant dense<0.000000e+00> : vector<16x128xf32>
    %271 = tpu.matmul %270, %260, %cst_236 {dimension_numbers = #tpu.dot_dimension_numbers<[1], [0], [0], [1], [0, 0, 1, 1], [], []>} : vector<16x16xf32>, vector<16x128xf32>, vector<16x128xf32> -> vector<16x128xf32>
    %c0_237 = arith.constant 0 : index
    %c256_238 = arith.constant 256 : index
    %272 = vector.load %arg7[%c0_237, %c256_238] : memref<16x512xf32, #tpu.memory_space<vmem>>, vector<16x128xf32>
    tpu.vector_store %arg7[%c0_237, %c256_238], %271 {strides = array<i32>} : memref<16x512xf32, #tpu.memory_space<vmem>>, vector<16x128xf32>,
    %c0_239 = arith.constant 0 : index
    %c384_240 = arith.constant 384 : index
    %273 = vector.load %arg7[%c0_239, %c384_240] : memref<16x512xf32, #tpu.memory_space<vmem>>, vector<16x128xf32>
    tpu.vector_store %arg7[%c0_239, %c384_240], %260 {strides = array<i32>} : memref<16x512xf32, #tpu.memory_space<vmem>>, vector<16x128xf32>,
    %c0_241 = arith.constant 0 : index
    %c0_242 = arith.constant 0 : index
    %274 = vector.load %arg7[%c0_241, %c0_242] : memref<16x512xf32, #tpu.memory_space<vmem>>, vector<16x512xf32>
    %c0_243 = arith.constant 0 : index
    %c0_244 = arith.constant 0 : index
    %275 = vector.load %arg3[%c0_243, %c0_244] : memref<512x384xf32, #tpu.memory_space<vmem>>, vector<512x384xf32>
    %cst_245 = arith.constant dense<0.000000e+00> : vector<16x384xf32>
    %276 = tpu.matmul %274, %275, %cst_245 {dimension_numbers = #tpu.dot_dimension_numbers<[1], [0], [0], [1], [0, 0, 1, 1], [], []>} : vector<16x512xf32>, vector<512x384xf32>, vector<16x384xf32> -> vector<16x384xf32>
    %c0_246 = arith.constant 0 : index
    %c0_247 = arith.constant 0 : index
    %277 = vector.load %arg2[%c0_246, %c0_247] : memref<16x384xf32, #tpu.memory_space<vmem>>, vector<16x384xf32>
    %278 = arith.addf %276, %277 : vector<16x384xf32>
    %279 = vector.extract_strided_slice %278 {offsets = [0, 0], sizes = [16, 128], strides = [1, 1]} : vector<16x384xf32> to vector<16x128xf32>
    %280 = arith.negf %279 : vector<16x128xf32>
    %281 = math.exp %280 : vector<16x128xf32>
    %cst_248 = arith.constant 1.000000e+00 : f32
    %282 = vector.broadcast %cst_248 : f32 to vector<16x128xf32>
    %283 = arith.addf %282, %281 : vector<16x128xf32>
    %284 = arith.divf %282, %283 : vector<16x128xf32>
    %285 = vector.extract_strided_slice %278 {offsets = [0, 128], sizes = [16, 128], strides = [1, 1]} : vector<16x384xf32> to vector<16x128xf32>
    %286 = arith.negf %285 : vector<16x128xf32>
    %287 = math.exp %286 : vector<16x128xf32>
    %cst_249 = arith.constant 1.000000e+00 : f32
    %288 = vector.broadcast %cst_249 : f32 to vector<16x128xf32>
    %289 = arith.addf %288, %287 : vector<16x128xf32>
    %290 = arith.divf %288, %289 : vector<16x128xf32>
    %291 = vector.extract_strided_slice %278 {offsets = [0, 256], sizes = [16, 128], strides = [1, 1]} : vector<16x384xf32> to vector<16x128xf32>
    %292 = arith.mulf %290, %260 : vector<16x128xf32>
    %c0_250 = arith.constant 0 : index
    %c0_251 = arith.constant 0 : index
    %293 = vector.load %arg4[%c0_250, %c0_251] : memref<128x128xf32, #tpu.memory_space<vmem>>, vector<128x128xf32>
    %cst_252 = arith.constant dense<0.000000e+00> : vector<16x128xf32>
    %294 = tpu.matmul %292, %293, %cst_252 {dimension_numbers = #tpu.dot_dimension_numbers<[1], [0], [0], [1], [0, 0, 1, 1], [], []>} : vector<16x128xf32>, vector<128x128xf32>, vector<16x128xf32> -> vector<16x128xf32>
    %295 = arith.addf %291, %294 : vector<16x128xf32>
    %296 = math.tanh %295 : vector<16x128xf32>
    %cst_253 = arith.constant 1.000000e+00 : f32
    %297 = vector.broadcast %cst_253 : f32 to vector<16x128xf32>
    %298 = arith.subf %297, %284 : vector<16x128xf32>
    %299 = arith.mulf %298, %260 : vector<16x128xf32>
    %300 = arith.mulf %284, %296 : vector<16x128xf32>
    %301 = arith.addf %299, %300 : vector<16x128xf32>
    %c0_254 = arith.constant 0 : index
    %c0_255 = arith.constant 0 : index
    %302 = vector.load %arg6[%c0_254, %c0_255] : memref<16x128xf32, #tpu.memory_space<vmem>>, vector<16x128xf32>
    tpu.vector_store %arg6[%c0_254, %c0_255], %301 {strides = array<i32>} : memref<16x128xf32, #tpu.memory_space<vmem>>, vector<16x128xf32>,
    %c7_i32 = arith.constant 7 : i32
    %c0_256 = arith.constant 0 : index
    %c0_257 = arith.constant 0 : index
    %303 = vector.load %arg6[%c0_256, %c0_257] : memref<16x128xf32, #tpu.memory_space<vmem>>, vector<16x128xf32>
    %c0_258 = arith.constant 0 : index
    %c0_259 = arith.constant 0 : index
    %c0_260 = arith.constant 0 : index
    %304 = vector.load %arg0[%c0_258, %c0_259, %c0_260] : memref<3x16x16xf32, #tpu.memory_space<vmem>>, vector<1x16x16xf32>
    %305 = vector.shape_cast %304 : vector<1x16x16xf32> to vector<16x16xf32>
    %cst_261 = arith.constant dense<0.000000e+00> : vector<16x128xf32>
    %306 = tpu.matmul %305, %303, %cst_261 {dimension_numbers = #tpu.dot_dimension_numbers<[1], [0], [0], [1], [0, 0, 1, 1], [], []>} : vector<16x16xf32>, vector<16x128xf32>, vector<16x128xf32> -> vector<16x128xf32>
    %c0_262 = arith.constant 0 : index
    %c0_263 = arith.constant 0 : index
    %307 = vector.load %arg7[%c0_262, %c0_263] : memref<16x512xf32, #tpu.memory_space<vmem>>, vector<16x128xf32>
    tpu.vector_store %arg7[%c0_262, %c0_263], %306 {strides = array<i32>} : memref<16x512xf32, #tpu.memory_space<vmem>>, vector<16x128xf32>,
    %c1_264 = arith.constant 1 : index
    %c0_265 = arith.constant 0 : index
    %c0_266 = arith.constant 0 : index
    %308 = vector.load %arg0[%c1_264, %c0_265, %c0_266] : memref<3x16x16xf32, #tpu.memory_space<vmem>>, vector<1x16x16xf32>
    %309 = vector.shape_cast %308 : vector<1x16x16xf32> to vector<16x16xf32>
    %cst_267 = arith.constant dense<0.000000e+00> : vector<16x128xf32>
    %310 = tpu.matmul %309, %303, %cst_267 {dimension_numbers = #tpu.dot_dimension_numbers<[1], [0], [0], [1], [0, 0, 1, 1], [], []>} : vector<16x16xf32>, vector<16x128xf32>, vector<16x128xf32> -> vector<16x128xf32>
    %c0_268 = arith.constant 0 : index
    %c128_269 = arith.constant 128 : index
    %311 = vector.load %arg7[%c0_268, %c128_269] : memref<16x512xf32, #tpu.memory_space<vmem>>, vector<16x128xf32>
    tpu.vector_store %arg7[%c0_268, %c128_269], %310 {strides = array<i32>} : memref<16x512xf32, #tpu.memory_space<vmem>>, vector<16x128xf32>,
    %c2_270 = arith.constant 2 : index
    %c0_271 = arith.constant 0 : index
    %c0_272 = arith.constant 0 : index
    %312 = vector.load %arg0[%c2_270, %c0_271, %c0_272] : memref<3x16x16xf32, #tpu.memory_space<vmem>>, vector<1x16x16xf32>
    %313 = vector.shape_cast %312 : vector<1x16x16xf32> to vector<16x16xf32>
    %cst_273 = arith.constant dense<0.000000e+00> : vector<16x128xf32>
    %314 = tpu.matmul %313, %303, %cst_273 {dimension_numbers = #tpu.dot_dimension_numbers<[1], [0], [0], [1], [0, 0, 1, 1], [], []>} : vector<16x16xf32>, vector<16x128xf32>, vector<16x128xf32> -> vector<16x128xf32>
    %c0_274 = arith.constant 0 : index
    %c256_275 = arith.constant 256 : index
    %315 = vector.load %arg7[%c0_274, %c256_275] : memref<16x512xf32, #tpu.memory_space<vmem>>, vector<16x128xf32>
    tpu.vector_store %arg7[%c0_274, %c256_275], %314 {strides = array<i32>} : memref<16x512xf32, #tpu.memory_space<vmem>>, vector<16x128xf32>,
    %c0_276 = arith.constant 0 : index
    %c384_277 = arith.constant 384 : index
    %316 = vector.load %arg7[%c0_276, %c384_277] : memref<16x512xf32, #tpu.memory_space<vmem>>, vector<16x128xf32>
    tpu.vector_store %arg7[%c0_276, %c384_277], %303 {strides = array<i32>} : memref<16x512xf32, #tpu.memory_space<vmem>>, vector<16x128xf32>,
    %c0_278 = arith.constant 0 : index
    %c0_279 = arith.constant 0 : index
    %317 = vector.load %arg7[%c0_278, %c0_279] : memref<16x512xf32, #tpu.memory_space<vmem>>, vector<16x512xf32>
    %c0_280 = arith.constant 0 : index
    %c0_281 = arith.constant 0 : index
    %318 = vector.load %arg3[%c0_280, %c0_281] : memref<512x384xf32, #tpu.memory_space<vmem>>, vector<512x384xf32>
    %cst_282 = arith.constant dense<0.000000e+00> : vector<16x384xf32>
    %319 = tpu.matmul %317, %318, %cst_282 {dimension_numbers = #tpu.dot_dimension_numbers<[1], [0], [0], [1], [0, 0, 1, 1], [], []>} : vector<16x512xf32>, vector<512x384xf32>, vector<16x384xf32> -> vector<16x384xf32>
    %c0_283 = arith.constant 0 : index
    %c0_284 = arith.constant 0 : index
    %320 = vector.load %arg2[%c0_283, %c0_284] : memref<16x384xf32, #tpu.memory_space<vmem>>, vector<16x384xf32>
    %321 = arith.addf %319, %320 : vector<16x384xf32>
    %322 = vector.extract_strided_slice %321 {offsets = [0, 0], sizes = [16, 128], strides = [1, 1]} : vector<16x384xf32> to vector<16x128xf32>
    %323 = arith.negf %322 : vector<16x128xf32>
    %324 = math.exp %323 : vector<16x128xf32>
    %cst_285 = arith.constant 1.000000e+00 : f32
    %325 = vector.broadcast %cst_285 : f32 to vector<16x128xf32>
    %326 = arith.addf %325, %324 : vector<16x128xf32>
    %327 = arith.divf %325, %326 : vector<16x128xf32>
    %328 = vector.extract_strided_slice %321 {offsets = [0, 128], sizes = [16, 128], strides = [1, 1]} : vector<16x384xf32> to vector<16x128xf32>
    %329 = arith.negf %328 : vector<16x128xf32>
    %330 = math.exp %329 : vector<16x128xf32>
    %cst_286 = arith.constant 1.000000e+00 : f32
    %331 = vector.broadcast %cst_286 : f32 to vector<16x128xf32>
    %332 = arith.addf %331, %330 : vector<16x128xf32>
    %333 = arith.divf %331, %332 : vector<16x128xf32>
    %334 = vector.extract_strided_slice %321 {offsets = [0, 256], sizes = [16, 128], strides = [1, 1]} : vector<16x384xf32> to vector<16x128xf32>
    %335 = arith.mulf %333, %303 : vector<16x128xf32>
    %c0_287 = arith.constant 0 : index
    %c0_288 = arith.constant 0 : index
    %336 = vector.load %arg4[%c0_287, %c0_288] : memref<128x128xf32, #tpu.memory_space<vmem>>, vector<128x128xf32>
    %cst_289 = arith.constant dense<0.000000e+00> : vector<16x128xf32>
    %337 = tpu.matmul %335, %336, %cst_289 {dimension_numbers = #tpu.dot_dimension_numbers<[1], [0], [0], [1], [0, 0, 1, 1], [], []>} : vector<16x128xf32>, vector<128x128xf32>, vector<16x128xf32> -> vector<16x128xf32>
    %338 = arith.addf %334, %337 : vector<16x128xf32>
    %339 = math.tanh %338 : vector<16x128xf32>
    %cst_290 = arith.constant 1.000000e+00 : f32
    %340 = vector.broadcast %cst_290 : f32 to vector<16x128xf32>
    %341 = arith.subf %340, %327 : vector<16x128xf32>
    %342 = arith.mulf %341, %303 : vector<16x128xf32>
    %343 = arith.mulf %327, %339 : vector<16x128xf32>
    %344 = arith.addf %342, %343 : vector<16x128xf32>
    %c0_291 = arith.constant 0 : index
    %c0_292 = arith.constant 0 : index
    %345 = vector.load %arg6[%c0_291, %c0_292] : memref<16x128xf32, #tpu.memory_space<vmem>>, vector<16x128xf32>
    tpu.vector_store %arg6[%c0_291, %c0_292], %344 {strides = array<i32>} : memref<16x128xf32, #tpu.memory_space<vmem>>, vector<16x128xf32>,
    %c8_i32 = arith.constant 8 : i32
    %c0_293 = arith.constant 0 : index
    %c0_294 = arith.constant 0 : index
    %346 = vector.load %arg6[%c0_293, %c0_294] : memref<16x128xf32, #tpu.memory_space<vmem>>, vector<16x128xf32>
    %c0_295 = arith.constant 0 : index
    %c0_296 = arith.constant 0 : index
    %c0_297 = arith.constant 0 : index
    %347 = vector.load %arg0[%c0_295, %c0_296, %c0_297] : memref<3x16x16xf32, #tpu.memory_space<vmem>>, vector<1x16x16xf32>
    %348 = vector.shape_cast %347 : vector<1x16x16xf32> to vector<16x16xf32>
    %cst_298 = arith.constant dense<0.000000e+00> : vector<16x128xf32>
    %349 = tpu.matmul %348, %346, %cst_298 {dimension_numbers = #tpu.dot_dimension_numbers<[1], [0], [0], [1], [0, 0, 1, 1], [], []>} : vector<16x16xf32>, vector<16x128xf32>, vector<16x128xf32> -> vector<16x128xf32>
    %c0_299 = arith.constant 0 : index
    %c0_300 = arith.constant 0 : index
    %350 = vector.load %arg7[%c0_299, %c0_300] : memref<16x512xf32, #tpu.memory_space<vmem>>, vector<16x128xf32>
    tpu.vector_store %arg7[%c0_299, %c0_300], %349 {strides = array<i32>} : memref<16x512xf32, #tpu.memory_space<vmem>>, vector<16x128xf32>,
    %c1_301 = arith.constant 1 : index
    %c0_302 = arith.constant 0 : index
    %c0_303 = arith.constant 0 : index
    %351 = vector.load %arg0[%c1_301, %c0_302, %c0_303] : memref<3x16x16xf32, #tpu.memory_space<vmem>>, vector<1x16x16xf32>
    %352 = vector.shape_cast %351 : vector<1x16x16xf32> to vector<16x16xf32>
    %cst_304 = arith.constant dense<0.000000e+00> : vector<16x128xf32>
    %353 = tpu.matmul %352, %346, %cst_304 {dimension_numbers = #tpu.dot_dimension_numbers<[1], [0], [0], [1], [0, 0, 1, 1], [], []>} : vector<16x16xf32>, vector<16x128xf32>, vector<16x128xf32> -> vector<16x128xf32>
    %c0_305 = arith.constant 0 : index
    %c128_306 = arith.constant 128 : index
    %354 = vector.load %arg7[%c0_305, %c128_306] : memref<16x512xf32, #tpu.memory_space<vmem>>, vector<16x128xf32>
    tpu.vector_store %arg7[%c0_305, %c128_306], %353 {strides = array<i32>} : memref<16x512xf32, #tpu.memory_space<vmem>>, vector<16x128xf32>,
    %c2_307 = arith.constant 2 : index
    %c0_308 = arith.constant 0 : index
    %c0_309 = arith.constant 0 : index
    %355 = vector.load %arg0[%c2_307, %c0_308, %c0_309] : memref<3x16x16xf32, #tpu.memory_space<vmem>>, vector<1x16x16xf32>
    %356 = vector.shape_cast %355 : vector<1x16x16xf32> to vector<16x16xf32>
    %cst_310 = arith.constant dense<0.000000e+00> : vector<16x128xf32>
    %357 = tpu.matmul %356, %346, %cst_310 {dimension_numbers = #tpu.dot_dimension_numbers<[1], [0], [0], [1], [0, 0, 1, 1], [], []>} : vector<16x16xf32>, vector<16x128xf32>, vector<16x128xf32> -> vector<16x128xf32>
    %c0_311 = arith.constant 0 : index
    %c256_312 = arith.constant 256 : index
    %358 = vector.load %arg7[%c0_311, %c256_312] : memref<16x512xf32, #tpu.memory_space<vmem>>, vector<16x128xf32>
    tpu.vector_store %arg7[%c0_311, %c256_312], %357 {strides = array<i32>} : memref<16x512xf32, #tpu.memory_space<vmem>>, vector<16x128xf32>,
    %c0_313 = arith.constant 0 : index
    %c384_314 = arith.constant 384 : index
    %359 = vector.load %arg7[%c0_313, %c384_314] : memref<16x512xf32, #tpu.memory_space<vmem>>, vector<16x128xf32>
    tpu.vector_store %arg7[%c0_313, %c384_314], %346 {strides = array<i32>} : memref<16x512xf32, #tpu.memory_space<vmem>>, vector<16x128xf32>,
    %c0_315 = arith.constant 0 : index
    %c0_316 = arith.constant 0 : index
    %360 = vector.load %arg7[%c0_315, %c0_316] : memref<16x512xf32, #tpu.memory_space<vmem>>, vector<16x512xf32>
    %c0_317 = arith.constant 0 : index
    %c0_318 = arith.constant 0 : index
    %361 = vector.load %arg3[%c0_317, %c0_318] : memref<512x384xf32, #tpu.memory_space<vmem>>, vector<512x384xf32>
    %cst_319 = arith.constant dense<0.000000e+00> : vector<16x384xf32>
    %362 = tpu.matmul %360, %361, %cst_319 {dimension_numbers = #tpu.dot_dimension_numbers<[1], [0], [0], [1], [0, 0, 1, 1], [], []>} : vector<16x512xf32>, vector<512x384xf32>, vector<16x384xf32> -> vector<16x384xf32>
    %c0_320 = arith.constant 0 : index
    %c0_321 = arith.constant 0 : index
    %363 = vector.load %arg2[%c0_320, %c0_321] : memref<16x384xf32, #tpu.memory_space<vmem>>, vector<16x384xf32>
    %364 = arith.addf %362, %363 : vector<16x384xf32>
    %365 = vector.extract_strided_slice %364 {offsets = [0, 0], sizes = [16, 128], strides = [1, 1]} : vector<16x384xf32> to vector<16x128xf32>
    %366 = arith.negf %365 : vector<16x128xf32>
    %367 = math.exp %366 : vector<16x128xf32>
    %cst_322 = arith.constant 1.000000e+00 : f32
    %368 = vector.broadcast %cst_322 : f32 to vector<16x128xf32>
    %369 = arith.addf %368, %367 : vector<16x128xf32>
    %370 = arith.divf %368, %369 : vector<16x128xf32>
    %371 = vector.extract_strided_slice %364 {offsets = [0, 128], sizes = [16, 128], strides = [1, 1]} : vector<16x384xf32> to vector<16x128xf32>
    %372 = arith.negf %371 : vector<16x128xf32>
    %373 = math.exp %372 : vector<16x128xf32>
    %cst_323 = arith.constant 1.000000e+00 : f32
    %374 = vector.broadcast %cst_323 : f32 to vector<16x128xf32>
    %375 = arith.addf %374, %373 : vector<16x128xf32>
    %376 = arith.divf %374, %375 : vector<16x128xf32>
    %377 = vector.extract_strided_slice %364 {offsets = [0, 256], sizes = [16, 128], strides = [1, 1]} : vector<16x384xf32> to vector<16x128xf32>
    %378 = arith.mulf %376, %346 : vector<16x128xf32>
    %c0_324 = arith.constant 0 : index
    %c0_325 = arith.constant 0 : index
    %379 = vector.load %arg4[%c0_324, %c0_325] : memref<128x128xf32, #tpu.memory_space<vmem>>, vector<128x128xf32>
    %cst_326 = arith.constant dense<0.000000e+00> : vector<16x128xf32>
    %380 = tpu.matmul %378, %379, %cst_326 {dimension_numbers = #tpu.dot_dimension_numbers<[1], [0], [0], [1], [0, 0, 1, 1], [], []>} : vector<16x128xf32>, vector<128x128xf32>, vector<16x128xf32> -> vector<16x128xf32>
    %381 = arith.addf %377, %380 : vector<16x128xf32>
    %382 = math.tanh %381 : vector<16x128xf32>
    %cst_327 = arith.constant 1.000000e+00 : f32
    %383 = vector.broadcast %cst_327 : f32 to vector<16x128xf32>
    %384 = arith.subf %383, %370 : vector<16x128xf32>
    %385 = arith.mulf %384, %346 : vector<16x128xf32>
    %386 = arith.mulf %370, %382 : vector<16x128xf32>
    %387 = arith.addf %385, %386 : vector<16x128xf32>
    %c0_328 = arith.constant 0 : index
    %c0_329 = arith.constant 0 : index
    %388 = vector.load %arg6[%c0_328, %c0_329] : memref<16x128xf32, #tpu.memory_space<vmem>>, vector<16x128xf32>
    tpu.vector_store %arg6[%c0_328, %c0_329], %387 {strides = array<i32>} : memref<16x128xf32, #tpu.memory_space<vmem>>, vector<16x128xf32>,
    %c9_i32 = arith.constant 9 : i32
    %c0_330 = arith.constant 0 : index
    %c0_331 = arith.constant 0 : index
    %389 = vector.load %arg6[%c0_330, %c0_331] : memref<16x128xf32, #tpu.memory_space<vmem>>, vector<16x128xf32>
    %c0_332 = arith.constant 0 : index
    %c0_333 = arith.constant 0 : index
    %c0_334 = arith.constant 0 : index
    %390 = vector.load %arg0[%c0_332, %c0_333, %c0_334] : memref<3x16x16xf32, #tpu.memory_space<vmem>>, vector<1x16x16xf32>
    %391 = vector.shape_cast %390 : vector<1x16x16xf32> to vector<16x16xf32>
    %cst_335 = arith.constant dense<0.000000e+00> : vector<16x128xf32>
    %392 = tpu.matmul %391, %389, %cst_335 {dimension_numbers = #tpu.dot_dimension_numbers<[1], [0], [0], [1], [0, 0, 1, 1], [], []>} : vector<16x16xf32>, vector<16x128xf32>, vector<16x128xf32> -> vector<16x128xf32>
    %c0_336 = arith.constant 0 : index
    %c0_337 = arith.constant 0 : index
    %393 = vector.load %arg7[%c0_336, %c0_337] : memref<16x512xf32, #tpu.memory_space<vmem>>, vector<16x128xf32>
    tpu.vector_store %arg7[%c0_336, %c0_337], %392 {strides = array<i32>} : memref<16x512xf32, #tpu.memory_space<vmem>>, vector<16x128xf32>,
    %c1_338 = arith.constant 1 : index
    %c0_339 = arith.constant 0 : index
    %c0_340 = arith.constant 0 : index
    %394 = vector.load %arg0[%c1_338, %c0_339, %c0_340] : memref<3x16x16xf32, #tpu.memory_space<vmem>>, vector<1x16x16xf32>
    %395 = vector.shape_cast %394 : vector<1x16x16xf32> to vector<16x16xf32>
    %cst_341 = arith.constant dense<0.000000e+00> : vector<16x128xf32>
    %396 = tpu.matmul %395, %389, %cst_341 {dimension_numbers = #tpu.dot_dimension_numbers<[1], [0], [0], [1], [0, 0, 1, 1], [], []>} : vector<16x16xf32>, vector<16x128xf32>, vector<16x128xf32> -> vector<16x128xf32>
    %c0_342 = arith.constant 0 : index
    %c128_343 = arith.constant 128 : index
    %397 = vector.load %arg7[%c0_342, %c128_343] : memref<16x512xf32, #tpu.memory_space<vmem>>, vector<16x128xf32>
    tpu.vector_store %arg7[%c0_342, %c128_343], %396 {strides = array<i32>} : memref<16x512xf32, #tpu.memory_space<vmem>>, vector<16x128xf32>,
    %c2_344 = arith.constant 2 : index
    %c0_345 = arith.constant 0 : index
    %c0_346 = arith.constant 0 : index
    %398 = vector.load %arg0[%c2_344, %c0_345, %c0_346] : memref<3x16x16xf32, #tpu.memory_space<vmem>>, vector<1x16x16xf32>
    %399 = vector.shape_cast %398 : vector<1x16x16xf32> to vector<16x16xf32>
    %cst_347 = arith.constant dense<0.000000e+00> : vector<16x128xf32>
    %400 = tpu.matmul %399, %389, %cst_347 {dimension_numbers = #tpu.dot_dimension_numbers<[1], [0], [0], [1], [0, 0, 1, 1], [], []>} : vector<16x16xf32>, vector<16x128xf32>, vector<16x128xf32> -> vector<16x128xf32>
    %c0_348 = arith.constant 0 : index
    %c256_349 = arith.constant 256 : index
    %401 = vector.load %arg7[%c0_348, %c256_349] : memref<16x512xf32, #tpu.memory_space<vmem>>, vector<16x128xf32>
    tpu.vector_store %arg7[%c0_348, %c256_349], %400 {strides = array<i32>} : memref<16x512xf32, #tpu.memory_space<vmem>>, vector<16x128xf32>,
    %c0_350 = arith.constant 0 : index
    %c384_351 = arith.constant 384 : index
    %402 = vector.load %arg7[%c0_350, %c384_351] : memref<16x512xf32, #tpu.memory_space<vmem>>, vector<16x128xf32>
    tpu.vector_store %arg7[%c0_350, %c384_351], %389 {strides = array<i32>} : memref<16x512xf32, #tpu.memory_space<vmem>>, vector<16x128xf32>,
    %c0_352 = arith.constant 0 : index
    %c0_353 = arith.constant 0 : index
    %403 = vector.load %arg7[%c0_352, %c0_353] : memref<16x512xf32, #tpu.memory_space<vmem>>, vector<16x512xf32>
    %c0_354 = arith.constant 0 : index
    %c0_355 = arith.constant 0 : index
    %404 = vector.load %arg3[%c0_354, %c0_355] : memref<512x384xf32, #tpu.memory_space<vmem>>, vector<512x384xf32>
    %cst_356 = arith.constant dense<0.000000e+00> : vector<16x384xf32>
    %405 = tpu.matmul %403, %404, %cst_356 {dimension_numbers = #tpu.dot_dimension_numbers<[1], [0], [0], [1], [0, 0, 1, 1], [], []>} : vector<16x512xf32>, vector<512x384xf32>, vector<16x384xf32> -> vector<16x384xf32>
    %c0_357 = arith.constant 0 : index
    %c0_358 = arith.constant 0 : index
    %406 = vector.load %arg2[%c0_357, %c0_358] : memref<16x384xf32, #tpu.memory_space<vmem>>, vector<16x384xf32>
    %407 = arith.addf %405, %406 : vector<16x384xf32>
    %408 = vector.extract_strided_slice %407 {offsets = [0, 0], sizes = [16, 128], strides = [1, 1]} : vector<16x384xf32> to vector<16x128xf32>
    %409 = arith.negf %408 : vector<16x128xf32>
    %410 = math.exp %409 : vector<16x128xf32>
    %cst_359 = arith.constant 1.000000e+00 : f32
    %411 = vector.broadcast %cst_359 : f32 to vector<16x128xf32>
    %412 = arith.addf %411, %410 : vector<16x128xf32>
    %413 = arith.divf %411, %412 : vector<16x128xf32>
    %414 = vector.extract_strided_slice %407 {offsets = [0, 128], sizes = [16, 128], strides = [1, 1]} : vector<16x384xf32> to vector<16x128xf32>
    %415 = arith.negf %414 : vector<16x128xf32>
    %416 = math.exp %415 : vector<16x128xf32>
    %cst_360 = arith.constant 1.000000e+00 : f32
    %417 = vector.broadcast %cst_360 : f32 to vector<16x128xf32>
    %418 = arith.addf %417, %416 : vector<16x128xf32>
    %419 = arith.divf %417, %418 : vector<16x128xf32>
    %420 = vector.extract_strided_slice %407 {offsets = [0, 256], sizes = [16, 128], strides = [1, 1]} : vector<16x384xf32> to vector<16x128xf32>
    %421 = arith.mulf %419, %389 : vector<16x128xf32>
    %c0_361 = arith.constant 0 : index
    %c0_362 = arith.constant 0 : index
    %422 = vector.load %arg4[%c0_361, %c0_362] : memref<128x128xf32, #tpu.memory_space<vmem>>, vector<128x128xf32>
    %cst_363 = arith.constant dense<0.000000e+00> : vector<16x128xf32>
    %423 = tpu.matmul %421, %422, %cst_363 {dimension_numbers = #tpu.dot_dimension_numbers<[1], [0], [0], [1], [0, 0, 1, 1], [], []>} : vector<16x128xf32>, vector<128x128xf32>, vector<16x128xf32> -> vector<16x128xf32>
    %424 = arith.addf %420, %423 : vector<16x128xf32>
    %425 = math.tanh %424 : vector<16x128xf32>
    %cst_364 = arith.constant 1.000000e+00 : f32
    %426 = vector.broadcast %cst_364 : f32 to vector<16x128xf32>
    %427 = arith.subf %426, %413 : vector<16x128xf32>
    %428 = arith.mulf %427, %389 : vector<16x128xf32>
    %429 = arith.mulf %413, %425 : vector<16x128xf32>
    %430 = arith.addf %428, %429 : vector<16x128xf32>
    %c0_365 = arith.constant 0 : index
    %c0_366 = arith.constant 0 : index
    %431 = vector.load %arg6[%c0_365, %c0_366] : memref<16x128xf32, #tpu.memory_space<vmem>>, vector<16x128xf32>
    tpu.vector_store %arg6[%c0_365, %c0_366], %430 {strides = array<i32>} : memref<16x128xf32, #tpu.memory_space<vmem>>, vector<16x128xf32>,
    %c0_367 = arith.constant 0 : index
    %c0_368 = arith.constant 0 : index
    %432 = vector.load %arg6[%c0_367, %c0_368] : memref<16x128xf32, #tpu.memory_space<vmem>>, vector<16x128xf32>
    %c0_369 = arith.constant 0 : index
    %c0_370 = arith.constant 0 : index
    %433 = vector.load %arg5[%c0_369, %c0_370] : memref<16x128xf32, #tpu.memory_space<vmem>>, vector<16x128xf32>
    tpu.vector_store %arg5[%c0_369, %c0_370], %432 {strides = array<i32>} : memref<16x128xf32, #tpu.memory_space<vmem>>, vector<16x128xf32>,
    return
  }
}

</mosaic_0001>

<llo_original>
// kernel: tpu_custom_call.1
$region0: #{tpu_custom_call.1}
  #allocation0 [shape = 'u32[]', space=smem, size = 0x4, offset = 0x4, fixed_abs, tag = 'smem constant byte address 0x4 - core index']
  #allocation1 [shape = 'u32[144,128]{1,0:T(1,128)}', space=vmem, size = 0x12000, scoped, tag = 'internal scratch']
  #allocation2 [shape = 'f32[16,128]{1,0:T(8,128)}', space=vmem, size = 0x2000, scoped, tag = 'scratch operand']
  #allocation3 [shape = 'f32[16,512]{1,0:T(8,128)}', space=vmem, size = 0x8000, scoped, tag = 'scratch operand']
  %s0 = inlined_call_operand.hbm [shape: f32[3,16,16], index: 0, kind: input, shape index: {}]
  %s1 = inlined_call_operand.hbm [shape: f32[16,128], index: 1, kind: input, shape index: {}]
  %s2 = inlined_call_operand.hbm [shape: f32[16,384], index: 2, kind: input, shape index: {}]
  %s3 = inlined_call_operand.hbm [shape: f32[512,384], index: 3, kind: input, shape index: {}]
  %s4 = inlined_call_operand.hbm [shape: f32[128,128], index: 4, kind: input, shape index: {}]
  %s5 = inlined_call_operand.hbm [shape: f32[16,128], index: 5, kind: output, shape index: {}]
  %s6 = sld [smem:[#allocation0]]
  $region50: #{tpu_custom_call.1} parent=0
    _
  %s8 = ssub.s32 1, %s6
  %s9 = scalar_select 0, %s8, %s6
  $region1: #{tpu_custom_call.1} parent=0
    #allocation4 [shape = 'u8[24576]{0}', space=vmem, size = 0x6000, scoped, tag = 'input window, operand 0, single buffered']
    #allocation5 [shape = 's32[1]{0}', space=sflag, size = 0x4, scoped, tag = 'scoped memory for tpu_custom_call.1']
    #allocation6 [shape = 's32[1]{0}', space=sflag, size = 0x4, scoped, tag = 'scoped memory for tpu_custom_call.1']
    #allocation7 [shape = 'u8[8192]{0}', space=vmem, size = 0x2000, scoped, tag = 'input window, operand 1, single buffered']
    #allocation8 [shape = 's32[1]{0}', space=sflag, size = 0x4, scoped, tag = 'scoped memory for tpu_custom_call.1']
    #allocation9 [shape = 'u8[24576]{0}', space=vmem, size = 0x6000, scoped, tag = 'input window, operand 2, single buffered']
    #allocation10 [shape = 'u8[786432]{0}', space=vmem, size = 0xc0000, scoped, tag = 'input window, operand 3, single buffered']
    #allocation11 [shape = 's32[1]{0}', space=sflag, size = 0x4, scoped, tag = 'scoped memory for tpu_custom_call.1']
    #allocation12 [shape = 'u8[65536]{0}', space=vmem, size = 0x10000, scoped, tag = 'input window, operand 4, single buffered']
    #allocation13 [shape = 'u8[8192]{0}', space=vmem, size = 0x2000, scoped, tag = 'output window, operand 0, single buffered']
    %10 = vsyncpa [#allocation5], 0
    %11 = vsyncpa [#allocation8], 0
    %12 = vsyncpa [#allocation11], 0
    %13 = vsyncpa [#allocation6], 0
    // Predicated region
    $region2: #{tpu_custom_call.1} parent=1 // pred_check
      _
    $region3: #{tpu_custom_call.1} parent=1 // pred_check_branch
      %15 = sbr.rel (0) target = $region5
    $region4: #{tpu_custom_call.1} parent=1 // pred_region
      %s17 = ssub.s32 768, 768
      %18 = vsyncadd [#allocation5], %s17
      %s19 = sshll.u32 [#allocation4], 4
      %s20 = int_to_ptr.vmem [resolvable:$true] %s19
      %25 = dma.hbm_to_vmem [thread:$0]  %s0, 768, %s20, [#allocation5], 128, 128, 8
    $region5: #{tpu_custom_call.1} parent=1 // pred_fallthru
      _
    // Predicated region
    $region6: #{tpu_custom_call.1} parent=1 // pred_check
      _
    $region7: #{tpu_custom_call.1} parent=1 // pred_check_branch
      %27 = sbr.rel (0) target = $region9
    $region8: #{tpu_custom_call.1} parent=1 // pred_region
      %s29 = ssub.s32 256, 256
      %30 = vsyncadd [#allocation8], %s29
      %s31 = sshll.u32 [#allocation7], 4
      %s32 = int_to_ptr.vmem [resolvable:$true] %s31
      %37 = dma.hbm_to_vmem [thread:$0]  %s1, 256, %s32, [#allocation8], 128, 128, 8
    $region9: #{tpu_custom_call.1} parent=1 // pred_fallthru
      _
    // Predicated region
    $region10: #{tpu_custom_call.1} parent=1 // pred_check
      _
    $region11: #{tpu_custom_call.1} parent=1 // pred_check_branch
      %39 = sbr.rel (0) target = $region13
    $region12: #{tpu_custom_call.1} parent=1 // pred_region
      %s41 = ssub.s32 768, 768
      %42 = vsyncadd [#allocation8], %s41
      %s43 = sshll.u32 [#allocation9], 4
      %s44 = int_to_ptr.vmem [resolvable:$true] %s43
      %49 = dma.hbm_to_vmem [thread:$0]  %s2, 768, %s44, [#allocation8], 384, 384, 24
    $region13: #{tpu_custom_call.1} parent=1 // pred_fallthru
      _
    // Predicated region
    $region14: #{tpu_custom_call.1} parent=1 // pred_check
      _
    $region15: #{tpu_custom_call.1} parent=1 // pred_check_branch
      %51 = sbr.rel (0) target = $region17
    $region16: #{tpu_custom_call.1} parent=1 // pred_region
      %s53 = ssub.s32 24576, 24576
      %54 = vsyncadd [#allocation11], %s53
      %s55 = sshll.u32 [#allocation10], 4
      %s56 = int_to_ptr.vmem [resolvable:$true] %s55
      %61 = dma.hbm_to_vmem [thread:$0]  %s3, 24576, %s56, [#allocation11], 384, 384, 24
    $region17: #{tpu_custom_call.1} parent=1 // pred_fallthru
      _
    // Predicated region
    $region18: #{tpu_custom_call.1} parent=1 // pred_check
      _
    $region19: #{tpu_custom_call.1} parent=1 // pred_check_branch
      %63 = sbr.rel (0) target = $region21
    $region20: #{tpu_custom_call.1} parent=1 // pred_region
      %s65 = ssub.s32 2048, 2048
      %66 = vsyncadd [#allocation11], %s65
      %s67 = sshll.u32 [#allocation12], 4
      %s68 = int_to_ptr.vmem [resolvable:$true] %s67
      %73 = dma.hbm_to_vmem [thread:$0]  %s4, 2048, %s68, [#allocation11], 128, 128, 8
    $region21: #{tpu_custom_call.1} parent=1 // pred_fallthru
      _
    // Predicated region
    $region22: #{tpu_custom_call.1} parent=1 // pred_check
      _
    $region23: #{tpu_custom_call.1} parent=1 // pred_check_branch
      %75 = sbr.rel (0) target = $region25
    $region24: #{tpu_custom_call.1} parent=1 // pred_region
      %76 = dma.done [#allocation5], 768
    $region25: #{tpu_custom_call.1} parent=1 // pred_fallthru
      _
    // Predicated region
    $region26: #{tpu_custom_call.1} parent=1 // pred_check
      _
    $region27: #{tpu_custom_call.1} parent=1 // pred_check_branch
      %78 = sbr.rel (0) target = $region29
    $region28: #{tpu_custom_call.1} parent=1 // pred_region
      %79 = dma.done [#allocation8], 256
    $region29: #{tpu_custom_call.1} parent=1 // pred_fallthru
      _
    // Predicated region
    $region30: #{tpu_custom_call.1} parent=1 // pred_check
      _
    $region31: #{tpu_custom_call.1} parent=1 // pred_check_branch
      %81 = sbr.rel (0) target = $region33
    $region32: #{tpu_custom_call.1} parent=1 // pred_region
      %82 = dma.done [#allocation8], 768
    $region33: #{tpu_custom_call.1} parent=1 // pred_fallthru
      _
    // Predicated region
    $region34: #{tpu_custom_call.1} parent=1 // pred_check
      _
    $region35: #{tpu_custom_call.1} parent=1 // pred_check_branch
      %84 = sbr.rel (0) target = $region37
    $region36: #{tpu_custom_call.1} parent=1 // pred_region
      %85 = dma.done [#allocation11], 24576
    $region37: #{tpu_custom_call.1} parent=1 // pred_fallthru
      _
    // Predicated region
    $region38: #{tpu_custom_call.1} parent=1 // pred_check
      _
    $region39: #{tpu_custom_call.1} parent=1 // pred_check_branch
      %87 = sbr.rel (0) target = $region41
    $region40: #{tpu_custom_call.1} parent=1 // pred_region
      %88 = dma.done [#allocation11], 2048
    $region41: #{tpu_custom_call.1} parent=1 // pred_fallthru
      _
    %v89 = vld [vmem:[#allocation7] sm:$0xff]
    %v90 = vld [vmem:[#allocation7 + $0x8] sm:$0xff]
    %91 = vst [vmem:[#allocation2] sm:$0xff] %v89
    %92 = vst [vmem:[#allocation2 + $0x8] sm:$0xff] %v90
    %v93 = vld [vmem:[#allocation2] sm:$0xff]
    %v94 = vld [vmem:[#allocation2 + $0x8] sm:$0xff]
    %v95 = vld [vmem:[#allocation4] sm:$0xff]
    %v96 = vld [vmem:[#allocation4 + $0x8] sm:$0xff]
    %vm97 = vcmask 130048
    %v99 = vsel %vm97, %v95, 0
    %v102 = vsel %vm97, %v96, 0
    %104 = vmatprep.subr.mxu0 0.0
    %105 = vmatpush1.msra.mxu0 %v93
    %106 = vmatprep.subr.mxu0 0.0
    %107 = vmatpush1.msra.mxu0 %v94
    %108 = vmatprep.subr.mxu0 0.0
    %109 = vmatpush1.msra.mxu0 0.0
    %110 = vmatprep.subr.mxu0 0.0
    %111 = vmatpush1.msra.mxu0 0.0
    %112 = vmatprep.subr.mxu0 0.0
    %113 = vmatpush1.msra.mxu0 0.0
    %114 = vmatprep.subr.mxu0 0.0
    %115 = vmatpush1.msra.mxu0 0.0
    %116 = vmatprep.subr.mxu0 0.0
    %117 = vmatpush1.msra.mxu0 0.0
    %118 = vmatprep.subr.mxu0 0.0
    %119 = vmatpush1.msra.mxu0 0.0
    %120 = vmatprep.subr.mxu0 0.0
    %121 = vmatpush1.msra.mxu0 0.0
    %122 = vmatprep.subr.mxu0 0.0
    %123 = vmatpush1.msra.mxu0 0.0
    %124 = vmatprep.subr.mxu0 0.0
    %125 = vmatpush1.msra.mxu0 0.0
    %126 = vmatprep.subr.mxu0 0.0
    %127 = vmatpush1.msra.mxu0 0.0
    %128 = vmatprep.subr.mxu0 0.0
    %129 = vmatpush1.msra.mxu0 0.0
    %130 = vmatprep.subr.mxu0 0.0
    %131 = vmatpush1.msra.mxu0 0.0
    %132 = vmatprep.subr.mxu0 0.0
    %133 = vmatpush1.msra.mxu0 0.0
    %134 = vmatprep.subr.mxu0 0.0
    %135 = vmatpush1.msra.mxu0 0.0
    %136 = vmatprep.subr.mxu0 0.0
    %137 = vmatpush1.msra.mxu0 0.0
    %138 = vmatprep.subr.mxu0 0.0
    %139 = vmatpush1.msra.mxu0 0.0
    %140 = vmatprep.subr.mxu0 0.0
    %141 = vmatpush1.msra.mxu0 0.0
    %142 = vmatprep.subr.mxu0 0.0
    %143 = vmatpush1.msra.mxu0 0.0
    %144 = vmatprep.subr.mxu0 0.0
    %145 = vmatpush1.msra.mxu0 0.0
    %146 = vmatprep.subr.mxu0 0.0
    %147 = vmatpush1.msra.mxu0 0.0
    %148 = vmatprep.subr.mxu0 0.0
    %149 = vmatpush1.msra.mxu0 0.0
    %150 = vmatprep.subr.mxu0 0.0
    %151 = vmatpush1.msra.mxu0 0.0
    %152 = vmatprep.subr.mxu0 0.0
    %153 = vmatpush1.msra.mxu0 0.0
    %154 = vmatprep.subr.mxu0 0.0
    %155 = vmatpush1.msra.mxu0 0.0
    %156 = vmatprep.subr.mxu0 0.0
    %157 = vmatpush1.msra.mxu0 0.0
    %158 = vmatprep.subr.mxu0 0.0
    %159 = vmatpush1.msra.mxu0 0.0
    %160 = vmatprep.subr.mxu0 0.0
    %161 = vmatpush1.msra.mxu0 0.0
    %162 = vmatprep.subr.mxu0 0.0
    %163 = vmatpush1.msra.mxu0 0.0
    %164 = vmatprep.subr.mxu0 0.0
    %165 = vmatpush1.msra.mxu0 0.0
    %166 = vmatprep.subr.mxu0 0.0
    %167 = vmatpush1.msra.mxu0 0.0
    %168 = vmatprep.mubr.f32.mxu0 0.0
    %169 = vmatmul.mubr.f32.gmra.mrb[0].mxu0 %v99
    %v170 = vpop.f32.mrb[0].mxu0
    %v171 = vadd.f32 0.0, %v170
    %v172 = vpop.f32.mrb[0].mxu0
    %173 = vmatprep.mubr.f32.mxu0 0.0
    %174 = vmatmul.mubr.f32.gmra.mrb[0].mxu0 %v102
    %v175 = vpop.f32.mrb[0].mxu0
    %v176 = vadd.f32 0.0, %v175
    %v177 = vpop.f32.mrb[0].mxu0
    %178 = vdwg.mxu0
    %179 = vst [vmem:[#allocation3] sm:$0xff] %v171
    %180 = vst [vmem:[#allocation3 + $0x20] sm:$0xff] %v176
    %s181 = scalar_lea.vmem [#allocation4], 16
    %v182 = vld [vmem:[%s181] sm:$0xff]
    %v183 = vld [vmem:[%s181 + $0x8] sm:$0xff]
    %v185 = vsel %vm97, %v182, 0
    %v188 = vsel %vm97, %v183, 0
    %190 = vmatprep.subr.mxu0 0.0
    %191 = vmatpush1.msra.mxu0 %v93
    %192 = vmatprep.subr.mxu0 0.0
    %193 = vmatpush1.msra.mxu0 %v94
    %194 = vmatprep.subr.mxu0 0.0
    %195 = vmatpush1.msra.mxu0 0.0
    %196 = vmatprep.subr.mxu0 0.0
    %197 = vmatpush1.msra.mxu0 0.0
    %198 = vmatprep.subr.mxu0 0.0
    %199 = vmatpush1.msra.mxu0 0.0
    %200 = vmatprep.subr.mxu0 0.0
    %201 = vmatpush1.msra.mxu0 0.0
    %202 = vmatprep.subr.mxu0 0.0
    %203 = vmatpush1.msra.mxu0 0.0
    %204 = vmatprep.subr.mxu0 0.0
    %205 = vmatpush1.msra.mxu0 0.0
    %206 = vmatprep.subr.mxu0 0.0
    %207 = vmatpush1.msra.mxu0 0.0
    %208 = vmatprep.subr.mxu0 0.0
    %209 = vmatpush1.msra.mxu0 0.0
    %210 = vmatprep.subr.mxu0 0.0
    %211 = vmatpush1.msra.mxu0 0.0
    %212 = vmatprep.subr.mxu0 0.0
    %213 = vmatpush1.msra.mxu0 0.0
    %214 = vmatprep.subr.mxu0 0.0
    %215 = vmatpush1.msra.mxu0 0.0
    %216 = vmatprep.subr.mxu0 0.0
    %217 = vmatpush1.msra.mxu0 0.0
    %218 = vmatprep.subr.mxu0 0.0
    %219 = vmatpush1.msra.mxu0 0.0
    %220 = vmatprep.subr.mxu0 0.0
    %221 = vmatpush1.msra.mxu0 0.0
    %222 = vmatprep.subr.mxu0 0.0
    %223 = vmatpush1.msra.mxu0 0.0
    %224 = vmatprep.subr.mxu0 0.0
    %225 = vmatpush1.msra.mxu0 0.0
    %226 = vmatprep.subr.mxu0 0.0
    %227 = vmatpush1.msra.mxu0 0.0
    %228 = vmatprep.subr.mxu0 0.0
    %229 = vmatpush1.msra.mxu0 0.0
    %230 = vmatprep.subr.mxu0 0.0
    %231 = vmatpush1.msra.mxu0 0.0
    %232 = vmatprep.subr.mxu0 0.0
    %233 = vmatpush1.msra.mxu0 0.0
    %234 = vmatprep.subr.mxu0 0.0
    %235 = vmatpush1.msra.mxu0 0.0
    %236 = vmatprep.subr.mxu0 0.0
    %237 = vmatpush1.msra.mxu0 0.0
    %238 = vmatprep.subr.mxu0 0.0
    %239 = vmatpush1.msra.mxu0 0.0
    %240 = vmatprep.subr.mxu0 0.0
    %241 = vmatpush1.msra.mxu0 0.0
    %242 = vmatprep.subr.mxu0 0.0
    %243 = vmatpush1.msra.mxu0 0.0
    %244 = vmatprep.subr.mxu0 0.0
    %245 = vmatpush1.msra.mxu0 0.0
    %246 = vmatprep.subr.mxu0 0.0
    %247 = vmatpush1.msra.mxu0 0.0
    %248 = vmatprep.subr.mxu0 0.0
    %249 = vmatpush1.msra.mxu0 0.0
    %250 = vmatprep.subr.mxu0 0.0
    %251 = vmatpush1.msra.mxu0 0.0
    %252 = vmatprep.subr.mxu0 0.0
    %253 = vmatpush1.msra.mxu0 0.0
    %254 = vmatprep.mubr.f32.mxu0 0.0
    %255 = vmatmul.mubr.f32.gmra.mrb[0].mxu0 %v185
    %v256 = vpop.f32.mrb[0].mxu0
    %v257 = vadd.f32 0.0, %v256
    %v258 = vpop.f32.mrb[0].mxu0
    %259 = vmatprep.mubr.f32.mxu0 0.0
    %260 = vmatmul.mubr.f32.gmra.mrb[0].mxu0 %v188
    %v261 = vpop.f32.mrb[0].mxu0
    %v262 = vadd.f32 0.0, %v261
    %v263 = vpop.f32.mrb[0].mxu0
    %264 = vdwg.mxu0
    %265 = vst [vmem:[#allocation3 + $0x8] sm:$0xff] %v257
    %266 = vst [vmem:[#allocation3 + $0x28] sm:$0xff] %v262
    %s267 = scalar_lea.vmem [#allocation4], 32
    %v268 = vld [vmem:[%s267] sm:$0xff]
    %v269 = vld [vmem:[%s267 + $0x8] sm:$0xff]
    %v271 = vsel %vm97, %v268, 0
    %v274 = vsel %vm97, %v269, 0
    %276 = vmatprep.subr.mxu0 0.0
    %277 = vmatpush1.msra.mxu0 %v93
    %278 = vmatprep.subr.mxu0 0.0
    %279 = vmatpush1.msra.mxu0 %v94
    %280 = vmatprep.subr.mxu0 0.0
    %281 = vmatpush1.msra.mxu0 0.0
    %282 = vmatprep.subr.mxu0 0.0
    %283 = vmatpush1.msra.mxu0 0.0
    %284 = vmatprep.subr.mxu0 0.0
    %285 = vmatpush1.msra.mxu0 0.0
    %286 = vmatprep.subr.mxu0 0.0
    %287 = vmatpush1.msra.mxu0 0.0
    %288 = vmatprep.subr.mxu0 0.0
    %289 = vmatpush1.msra.mxu0 0.0
    %290 = vmatprep.subr.mxu0 0.0
    %291 = vmatpush1.msra.mxu0 0.0
    %292 = vmatprep.subr.mxu0 0.0
    %293 = vmatpush1.msra.mxu0 0.0
    %294 = vmatprep.subr.mxu0 0.0
    %295 = vmatpush1.msra.mxu0 0.0
    %296 = vmatprep.subr.mxu0 0.0
    %297 = vmatpush1.msra.mxu0 0.0
    %298 = vmatprep.subr.mxu0 0.0
    %299 = vmatpush1.msra.mxu0 0.0
    %300 = vmatprep.subr.mxu0 0.0
    %301 = vmatpush1.msra.mxu0 0.0
    %302 = vmatprep.subr.mxu0 0.0
    %303 = vmatpush1.msra.mxu0 0.0
    %304 = vmatprep.subr.mxu0 0.0
    %305 = vmatpush1.msra.mxu0 0.0
    %306 = vmatprep.subr.mxu0 0.0
    %307 = vmatpush1.msra.mxu0 0.0
    %308 = vmatprep.subr.mxu0 0.0
    %309 = vmatpush1.msra.mxu0 0.0
    %310 = vmatprep.subr.mxu0 0.0
    %311 = vmatpush1.msra.mxu0 0.0
    %312 = vmatprep.subr.mxu0 0.0
    %313 = vmatpush1.msra.mxu0 0.0
    %314 = vmatprep.subr.mxu0 0.0
    %315 = vmatpush1.msra.mxu0 0.0
    %316 = vmatprep.subr.mxu0 0.0
    %317 = vmatpush1.msra.mxu0 0.0
    %318 = vmatprep.subr.mxu0 0.0
    %319 = vmatpush1.msra.mxu0 0.0
    %320 = vmatprep.subr.mxu0 0.0
    %321 = vmatpush1.msra.mxu0 0.0
    %322 = vmatprep.subr.mxu0 0.0
    %323 = vmatpush1.msra.mxu0 0.0
    %324 = vmatprep.subr.mxu0 0.0
    %325 = vmatpush1.msra.mxu0 0.0
    %326 = vmatprep.subr.mxu0 0.0
    %327 = vmatpush1.msra.mxu0 0.0
    %328 = vmatprep.subr.mxu0 0.0
    %329 = vmatpush1.msra.mxu0 0.0
    %330 = vmatprep.subr.mxu0 0.0
    %331 = vmatpush1.msra.mxu0 0.0
    %332 = vmatprep.subr.mxu0 0.0
    %333 = vmatpush1.msra.mxu0 0.0
    %334 = vmatprep.subr.mxu0 0.0
    %335 = vmatpush1.msra.mxu0 0.0
    %336 = vmatprep.subr.mxu0 0.0
    %337 = vmatpush1.msra.mxu0 0.0
    %338 = vmatprep.subr.mxu0 0.0
    %339 = vmatpush1.msra.mxu0 0.0
    %340 = vmatprep.mubr.f32.mxu0 0.0
    %341 = vmatmul.mubr.f32.gmra.mrb[0].mxu0 %v271
    %v342 = vpop.f32.mrb[0].mxu0
    %v343 = vadd.f32 0.0, %v342
    %v344 = vpop.f32.mrb[0].mxu0
    %345 = vmatprep.mubr.f32.mxu0 0.0
    %346 = vmatmul.mubr.f32.gmra.mrb[0].mxu0 %v274
    %v347 = vpop.f32.mrb[0].mxu0
    %v348 = vadd.f32 0.0, %v347
    %v349 = vpop.f32.mrb[0].mxu0
    %350 = vdwg.mxu0
    %351 = vst [vmem:[#allocation3 + $0x10] sm:$0xff] %v343
    %352 = vst [vmem:[#allocation3 + $0x30] sm:$0xff] %v348
    %353 = vst [vmem:[#allocation3 + $0x18] sm:$0xff] %v93
    %354 = vst [vmem:[#allocation3 + $0x38] sm:$0xff] %v94
    %v355 = vld [vmem:[#allocation3] sm:$0xff]
    %v356 = vld [vmem:[#allocation3 + $0x8] sm:$0xff]
    %v357 = vld [vmem:[#allocation3 + $0x10] sm:$0xff]
    %v358 = vld [vmem:[#allocation3 + $0x18] sm:$0xff]
    %v359 = vld [vmem:[#allocation3 + $0x20] sm:$0xff]
    %v360 = vld [vmem:[#allocation3 + $0x28] sm:$0xff]
    %v361 = vld [vmem:[#allocation3 + $0x30] sm:$0xff]
    %v362 = vld [vmem:[#allocation3 + $0x38] sm:$0xff]
    %v363 = vld [vmem:[#allocation10] sm:$0xff]
    %v364 = vld [vmem:[#allocation10 + $0x8] sm:$0xff]
    %v365 = vld [vmem:[#allocation10 + $0x10] sm:$0xff]
    %v366 = vld [vmem:[#allocation10 + $0x18] sm:$0xff]
    %v367 = vld [vmem:[#allocation10 + $0x20] sm:$0xff]
    %v368 = vld [vmem:[#allocation10 + $0x28] sm:$0xff]
    %v369 = vld [vmem:[#allocation10 + $0x30] sm:$0xff]
    %v370 = vld [vmem:[#allocation10 + $0x38] sm:$0xff]
    %v371 = vld [vmem:[#allocation10 + $0x40] sm:$0xff]
    %v372 = vld [vmem:[#allocation10 + $0x48] sm:$0xff]
    %v373 = vld [vmem:[#allocation10 + $0x50] sm:$0xff]
    %v374 = vld [vmem:[#allocation10 + $0x58] sm:$0xff]
    %v375 = vld [vmem:[#allocation10 + $0x60] sm:$0xff]
    %v376 = vld [vmem:[#allocation10 + $0x68] sm:$0xff]
    %v377 = vld [vmem:[#allocation10 + $0x70] sm:$0xff]
    %v378 = vld [vmem:[#allocation10 + $0x78] sm:$0xff]
    %v379 = vld [vmem:[#allocation10 + $0x80] sm:$0xff]
    %v380 = vld [vmem:[#allocation10 + $0x88] sm:$0xff]
    %v381 = vld [vmem:[#allocation10 + $0x90] sm:$0xff]
    %v382 = vld [vmem:[#allocation10 + $0x98] sm:$0xff]
    %v383 = vld [vmem:[#allocation10 + $0xa0] sm:$0xff]
    %v384 = vld [vmem:[#allocation10 + $0xa8] sm:$0xff]
    %v385 = vld [vmem:[#allocation10 + $0xb0] sm:$0xff]
    %v386 = vld [vmem:[#allocation10 + $0xb8] sm:$0xff]
    %v387 = vld [vmem:[#allocation10 + $0xc0] sm:$0xff]
    %v388 = vld [vmem:[#allocation10 + $0xc8] sm:$0xff]
    %v389 = vld [vmem:[#allocation10 + $0xd0] sm:$0xff]
    %v390 = vld [vmem:[#allocation10 + $0xd8] sm:$0xff]
    %v391 = vld [vmem:[#allocation10 + $0xe0] sm:$0xff]
    %v392 = vld [vmem:[#allocation10 + $0xe8] sm:$0xff]
    %v393 = vld [vmem:[#allocation10 + $0xf0] sm:$0xff]
    %v394 = vld [vmem:[#allocation10 + $0xf8] sm:$0xff]
    %v395 = vld [vmem:[#allocation10 + $0x100] sm:$0xff]
    %v396 = vld [vmem:[#allocation10 + $0x108] sm:$0xff]
    %v397 = vld [vmem:[#allocation10 + $0x110] sm:$0xff]
    %v398 = vld [vmem:[#allocation10 + $0x118] sm:$0xff]
    %v399 = vld [vmem:[#allocation10 + $0x120] sm:$0xff]
    %v400 = vld [vmem:[#allocation10 + $0x128] sm:$0xff]
    %v401 = vld [vmem:[#allocation10 + $0x130] sm:$0xff]
    %v402 = vld [vmem:[#allocation10 + $0x138] sm:$0xff]
    %v403 = vld [vmem:[#allocation10 + $0x140] sm:$0xff]
    %v404 = vld [vmem:[#allocation10 + $0x148] sm:$0xff]
    %v405 = vld [vmem:[#allocation10 + $0x150] sm:$0xff]
    %v406 = vld [vmem:[#allocation10 + $0x158] sm:$0xff]
    %v407 = vld [vmem:[#allocation10 + $0x160] sm:$0xff]
    %v408 = vld [vmem:[#allocation10 + $0x168] sm:$0xff]
    %v409 = vld [vmem:[#allocation10 + $0x170] sm:$0xff]
    %v410 = vld [vmem:[#allocation10 + $0x178] sm:$0xff]
    %v411 = vld [vmem:[#allocation10 + $0x180] sm:$0xff]
    %v412 = vld [vmem:[#allocation10 + $0x188] sm:$0xff]
    %v413 = vld [vmem:[#allocation10 + $0x190] sm:$0xff]
    %v414 = vld [vmem:[#allocation10 + $0x198] sm:$0xff]
    %v415 = vld [vmem:[#allocation10 + $0x1a0] sm:$0xff]
    %v416 = vld [vmem:[#allocation10 + $0x1a8] sm:$0xff]
    %v417 = vld [vmem:[#allocation10 + $0x1b0] sm:$0xff]
    %v418 = vld [vmem:[#allocation10 + $0x1b8] sm:$0xff]
    %v419 = vld [vmem:[#allocation10 + $0x1c0] sm:$0xff]
    %v420 = vld [vmem:[#allocation10 + $0x1c8] sm:$0xff]
    %v421 = vld [vmem:[#allocation10 + $0x1d0] sm:$0xff]
    %v422 = vld [vmem:[#allocation10 + $0x1d8] sm:$0xff]
    %v423 = vld [vmem:[#allocation10 + $0x1e0] sm:$0xff]
    %v424 = vld [vmem:[#allocation10 + $0x1e8] sm:$0xff]
    %v425 = vld [vmem:[#allocation10 + $0x1f0] sm:$0xff]
    %v426 = vld [vmem:[#allocation10 + $0x1f8] sm:$0xff]
    %v427 = vld [vmem:[#allocation10 + $0x200] sm:$0xff]
    %v428 = vld [vmem:[#allocation10 + $0x208] sm:$0xff]
    %v429 = vld [vmem:[#allocation10 + $0x210] sm:$0xff]
    %v430 = vld [vmem:[#allocation10 + $0x218] sm:$0xff]
    %v431 = vld [vmem:[#allocation10 + $0x220] sm:$0xff]
    %v432 = vld [vmem:[#allocation10 + $0x228] sm:$0xff]
    %v433 = vld [vmem:[#allocation10 + $0x230] sm:$0xff]
    %v434 = vld [vmem:[#allocation10 + $0x238] sm:$0xff]
    %v435 = vld [vmem:[#allocation10 + $0x240] sm:$0xff]
    %v436 = vld [vmem:[#allocation10 + $0x248] sm:$0xff]
    %v437 = vld [vmem:[#allocation10 + $0x250] sm:$0xff]
    %v438 = vld [vmem:[#allocation10 + $0x258] sm:$0xff]
    %v439 = vld [vmem:[#allocation10 + $0x260] sm:$0xff]
    %v440 = vld [vmem:[#allocation10 + $0x268] sm:$0xff]
    %v441 = vld [vmem:[#allocation10 + $0x270] sm:$0xff]
    %v442 = vld [vmem:[#allocation10 + $0x278] sm:$0xff]
    %v443 = vld [vmem:[#allocation10 + $0x280] sm:$0xff]
    %v444 = vld [vmem:[#allocation10 + $0x288] sm:$0xff]
    %v445 = vld [vmem:[#allocation10 + $0x290] sm:$0xff]
    %v446 = vld [vmem:[#allocation10 + $0x298] sm:$0xff]
    %v447 = vld [vmem:[#allocation10 + $0x2a0] sm:$0xff]
    %v448 = vld [vmem:[#allocation10 + $0x2a8] sm:$0xff]
    %v449 = vld [vmem:[#allocation10 + $0x2b0] sm:$0xff]
    %v450 = vld [vmem:[#allocation10 + $0x2b8] sm:$0xff]
    %v451 = vld [vmem:[#allocation10 + $0x2c0] sm:$0xff]
    %v452 = vld [vmem:[#allocation10 + $0x2c8] sm:$0xff]
    %v453 = vld [vmem:[#allocation10 + $0x2d0] sm:$0xff]
    %v454 = vld [vmem:[#allocation10 + $0x2d8] sm:$0xff]
    %v455 = vld [vmem:[#allocation10 + $0x2e0] sm:$0xff]
    %v456 = vld [vmem:[#allocation10 + $0x2e8] sm:$0xff]
    %v457 = vld [vmem:[#allocation10 + $0x2f0] sm:$0xff]
    %v458 = vld [vmem:[#allocation10 + $0x2f8] sm:$0xff]
    %v459 = vld [vmem:[#allocation10 + $0x300] sm:$0xff]
    %v460 = vld [vmem:[#allocation10 + $0x308] sm:$0xff]
    %v461 = vld [vmem:[#allocation10 + $0x310] sm:$0xff]
    %v462 = vld [vmem:[#allocation10 + $0x318] sm:$0xff]
    %v463 = vld [vmem:[#allocation10 + $0x320] sm:$0xff]
    %v464 = vld [vmem:[#allocation10 + $0x328] sm:$0xff]
    %v465 = vld [vmem:[#allocation10 + $0x330] sm:$0xff]
    %v466 = vld [vmem:[#allocation10 + $0x338] sm:$0xff]
    %v467 = vld [vmem:[#allocation10 + $0x340] sm:$0xff]
    %v468 = vld [vmem:[#allocation10 + $0x348] sm:$0xff]
    %v469 = vld [vmem:[#allocation10 + $0x350] sm:$0xff]
    %v470 = vld [vmem:[#allocation10 + $0x358] sm:$0xff]
    %v471 = vld [vmem:[#allocation10 + $0x360] sm:$0xff]
    %v472 = vld [vmem:[#allocation10 + $0x368] sm:$0xff]
    %v473 = vld [vmem:[#allocation10 + $0x370] sm:$0xff]
    %v474 = vld [vmem:[#allocation10 + $0x378] sm:$0xff]
    %v475 = vld [vmem:[#allocation10 + $0x380] sm:$0xff]
    %v476 = vld [vmem:[#allocation10 + $0x388] sm:$0xff]
    %v477 = vld [vmem:[#allocation10 + $0x390] sm:$0xff]
    %v478 = vld [vmem:[#allocation10 + $0x398] sm:$0xff]
    %v479 = vld [vmem:[#allocation10 + $0x3a0] sm:$0xff]
    %v480 = vld [vmem:[#allocation10 + $0x3a8] sm:$0xff]
    %v481 = vld [vmem:[#allocation10 + $0x3b0] sm:$0xff]
    %v482 = vld [vmem:[#allocation10 + $0x3b8] sm:$0xff]
    %v483 = vld [vmem:[#allocation10 + $0x3c0] sm:$0xff]
    %v484 = vld [vmem:[#allocation10 + $0x3c8] sm:$0xff]
    %v485 = vld [vmem:[#allocation10 + $0x3d0] sm:$0xff]
    %v486 = vld [vmem:[#allocation10 + $0x3d8] sm:$0xff]
    %v487 = vld [vmem:[#allocation10 + $0x3e0] sm:$0xff]
    %v488 = vld [vmem:[#allocation10 + $0x3e8] sm:$0xff]
    %v489 = vld [vmem:[#allocation10 + $0x3f0] sm:$0xff]
    %v490 = vld [vmem:[#allocation10 + $0x3f8] sm:$0xff]
    %v491 = vld [vmem:[#allocation10 + $0x400] sm:$0xff]
    %v492 = vld [vmem:[#allocation10 + $0x408] sm:$0xff]
    %v493 = vld [vmem:[#allocation10 + $0x410] sm:$0xff]
    %v494 = vld [vmem:[#allocation10 + $0x418] sm:$0xff]
    %v495 = vld [vmem:[#allocation10 + $0x420] sm:$0xff]
    %v496 = vld [vmem:[#allocation10 + $0x428] sm:$0xff]
    %v497 = vld [vmem:[#allocation10 + $0x430] sm:$0xff]
    %v498 = vld [vmem:[#allocation10 + $0x438] sm:$0xff]
    %v499 = vld [vmem:[#allocation10 + $0x440] sm:$0xff]
    %v500 = vld [vmem:[#allocation10 + $0x448] sm:$0xff]
    %v501 = vld [vmem:[#allocation10 + $0x450] sm:$0xff]
    %v502 = vld [vmem:[#allocation10 + $0x458] sm:$0xff]
    %v503 = vld [vmem:[#allocation10 + $0x460] sm:$0xff]
    %v504 = vld [vmem:[#allocation10 + $0x468] sm:$0xff]
    %v505 = vld [vmem:[#allocation10 + $0x470] sm:$0xff]
    %v506 = vld [vmem:[#allocation10 + $0x478] sm:$0xff]
    %v507 = vld [vmem:[#allocation10 + $0x480] sm:$0xff]
    %v508 = vld [vmem:[#allocation10 + $0x488] sm:$0xff]
    %v509 = vld [vmem:[#allocation10 + $0x490] sm:$0xff]
    %v510 = vld [vmem:[#allocation10 + $0x498] sm:$0xff]
    %v511 = vld [vmem:[#allocation10 + $0x4a0] sm:$0xff]
    %v512 = vld [vmem:[#allocation10 + $0x4a8] sm:$0xff]
    %v513 = vld [vmem:[#allocation10 + $0x4b0] sm:$0xff]
    %v514 = vld [vmem:[#allocation10 + $0x4b8] sm:$0xff]
    %v515 = vld [vmem:[#allocation10 + $0x4c0] sm:$0xff]
    %v516 = vld [vmem:[#allocation10 + $0x4c8] sm:$0xff]
    %v517 = vld [vmem:[#allocation10 + $0x4d0] sm:$0xff]
    %v518 = vld [vmem:[#allocation10 + $0x4d8] sm:$0xff]
    %v519 = vld [vmem:[#allocation10 + $0x4e0] sm:$0xff]
    %v520 = vld [vmem:[#allocation10 + $0x4e8] sm:$0xff]
    %v521 = vld [vmem:[#allocation10 + $0x4f0] sm:$0xff]
    %v522 = vld [vmem:[#allocation10 + $0x4f8] sm:$0xff]
    %v523 = vld [vmem:[#allocation10 + $0x500] sm:$0xff]
    %v524 = vld [vmem:[#allocation10 + $0x508] sm:$0xff]
    %v525 = vld [vmem:[#allocation10 + $0x510] sm:$0xff]
    %v526 = vld [vmem:[#allocation10 + $0x518] sm:$0xff]
    %v527 = vld [vmem:[#allocation10 + $0x520] sm:$0xff]
    %v528 = vld [vmem:[#allocation10 + $0x528] sm:$0xff]
    %v529 = vld [vmem:[#allocation10 + $0x530] sm:$0xff]
    %v530 = vld [vmem:[#allocation10 + $0x538] sm:$0xff]
    %v531 = vld [vmem:[#allocation10 + $0x540] sm:$0xff]
    %v532 = vld [vmem:[#allocation10 + $0x548] sm:$0xff]
    %v533 = vld [vmem:[#allocation10 + $0x550] sm:$0xff]
    %v534 = vld [vmem:[#allocation10 + $0x558] sm:$0xff]
    %v535 = vld [vmem:[#allocation10 + $0x560] sm:$0xff]
    %v536 = vld [vmem:[#allocation10 + $0x568] sm:$0xff]
    %v537 = vld [vmem:[#allocation10 + $0x570] sm:$0xff]
    %v538 = vld [vmem:[#allocation10 + $0x578] sm:$0xff]
    %v539 = vld [vmem:[#allocation10 + $0x580] sm:$0xff]
    %v540 = vld [vmem:[#allocation10 + $0x588] sm:$0xff]
    %v541 = vld [vmem:[#allocation10 + $0x590] sm:$0xff]
    %v542 = vld [vmem:[#allocation10 + $0x598] sm:$0xff]
    %v543 = vld [vmem:[#allocation10 + $0x5a0] sm:$0xff]
    %v544 = vld [vmem:[#allocation10 + $0x5a8] sm:$0xff]
    %v545 = vld [vmem:[#allocation10 + $0x5b0] sm:$0xff]
    %v546 = vld [vmem:[#allocation10 + $0x5b8] sm:$0xff]
    %v547 = vld [vmem:[#allocation10 + $0x5c0] sm:$0xff]
    %v548 = vld [vmem:[#allocation10 + $0x5c8] sm:$0xff]
    %v549 = vld [vmem:[#allocation10 + $0x5d0] sm:$0xff]
    %v550 = vld [vmem:[#allocation10 + $0x5d8] sm:$0xff]
    %v551 = vld [vmem:[#allocation10 + $0x5e0] sm:$0xff]
    %v552 = vld [vmem:[#allocation10 + $0x5e8] sm:$0xff]
    %v553 = vld [vmem:[#allocation10 + $0x5f0] sm:$0xff]
    %v554 = vld [vmem:[#allocation10 + $0x5f8] sm:$0xff]
    %v555 = vld [vmem:[#allocation9] sm:$0xff]
    %v556 = vld [vmem:[#allocation9 + $0x8] sm:$0xff]
    %v557 = vld [vmem:[#allocation9 + $0x10] sm:$0xff]
    %v558 = vld [vmem:[#allocation9 + $0x18] sm:$0xff]
    %v559 = vld [vmem:[#allocation9 + $0x20] sm:$0xff]
    %v560 = vld [vmem:[#allocation9 + $0x28] sm:$0xff]
    %561 = vmatprep.subr.mxu0 %v364
    %562 = vmatpush1.msra.mxu0 %v363
    %563 = vmatprep.subr.mxu0 %v367
    %564 = vmatpush1.msra.mxu0 %v366
    %565 = vmatprep.subr.mxu0 %v370
    %566 = vmatpush1.msra.mxu0 %v369
    %567 = vmatprep.subr.mxu0 %v373
    %568 = vmatpush1.msra.mxu0 %v372
    %569 = vmatprep.subr.mxu0 %v376
    %570 = vmatpush1.msra.mxu0 %v375
    %571 = vmatprep.subr.mxu0 %v379
    %572 = vmatpush1.msra.mxu0 %v378
    %573 = vmatprep.subr.mxu0 %v382
    %574 = vmatpush1.msra.mxu0 %v381
    %575 = vmatprep.subr.mxu0 %v385
    %576 = vmatpush1.msra.mxu0 %v384
    %577 = vmatprep.subr.mxu0 %v388
    %578 = vmatpush1.msra.mxu0 %v387
    %579 = vmatprep.subr.mxu0 %v391
    %580 = vmatpush1.msra.mxu0 %v390
    %581 = vmatprep.subr.mxu0 %v394
    %582 = vmatpush1.msra.mxu0 %v393
    %583 = vmatprep.subr.mxu0 %v397
    %584 = vmatpush1.msra.mxu0 %v396
    %585 = vmatprep.subr.mxu0 %v400
    %586 = vmatpush1.msra.mxu0 %v399
    %587 = vmatprep.subr.mxu0 %v403
    %588 = vmatpush1.msra.mxu0 %v402
    %589 = vmatprep.subr.mxu0 %v406
    %590 = vmatpush1.msra.mxu0 %v405
    %591 = vmatprep.subr.mxu0 %v409
    %592 = vmatpush1.msra.mxu0 %v408
    %593 = vmatprep.subr.mxu0 %v412
    %594 = vmatpush1.msra.mxu0 %v411
    %595 = vmatprep.subr.mxu0 %v415
    %596 = vmatpush1.msra.mxu0 %v414
    %597 = vmatprep.subr.mxu0 %v418
    %598 = vmatpush1.msra.mxu0 %v417
    %599 = vmatprep.subr.mxu0 %v421
    %600 = vmatpush1.msra.mxu0 %v420
    %601 = vmatprep.subr.mxu0 %v424
    %602 = vmatpush1.msra.mxu0 %v423
    %603 = vmatprep.subr.mxu0 %v427
    %604 = vmatpush1.msra.mxu0 %v426
    %605 = vmatprep.subr.mxu0 %v430
    %606 = vmatpush1.msra.mxu0 %v429
    %607 = vmatprep.subr.mxu0 %v433
    %608 = vmatpush1.msra.mxu0 %v432
    %609 = vmatprep.subr.mxu0 %v436
    %610 = vmatpush1.msra.mxu0 %v435
    %611 = vmatprep.subr.mxu0 %v439
    %612 = vmatpush1.msra.mxu0 %v438
    %613 = vmatprep.subr.mxu0 %v442
    %614 = vmatpush1.msra.mxu0 %v441
    %615 = vmatprep.subr.mxu0 %v445
    %616 = vmatpush1.msra.mxu0 %v444
    %617 = vmatprep.subr.mxu0 %v448
    %618 = vmatpush1.msra.mxu0 %v447
    %619 = vmatprep.subr.mxu0 %v451
    %620 = vmatpush1.msra.mxu0 %v450
    %621 = vmatprep.subr.mxu0 %v454
    %622 = vmatpush1.msra.mxu0 %v453
    %623 = vmatprep.subr.mxu0 %v457
    %624 = vmatpush1.msra.mxu0 %v456
    %625 = vmatprep.mubr.f32.mxu0 %v356
    %626 = vmatmul.mubr.f32.gmra.mrb[0].mxu0 %v355
    %v627 = vpop.f32.mrb[0].mxu0
    %v628 = vadd.f32 %v555, %v627
    %v629 = vpop.f32.mrb[0].mxu0
    %v630 = vadd.f32 %v556, %v629
    %631 = vmatprep.mubr.f32.mxu0 %v360
    %632 = vmatmul.mubr.f32.gmra.mrb[0].mxu0 %v359
    %v633 = vpop.f32.mrb[0].mxu0
    %v634 = vadd.f32 %v558, %v633
    %v635 = vpop.f32.mrb[0].mxu0
    %v636 = vadd.f32 %v559, %v635
    %637 = vdwg.mxu0
    %638 = vmatprep.subr.mxu0 %v460
    %639 = vmatpush1.msra.mxu0 %v459
    %640 = vmatprep.subr.mxu0 %v463
    %641 = vmatpush1.msra.mxu0 %v462
    %642 = vmatprep.subr.mxu0 %v466
    %643 = vmatpush1.msra.mxu0 %v465
    %644 = vmatprep.subr.mxu0 %v469
    %645 = vmatpush1.msra.mxu0 %v468
    %646 = vmatprep.subr.mxu0 %v472
    %647 = vmatpush1.msra.mxu0 %v471
    %648 = vmatprep.subr.mxu0 %v475
    %649 = vmatpush1.msra.mxu0 %v474
    %650 = vmatprep.subr.mxu0 %v478
    %651 = vmatpush1.msra.mxu0 %v477
    %652 = vmatprep.subr.mxu0 %v481
    %653 = vmatpush1.msra.mxu0 %v480
    %654 = vmatprep.subr.mxu0 %v484
    %655 = vmatpush1.msra.mxu0 %v483
    %656 = vmatprep.subr.mxu0 %v487
    %657 = vmatpush1.msra.mxu0 %v486
    %658 = vmatprep.subr.mxu0 %v490
    %659 = vmatpush1.msra.mxu0 %v489
    %660 = vmatprep.subr.mxu0 %v493
    %661 = vmatpush1.msra.mxu0 %v492
    %662 = vmatprep.subr.mxu0 %v496
    %663 = vmatpush1.msra.mxu0 %v495
    %664 = vmatprep.subr.mxu0 %v499
    %665 = vmatpush1.msra.mxu0 %v498
    %666 = vmatprep.subr.mxu0 %v502
    %667 = vmatpush1.msra.mxu0 %v501
    %668 = vmatprep.subr.mxu0 %v505
    %669 = vmatpush1.msra.mxu0 %v504
    %670 = vmatprep.subr.mxu0 %v508
    %671 = vmatpush1.msra.mxu0 %v507
    %672 = vmatprep.subr.mxu0 %v511
    %673 = vmatpush1.msra.mxu0 %v510
    %674 = vmatprep.subr.mxu0 %v514
    %675 = vmatpush1.msra.mxu0 %v513
    %676 = vmatprep.subr.mxu0 %v517
    %677 = vmatpush1.msra.mxu0 %v516
    %678 = vmatprep.subr.mxu0 %v520
    %679 = vmatpush1.msra.mxu0 %v519
    %680 = vmatprep.subr.mxu0 %v523
    %681 = vmatpush1.msra.mxu0 %v522
    %682 = vmatprep.subr.mxu0 %v526
    %683 = vmatpush1.msra.mxu0 %v525
    %684 = vmatprep.subr.mxu0 %v529
    %685 = vmatpush1.msra.mxu0 %v528
    %686 = vmatprep.subr.mxu0 %v532
    %687 = vmatpush1.msra.mxu0 %v531
    %688 = vmatprep.subr.mxu0 %v535
    %689 = vmatpush1.msra.mxu0 %v534
    %690 = vmatprep.subr.mxu0 %v538
    %691 = vmatpush1.msra.mxu0 %v537
    %692 = vmatprep.subr.mxu0 %v541
    %693 = vmatpush1.msra.mxu0 %v540
    %694 = vmatprep.subr.mxu0 %v544
    %695 = vmatpush1.msra.mxu0 %v543
    %696 = vmatprep.subr.mxu0 %v547
    %697 = vmatpush1.msra.mxu0 %v546
    %698 = vmatprep.subr.mxu0 %v550
    %699 = vmatpush1.msra.mxu0 %v549
    %700 = vmatprep.subr.mxu0 %v553
    %701 = vmatpush1.msra.mxu0 %v552
    %702 = vmatprep.mubr.f32.mxu0 %v358
    %703 = vmatmul.mubr.f32.gmra.mrb[0].mxu0 %v357
    %v704 = vpop.f32.mrb[0].mxu0
    %v705 = vadd.f32 %v628, %v704
    %v706 = vpop.f32.mrb[0].mxu0
    %v707 = vadd.f32 %v630, %v706
    %708 = vmatprep.mubr.f32.mxu0 %v362
    %709 = vmatmul.mubr.f32.gmra.mrb[0].mxu0 %v361
    %v710 = vpop.f32.mrb[0].mxu0
    %v711 = vadd.f32 %v634, %v710
    %v712 = vpop.f32.mrb[0].mxu0
    %v713 = vadd.f32 %v636, %v712
    %714 = vdwg.mxu0
    %715 = vmatprep.subr.mxu0 0.0
    %716 = vmatpush1.msra.mxu0 %v365
    %717 = vmatprep.subr.mxu0 0.0
    %718 = vmatpush1.msra.mxu0 %v368
    %719 = vmatprep.subr.mxu0 0.0
    %720 = vmatpush1.msra.mxu0 %v371
    %721 = vmatprep.subr.mxu0 0.0
    %722 = vmatpush1.msra.mxu0 %v374
    %723 = vmatprep.subr.mxu0 0.0
    %724 = vmatpush1.msra.mxu0 %v377
    %725 = vmatprep.subr.mxu0 0.0
    %726 = vmatpush1.msra.mxu0 %v380
    %727 = vmatprep.subr.mxu0 0.0
    %728 = vmatpush1.msra.mxu0 %v383
    %729 = vmatprep.subr.mxu0 0.0
    %730 = vmatpush1.msra.mxu0 %v386
    %731 = vmatprep.subr.mxu0 0.0
    %732 = vmatpush1.msra.mxu0 %v389
    %733 = vmatprep.subr.mxu0 0.0
    %734 = vmatpush1.msra.mxu0 %v392
    %735 = vmatprep.subr.mxu0 0.0
    %736 = vmatpush1.msra.mxu0 %v395
    %737 = vmatprep.subr.mxu0 0.0
    %738 = vmatpush1.msra.mxu0 %v398
    %739 = vmatprep.subr.mxu0 0.0
    %740 = vmatpush1.msra.mxu0 %v401
    %741 = vmatprep.subr.mxu0 0.0
    %742 = vmatpush1.msra.mxu0 %v404
    %743 = vmatprep.subr.mxu0 0.0
    %744 = vmatpush1.msra.mxu0 %v407
    %745 = vmatprep.subr.mxu0 0.0
    %746 = vmatpush1.msra.mxu0 %v410
    %747 = vmatprep.subr.mxu0 0.0
    %748 = vmatpush1.msra.mxu0 %v413
    %749 = vmatprep.subr.mxu0 0.0
    %750 = vmatpush1.msra.mxu0 %v416
    %751 = vmatprep.subr.mxu0 0.0
    %752 = vmatpush1.msra.mxu0 %v419
    %753 = vmatprep.subr.mxu0 0.0
    %754 = vmatpush1.msra.mxu0 %v422
    %755 = vmatprep.subr.mxu0 0.0
    %756 = vmatpush1.msra.mxu0 %v425
    %757 = vmatprep.subr.mxu0 0.0
    %758 = vmatpush1.msra.mxu0 %v428
    %759 = vmatprep.subr.mxu0 0.0
    %760 = vmatpush1.msra.mxu0 %v431
    %761 = vmatprep.subr.mxu0 0.0
    %762 = vmatpush1.msra.mxu0 %v434
    %763 = vmatprep.subr.mxu0 0.0
    %764 = vmatpush1.msra.mxu0 %v437
    %765 = vmatprep.subr.mxu0 0.0
    %766 = vmatpush1.msra.mxu0 %v440
    %767 = vmatprep.subr.mxu0 0.0
    %768 = vmatpush1.msra.mxu0 %v443
    %769 = vmatprep.subr.mxu0 0.0
    %770 = vmatpush1.msra.mxu0 %v446
    %771 = vmatprep.subr.mxu0 0.0
    %772 = vmatpush1.msra.mxu0 %v449
    %773 = vmatprep.subr.mxu0 0.0
    %774 = vmatpush1.msra.mxu0 %v452
    %775 = vmatprep.subr.mxu0 0.0
    %776 = vmatpush1.msra.mxu0 %v455
    %777 = vmatprep.subr.mxu0 0.0
    %778 = vmatpush1.msra.mxu0 %v458
    %779 = vmatprep.mubr.f32.mxu0 %v356
    %780 = vmatmul.mubr.f32.gmra.mrb[0].mxu0 %v355
    %v781 = vpop.f32.mrb[0].mxu0
    %v782 = vadd.f32 %v557, %v781
    %v783 = vpop.f32.mrb[0].mxu0
    %784 = vmatprep.mubr.f32.mxu0 %v360
    %785 = vmatmul.mubr.f32.gmra.mrb[0].mxu0 %v359
    %v786 = vpop.f32.mrb[0].mxu0
    %v787 = vadd.f32 %v560, %v786
    %v788 = vpop.f32.mrb[0].mxu0
    %789 = vdwg.mxu0
    %790 = vmatprep.subr.mxu0 0.0
    %791 = vmatpush1.msra.mxu0 %v461
    %792 = vmatprep.subr.mxu0 0.0
    %793 = vmatpush1.msra.mxu0 %v464
    %794 = vmatprep.subr.mxu0 0.0
    %795 = vmatpush1.msra.mxu0 %v467
    %796 = vmatprep.subr.mxu0 0.0
    %797 = vmatpush1.msra.mxu0 %v470
    %798 = vmatprep.subr.mxu0 0.0
    %799 = vmatpush1.msra.mxu0 %v473
    %800 = vmatprep.subr.mxu0 0.0
    %801 = vmatpush1.msra.mxu0 %v476
    %802 = vmatprep.subr.mxu0 0.0
    %803 = vmatpush1.msra.mxu0 %v479
    %804 = vmatprep.subr.mxu0 0.0
    %805 = vmatpush1.msra.mxu0 %v482
    %806 = vmatprep.subr.mxu0 0.0
    %807 = vmatpush1.msra.mxu0 %v485
    %808 = vmatprep.subr.mxu0 0.0
    %809 = vmatpush1.msra.mxu0 %v488
    %810 = vmatprep.subr.mxu0 0.0
    %811 = vmatpush1.msra.mxu0 %v491
    %812 = vmatprep.subr.mxu0 0.0
    %813 = vmatpush1.msra.mxu0 %v494
    %814 = vmatprep.subr.mxu0 0.0
    %815 = vmatpush1.msra.mxu0 %v497
    %816 = vmatprep.subr.mxu0 0.0
    %817 = vmatpush1.msra.mxu0 %v500
    %818 = vmatprep.subr.mxu0 0.0
    %819 = vmatpush1.msra.mxu0 %v503
    %820 = vmatprep.subr.mxu0 0.0
    %821 = vmatpush1.msra.mxu0 %v506
    %822 = vmatprep.subr.mxu0 0.0
    %823 = vmatpush1.msra.mxu0 %v509
    %824 = vmatprep.subr.mxu0 0.0
    %825 = vmatpush1.msra.mxu0 %v512
    %826 = vmatprep.subr.mxu0 0.0
    %827 = vmatpush1.msra.mxu0 %v515
    %828 = vmatprep.subr.mxu0 0.0
    %829 = vmatpush1.msra.mxu0 %v518
    %830 = vmatprep.subr.mxu0 0.0
    %831 = vmatpush1.msra.mxu0 %v521
    %832 = vmatprep.subr.mxu0 0.0
    %833 = vmatpush1.msra.mxu0 %v524
    %834 = vmatprep.subr.mxu0 0.0
    %835 = vmatpush1.msra.mxu0 %v527
    %836 = vmatprep.subr.mxu0 0.0
    %837 = vmatpush1.msra.mxu0 %v530
    %838 = vmatprep.subr.mxu0 0.0
    %839 = vmatpush1.msra.mxu0 %v533
    %840 = vmatprep.subr.mxu0 0.0
    %841 = vmatpush1.msra.mxu0 %v536
    %842 = vmatprep.subr.mxu0 0.0
    %843 = vmatpush1.msra.mxu0 %v539
    %844 = vmatprep.subr.mxu0 0.0
    %845 = vmatpush1.msra.mxu0 %v542
    %846 = vmatprep.subr.mxu0 0.0
    %847 = vmatpush1.msra.mxu0 %v545
    %848 = vmatprep.subr.mxu0 0.0
    %849 = vmatpush1.msra.mxu0 %v548
    %850 = vmatprep.subr.mxu0 0.0
    %851 = vmatpush1.msra.mxu0 %v551
    %852 = vmatprep.subr.mxu0 0.0
    %853 = vmatpush1.msra.mxu0 %v554
    %854 = vmatprep.mubr.f32.mxu0 %v358
    %855 = vmatmul.mubr.f32.gmra.mrb[0].mxu0 %v357
    %v856 = vpop.f32.mrb[0].mxu0
    %v857 = vadd.f32 %v782, %v856
    %v858 = vpop.f32.mrb[0].mxu0
    %859 = vmatprep.mubr.f32.mxu0 %v362
    %860 = vmatmul.mubr.f32.gmra.mrb[0].mxu0 %v361
    %v861 = vpop.f32.mrb[0].mxu0
    %v862 = vadd.f32 %v787, %v861
    %v863 = vpop.f32.mrb[0].mxu0
    %864 = vdwg.mxu0
    %v865 = vxor.u32 %v705, 2147483648
    %v866 = vxor.u32 %v711, 2147483648
    %v867 = vmul.f32 %v865, 1.442695
    %v868 = vpow.pop %v867
    %v869 = vmul.f32 %v866, 1.442695
    %v870 = vpow.pop %v869
    %v871 = vadd.f32 %v868, 1.0
    %v872 = vadd.f32 %v870, 1.0
    %v873 = vrcp.pop %v871
    %v874 = vmul.f32 1.0, %v873
    %v875 = vrcp.pop %v872
    %v876 = vmul.f32 1.0, %v875
    %v877 = vxor.u32 %v707, 2147483648
    %v878 = vxor.u32 %v713, 2147483648
    %v879 = vmul.f32 %v877, 1.442695
    %v880 = vpow.pop %v879
    %v881 = vmul.f32 %v878, 1.442695
    %v882 = vpow.pop %v881
    %v883 = vadd.f32 %v880, 1.0
    %v884 = vadd.f32 %v882, 1.0
    %v885 = vrcp.pop %v883
    %v886 = vmul.f32 1.0, %v885
    %v887 = vrcp.pop %v884
    %v888 = vmul.f32 1.0, %v887
    %v889 = vmul.f32 %v886, %v93
    %v890 = vmul.f32 %v888, %v94
    %v891 = vld [vmem:[#allocation12] sm:$0xff]
    %v892 = vld [vmem:[#allocation12 + $0x8] sm:$0xff]
    %v893 = vld [vmem:[#allocation12 + $0x10] sm:$0xff]
    %v894 = vld [vmem:[#allocation12 + $0x18] sm:$0xff]
    %v895 = vld [vmem:[#allocation12 + $0x20] sm:$0xff]
    %v896 = vld [vmem:[#allocation12 + $0x28] sm:$0xff]
    %v897 = vld [vmem:[#allocation12 + $0x30] sm:$0xff]
    %v898 = vld [vmem:[#allocation12 + $0x38] sm:$0xff]
    %v899 = vld [vmem:[#allocation12 + $0x40] sm:$0xff]
    %v900 = vld [vmem:[#allocation12 + $0x48] sm:$0xff]
    %v901 = vld [vmem:[#allocation12 + $0x50] sm:$0xff]
    %v902 = vld [vmem:[#allocation12 + $0x58] sm:$0xff]
    %v903 = vld [vmem:[#allocation12 + $0x60] sm:$0xff]
    %v904 = vld [vmem:[#allocation12 + $0x68] sm:$0xff]
    %v905 = vld [vmem:[#allocation12 + $0x70] sm:$0xff]
    %v906 = vld [vmem:[#allocation12 + $0x78] sm:$0xff]
    %907 = vmatprep.subr.mxu0 0.0
    %908 = vmatpush1.msra.mxu0 %v891
    %909 = vmatprep.subr.mxu0 0.0
    %910 = vmatpush1.msra.mxu0 %v892
    %911 = vmatprep.subr.mxu0 0.0
    %912 = vmatpush1.msra.mxu0 %v893
    %913 = vmatprep.subr.mxu0 0.0
    %914 = vmatpush1.msra.mxu0 %v894
    %915 = vmatprep.subr.mxu0 0.0
    %916 = vmatpush1.msra.mxu0 %v895
    %917 = vmatprep.subr.mxu0 0.0
    %918 = vmatpush1.msra.mxu0 %v896
    %919 = vmatprep.subr.mxu0 0.0
    %920 = vmatpush1.msra.mxu0 %v897
    %921 = vmatprep.subr.mxu0 0.0
    %922 = vmatpush1.msra.mxu0 %v898
    %923 = vmatprep.subr.mxu0 0.0
    %924 = vmatpush1.msra.mxu0 %v899
    %925 = vmatprep.subr.mxu0 0.0
    %926 = vmatpush1.msra.mxu0 %v900
    %927 = vmatprep.subr.mxu0 0.0
    %928 = vmatpush1.msra.mxu0 %v901
    %929 = vmatprep.subr.mxu0 0.0
    %930 = vmatpush1.msra.mxu0 %v902
    %931 = vmatprep.subr.mxu0 0.0
    %932 = vmatpush1.msra.mxu0 %v903
    %933 = vmatprep.subr.mxu0 0.0
    %934 = vmatpush1.msra.mxu0 %v904
    %935 = vmatprep.subr.mxu0 0.0
    %936 = vmatpush1.msra.mxu0 %v905
    %937 = vmatprep.subr.mxu0 0.0
    %938 = vmatpush1.msra.mxu0 %v906
    %939 = vmatprep.subr.mxu0 0.0
    %940 = vmatpush1.msra.mxu0 0.0
    %941 = vmatprep.subr.mxu0 0.0
    %942 = vmatpush1.msra.mxu0 0.0
    %943 = vmatprep.subr.mxu0 0.0
    %944 = vmatpush1.msra.mxu0 0.0
    %945 = vmatprep.subr.mxu0 0.0
    %946 = vmatpush1.msra.mxu0 0.0
    %947 = vmatprep.subr.mxu0 0.0
    %948 = vmatpush1.msra.mxu0 0.0
    %949 = vmatprep.subr.mxu0 0.0
    %950 = vmatpush1.msra.mxu0 0.0
    %951 = vmatprep.subr.mxu0 0.0
    %952 = vmatpush1.msra.mxu0 0.0
    %953 = vmatprep.subr.mxu0 0.0
    %954 = vmatpush1.msra.mxu0 0.0
    %955 = vmatprep.subr.mxu0 0.0
    %956 = vmatpush1.msra.mxu0 0.0
    %957 = vmatprep.subr.mxu0 0.0
    %958 = vmatpush1.msra.mxu0 0.0
    %959 = vmatprep.subr.mxu0 0.0
    %960 = vmatpush1.msra.mxu0 0.0
    %961 = vmatprep.subr.mxu0 0.0
    %962 = vmatpush1.msra.mxu0 0.0
    %963 = vmatprep.subr.mxu0 0.0
    %964 = vmatpush1.msra.mxu0 0.0
    %965 = vmatprep.subr.mxu0 0.0
    %966 = vmatpush1.msra.mxu0 0.0
    %967 = vmatprep.subr.mxu0 0.0
    %968 = vmatpush1.msra.mxu0 0.0
    %969 = vmatprep.subr.mxu0 0.0
    %970 = vmatpush1.msra.mxu0 0.0
    %971 = vmatprep.mubr.f32.mxu0 0.0
    %972 = vmatmul.mubr.f32.gmra.mrb[0].mxu0 %v889
    %v973 = vpop.f32.mrb[0].mxu0
    %v974 = vadd.f32 0.0, %v973
    %v975 = vpop.f32.mrb[0].mxu0
    %976 = vmatprep.mubr.f32.mxu0 0.0
    %977 = vmatmul.mubr.f32.gmra.mrb[0].mxu0 %v890
    %v978 = vpop.f32.mrb[0].mxu0
    %v979 = vadd.f32 0.0, %v978
    %v980 = vpop.f32.mrb[0].mxu0
    %981 = vdwg.mxu0
    %v982 = vadd.f32 %v857, %v974
    %v983 = vadd.f32 %v862, %v979
    %v984 = vtanh.pop %v982
    %v985 = vtanh.pop %v983
    %v986 = vsub.f32 1.0, %v874
    %v987 = vsub.f32 1.0, %v876
    %v988 = vmul.f32 %v986, %v93
    %v989 = vmul.f32 %v987, %v94
    %v990 = vmul.f32 %v874, %v984
    %v991 = vmul.f32 %v876, %v985
    %v992 = vadd.f32 %v988, %v990
    %v993 = vadd.f32 %v989, %v991
    %994 = vst [vmem:[#allocation2] sm:$0xff] %v992
    %995 = vst [vmem:[#allocation2 + $0x8] sm:$0xff] %v993
    %v996 = vld [vmem:[#allocation2] sm:$0xff]
    %v997 = vld [vmem:[#allocation2 + $0x8] sm:$0xff]
    %v998 = vld [vmem:[#allocation4] sm:$0xff]
    %v999 = vld [vmem:[#allocation4 + $0x8] sm:$0xff]
    %v1001 = vsel %vm97, %v998, 0
    %v1004 = vsel %vm97, %v999, 0
    %1006 = vmatprep.subr.mxu0 0.0
    %1007 = vmatpush1.msra.mxu0 %v996
    %1008 = vmatprep.subr.mxu0 0.0
    %1009 = vmatpush1.msra.mxu0 %v997
    %1010 = vmatprep.subr.mxu0 0.0
    %1011 = vmatpush1.msra.mxu0 0.0
    %1012 = vmatprep.subr.mxu0 0.0
    %1013 = vmatpush1.msra.mxu0 0.0
    %1014 = vmatprep.subr.mxu0 0.0
    %1015 = vmatpush1.msra.mxu0 0.0
    %1016 = vmatprep.subr.mxu0 0.0
    %1017 = vmatpush1.msra.mxu0 0.0
    %1018 = vmatprep.subr.mxu0 0.0
    %1019 = vmatpush1.msra.mxu0 0.0
    %1020 = vmatprep.subr.mxu0 0.0
    %1021 = vmatpush1.msra.mxu0 0.0
    %1022 = vmatprep.subr.mxu0 0.0
    %1023 = vmatpush1.msra.mxu0 0.0
    %1024 = vmatprep.subr.mxu0 0.0
    %1025 = vmatpush1.msra.mxu0 0.0
    %1026 = vmatprep.subr.mxu0 0.0
    %1027 = vmatpush1.msra.mxu0 0.0
    %1028 = vmatprep.subr.mxu0 0.0
    %1029 = vmatpush1.msra.mxu0 0.0
    %1030 = vmatprep.subr.mxu0 0.0
    %1031 = vmatpush1.msra.mxu0 0.0
    %1032 = vmatprep.subr.mxu0 0.0
    %1033 = vmatpush1.msra.mxu0 0.0
    %1034 = vmatprep.subr.mxu0 0.0
    %1035 = vmatpush1.msra.mxu0 0.0
    %1036 = vmatprep.subr.mxu0 0.0
    %1037 = vmatpush1.msra.mxu0 0.0
    %1038 = vmatprep.subr.mxu0 0.0
    %1039 = vmatpush1.msra.mxu0 0.0
    %1040 = vmatprep.subr.mxu0 0.0
    %1041 = vmatpush1.msra.mxu0 0.0
    %1042 = vmatprep.subr.mxu0 0.0
    %1043 = vmatpush1.msra.mxu0 0.0
    %1044 = vmatprep.subr.mxu0 0.0
    %1045 = vmatpush1.msra.mxu0 0.0
    %1046 = vmatprep.subr.mxu0 0.0
    %1047 = vmatpush1.msra.mxu0 0.0
    %1048 = vmatprep.subr.mxu0 0.0
    %1049 = vmatpush1.msra.mxu0 0.0
    %1050 = vmatprep.subr.mxu0 0.0
    %1051 = vmatpush1.msra.mxu0 0.0
    %1052 = vmatprep.subr.mxu0 0.0
    %1053 = vmatpush1.msra.mxu0 0.0
    %1054 = vmatprep.subr.mxu0 0.0
    %1055 = vmatpush1.msra.mxu0 0.0
    %1056 = vmatprep.subr.mxu0 0.0
    %1057 = vmatpush1.msra.mxu0 0.0
    %1058 = vmatprep.subr.mxu0 0.0
    %1059 = vmatpush1.msra.mxu0 0.0
    %1060 = vmatprep.subr.mxu0 0.0
    %1061 = vmatpush1.msra.mxu0 0.0
    %1062 = vmatprep.subr.mxu0 0.0
    %1063 = vmatpush1.msra.mxu0 0.0
    %1064 = vmatprep.subr.mxu0 0.0
    %1065 = vmatpush1.msra.mxu0 0.0
    %1066 = vmatprep.subr.mxu0 0.0
    %1067 = vmatpush1.msra.mxu0 0.0
    %1068 = vmatprep.subr.mxu0 0.0
    %1069 = vmatpush1.msra.mxu0 0.0
    %1070 = vmatprep.mubr.f32.mxu0 0.0
    %1071 = vmatmul.mubr.f32.gmra.mrb[0].mxu0 %v1001
    %v1072 = vpop.f32.mrb[0].mxu0
    %v1073 = vadd.f32 0.0, %v1072
    %v1074 = vpop.f32.mrb[0].mxu0
    %1075 = vmatprep.mubr.f32.mxu0 0.0
    %1076 = vmatmul.mubr.f32.gmra.mrb[0].mxu0 %v1004
    %v1077 = vpop.f32.mrb[0].mxu0
    %v1078 = vadd.f32 0.0, %v1077
    %v1079 = vpop.f32.mrb[0].mxu0
    %1080 = vdwg.mxu0
    %1081 = vst [vmem:[#allocation3] sm:$0xff] %v1073
    %1082 = vst [vmem:[#allocation3 + $0x20] sm:$0xff] %v1078
    %v1083 = vld [vmem:[%s181] sm:$0xff]
    %v1084 = vld [vmem:[%s181 + $0x8] sm:$0xff]
    %v1086 = vsel %vm97, %v1083, 0
    %v1089 = vsel %vm97, %v1084, 0
    %1091 = vmatprep.subr.mxu0 0.0
    %1092 = vmatpush1.msra.mxu0 %v996
    %1093 = vmatprep.subr.mxu0 0.0
    %1094 = vmatpush1.msra.mxu0 %v997
    %1095 = vmatprep.subr.mxu0 0.0
    %1096 = vmatpush1.msra.mxu0 0.0
    %1097 = vmatprep.subr.mxu0 0.0
    %1098 = vmatpush1.msra.mxu0 0.0
    %1099 = vmatprep.subr.mxu0 0.0
    %1100 = vmatpush1.msra.mxu0 0.0
    %1101 = vmatprep.subr.mxu0 0.0
    %1102 = vmatpush1.msra.mxu0 0.0
    %1103 = vmatprep.subr.mxu0 0.0
    %1104 = vmatpush1.msra.mxu0 0.0
    %1105 = vmatprep.subr.mxu0 0.0
    %1106 = vmatpush1.msra.mxu0 0.0
    %1107 = vmatprep.subr.mxu0 0.0
    %1108 = vmatpush1.msra.mxu0 0.0
    %1109 = vmatprep.subr.mxu0 0.0
    %1110 = vmatpush1.msra.mxu0 0.0
    %1111 = vmatprep.subr.mxu0 0.0
    %1112 = vmatpush1.msra.mxu0 0.0
    %1113 = vmatprep.subr.mxu0 0.0
    %1114 = vmatpush1.msra.mxu0 0.0
    %1115 = vmatprep.subr.mxu0 0.0
    %1116 = vmatpush1.msra.mxu0 0.0
    %1117 = vmatprep.subr.mxu0 0.0
    %1118 = vmatpush1.msra.mxu0 0.0
    %1119 = vmatprep.subr.mxu0 0.0
    %1120 = vmatpush1.msra.mxu0 0.0
    %1121 = vmatprep.subr.mxu0 0.0
    %1122 = vmatpush1.msra.mxu0 0.0
    %1123 = vmatprep.subr.mxu0 0.0
    %1124 = vmatpush1.msra.mxu0 0.0
    %1125 = vmatprep.subr.mxu0 0.0
    %1126 = vmatpush1.msra.mxu0 0.0
    %1127 = vmatprep.subr.mxu0 0.0
    %1128 = vmatpush1.msra.mxu0 0.0
    %1129 = vmatprep.subr.mxu0 0.0
    %1130 = vmatpush1.msra.mxu0 0.0
    %1131 = vmatprep.subr.mxu0 0.0
    %1132 = vmatpush1.msra.mxu0 0.0
    %1133 = vmatprep.subr.mxu0 0.0
    %1134 = vmatpush1.msra.mxu0 0.0
    %1135 = vmatprep.subr.mxu0 0.0
    %1136 = vmatpush1.msra.mxu0 0.0
    %1137 = vmatprep.subr.mxu0 0.0
    %1138 = vmatpush1.msra.mxu0 0.0
    %1139 = vmatprep.subr.mxu0 0.0
    %1140 = vmatpush1.msra.mxu0 0.0
    %1141 = vmatprep.subr.mxu0 0.0
    %1142 = vmatpush1.msra.mxu0 0.0
    %1143 = vmatprep.subr.mxu0 0.0
    %1144 = vmatpush1.msra.mxu0 0.0
    %1145 = vmatprep.subr.mxu0 0.0
    %1146 = vmatpush1.msra.mxu0 0.0
    %1147 = vmatprep.subr.mxu0 0.0
    %1148 = vmatpush1.msra.mxu0 0.0
    %1149 = vmatprep.subr.mxu0 0.0
    %1150 = vmatpush1.msra.mxu0 0.0
    %1151 = vmatprep.subr.mxu0 0.0
    %1152 = vmatpush1.msra.mxu0 0.0
    %1153 = vmatprep.subr.mxu0 0.0
    %1154 = vmatpush1.msra.mxu0 0.0
    %1155 = vmatprep.mubr.f32.mxu0 0.0
    %1156 = vmatmul.mubr.f32.gmra.mrb[0].mxu0 %v1086
    %v1157 = vpop.f32.mrb[0].mxu0
    %v1158 = vadd.f32 0.0, %v1157
    %v1159 = vpop.f32.mrb[0].mxu0
    %1160 = vmatprep.mubr.f32.mxu0 0.0
    %1161 = vmatmul.mubr.f32.gmra.mrb[0].mxu0 %v1089
    %v1162 = vpop.f32.mrb[0].mxu0
    %v1163 = vadd.f32 0.0, %v1162
    %v1164 = vpop.f32.mrb[0].mxu0
    %1165 = vdwg.mxu0
    %1166 = vst [vmem:[#allocation3 + $0x8] sm:$0xff] %v1158
    %1167 = vst [vmem:[#allocation3 + $0x28] sm:$0xff] %v1163
    %v1168 = vld [vmem:[%s267] sm:$0xff]
    %v1169 = vld [vmem:[%s267 + $0x8] sm:$0xff]
    %v1171 = vsel %vm97, %v1168, 0
    %v1174 = vsel %vm97, %v1169, 0
    %1176 = vmatprep.subr.mxu0 0.0
    %1177 = vmatpush1.msra.mxu0 %v996
    %1178 = vmatprep.subr.mxu0 0.0
    %1179 = vmatpush1.msra.mxu0 %v997
    %1180 = vmatprep.subr.mxu0 0.0
    %1181 = vmatpush1.msra.mxu0 0.0
    %1182 = vmatprep.subr.mxu0 0.0
    %1183 = vmatpush1.msra.mxu0 0.0
    %1184 = vmatprep.subr.mxu0 0.0
    %1185 = vmatpush1.msra.mxu0 0.0
    %1186 = vmatprep.subr.mxu0 0.0
    %1187 = vmatpush1.msra.mxu0 0.0
    %1188 = vmatprep.subr.mxu0 0.0
    %1189 = vmatpush1.msra.mxu0 0.0
    %1190 = vmatprep.subr.mxu0 0.0
    %1191 = vmatpush1.msra.mxu0 0.0
    %1192 = vmatprep.subr.mxu0 0.0
    %1193 = vmatpush1.msra.mxu0 0.0
    %1194 = vmatprep.subr.mxu0 0.0
    %1195 = vmatpush1.msra.mxu0 0.0
    %1196 = vmatprep.subr.mxu0 0.0
    %1197 = vmatpush1.msra.mxu0 0.0
    %1198 = vmatprep.subr.mxu0 0.0
    %1199 = vmatpush1.msra.mxu0 0.0
    %1200 = vmatprep.subr.mxu0 0.0
    %1201 = vmatpush1.msra.mxu0 0.0
    %1202 = vmatprep.subr.mxu0 0.0
    %1203 = vmatpush1.msra.mxu0 0.0
    %1204 = vmatprep.subr.mxu0 0.0
    %1205 = vmatpush1.msra.mxu0 0.0
    %1206 = vmatprep.subr.mxu0 0.0
    %1207 = vmatpush1.msra.mxu0 0.0
    %1208 = vmatprep.subr.mxu0 0.0
    %1209 = vmatpush1.msra.mxu0 0.0
    %1210 = vmatprep.subr.mxu0 0.0
    %1211 = vmatpush1.msra.mxu0 0.0
    %1212 = vmatprep.subr.mxu0 0.0
    %1213 = vmatpush1.msra.mxu0 0.0
    %1214 = vmatprep.subr.mxu0 0.0
    %1215 = vmatpush1.msra.mxu0 0.0
    %1216 = vmatprep.subr.mxu0 0.0
    %1217 = vmatpush1.msra.mxu0 0.0
    %1218 = vmatprep.subr.mxu0 0.0
    %1219 = vmatpush1.msra.mxu0 0.0
    %1220 = vmatprep.subr.mxu0 0.0
    %1221 = vmatpush1.msra.mxu0 0.0
    %1222 = vmatprep.subr.mxu0 0.0
    %1223 = vmatpush1.msra.mxu0 0.0
    %1224 = vmatprep.subr.mxu0 0.0
    %1225 = vmatpush1.msra.mxu0 0.0
    %1226 = vmatprep.subr.mxu0 0.0
    %1227 = vmatpush1.msra.mxu0 0.0
    %1228 = vmatprep.subr.mxu0 0.0
    %1229 = vmatpush1.msra.mxu0 0.0
    %1230 = vmatprep.subr.mxu0 0.0
    %1231 = vmatpush1.msra.mxu0 0.0
    %1232 = vmatprep.subr.mxu0 0.0
    %1233 = vmatpush1.msra.mxu0 0.0
    %1234 = vmatprep.subr.mxu0 0.0
    %1235 = vmatpush1.msra.mxu0 0.0
    %1236 = vmatprep.subr.mxu0 0.0
    %1237 = vmatpush1.msra.mxu0 0.0
    %1238 = vmatprep.subr.mxu0 0.0
    %1239 = vmatpush1.msra.mxu0 0.0
    %1240 = vmatprep.mubr.f32.mxu0 0.0
    %1241 = vmatmul.mubr.f32.gmra.mrb[0].mxu0 %v1171
    %v1242 = vpop.f32.mrb[0].mxu0
    %v1243 = vadd.f32 0.0, %v1242
    %v1244 = vpop.f32.mrb[0].mxu0
    %1245 = vmatprep.mubr.f32.mxu0 0.0
    %1246 = vmatmul.mubr.f32.gmra.mrb[0].mxu0 %v1174
    %v1247 = vpop.f32.mrb[0].mxu0
    %v1248 = vadd.f32 0.0, %v1247
    %v1249 = vpop.f32.mrb[0].mxu0
    %1250 = vdwg.mxu0
    %1251 = vst [vmem:[#allocation3 + $0x10] sm:$0xff] %v1243
    %1252 = vst [vmem:[#allocation3 + $0x30] sm:$0xff] %v1248
    %1253 = vst [vmem:[#allocation3 + $0x18] sm:$0xff] %v996
    %1254 = vst [vmem:[#allocation3 + $0x38] sm:$0xff] %v997
    %v1255 = vld [vmem:[#allocation3] sm:$0xff]
    %v1256 = vld [vmem:[#allocation3 + $0x8] sm:$0xff]
    %v1257 = vld [vmem:[#allocation3 + $0x10] sm:$0xff]
    %v1258 = vld [vmem:[#allocation3 + $0x18] sm:$0xff]
    %v1259 = vld [vmem:[#allocation3 + $0x20] sm:$0xff]
    %v1260 = vld [vmem:[#allocation3 + $0x28] sm:$0xff]
    %v1261 = vld [vmem:[#allocation3 + $0x30] sm:$0xff]
    %v1262 = vld [vmem:[#allocation3 + $0x38] sm:$0xff]
    %v1263 = vld [vmem:[#allocation10] sm:$0xff]
    %v1264 = vld [vmem:[#allocation10 + $0x8] sm:$0xff]
    %v1265 = vld [vmem:[#allocation10 + $0x10] sm:$0xff]
    %v1266 = vld [vmem:[#allocation10 + $0x18] sm:$0xff]
    %v1267 = vld [vmem:[#allocation10 + $0x20] sm:$0xff]
    %v1268 = vld [vmem:[#allocation10 + $0x28] sm:$0xff]
    %v1269 = vld [vmem:[#allocation10 + $0x30] sm:$0xff]
    %v1270 = vld [vmem:[#allocation10 + $0x38] sm:$0xff]
    %v1271 = vld [vmem:[#allocation10 + $0x40] sm:$0xff]
    %v1272 = vld [vmem:[#allocation10 + $0x48] sm:$0xff]
    %v1273 = vld [vmem:[#allocation10 + $0x50] sm:$0xff]
    %v1274 = vld [vmem:[#allocation10 + $0x58] sm:$0xff]
    %v1275 = vld [vmem:[#allocation10 + $0x60] sm:$0xff]
    %v1276 = vld [vmem:[#allocation10 + $0x68] sm:$0xff]
    %v1277 = vld [vmem:[#allocation10 + $0x70] sm:$0xff]
    %v1278 = vld [vmem:[#allocation10 + $0x78] sm:$0xff]
    %v1279 = vld [vmem:[#allocation10 + $0x80] sm:$0xff]
    %v1280 = vld [vmem:[#allocation10 + $0x88] sm:$0xff]
    %v1281 = vld [vmem:[#allocation10 + $0x90] sm:$0xff]
    %v1282 = vld [vmem:[#allocation10 + $0x98] sm:$0xff]
    %v1283 = vld [vmem:[#allocation10 + $0xa0] sm:$0xff]
    %v1284 = vld [vmem:[#allocation10 + $0xa8] sm:$0xff]
    %v1285 = vld [vmem:[#allocation10 + $0xb0] sm:$0xff]
    %v1286 = vld [vmem:[#allocation10 + $0xb8] sm:$0xff]
    %v1287 = vld [vmem:[#allocation10 + $0xc0] sm:$0xff]
    %v1288 = vld [vmem:[#allocation10 + $0xc8] sm:$0xff]
    %v1289 = vld [vmem:[#allocation10 + $0xd0] sm:$0xff]
    %v1290 = vld [vmem:[#allocation10 + $0xd8] sm:$0xff]
    %v1291 = vld [vmem:[#allocation10 + $0xe0] sm:$0xff]
    %v1292 = vld [vmem:[#allocation10 + $0xe8] sm:$0xff]
    %v1293 = vld [vmem:[#allocation10 + $0xf0] sm:$0xff]
    %v1294 = vld [vmem:[#allocation10 + $0xf8] sm:$0xff]
    %v1295 = vld [vmem:[#allocation10 + $0x100] sm:$0xff]
    %v1296 = vld [vmem:[#allocation10 + $0x108] sm:$0xff]
    %v1297 = vld [vmem:[#allocation10 + $0x110] sm:$0xff]
    %v1298 = vld [vmem:[#allocation10 + $0x118] sm:$0xff]
    %v1299 = vld [vmem:[#allocation10 + $0x120] sm:$0xff]
    %v1300 = vld [vmem:[#allocation10 + $0x128] sm:$0xff]
    %v1301 = vld [vmem:[#allocation10 + $0x130] sm:$0xff]
    %v1302 = vld [vmem:[#allocation10 + $0x138] sm:$0xff]
    %v1303 = vld [vmem:[#allocation10 + $0x140] sm:$0xff]
    %v1304 = vld [vmem:[#allocation10 + $0x148] sm:$0xff]
    %v1305 = vld [vmem:[#allocation10 + $0x150] sm:$0xff]
    %v1306 = vld [vmem:[#allocation10 + $0x158] sm:$0xff]
    %v1307 = vld [vmem:[#allocation10 + $0x160] sm:$0xff]
    %v1308 = vld [vmem:[#allocation10 + $0x168] sm:$0xff]
    %v1309 = vld [vmem:[#allocation10 + $0x170] sm:$0xff]
    %v1310 = vld [vmem:[#allocation10 + $0x178] sm:$0xff]
    %v1311 = vld [vmem:[#allocation10 + $0x180] sm:$0xff]
    %v1312 = vld [vmem:[#allocation10 + $0x188] sm:$0xff]
    %v1313 = vld [vmem:[#allocation10 + $0x190] sm:$0xff]
    %v1314 = vld [vmem:[#allocation10 + $0x198] sm:$0xff]
    %v1315 = vld [vmem:[#allocation10 + $0x1a0] sm:$0xff]
    %v1316 = vld [vmem:[#allocation10 + $0x1a8] sm:$0xff]
    %v1317 = vld [vmem:[#allocation10 + $0x1b0] sm:$0xff]
    %v1318 = vld [vmem:[#allocation10 + $0x1b8] sm:$0xff]
    %v1319 = vld [vmem:[#allocation10 + $0x1c0] sm:$0xff]
    %v1320 = vld [vmem:[#allocation10 + $0x1c8] sm:$0xff]
    %v1321 = vld [vmem:[#allocation10 + $0x1d0] sm:$0xff]
    %v1322 = vld [vmem:[#allocation10 + $0x1d8] sm:$0xff]
    %v1323 = vld [vmem:[#allocation10 + $0x1e0] sm:$0xff]
    %v1324 = vld [vmem:[#allocation10 + $0x1e8] sm:$0xff]
    %v1325 = vld [vmem:[#allocation10 + $0x1f0] sm:$0xff]
    %v1326 = vld [vmem:[#allocation10 + $0x1f8] sm:$0xff]
    %v1327 = vld [vmem:[#allocation10 + $0x200] sm:$0xff]
    %v1328 = vld [vmem:[#allocation10 + $0x208] sm:$0xff]
    %v1329 = vld [vmem:[#allocation10 + $0x210] sm:$0xff]
    %v1330 = vld [vmem:[#allocation10 + $0x218] sm:$0xff]
    %v1331 = vld [vmem:[#allocation10 + $0x220] sm:$0xff]
    %v1332 = vld [vmem:[#allocation10 + $0x228] sm:$0xff]
    %v1333 = vld [vmem:[#allocation10 + $0x230] sm:$0xff]
    %v1334 = vld [vmem:[#allocation10 + $0x238] sm:$0xff]
    %v1335 = vld [vmem:[#allocation10 + $0x240] sm:$0xff]
    %v1336 = vld [vmem:[#allocation10 + $0x248] sm:$0xff]
    %v1337 = vld [vmem:[#allocation10 + $0x250] sm:$0xff]
    %v1338 = vld [vmem:[#allocation10 + $0x258] sm:$0xff]
    %v1339 = vld [vmem:[#allocation10 + $0x260] sm:$0xff]
    %v1340 = vld [vmem:[#allocation10 + $0x268] sm:$0xff]
    %v1341 = vld [vmem:[#allocation10 + $0x270] sm:$0xff]
    %v1342 = vld [vmem:[#allocation10 + $0x278] sm:$0xff]
    %v1343 = vld [vmem:[#allocation10 + $0x280] sm:$0xff]
    %v1344 = vld [vmem:[#allocation10 + $0x288] sm:$0xff]
    %v1345 = vld [vmem:[#allocation10 + $0x290] sm:$0xff]
    %v1346 = vld [vmem:[#allocation10 + $0x298] sm:$0xff]
    %v1347 = vld [vmem:[#allocation10 + $0x2a0] sm:$0xff]
    %v1348 = vld [vmem:[#allocation10 + $0x2a8] sm:$0xff]
    %v1349 = vld [vmem:[#allocation10 + $0x2b0] sm:$0xff]
    %v1350 = vld [vmem:[#allocation10 + $0x2b8] sm:$0xff]
    %v1351 = vld [vmem:[#allocation10 + $0x2c0] sm:$0xff]
    %v1352 = vld [vmem:[#allocation10 + $0x2c8] sm:$0xff]
    %v1353 = vld [vmem:[#allocation10 + $0x2d0] sm:$0xff]
    %v1354 = vld [vmem:[#allocation10 + $0x2d8] sm:$0xff]
    %v1355 = vld [vmem:[#allocation10 + $0x2e0] sm:$0xff]
    %v1356 = vld [vmem:[#allocation10 + $0x2e8] sm:$0xff]
    %v1357 = vld [vmem:[#allocation10 + $0x2f0] sm:$0xff]
    %v1358 = vld [vmem:[#allocation10 + $0x2f8] sm:$0xff]
    %v1359 = vld [vmem:[#allocation10 + $0x300] sm:$0xff]
    %v1360 = vld [vmem:[#allocation10 + $0x308] sm:$0xff]
    %v1361 = vld [vmem:[#allocation10 + $0x310] sm:$0xff]
    %v1362 = vld [vmem:[#allocation10 + $0x318] sm:$0xff]
    %v1363 = vld [vmem:[#allocation10 + $0x320] sm:$0xff]
    %v1364 = vld [vmem:[#allocation10 + $0x328] sm:$0xff]
    %v1365 = vld [vmem:[#allocation10 + $0x330] sm:$0xff]
    %v1366 = vld [vmem:[#allocation10 + $0x338] sm:$0xff]
    %v1367 = vld [vmem:[#allocation10 + $0x340] sm:$0xff]
    %v1368 = vld [vmem:[#allocation10 + $0x348] sm:$0xff]
    %v1369 = vld [vmem:[#allocation10 + $0x350] sm:$0xff]
    %v1370 = vld [vmem:[#allocation10 + $0x358] sm:$0xff]
    %v1371 = vld [vmem:[#allocation10 + $0x360] sm:$0xff]
    %v1372 = vld [vmem:[#allocation10 + $0x368] sm:$0xff]
    %v1373 = vld [vmem:[#allocation10 + $0x370] sm:$0xff]
    %v1374 = vld [vmem:[#allocation10 + $0x378] sm:$0xff]
    %v1375 = vld [vmem:[#allocation10 + $0x380] sm:$0xff]
    %v1376 = vld [vmem:[#allocation10 + $0x388] sm:$0xff]
    %v1377 = vld [vmem:[#allocation10 + $0x390] sm:$0xff]
    %v1378 = vld [vmem:[#allocation10 + $0x398] sm:$0xff]
    %v1379 = vld [vmem:[#allocation10 + $0x3a0] sm:$0xff]
    %v1380 = vld [vmem:[#allocation10 + $0x3a8] sm:$0xff]
    %v1381 = vld [vmem:[#allocation10 + $0x3b0] sm:$0xff]
    %v1382 = vld [vmem:[#allocation10 + $0x3b8] sm:$0xff]
    %v1383 = vld [vmem:[#allocation10 + $0x3c0] sm:$0xff]
    %v1384 = vld [vmem:[#allocation10 + $0x3c8] sm:$0xff]
    %v1385 = vld [vmem:[#allocation10 + $0x3d0] sm:$0xff]
    %v1386 = vld [vmem:[#allocation10 + $0x3d8] sm:$0xff]
    %v1387 = vld [vmem:[#allocation10 + $0x3e0] sm:$0xff]
    %v1388 = vld [vmem:[#allocation10 + $0x3e8] sm:$0xff]
    %v1389 = vld [vmem:[#allocation10 + $0x3f0] sm:$0xff]
    %v1390 = vld [vmem:[#allocation10 + $0x3f8] sm:$0xff]
    %v1391 = vld [vmem:[#allocation10 + $0x400] sm:$0xff]
    %v1392 = vld [vmem:[#allocation10 + $0x408] sm:$0xff]
    %v1393 = vld [vmem:[#allocation10 + $0x410] sm:$0xff]
    %v1394 = vld [vmem:[#allocation10 + $0x418] sm:$0xff]
    %v1395 = vld [vmem:[#allocation10 + $0x420] sm:$0xff]
    %v1396 = vld [vmem:[#allocation10 + $0x428] sm:$0xff]
    %v1397 = vld [vmem:[#allocation10 + $0x430] sm:$0xff]
    %v1398 = vld [vmem:[#allocation10 + $0x438] sm:$0xff]
    %v1399 = vld [vmem:[#allocation10 + $0x440] sm:$0xff]
    %v1400 = vld [vmem:[#allocation10 + $0x448] sm:$0xff]
    %v1401 = vld [vmem:[#allocation10 + $0x450] sm:$0xff]
    %v1402 = vld [vmem:[#allocation10 + $0x458] sm:$0xff]
    %v1403 = vld [vmem:[#allocation10 + $0x460] sm:$0xff]
    %v1404 = vld [vmem:[#allocation10 + $0x468] sm:$0xff]
    %v1405 = vld [vmem:[#allocation10 + $0x470] sm:$0xff]
    %v1406 = vld [vmem:[#allocation10 + $0x478] sm:$0xff]
    %v1407 = vld [vmem:[#allocation10 + $0x480] sm:$0xff]
    %v1408 = vld [vmem:[#allocation10 + $0x488] sm:$0xff]
    %v1409 = vld [vmem:[#allocation10 + $0x490] sm:$0xff]
    %v1410 = vld [vmem:[#allocation10 + $0x498] sm:$0xff]
    %v1411 = vld [vmem:[#allocation10 + $0x4a0] sm:$0xff]
    %v1412 = vld [vmem:[#allocation10 + $0x4a8] sm:$0xff]
    %v1413 = vld [vmem:[#allocation10 + $0x4b0] sm:$0xff]
    %v1414 = vld [vmem:[#allocation10 + $0x4b8] sm:$0xff]
    %v1415 = vld [vmem:[#allocation10 + $0x4c0] sm:$0xff]
    %v1416 = vld [vmem:[#allocation10 + $0x4c8] sm:$0xff]
    %v1417 = vld [vmem:[#allocation10 + $0x4d0] sm:$0xff]
    %v1418 = vld [vmem:[#allocation10 + $0x4d8] sm:$0xff]
    %v1419 = vld [vmem:[#allocation10 + $0x4e0] sm:$0xff]
    %v1420 = vld [vmem:[#allocation10 + $0x4e8] sm:$0xff]
    %v1421 = vld [vmem:[#allocation10 + $0x4f0] sm:$0xff]
    %v1422 = vld [vmem:[#allocation10 + $0x4f8] sm:$0xff]
    %v1423 = vld [vmem:[#allocation10 + $0x500] sm:$0xff]
    %v1424 = vld [vmem:[#allocation10 + $0x508] sm:$0xff]
    %v1425 = vld [vmem:[#allocation10 + $0x510] sm:$0xff]
    %v1426 = vld [vmem:[#allocation10 + $0x518] sm:$0xff]
    %v1427 = vld [vmem:[#allocation10 + $0x520] sm:$0xff]
    %v1428 = vld [vmem:[#allocation10 + $0x528] sm:$0xff]
    %v1429 = vld [vmem:[#allocation10 + $0x530] sm:$0xff]
    %v1430 = vld [vmem:[#allocation10 + $0x538] sm:$0xff]
    %v1431 = vld [vmem:[#allocation10 + $0x540] sm:$0xff]
    %v1432 = vld [vmem:[#allocation10 + $0x548] sm:$0xff]
    %v1433 = vld [vmem:[#allocation10 + $0x550] sm:$0xff]
    %v1434 = vld [vmem:[#allocation10 + $0x558] sm:$0xff]
    %v1435 = vld [vmem:[#allocation10 + $0x560] sm:$0xff]
    %v1436 = vld [vmem:[#allocation10 + $0x568] sm:$0xff]
    %v1437 = vld [vmem:[#allocation10 + $0x570] sm:$0xff]
    %v1438 = vld [vmem:[#allocation10 + $0x578] sm:$0xff]
    %v1439 = vld [vmem:[#allocation10 + $0x580] sm:$0xff]
    %v1440 = vld [vmem:[#allocation10 + $0x588] sm:$0xff]
    %v1441 = vld [vmem:[#allocation10 + $0x590] sm:$0xff]
    %v1442 = vld [vmem:[#allocation10 + $0x598] sm:$0xff]
    %v1443 = vld [vmem:[#allocation10 + $0x5a0] sm:$0xff]
    %v1444 = vld [vmem:[#allocation10 + $0x5a8] sm:$0xff]
    %v1445 = vld [vmem:[#allocation10 + $0x5b0] sm:$0xff]
    %v1446 = vld [vmem:[#allocation10 + $0x5b8] sm:$0xff]
    %v1447 = vld [vmem:[#allocation10 + $0x5c0] sm:$0xff]
    %v1448 = vld [vmem:[#allocation10 + $0x5c8] sm:$0xff]
    %v1449 = vld [vmem:[#allocation10 + $0x5d0] sm:$0xff]
    %v1450 = vld [vmem:[#allocation10 + $0x5d8] sm:$0xff]
    %v1451 = vld [vmem:[#allocation10 + $0x5e0] sm:$0xff]
    %v1452 = vld [vmem:[#allocation10 + $0x5e8] sm:$0xff]
    %v1453 = vld [vmem:[#allocation10 + $0x5f0] sm:$0xff]
    %v1454 = vld [vmem:[#allocation10 + $0x5f8] sm:$0xff]
    %v1455 = vld [vmem:[#allocation9] sm:$0xff]
    %v1456 = vld [vmem:[#allocation9 + $0x8] sm:$0xff]
    %v1457 = vld [vmem:[#allocation9 + $0x10] sm:$0xff]
    %v1458 = vld [vmem:[#allocation9 + $0x18] sm:$0xff]
    %v1459 = vld [vmem:[#allocation9 + $0x20] sm:$0xff]
    %v1460 = vld [vmem:[#allocation9 + $0x28] sm:$0xff]
    %1461 = vmatprep.subr.mxu0 %v1264
    %1462 = vmatpush1.msra.mxu0 %v1263
    %1463 = vmatprep.subr.mxu0 %v1267
    %1464 = vmatpush1.msra.mxu0 %v1266
    %1465 = vmatprep.subr.mxu0 %v1270
    %1466 = vmatpush1.msra.mxu0 %v1269
    %1467 = vmatprep.subr.mxu0 %v1273
    %1468 = vmatpush1.msra.mxu0 %v1272
    %1469 = vmatprep.subr.mxu0 %v1276
    %1470 = vmatpush1.msra.mxu0 %v1275
    %1471 = vmatprep.subr.mxu0 %v1279
    %1472 = vmatpush1.msra.mxu0 %v1278
    %1473 = vmatprep.subr.mxu0 %v1282
    %1474 = vmatpush1.msra.mxu0 %v1281
    %1475 = vmatprep.subr.mxu0 %v1285
    %1476 = vmatpush1.msra.mxu0 %v1284
    %1477 = vmatprep.subr.mxu0 %v1288
    %1478 = vmatpush1.msra.mxu0 %v1287
    %1479 = vmatprep.subr.mxu0 %v1291
    %1480 = vmatpush1.msra.mxu0 %v1290
    %1481 = vmatprep.subr.mxu0 %v1294
    %1482 = vmatpush1.msra.mxu0 %v1293
    %1483 = vmatprep.subr.mxu0 %v1297
    %1484 = vmatpush1.msra.mxu0 %v1296
    %1485 = vmatprep.subr.mxu0 %v1300
    %1486 = vmatpush1.msra.mxu0 %v1299
    %1487 = vmatprep.subr.mxu0 %v1303
    %1488 = vmatpush1.msra.mxu0 %v1302
    %1489 = vmatprep.subr.mxu0 %v1306
    %1490 = vmatpush1.msra.mxu0 %v1305
    %1491 = vmatprep.subr.mxu0 %v1309
    %1492 = vmatpush1.msra.mxu0 %v1308
    %1493 = vmatprep.subr.mxu0 %v1312
    %1494 = vmatpush1.msra.mxu0 %v1311
    %1495 = vmatprep.subr.mxu0 %v1315
    %1496 = vmatpush1.msra.mxu0 %v1314
    %1497 = vmatprep.subr.mxu0 %v1318
    %1498 = vmatpush1.msra.mxu0 %v1317
    %1499 = vmatprep.subr.mxu0 %v1321
    %1500 = vmatpush1.msra.mxu0 %v1320
    %1501 = vmatprep.subr.mxu0 %v1324
    %1502 = vmatpush1.msra.mxu0 %v1323
    %1503 = vmatprep.subr.mxu0 %v1327
    %1504 = vmatpush1.msra.mxu0 %v1326
    %1505 = vmatprep.subr.mxu0 %v1330
    %1506 = vmatpush1.msra.mxu0 %v1329
    %1507 = vmatprep.subr.mxu0 %v1333
    %1508 = vmatpush1.msra.mxu0 %v1332
    %1509 = vmatprep.subr.mxu0 %v1336
    %1510 = vmatpush1.msra.mxu0 %v1335
    %1511 = vmatprep.subr.mxu0 %v1339
    %1512 = vmatpush1.msra.mxu0 %v1338
    %1513 = vmatprep.subr.mxu0 %v1342
    %1514 = vmatpush1.msra.mxu0 %v1341
    %1515 = vmatprep.subr.mxu0 %v1345
    %1516 = vmatpush1.msra.mxu0 %v1344
    %1517 = vmatprep.subr.mxu0 %v1348
    %1518 = vmatpush1.msra.mxu0 %v1347
    %1519 = vmatprep.subr.mxu0 %v1351
    %1520 = vmatpush1.msra.mxu0 %v1350
    %1521 = vmatprep.subr.mxu0 %v1354
    %1522 = vmatpush1.msra.mxu0 %v1353
    %1523 = vmatprep.subr.mxu0 %v1357
    %1524 = vmatpush1.msra.mxu0 %v1356
    %1525 = vmatprep.mubr.f32.mxu0 %v1256
    %1526 = vmatmul.mubr.f32.gmra.mrb[0].mxu0 %v1255
    %v1527 = vpop.f32.mrb[0].mxu0
    %v1528 = vadd.f32 %v1455, %v1527
    %v1529 = vpop.f32.mrb[0].mxu0
    %v1530 = vadd.f32 %v1456, %v1529
    %1531 = vmatprep.mubr.f32.mxu0 %v1260
    %1532 = vmatmul.mubr.f32.gmra.mrb[0].mxu0 %v1259
    %v1533 = vpop.f32.mrb[0].mxu0
    %v1534 = vadd.f32 %v1458, %v1533
    %v1535 = vpop.f32.mrb[0].mxu0
    %v1536 = vadd.f32 %v1459, %v1535
    %1537 = vdwg.mxu0
    %1538 = vmatprep.subr.mxu0 %v1360
    %1539 = vmatpush1.msra.mxu0 %v1359
    %1540 = vmatprep.subr.mxu0 %v1363
    %1541 = vmatpush1.msra.mxu0 %v1362
    %1542 = vmatprep.subr.mxu0 %v1366
    %1543 = vmatpush1.msra.mxu0 %v1365
    %1544 = vmatprep.subr.mxu0 %v1369
    %1545 = vmatpush1.msra.mxu0 %v1368
    %1546 = vmatprep.subr.mxu0 %v1372
    %1547 = vmatpush1.msra.mxu0 %v1371
    %1548 = vmatprep.subr.mxu0 %v1375
    %1549 = vmatpush1.msra.mxu0 %v1374
    %1550 = vmatprep.subr.mxu0 %v1378
    %1551 = vmatpush1.msra.mxu0 %v1377
    %1552 = vmatprep.subr.mxu0 %v1381
    %1553 = vmatpush1.msra.mxu0 %v1380
    %1554 = vmatprep.subr.mxu0 %v1384
    %1555 = vmatpush1.msra.mxu0 %v1383
    %1556 = vmatprep.subr.mxu0 %v1387
    %1557 = vmatpush1.msra.mxu0 %v1386
    %1558 = vmatprep.subr.mxu0 %v1390
    %1559 = vmatpush1.msra.mxu0 %v1389
    %1560 = vmatprep.subr.mxu0 %v1393
    %1561 = vmatpush1.msra.mxu0 %v1392
    %1562 = vmatprep.subr.mxu0 %v1396
    %1563 = vmatpush1.msra.mxu0 %v1395
    %1564 = vmatprep.subr.mxu0 %v1399
    %1565 = vmatpush1.msra.mxu0 %v1398
    %1566 = vmatprep.subr.mxu0 %v1402
    %1567 = vmatpush1.msra.mxu0 %v1401
    %1568 = vmatprep.subr.mxu0 %v1405
    %1569 = vmatpush1.msra.mxu0 %v1404
    %1570 = vmatprep.subr.mxu0 %v1408
    %1571 = vmatpush1.msra.mxu0 %v1407
    %1572 = vmatprep.subr.mxu0 %v1411
    %1573 = vmatpush1.msra.mxu0 %v1410
    %1574 = vmatprep.subr.mxu0 %v1414
    %1575 = vmatpush1.msra.mxu0 %v1413
    %1576 = vmatprep.subr.mxu0 %v1417
    %1577 = vmatpush1.msra.mxu0 %v1416
    %1578 = vmatprep.subr.mxu0 %v1420
    %1579 = vmatpush1.msra.mxu0 %v1419
    %1580 = vmatprep.subr.mxu0 %v1423
    %1581 = vmatpush1.msra.mxu0 %v1422
    %1582 = vmatprep.subr.mxu0 %v1426
    %1583 = vmatpush1.msra.mxu0 %v1425
    %1584 = vmatprep.subr.mxu0 %v1429
    %1585 = vmatpush1.msra.mxu0 %v1428
    %1586 = vmatprep.subr.mxu0 %v1432
    %1587 = vmatpush1.msra.mxu0 %v1431
    %1588 = vmatprep.subr.mxu0 %v1435
    %1589 = vmatpush1.msra.mxu0 %v1434
    %1590 = vmatprep.subr.mxu0 %v1438
    %1591 = vmatpush1.msra.mxu0 %v1437
    %1592 = vmatprep.subr.mxu0 %v1441
    %1593 = vmatpush1.msra.mxu0 %v1440
    %1594 = vmatprep.subr.mxu0 %v1444
    %1595 = vmatpush1.msra.mxu0 %v1443
    %1596 = vmatprep.subr.mxu0 %v1447
    %1597 = vmatpush1.msra.mxu0 %v1446
    %1598 = vmatprep.subr.mxu0 %v1450
    %1599 = vmatpush1.msra.mxu0 %v1449
    %1600 = vmatprep.subr.mxu0 %v1453
    %1601 = vmatpush1.msra.mxu0 %v1452
    %1602 = vmatprep.mubr.f32.mxu0 %v1258
    %1603 = vmatmul.mubr.f32.gmra.mrb[0].mxu0 %v1257
    %v1604 = vpop.f32.mrb[0].mxu0
    %v1605 = vadd.f32 %v1528, %v1604
    %v1606 = vpop.f32.mrb[0].mxu0
    %v1607 = vadd.f32 %v1530, %v1606
    %1608 = vmatprep.mubr.f32.mxu0 %v1262
    %1609 = vmatmul.mubr.f32.gmra.mrb[0].mxu0 %v1261
    %v1610 = vpop.f32.mrb[0].mxu0
    %v1611 = vadd.f32 %v1534, %v1610
    %v1612 = vpop.f32.mrb[0].mxu0
    %v1613 = vadd.f32 %v1536, %v1612
    %1614 = vdwg.mxu0
    %1615 = vmatprep.subr.mxu0 0.0
    %1616 = vmatpush1.msra.mxu0 %v1265
    %1617 = vmatprep.subr.mxu0 0.0
    %1618 = vmatpush1.msra.mxu0 %v1268
    %1619 = vmatprep.subr.mxu0 0.0
    %1620 = vmatpush1.msra.mxu0 %v1271
    %1621 = vmatprep.subr.mxu0 0.0
    %1622 = vmatpush1.msra.mxu0 %v1274
    %1623 = vmatprep.subr.mxu0 0.0
    %1624 = vmatpush1.msra.mxu0 %v1277
    %1625 = vmatprep.subr.mxu0 0.0
    %1626 = vmatpush1.msra.mxu0 %v1280
    %1627 = vmatprep.subr.mxu0 0.0
    %1628 = vmatpush1.msra.mxu0 %v1283
    %1629 = vmatprep.subr.mxu0 0.0
    %1630 = vmatpush1.msra.mxu0 %v1286
    %1631 = vmatprep.subr.mxu0 0.0
    %1632 = vmatpush1.msra.mxu0 %v1289
    %1633 = vmatprep.subr.mxu0 0.0
    %1634 = vmatpush1.msra.mxu0 %v1292
    %1635 = vmatprep.subr.mxu0 0.0
    %1636 = vmatpush1.msra.mxu0 %v1295
    %1637 = vmatprep.subr.mxu0 0.0
    %1638 = vmatpush1.msra.mxu0 %v1298
    %1639 = vmatprep.subr.mxu0 0.0
    %1640 = vmatpush1.msra.mxu0 %v1301
    %1641 = vmatprep.subr.mxu0 0.0
    %1642 = vmatpush1.msra.mxu0 %v1304
    %1643 = vmatprep.subr.mxu0 0.0
    %1644 = vmatpush1.msra.mxu0 %v1307
    %1645 = vmatprep.subr.mxu0 0.0
    %1646 = vmatpush1.msra.mxu0 %v1310
    %1647 = vmatprep.subr.mxu0 0.0
    %1648 = vmatpush1.msra.mxu0 %v1313
    %1649 = vmatprep.subr.mxu0 0.0
    %1650 = vmatpush1.msra.mxu0 %v1316
    %1651 = vmatprep.subr.mxu0 0.0
    %1652 = vmatpush1.msra.mxu0 %v1319
    %1653 = vmatprep.subr.mxu0 0.0
    %1654 = vmatpush1.msra.mxu0 %v1322
    %1655 = vmatprep.subr.mxu0 0.0
    %1656 = vmatpush1.msra.mxu0 %v1325
    %1657 = vmatprep.subr.mxu0 0.0
    %1658 = vmatpush1.msra.mxu0 %v1328
    %1659 = vmatprep.subr.mxu0 0.0
    %1660 = vmatpush1.msra.mxu0 %v1331
    %1661 = vmatprep.subr.mxu0 0.0
    %1662 = vmatpush1.msra.mxu0 %v1334
    %1663 = vmatprep.subr.mxu0 0.0
    %1664 = vmatpush1.msra.mxu0 %v1337
    %1665 = vmatprep.subr.mxu0 0.0
    %1666 = vmatpush1.msra.mxu0 %v1340
    %1667 = vmatprep.subr.mxu0 0.0
    %1668 = vmatpush1.msra.mxu0 %v1343
    %1669 = vmatprep.subr.mxu0 0.0
    %1670 = vmatpush1.msra.mxu0 %v1346
    %1671 = vmatprep.subr.mxu0 0.0
    %1672 = vmatpush1.msra.mxu0 %v1349
    %1673 = vmatprep.subr.mxu0 0.0
    %1674 = vmatpush1.msra.mxu0 %v1352
    %1675 = vmatprep.subr.mxu0 0.0
    %1676 = vmatpush1.msra.mxu0 %v1355
    %1677 = vmatprep.subr.mxu0 0.0
    %1678 = vmatpush1.msra.mxu0 %v1358
    %1679 = vmatprep.mubr.f32.mxu0 %v1256
    %1680 = vmatmul.mubr.f32.gmra.mrb[0].mxu0 %v1255
    %v1681 = vpop.f32.mrb[0].mxu0
    %v1682 = vadd.f32 %v1457, %v1681
    %v1683 = vpop.f32.mrb[0].mxu0
    %1684 = vmatprep.mubr.f32.mxu0 %v1260
    %1685 = vmatmul.mubr.f32.gmra.mrb[0].mxu0 %v1259
    %v1686 = vpop.f32.mrb[0].mxu0
    %v1687 = vadd.f32 %v1460, %v1686
    %v1688 = vpop.f32.mrb[0].mxu0
    %1689 = vdwg.mxu0
    %1690 = vmatprep.subr.mxu0 0.0
    %1691 = vmatpush1.msra.mxu0 %v1361
    %1692 = vmatprep.subr.mxu0 0.0
    %1693 = vmatpush1.msra.mxu0 %v1364
    %1694 = vmatprep.subr.mxu0 0.0
    %1695 = vmatpush1.msra.mxu0 %v1367
    %1696 = vmatprep.subr.mxu0 0.0
    %1697 = vmatpush1.msra.mxu0 %v1370
    %1698 = vmatprep.subr.mxu0 0.0
    %1699 = vmatpush1.msra.mxu0 %v1373
    %1700 = vmatprep.subr.mxu0 0.0
    %1701 = vmatpush1.msra.mxu0 %v1376
    %1702 = vmatprep.subr.mxu0 0.0
    %1703 = vmatpush1.msra.mxu0 %v1379
    %1704 = vmatprep.subr.mxu0 0.0
    %1705 = vmatpush1.msra.mxu0 %v1382
    %1706 = vmatprep.subr.mxu0 0.0
    %1707 = vmatpush1.msra.mxu0 %v1385
    %1708 = vmatprep.subr.mxu0 0.0
    %1709 = vmatpush1.msra.mxu0 %v1388
    %1710 = vmatprep.subr.mxu0 0.0
    %1711 = vmatpush1.msra.mxu0 %v1391
    %1712 = vmatprep.subr.mxu0 0.0
    %1713 = vmatpush1.msra.mxu0 %v1394
    %1714 = vmatprep.subr.mxu0 0.0
    %1715 = vmatpush1.msra.mxu0 %v1397
    %1716 = vmatprep.subr.mxu0 0.0
    %1717 = vmatpush1.msra.mxu0 %v1400
    %1718 = vmatprep.subr.mxu0 0.0
    %1719 = vmatpush1.msra.mxu0 %v1403
    %1720 = vmatprep.subr.mxu0 0.0
    %1721 = vmatpush1.msra.mxu0 %v1406
    %1722 = vmatprep.subr.mxu0 0.0
    %1723 = vmatpush1.msra.mxu0 %v1409
    %1724 = vmatprep.subr.mxu0 0.0
    %1725 = vmatpush1.msra.mxu0 %v1412
    %1726 = vmatprep.subr.mxu0 0.0
    %1727 = vmatpush1.msra.mxu0 %v1415
    %1728 = vmatprep.subr.mxu0 0.0
    %1729 = vmatpush1.msra.mxu0 %v1418
    %1730 = vmatprep.subr.mxu0 0.0
    %1731 = vmatpush1.msra.mxu0 %v1421
    %1732 = vmatprep.subr.mxu0 0.0
    %1733 = vmatpush1.msra.mxu0 %v1424
    %1734 = vmatprep.subr.mxu0 0.0
    %1735 = vmatpush1.msra.mxu0 %v1427
    %1736 = vmatprep.subr.mxu0 0.0
    %1737 = vmatpush1.msra.mxu0 %v1430
    %1738 = vmatprep.subr.mxu0 0.0
    %1739 = vmatpush1.msra.mxu0 %v1433
    %1740 = vmatprep.subr.mxu0 0.0
    %1741 = vmatpush1.msra.mxu0 %v1436
    %1742 = vmatprep.subr.mxu0 0.0
    %1743 = vmatpush1.msra.mxu0 %v1439
    %1744 = vmatprep.subr.mxu0 0.0
    %1745 = vmatpush1.msra.mxu0 %v1442
    %1746 = vmatprep.subr.mxu0 0.0
    %1747 = vmatpush1.msra.mxu0 %v1445
    %1748 = vmatprep.subr.mxu0 0.0
    %1749 = vmatpush1.msra.mxu0 %v1448
    %1750 = vmatprep.subr.mxu0 0.0
    %1751 = vmatpush1.msra.mxu0 %v1451
    %1752 = vmatprep.subr.mxu0 0.0
    %1753 = vmatpush1.msra.mxu0 %v1454
    %1754 = vmatprep.mubr.f32.mxu0 %v1258
    %1755 = vmatmul.mubr.f32.gmra.mrb[0].mxu0 %v1257
    %v1756 = vpop.f32.mrb[0].mxu0
    %v1757 = vadd.f32 %v1682, %v1756
    %v1758 = vpop.f32.mrb[0].mxu0
    %1759 = vmatprep.mubr.f32.mxu0 %v1262
    %1760 = vmatmul.mubr.f32.gmra.mrb[0].mxu0 %v1261
    %v1761 = vpop.f32.mrb[0].mxu0
    %v1762 = vadd.f32 %v1687, %v1761
    %v1763 = vpop.f32.mrb[0].mxu0
    %1764 = vdwg.mxu0
    %v1765 = vxor.u32 %v1605, 2147483648
    %v1766 = vxor.u32 %v1611, 2147483648
    %v1767 = vmul.f32 %v1765, 1.442695
    %v1768 = vpow.pop %v1767
    %v1769 = vmul.f32 %v1766, 1.442695
    %v1770 = vpow.pop %v1769
    %v1771 = vadd.f32 %v1768, 1.0
    %v1772 = vadd.f32 %v1770, 1.0
    %v1773 = vrcp.pop %v1771
    %v1774 = vmul.f32 1.0, %v1773
    %v1775 = vrcp.pop %v1772
    %v1776 = vmul.f32 1.0, %v1775
    %v1777 = vxor.u32 %v1607, 2147483648
    %v1778 = vxor.u32 %v1613, 2147483648
    %v1779 = vmul.f32 %v1777, 1.442695
    %v1780 = vpow.pop %v1779
    %v1781 = vmul.f32 %v1778, 1.442695
    %v1782 = vpow.pop %v1781
    %v1783 = vadd.f32 %v1780, 1.0
    %v1784 = vadd.f32 %v1782, 1.0
    %v1785 = vrcp.pop %v1783
    %v1786 = vmul.f32 1.0, %v1785
    %v1787 = vrcp.pop %v1784
    %v1788 = vmul.f32 1.0, %v1787
    %v1789 = vmul.f32 %v1786, %v996
    %v1790 = vmul.f32 %v1788, %v997
    %v1791 = vld [vmem:[#allocation12] sm:$0xff]
    %v1792 = vld [vmem:[#allocation12 + $0x8] sm:$0xff]
    %v1793 = vld [vmem:[#allocation12 + $0x10] sm:$0xff]
    %v1794 = vld [vmem:[#allocation12 + $0x18] sm:$0xff]
    %v1795 = vld [vmem:[#allocation12 + $0x20] sm:$0xff]
    %v1796 = vld [vmem:[#allocation12 + $0x28] sm:$0xff]
    %v1797 = vld [vmem:[#allocation12 + $0x30] sm:$0xff]
    %v1798 = vld [vmem:[#allocation12 + $0x38] sm:$0xff]
    %v1799 = vld [vmem:[#allocation12 + $0x40] sm:$0xff]
    %v1800 = vld [vmem:[#allocation12 + $0x48] sm:$0xff]
    %v1801 = vld [vmem:[#allocation12 + $0x50] sm:$0xff]
    %v1802 = vld [vmem:[#allocation12 + $0x58] sm:$0xff]
    %v1803 = vld [vmem:[#allocation12 + $0x60] sm:$0xff]
    %v1804 = vld [vmem:[#allocation12 + $0x68] sm:$0xff]
    %v1805 = vld [vmem:[#allocation12 + $0x70] sm:$0xff]
    %v1806 = vld [vmem:[#allocation12 + $0x78] sm:$0xff]
    %1807 = vmatprep.subr.mxu0 0.0
    %1808 = vmatpush1.msra.mxu0 %v1791
    %1809 = vmatprep.subr.mxu0 0.0
    %1810 = vmatpush1.msra.mxu0 %v1792
    %1811 = vmatprep.subr.mxu0 0.0
    %1812 = vmatpush1.msra.mxu0 %v1793
    %1813 = vmatprep.subr.mxu0 0.0
    %1814 = vmatpush1.msra.mxu0 %v1794
    %1815 = vmatprep.subr.mxu0 0.0
    %1816 = vmatpush1.msra.mxu0 %v1795
    %1817 = vmatprep.subr.mxu0 0.0
    %1818 = vmatpush1.msra.mxu0 %v1796
    %1819 = vmatprep.subr.mxu0 0.0
    %1820 = vmatpush1.msra.mxu0 %v1797
    %1821 = vmatprep.subr.mxu0 0.0
    %1822 = vmatpush1.msra.mxu0 %v1798
    %1823 = vmatprep.subr.mxu0 0.0
    %1824 = vmatpush1.msra.mxu0 %v1799
    %1825 = vmatprep.subr.mxu0 0.0
    %1826 = vmatpush1.msra.mxu0 %v1800
    %1827 = vmatprep.subr.mxu0 0.0
    %1828 = vmatpush1.msra.mxu0 %v1801
    %1829 = vmatprep.subr.mxu0 0.0
    %1830 = vmatpush1.msra.mxu0 %v1802
    %1831 = vmatprep.subr.mxu0 0.0
    %1832 = vmatpush1.msra.mxu0 %v1803
    %1833 = vmatprep.subr.mxu0 0.0
    %1834 = vmatpush1.msra.mxu0 %v1804
    %1835 = vmatprep.subr.mxu0 0.0
    %1836 = vmatpush1.msra.mxu0 %v1805
    %1837 = vmatprep.subr.mxu0 0.0
    %1838 = vmatpush1.msra.mxu0 %v1806
    %1839 = vmatprep.subr.mxu0 0.0
    %1840 = vmatpush1.msra.mxu0 0.0
    %1841 = vmatprep.subr.mxu0 0.0
    %1842 = vmatpush1.msra.mxu0 0.0
    %1843 = vmatprep.subr.mxu0 0.0
    %1844 = vmatpush1.msra.mxu0 0.0
    %1845 = vmatprep.subr.mxu0 0.0
    %1846 = vmatpush1.msra.mxu0 0.0
    %1847 = vmatprep.subr.mxu0 0.0
    %1848 = vmatpush1.msra.mxu0 0.0
    %1849 = vmatprep.subr.mxu0 0.0
    %1850 = vmatpush1.msra.mxu0 0.0
    %1851 = vmatprep.subr.mxu0 0.0
    %1852 = vmatpush1.msra.mxu0 0.0
    %1853 = vmatprep.subr.mxu0 0.0
    %1854 = vmatpush1.msra.mxu0 0.0
    %1855 = vmatprep.subr.mxu0 0.0
    %1856 = vmatpush1.msra.mxu0 0.0
    %1857 = vmatprep.subr.mxu0 0.0
    %1858 = vmatpush1.msra.mxu0 0.0
    %1859 = vmatprep.subr.mxu0 0.0
    %1860 = vmatpush1.msra.mxu0 0.0
    %1861 = vmatprep.subr.mxu0 0.0
    %1862 = vmatpush1.msra.mxu0 0.0
    %1863 = vmatprep.subr.mxu0 0.0
    %1864 = vmatpush1.msra.mxu0 0.0
    %1865 = vmatprep.subr.mxu0 0.0
    %1866 = vmatpush1.msra.mxu0 0.0
    %1867 = vmatprep.subr.mxu0 0.0
    %1868 = vmatpush1.msra.mxu0 0.0
    %1869 = vmatprep.subr.mxu0 0.0
    %1870 = vmatpush1.msra.mxu0 0.0
    %1871 = vmatprep.mubr.f32.mxu0 0.0
    %1872 = vmatmul.mubr.f32.gmra.mrb[0].mxu0 %v1789
    %v1873 = vpop.f32.mrb[0].mxu0
    %v1874 = vadd.f32 0.0, %v1873
    %v1875 = vpop.f32.mrb[0].mxu0
    %1876 = vmatprep.mubr.f32.mxu0 0.0
    %1877 = vmatmul.mubr.f32.gmra.mrb[0].mxu0 %v1790
    %v1878 = vpop.f32.mrb[0].mxu0
    %v1879 = vadd.f32 0.0, %v1878
    %v1880 = vpop.f32.mrb[0].mxu0
    %1881 = vdwg.mxu0
    %v1882 = vadd.f32 %v1757, %v1874
    %v1883 = vadd.f32 %v1762, %v1879
    %v1884 = vtanh.pop %v1882
    %v1885 = vtanh.pop %v1883
    %v1886 = vsub.f32 1.0, %v1774
    %v1887 = vsub.f32 1.0, %v1776
    %v1888 = vmul.f32 %v1886, %v996
    %v1889 = vmul.f32 %v1887, %v997
    %v1890 = vmul.f32 %v1774, %v1884
    %v1891 = vmul.f32 %v1776, %v1885
    %v1892 = vadd.f32 %v1888, %v1890
    %v1893 = vadd.f32 %v1889, %v1891
    %1894 = vst [vmem:[#allocation2] sm:$0xff] %v1892
    %1895 = vst [vmem:[#allocation2 + $0x8] sm:$0xff] %v1893
    %v1896 = vld [vmem:[#allocation2] sm:$0xff]
    %v1897 = vld [vmem:[#allocation2 + $0x8] sm:$0xff]
    %v1898 = vld [vmem:[#allocation4] sm:$0xff]
    %v1899 = vld [vmem:[#allocation4 + $0x8] sm:$0xff]
    %v1901 = vsel %vm97, %v1898, 0
    %v1904 = vsel %vm97, %v1899, 0
    %1906 = vmatprep.subr.mxu0 0.0
    %1907 = vmatpush1.msra.mxu0 %v1896
    %1908 = vmatprep.subr.mxu0 0.0
    %1909 = vmatpush1.msra.mxu0 %v1897
    %1910 = vmatprep.subr.mxu0 0.0
    %1911 = vmatpush1.msra.mxu0 0.0
    %1912 = vmatprep.subr.mxu0 0.0
    %1913 = vmatpush1.msra.mxu0 0.0
    %1914 = vmatprep.subr.mxu0 0.0
    %1915 = vmatpush1.msra.mxu0 0.0
    %1916 = vmatprep.subr.mxu0 0.0
    %1917 = vmatpush1.msra.mxu0 0.0
    %1918 = vmatprep.subr.mxu0 0.0
    %1919 = vmatpush1.msra.mxu0 0.0
    %1920 = vmatprep.subr.mxu0 0.0
    %1921 = vmatpush1.msra.mxu0 0.0
    %1922 = vmatprep.subr.mxu0 0.0
    %1923 = vmatpush1.msra.mxu0 0.0
    %1924 = vmatprep.subr.mxu0 0.0
    %1925 = vmatpush1.msra.mxu0 0.0
    %1926 = vmatprep.subr.mxu0 0.0
    %1927 = vmatpush1.msra.mxu0 0.0
    %1928 = vmatprep.subr.mxu0 0.0
    %1929 = vmatpush1.msra.mxu0 0.0
    %1930 = vmatprep.subr.mxu0 0.0
    %1931 = vmatpush1.msra.mxu0 0.0
    %1932 = vmatprep.subr.mxu0 0.0
    %1933 = vmatpush1.msra.mxu0 0.0
    %1934 = vmatprep.subr.mxu0 0.0
    %1935 = vmatpush1.msra.mxu0 0.0
    %1936 = vmatprep.subr.mxu0 0.0
    %1937 = vmatpush1.msra.mxu0 0.0
    %1938 = vmatprep.subr.mxu0 0.0
    %1939 = vmatpush1.msra.mxu0 0.0
    %1940 = vmatprep.subr.mxu0 0.0
    %1941 = vmatpush1.msra.mxu0 0.0
    %1942 = vmatprep.subr.mxu0 0.0
    %1943 = vmatpush1.msra.mxu0 0.0
    %1944 = vmatprep.subr.mxu0 0.0
    %1945 = vmatpush1.msra.mxu0 0.0
    %1946 = vmatprep.subr.mxu0 0.0
    %1947 = vmatpush1.msra.mxu0 0.0
    %1948 = vmatprep.subr.mxu0 0.0
    %1949 = vmatpush1.msra.mxu0 0.0
    %1950 = vmatprep.subr.mxu0 0.0
    %1951 = vmatpush1.msra.mxu0 0.0
    %1952 = vmatprep.subr.mxu0 0.0
    %1953 = vmatpush1.msra.mxu0 0.0
    %1954 = vmatprep.subr.mxu0 0.0
    %1955 = vmatpush1.msra.mxu0 0.0
    %1956 = vmatprep.subr.mxu0 0.0
    %1957 = vmatpush1.msra.mxu0 0.0
    %1958 = vmatprep.subr.mxu0 0.0
    %1959 = vmatpush1.msra.mxu0 0.0
    %1960 = vmatprep.subr.mxu0 0.0
    %1961 = vmatpush1.msra.mxu0 0.0
    %1962 = vmatprep.subr.mxu0 0.0
    %1963 = vmatpush1.msra.mxu0 0.0
    %1964 = vmatprep.subr.mxu0 0.0
    %1965 = vmatpush1.msra.mxu0 0.0
    %1966 = vmatprep.subr.mxu0 0.0
    %1967 = vmatpush1.msra.mxu0 0.0
    %1968 = vmatprep.subr.mxu0 0.0
    %1969 = vmatpush1.msra.mxu0 0.0
    %1970 = vmatprep.mubr.f32.mxu0 0.0
    %1971 = vmatmul.mubr.f32.gmra.mrb[0].mxu0 %v1901
    %v1972 = vpop.f32.mrb[0].mxu0
    %v1973 = vadd.f32 0.0, %v1972
    %v1974 = vpop.f32.mrb[0].mxu0
    %1975 = vmatprep.mubr.f32.mxu0 0.0
    %1976 = vmatmul.mubr.f32.gmra.mrb[0].mxu0 %v1904
    %v1977 = vpop.f32.mrb[0].mxu0
    %v1978 = vadd.f32 0.0, %v1977
    %v1979 = vpop.f32.mrb[0].mxu0
    %1980 = vdwg.mxu0
    %1981 = vst [vmem:[#allocation3] sm:$0xff] %v1973
    %1982 = vst [vmem:[#allocation3 + $0x20] sm:$0xff] %v1978
    %v1983 = vld [vmem:[%s181] sm:$0xff]
    %v1984 = vld [vmem:[%s181 + $0x8] sm:$0xff]
    %v1986 = vsel %vm97, %v1983, 0
    %v1989 = vsel %vm97, %v1984, 0
    %1991 = vmatprep.subr.mxu0 0.0
    %1992 = vmatpush1.msra.mxu0 %v1896
    %1993 = vmatprep.subr.mxu0 0.0
    %1994 = vmatpush1.msra.mxu0 %v1897
    %1995 = vmatprep.subr.mxu0 0.0
    %1996 = vmatpush1.msra.mxu0 0.0
    %1997 = vmatprep.subr.mxu0 0.0
    %1998 = vmatpush1.msra.mxu0 0.0
    %1999 = vmatprep.subr.mxu0 0.0
    %2000 = vmatpush1.msra.mxu0 0.0
    %2001 = vmatprep.subr.mxu0 0.0
    %2002 = vmatpush1.msra.mxu0 0.0
    %2003 = vmatprep.subr.mxu0 0.0
    %2004 = vmatpush1.msra.mxu0 0.0
    %2005 = vmatprep.subr.mxu0 0.0
    %2006 = vmatpush1.msra.mxu0 0.0
    %2007 = vmatprep.subr.mxu0 0.0
    %2008 = vmatpush1.msra.mxu0 0.0
    %2009 = vmatprep.subr.mxu0 0.0
    %2010 = vmatpush1.msra.mxu0 0.0
    %2011 = vmatprep.subr.mxu0 0.0
    %2012 = vmatpush1.msra.mxu0 0.0
    %2013 = vmatprep.subr.mxu0 0.0
    %2014 = vmatpush1.msra.mxu0 0.0
    %2015 = vmatprep.subr.mxu0 0.0
    %2016 = vmatpush1.msra.mxu0 0.0
    %2017 = vmatprep.subr.mxu0 0.0
    %2018 = vmatpush1.msra.mxu0 0.0
    %2019 = vmatprep.subr.mxu0 0.0
    %2020 = vmatpush1.msra.mxu0 0.0
    %2021 = vmatprep.subr.mxu0 0.0
    %2022 = vmatpush1.msra.mxu0 0.0
    %2023 = vmatprep.subr.mxu0 0.0
    %2024 = vmatpush1.msra.mxu0 0.0
    %2025 = vmatprep.subr.mxu0 0.0
    %2026 = vmatpush1.msra.mxu0 0.0
    %2027 = vmatprep.subr.mxu0 0.0
    %2028 = vmatpush1.msra.mxu0 0.0
    %2029 = vmatprep.subr.mxu0 0.0
    %2030 = vmatpush1.msra.mxu0 0.0
    %2031 = vmatprep.subr.mxu0 0.0
    %2032 = vmatpush1.msra.mxu0 0.0
    %2033 = vmatprep.subr.mxu0 0.0
    %2034 = vmatpush1.msra.mxu0 0.0
    %2035 = vmatprep.subr.mxu0 0.0
    %2036 = vmatpush1.msra.mxu0 0.0
    %2037 = vmatprep.subr.mxu0 0.0
    %2038 = vmatpush1.msra.mxu0 0.0
    %2039 = vmatprep.subr.mxu0 0.0
    %2040 = vmatpush1.msra.mxu0 0.0
    %2041 = vmatprep.subr.mxu0 0.0
    %2042 = vmatpush1.msra.mxu0 0.0
    %2043 = vmatprep.subr.mxu0 0.0
    %2044 = vmatpush1.msra.mxu0 0.0
    %2045 = vmatprep.subr.mxu0 0.0
    %2046 = vmatpush1.msra.mxu0 0.0
    %2047 = vmatprep.subr.mxu0 0.0
    %2048 = vmatpush1.msra.mxu0 0.0
    %2049 = vmatprep.subr.mxu0 0.0
    %2050 = vmatpush1.msra.mxu0 0.0
    %2051 = vmatprep.subr.mxu0 0.0
    %2052 = vmatpush1.msra.mxu0 0.0
    %2053 = vmatprep.subr.mxu0 0.0
    %2054 = vmatpush1.msra.mxu0 0.0
    %2055 = vmatprep.mubr.f32.mxu0 0.0
    %2056 = vmatmul.mubr.f32.gmra.mrb[0].mxu0 %v1986
    %v2057 = vpop.f32.mrb[0].mxu0
    %v2058 = vadd.f32 0.0, %v2057
    %v2059 = vpop.f32.mrb[0].mxu0
    %2060 = vmatprep.mubr.f32.mxu0 0.0
    %2061 = vmatmul.mubr.f32.gmra.mrb[0].mxu0 %v1989
    %v2062 = vpop.f32.mrb[0].mxu0
    %v2063 = vadd.f32 0.0, %v2062
    %v2064 = vpop.f32.mrb[0].mxu0
    %2065 = vdwg.mxu0
    %2066 = vst [vmem:[#allocation3 + $0x8] sm:$0xff] %v2058
    %2067 = vst [vmem:[#allocation3 + $0x28] sm:$0xff] %v2063
    %v2068 = vld [vmem:[%s267] sm:$0xff]
    %v2069 = vld [vmem:[%s267 + $0x8] sm:$0xff]
    %v2071 = vsel %vm97, %v2068, 0
    %v2074 = vsel %vm97, %v2069, 0
    %2076 = vmatprep.subr.mxu0 0.0
    %2077 = vmatpush1.msra.mxu0 %v1896
    %2078 = vmatprep.subr.mxu0 0.0
    %2079 = vmatpush1.msra.mxu0 %v1897
    %2080 = vmatprep.subr.mxu0 0.0
    %2081 = vmatpush1.msra.mxu0 0.0
    %2082 = vmatprep.subr.mxu0 0.0
    %2083 = vmatpush1.msra.mxu0 0.0
    %2084 = vmatprep.subr.mxu0 0.0
    %2085 = vmatpush1.msra.mxu0 0.0
    %2086 = vmatprep.subr.mxu0 0.0
    %2087 = vmatpush1.msra.mxu0 0.0
    %2088 = vmatprep.subr.mxu0 0.0
    %2089 = vmatpush1.msra.mxu0 0.0
    %2090 = vmatprep.subr.mxu0 0.0
    %2091 = vmatpush1.msra.mxu0 0.0
    %2092 = vmatprep.subr.mxu0 0.0
    %2093 = vmatpush1.msra.mxu0 0.0
    %2094 = vmatprep.subr.mxu0 0.0
    %2095 = vmatpush1.msra.mxu0 0.0
    %2096 = vmatprep.subr.mxu0 0.0
    %2097 = vmatpush1.msra.mxu0 0.0
    %2098 = vmatprep.subr.mxu0 0.0
    %2099 = vmatpush1.msra.mxu0 0.0
    %2100 = vmatprep.subr.mxu0 0.0
    %2101 = vmatpush1.msra.mxu0 0.0
    %2102 = vmatprep.subr.mxu0 0.0
    %2103 = vmatpush1.msra.mxu0 0.0
    %2104 = vmatprep.subr.mxu0 0.0
    %2105 = vmatpush1.msra.mxu0 0.0
    %2106 = vmatprep.subr.mxu0 0.0
    %2107 = vmatpush1.msra.mxu0 0.0
    %2108 = vmatprep.subr.mxu0 0.0
    %2109 = vmatpush1.msra.mxu0 0.0
    %2110 = vmatprep.subr.mxu0 0.0
    %2111 = vmatpush1.msra.mxu0 0.0
    %2112 = vmatprep.subr.mxu0 0.0
    %2113 = vmatpush1.msra.mxu0 0.0
    %2114 = vmatprep.subr.mxu0 0.0
    %2115 = vmatpush1.msra.mxu0 0.0
    %2116 = vmatprep.subr.mxu0 0.0
    %2117 = vmatpush1.msra.mxu0 0.0
    %2118 = vmatprep.subr.mxu0 0.0
    %2119 = vmatpush1.msra.mxu0 0.0
    %2120 = vmatprep.subr.mxu0 0.0
    %2121 = vmatpush1.msra.mxu0 0.0
    %2122 = vmatprep.subr.mxu0 0.0
    %2123 = vmatpush1.msra.mxu0 0.0
    %2124 = vmatprep.subr.mxu0 0.0
    %2125 = vmatpush1.msra.mxu0 0.0
    %2126 = vmatprep.subr.mxu0 0.0
    %2127 = vmatpush1.msra.mxu0 0.0
    %2128 = vmatprep.subr.mxu0 0.0
    %2129 = vmatpush1.msra.mxu0 0.0
    %2130 = vmatprep.subr.mxu0 0.0
    %2131 = vmatpush1.msra.mxu0 0.0
    %2132 = vmatprep.subr.mxu0 0.0
    %2133 = vmatpush1.msra.mxu0 0.0
    %2134 = vmatprep.subr.mxu0 0.0
    %2135 = vmatpush1.msra.mxu0 0.0
    %2136 = vmatprep.subr.mxu0 0.0
    %2137 = vmatpush1.msra.mxu0 0.0
    %2138 = vmatprep.subr.mxu0 0.0
    %2139 = vmatpush1.msra.mxu0 0.0
    %2140 = vmatprep.mubr.f32.mxu0 0.0
    %2141 = vmatmul.mubr.f32.gmra.mrb[0].mxu0 %v2071
    %v2142 = vpop.f32.mrb[0].mxu0
    %v2143 = vadd.f32 0.0, %v2142
    %v2144 = vpop.f32.mrb[0].mxu0
    %2145 = vmatprep.mubr.f32.mxu0 0.0
    %2146 = vmatmul.mubr.f32.gmra.mrb[0].mxu0 %v2074
    %v2147 = vpop.f32.mrb[0].mxu0
    %v2148 = vadd.f32 0.0, %v2147
    %v2149 = vpop.f32.mrb[0].mxu0
    %2150 = vdwg.mxu0
    %2151 = vst [vmem:[#allocation3 + $0x10] sm:$0xff] %v2143
    %2152 = vst [vmem:[#allocation3 + $0x30] sm:$0xff] %v2148
    %2153 = vst [vmem:[#allocation3 + $0x18] sm:$0xff] %v1896
    %2154 = vst [vmem:[#allocation3 + $0x38] sm:$0xff] %v1897
    %v2155 = vld [vmem:[#allocation3] sm:$0xff]
    %v2156 = vld [vmem:[#allocation3 + $0x8] sm:$0xff]
    %v2157 = vld [vmem:[#allocation3 + $0x10] sm:$0xff]
    %v2158 = vld [vmem:[#allocation3 + $0x18] sm:$0xff]
    %v2159 = vld [vmem:[#allocation3 + $0x20] sm:$0xff]
    %v2160 = vld [vmem:[#allocation3 + $0x28] sm:$0xff]
    %v2161 = vld [vmem:[#allocation3 + $0x30] sm:$0xff]
    %v2162 = vld [vmem:[#allocation3 + $0x38] sm:$0xff]
    %v2163 = vld [vmem:[#allocation10] sm:$0xff]
    %v2164 = vld [vmem:[#allocation10 + $0x8] sm:$0xff]
    %v2165 = vld [vmem:[#allocation10 + $0x10] sm:$0xff]
    %v2166 = vld [vmem:[#allocation10 + $0x18] sm:$0xff]
    %v2167 = vld [vmem:[#allocation10 + $0x20] sm:$0xff]
    %v2168 = vld [vmem:[#allocation10 + $0x28] sm:$0xff]
    %v2169 = vld [vmem:[#allocation10 + $0x30] sm:$0xff]
    %v2170 = vld [vmem:[#allocation10 + $0x38] sm:$0xff]
    %v2171 = vld [vmem:[#allocation10 + $0x40] sm:$0xff]
    %v2172 = vld [vmem:[#allocation10 + $0x48] sm:$0xff]
    %v2173 = vld [vmem:[#allocation10 + $0x50] sm:$0xff]
    %v2174 = vld [vmem:[#allocation10 + $0x58] sm:$0xff]
    %v2175 = vld [vmem:[#allocation10 + $0x60] sm:$0xff]
    %v2176 = vld [vmem:[#allocation10 + $0x68] sm:$0xff]
    %v2177 = vld [vmem:[#allocation10 + $0x70] sm:$0xff]
    %v2178 = vld [vmem:[#allocation10 + $0x78] sm:$0xff]
    %v2179 = vld [vmem:[#allocation10 + $0x80] sm:$0xff]
    %v2180 = vld [vmem:[#allocation10 + $0x88] sm:$0xff]
    %v2181 = vld [vmem:[#allocation10 + $0x90] sm:$0xff]
    %v2182 = vld [vmem:[#allocation10 + $0x98] sm:$0xff]
    %v2183 = vld [vmem:[#allocation10 + $0xa0] sm:$0xff]
    %v2184 = vld [vmem:[#allocation10 + $0xa8] sm:$0xff]
    %v2185 = vld [vmem:[#allocation10 + $0xb0] sm:$0xff]
    %v2186 = vld [vmem:[#allocation10 + $0xb8] sm:$0xff]
    %v2187 = vld [vmem:[#allocation10 + $0xc0] sm:$0xff]
    %v2188 = vld [vmem:[#allocation10 + $0xc8] sm:$0xff]
    %v2189 = vld [vmem:[#allocation10 + $0xd0] sm:$0xff]
    %v2190 = vld [vmem:[#allocation10 + $0xd8] sm:$0xff]
    %v2191 = vld [vmem:[#allocation10 + $0xe0] sm:$0xff]
    %v2192 = vld [vmem:[#allocation10 + $0xe8] sm:$0xff]
    %v2193 = vld [vmem:[#allocation10 + $0xf0] sm:$0xff]
    %v2194 = vld [vmem:[#allocation10 + $0xf8] sm:$0xff]
    %v2195 = vld [vmem:[#allocation10 + $0x100] sm:$0xff]
    %v2196 = vld [vmem:[#allocation10 + $0x108] sm:$0xff]
    %v2197 = vld [vmem:[#allocation10 + $0x110] sm:$0xff]
    %v2198 = vld [vmem:[#allocation10 + $0x118] sm:$0xff]
    %v2199 = vld [vmem:[#allocation10 + $0x120] sm:$0xff]
    %v2200 = vld [vmem:[#allocation10 + $0x128] sm:$0xff]
    %v2201 = vld [vmem:[#allocation10 + $0x130] sm:$0xff]
    %v2202 = vld [vmem:[#allocation10 + $0x138] sm:$0xff]
    %v2203 = vld [vmem:[#allocation10 + $0x140] sm:$0xff]
    %v2204 = vld [vmem:[#allocation10 + $0x148] sm:$0xff]
    %v2205 = vld [vmem:[#allocation10 + $0x150] sm:$0xff]
    %v2206 = vld [vmem:[#allocation10 + $0x158] sm:$0xff]
    %v2207 = vld [vmem:[#allocation10 + $0x160] sm:$0xff]
    %v2208 = vld [vmem:[#allocation10 + $0x168] sm:$0xff]
    %v2209 = vld [vmem:[#allocation10 + $0x170] sm:$0xff]
    %v2210 = vld [vmem:[#allocation10 + $0x178] sm:$0xff]
    %v2211 = vld [vmem:[#allocation10 + $0x180] sm:$0xff]
    %v2212 = vld [vmem:[#allocation10 + $0x188] sm:$0xff]
    %v2213 = vld [vmem:[#allocation10 + $0x190] sm:$0xff]
    %v2214 = vld [vmem:[#allocation10 + $0x198] sm:$0xff]
    %v2215 = vld [vmem:[#allocation10 + $0x1a0] sm:$0xff]
    %v2216 = vld [vmem:[#allocation10 + $0x1a8] sm:$0xff]
    %v2217 = vld [vmem:[#allocation10 + $0x1b0] sm:$0xff]
    %v2218 = vld [vmem:[#allocation10 + $0x1b8] sm:$0xff]
    %v2219 = vld [vmem:[#allocation10 + $0x1c0] sm:$0xff]
    %v2220 = vld [vmem:[#allocation10 + $0x1c8] sm:$0xff]
    %v2221 = vld [vmem:[#allocation10 + $0x1d0] sm:$0xff]
    %v2222 = vld [vmem:[#allocation10 + $0x1d8] sm:$0xff]
    %v2223 = vld [vmem:[#allocation10 + $0x1e0] sm:$0xff]
    %v2224 = vld [vmem:[#allocation10 + $0x1e8] sm:$0xff]
    %v2225 = vld [vmem:[#allocation10 + $0x1f0] sm:$0xff]
    %v2226 = vld [vmem:[#allocation10 + $0x1f8] sm:$0xff]
    %v2227 = vld [vmem:[#allocation10 + $0x200] sm:$0xff]
    %v2228 = vld [vmem:[#allocation10 + $0x208] sm:$0xff]
    %v2229 = vld [vmem:[#allocation10 + $0x210] sm:$0xff]
    %v2230 = vld [vmem:[#allocation10 + $0x218] sm:$0xff]
    %v2231 = vld [vmem:[#allocation10 + $0x220] sm:$0xff]
    %v2232 = vld [vmem:[#allocation10 + $0x228] sm:$0xff]
    %v2233 = vld [vmem:[#allocation10 + $0x230] sm:$0xff]
    %v2234 = vld [vmem:[#allocation10 + $0x238] sm:$0xff]
    %v2235 = vld [vmem:[#allocation10 + $0x240] sm:$0xff]
    %v2236 = vld [vmem:[#allocation10 + $0x248] sm:$0xff]
    %v2237 = vld [vmem:[#allocation10 + $0x250] sm:$0xff]
    %v2238 = vld [vmem:[#allocation10 + $0x258] sm:$0xff]
    %v2239 = vld [vmem:[#allocation10 + $0x260] sm:$0xff]
    %v2240 = vld [vmem:[#allocation10 + $0x268] sm:$0xff]
    %v2241 = vld [vmem:[#allocation10 + $0x270] sm:$0xff]
    %v2242 = vld [vmem:[#allocation10 + $0x278] sm:$0xff]
    %v2243 = vld [vmem:[#allocation10 + $0x280] sm:$0xff]
    %v2244 = vld [vmem:[#allocation10 + $0x288] sm:$0xff]
    %v2245 = vld [vmem:[#allocation10 + $0x290] sm:$0xff]
    %v2246 = vld [vmem:[#allocation10 + $0x298] sm:$0xff]
    %v2247 = vld [vmem:[#allocation10 + $0x2a0] sm:$0xff]
    %v2248 = vld [vmem:[#allocation10 + $0x2a8] sm:$0xff]
    %v2249 = vld [vmem:[#allocation10 + $0x2b0] sm:$0xff]
    %v2250 = vld [vmem:[#allocation10 + $0x2b8] sm:$0xff]
    %v2251 = vld [vmem:[#allocation10 + $0x2c0] sm:$0xff]
    %v2252 = vld [vmem:[#allocation10 + $0x2c8] sm:$0xff]
    %v2253 = vld [vmem:[#allocation10 + $0x2d0] sm:$0xff]
    %v2254 = vld [vmem:[#allocation10 + $0x2d8] sm:$0xff]
    %v2255 = vld [vmem:[#allocation10 + $0x2e0] sm:$0xff]
    %v2256 = vld [vmem:[#allocation10 + $0x2e8] sm:$0xff]
    %v2257 = vld [vmem:[#allocation10 + $0x2f0] sm:$0xff]
    %v2258 = vld [vmem:[#allocation10 + $0x2f8] sm:$0xff]
    %v2259 = vld [vmem:[#allocation10 + $0x300] sm:$0xff]
    %v2260 = vld [vmem:[#allocation10 + $0x308] sm:$0xff]
    %v2261 = vld [vmem:[#allocation10 + $0x310] sm:$0xff]
    %v2262 = vld [vmem:[#allocation10 + $0x318] sm:$0xff]
    %v2263 = vld [vmem:[#allocation10 + $0x320] sm:$0xff]
    %v2264 = vld [vmem:[#allocation10 + $0x328] sm:$0xff]
    %v2265 = vld [vmem:[#allocation10 + $0x330] sm:$0xff]
    %v2266 = vld [vmem:[#allocation10 + $0x338] sm:$0xff]
    %v2267 = vld [vmem:[#allocation10 + $0x340] sm:$0xff]
    %v2268 = vld [vmem:[#allocation10 + $0x348] sm:$0xff]
    %v2269 = vld [vmem:[#allocation10 + $0x350] sm:$0xff]
    %v2270 = vld [vmem:[#allocation10 + $0x358] sm:$0xff]
    %v2271 = vld [vmem:[#allocation10 + $0x360] sm:$0xff]
    %v2272 = vld [vmem:[#allocation10 + $0x368] sm:$0xff]
    %v2273 = vld [vmem:[#allocation10 + $0x370] sm:$0xff]
    %v2274 = vld [vmem:[#allocation10 + $0x378] sm:$0xff]
    %v2275 = vld [vmem:[#allocation10 + $0x380] sm:$0xff]
    %v2276 = vld [vmem:[#allocation10 + $0x388] sm:$0xff]
    %v2277 = vld [vmem:[#allocation10 + $0x390] sm:$0xff]
    %v2278 = vld [vmem:[#allocation10 + $0x398] sm:$0xff]
    %v2279 = vld [vmem:[#allocation10 + $0x3a0] sm:$0xff]
    %v2280 = vld [vmem:[#allocation10 + $0x3a8] sm:$0xff]
    %v2281 = vld [vmem:[#allocation10 + $0x3b0] sm:$0xff]
    %v2282 = vld [vmem:[#allocation10 + $0x3b8] sm:$0xff]
    %v2283 = vld [vmem:[#allocation10 + $0x3c0] sm:$0xff]
    %v2284 = vld [vmem:[#allocation10 + $0x3c8] sm:$0xff]
    %v2285 = vld [vmem:[#allocation10 + $0x3d0] sm:$0xff]
    %v2286 = vld [vmem:[#allocation10 + $0x3d8] sm:$0xff]
    %v2287 = vld [vmem:[#allocation10 + $0x3e0] sm:$0xff]
    %v2288 = vld [vmem:[#allocation10 + $0x3e8] sm:$0xff]
    %v2289 = vld [vmem:[#allocation10 + $0x3f0] sm:$0xff]
    %v2290 = vld [vmem:[#allocation10 + $0x3f8] sm:$0xff]
    %v2291 = vld [vmem:[#allocation10 + $0x400] sm:$0xff]
    %v2292 = vld [vmem:[#allocation10 + $0x408] sm:$0xff]
    %v2293 = vld [vmem:[#allocation10 + $0x410] sm:$0xff]
    %v2294 = vld [vmem:[#allocation10 + $0x418] sm:$0xff]
    %v2295 = vld [vmem:[#allocation10 + $0x420] sm:$0xff]
    %v2296 = vld [vmem:[#allocation10 + $0x428] sm:$0xff]
    %v2297 = vld [vmem:[#allocation10 + $0x430] sm:$0xff]
    %v2298 = vld [vmem:[#allocation10 + $0x438] sm:$0xff]
    %v2299 = vld [vmem:[#allocation10 + $0x440] sm:$0xff]
    %v2300 = vld [vmem:[#allocation10 + $0x448] sm:$0xff]
    %v2301 = vld [vmem:[#allocation10 + $0x450] sm:$0xff]
    %v2302 = vld [vmem:[#allocation10 + $0x458] sm:$0xff]
    %v2303 = vld [vmem:[#allocation10 + $0x460] sm:$0xff]
    %v2304 = vld [vmem:[#allocation10 + $0x468] sm:$0xff]
    %v2305 = vld [vmem:[#allocation10 + $0x470] sm:$0xff]
    %v2306 = vld [vmem:[#allocation10 + $0x478] sm:$0xff]
    %v2307 = vld [vmem:[#allocation10 + $0x480] sm:$0xff]
    %v2308 = vld [vmem:[#allocation10 + $0x488] sm:$0xff]
    %v2309 = vld [vmem:[#allocation10 + $0x490] sm:$0xff]
    %v2310 = vld [vmem:[#allocation10 + $0x498] sm:$0xff]
    %v2311 = vld [vmem:[#allocation10 + $0x4a0] sm:$0xff]
    %v2312 = vld [vmem:[#allocation10 + $0x4a8] sm:$0xff]
    %v2313 = vld [vmem:[#allocation10 + $0x4b0] sm:$0xff]
    %v2314 = vld [vmem:[#allocation10 + $0x4b8] sm:$0xff]
    %v2315 = vld [vmem:[#allocation10 + $0x4c0] sm:$0xff]
    %v2316 = vld [vmem:[#allocation10 + $0x4c8] sm:$0xff]
    %v2317 = vld [vmem:[#allocation10 + $0x4d0] sm:$0xff]
    %v2318 = vld [vmem:[#allocation10 + $0x4d8] sm:$0xff]
    %v2319 = vld [vmem:[#allocation10 + $0x4e0] sm:$0xff]
    %v2320 = vld [vmem:[#allocation10 + $0x4e8] sm:$0xff]
    %v2321 = vld [vmem:[#allocation10 + $0x4f0] sm:$0xff]
    %v2322 = vld [vmem:[#allocation10 + $0x4f8] sm:$0xff]
    %v2323 = vld [vmem:[#allocation10 + $0x500] sm:$0xff]
    %v2324 = vld [vmem:[#allocation10 + $0x508] sm:$0xff]
    %v2325 = vld [vmem:[#allocation10 + $0x510] sm:$0xff]
    %v2326 = vld [vmem:[#allocation10 + $0x518] sm:$0xff]
    %v2327 = vld [vmem:[#allocation10 + $0x520] sm:$0xff]
    %v2328 = vld [vmem:[#allocation10 + $0x528] sm:$0xff]
    %v2329 = vld [vmem:[#allocation10 + $0x530] sm:$0xff]
    %v2330 = vld [vmem:[#allocation10 + $0x538] sm:$0xff]
    %v2331 = vld [vmem:[#allocation10 + $0x540] sm:$0xff]
    %v2332 = vld [vmem:[#allocation10 + $0x548] sm:$0xff]
    %v2333 = vld [vmem:[#allocation10 + $0x550] sm:$0xff]
    %v2334 = vld [vmem:[#allocation10 + $0x558] sm:$0xff]
    %v2335 = vld [vmem:[#allocation10 + $0x560] sm:$0xff]
    %v2336 = vld [vmem:[#allocation10 + $0x568] sm:$0xff]
    %v2337 = vld [vmem:[#allocation10 + $0x570] sm:$0xff]
    %v2338 = vld [vmem:[#allocation10 + $0x578] sm:$0xff]
    %v2339 = vld [vmem:[#allocation10 + $0x580] sm:$0xff]
    %v2340 = vld [vmem:[#allocation10 + $0x588] sm:$0xff]
    %v2341 = vld [vmem:[#allocation10 + $0x590] sm:$0xff]
    %v2342 = vld [vmem:[#allocation10 + $0x598] sm:$0xff]
    %v2343 = vld [vmem:[#allocation10 + $0x5a0] sm:$0xff]
    %v2344 = vld [vmem:[#allocation10 + $0x5a8] sm:$0xff]
    %v2345 = vld [vmem:[#allocation10 + $0x5b0] sm:$0xff]
    %v2346 = vld [vmem:[#allocation10 + $0x5b8] sm:$0xff]
    %v2347 = vld [vmem:[#allocation10 + $0x5c0] sm:$0xff]
    %v2348 = vld [vmem:[#allocation10 + $0x5c8] sm:$0xff]
    %v2349 = vld [vmem:[#allocation10 + $0x5d0] sm:$0xff]
    %v2350 = vld [vmem:[#allocation10 + $0x5d8] sm:$0xff]
    %v2351 = vld [vmem:[#allocation10 + $0x5e0] sm:$0xff]
    %v2352 = vld [vmem:[#allocation10 + $0x5e8] sm:$0xff]
    %v2353 = vld [vmem:[#allocation10 + $0x5f0] sm:$0xff]
    %v2354 = vld [vmem:[#allocation10 + $0x5f8] sm:$0xff]
    %v2355 = vld [vmem:[#allocation9] sm:$0xff]
    %v2356 = vld [vmem:[#allocation9 + $0x8] sm:$0xff]
    %v2357 = vld [vmem:[#allocation9 + $0x10] sm:$0xff]
    %v2358 = vld [vmem:[#allocation9 + $0x18] sm:$0xff]
    %v2359 = vld [vmem:[#allocation9 + $0x20] sm:$0xff]
    %v2360 = vld [vmem:[#allocation9 + $0x28] sm:$0xff]
    %2361 = vmatprep.subr.mxu0 %v2164
    %2362 = vmatpush1.msra.mxu0 %v2163
    %2363 = vmatprep.subr.mxu0 %v2167
    %2364 = vmatpush1.msra.mxu0 %v2166
    %2365 = vmatprep.subr.mxu0 %v2170
    %2366 = vmatpush1.msra.mxu0 %v2169
    %2367 = vmatprep.subr.mxu0 %v2173
    %2368 = vmatpush1.msra.mxu0 %v2172
    %2369 = vmatprep.subr.mxu0 %v2176
    %2370 = vmatpush1.msra.mxu0 %v2175
    %2371 = vmatprep.subr.mxu0 %v2179
    %2372 = vmatpush1.msra.mxu0 %v2178
    %2373 = vmatprep.subr.mxu0 %v2182
    %2374 = vmatpush1.msra.mxu0 %v2181
    %2375 = vmatprep.subr.mxu0 %v2185
    %2376 = vmatpush1.msra.mxu0 %v2184
    %2377 = vmatprep.subr.mxu0 %v2188
    %2378 = vmatpush1.msra.mxu0 %v2187
    %2379 = vmatprep.subr.mxu0 %v2191
    %2380 = vmatpush1.msra.mxu0 %v2190
    %2381 = vmatprep.subr.mxu0 %v2194
    %2382 = vmatpush1.msra.mxu0 %v2193
    %2383 = vmatprep.subr.mxu0 %v2197
    %2384 = vmatpush1.msra.mxu0 %v2196
    %2385 = vmatprep.subr.mxu0 %v2200
    %2386 = vmatpush1.msra.mxu0 %v2199
    %2387 = vmatprep.subr.mxu0 %v2203
    %2388 = vmatpush1.msra.mxu0 %v2202
    %2389 = vmatprep.subr.mxu0 %v2206
    %2390 = vmatpush1.msra.mxu0 %v2205
    %2391 = vmatprep.subr.mxu0 %v2209
    %2392 = vmatpush1.msra.mxu0 %v2208
    %2393 = vmatprep.subr.mxu0 %v2212
    %2394 = vmatpush1.msra.mxu0 %v2211
    %2395 = vmatprep.subr.mxu0 %v2215
    %2396 = vmatpush1.msra.mxu0 %v2214
    %2397 = vmatprep.subr.mxu0 %v2218
    %2398 = vmatpush1.msra.mxu0 %v2217
    %2399 = vmatprep.subr.mxu0 %v2221
    %2400 = vmatpush1.msra.mxu0 %v2220
    %2401 = vmatprep.subr.mxu0 %v2224
    %2402 = vmatpush1.msra.mxu0 %v2223
    %2403 = vmatprep.subr.mxu0 %v2227
    %2404 = vmatpush1.msra.mxu0 %v2226
    %2405 = vmatprep.subr.mxu0 %v2230
    %2406 = vmatpush1.msra.mxu0 %v2229
    %2407 = vmatprep.subr.mxu0 %v2233
    %2408 = vmatpush1.msra.mxu0 %v2232
    %2409 = vmatprep.subr.mxu0 %v2236
    %2410 = vmatpush1.msra.mxu0 %v2235
    %2411 = vmatprep.subr.mxu0 %v2239
    %2412 = vmatpush1.msra.mxu0 %v2238
    %2413 = vmatprep.subr.mxu0 %v2242
    %2414 = vmatpush1.msra.mxu0 %v2241
    %2415 = vmatprep.subr.mxu0 %v2245
    %2416 = vmatpush1.msra.mxu0 %v2244
    %2417 = vmatprep.subr.mxu0 %v2248
    %2418 = vmatpush1.msra.mxu0 %v2247
    %2419 = vmatprep.subr.mxu0 %v2251
    %2420 = vmatpush1.msra.mxu0 %v2250
    %2421 = vmatprep.subr.mxu0 %v2254
    %2422 = vmatpush1.msra.mxu0 %v2253
    %2423 = vmatprep.subr.mxu0 %v2257
    %2424 = vmatpush1.msra.mxu0 %v2256
    %2425 = vmatprep.mubr.f32.mxu0 %v2156
    %2426 = vmatmul.mubr.f32.gmra.mrb[0].mxu0 %v2155
    %v2427 = vpop.f32.mrb[0].mxu0
    %v2428 = vadd.f32 %v2355, %v2427
    %v2429 = vpop.f32.mrb[0].mxu0
    %v2430 = vadd.f32 %v2356, %v2429
    %2431 = vmatprep.mubr.f32.mxu0 %v2160
    %2432 = vmatmul.mubr.f32.gmra.mrb[0].mxu0 %v2159
    %v2433 = vpop.f32.mrb[0].mxu0
    %v2434 = vadd.f32 %v2358, %v2433
    %v2435 = vpop.f32.mrb[0].mxu0
    %v2436 = vadd.f32 %v2359, %v2435
    %2437 = vdwg.mxu0
    %2438 = vmatprep.subr.mxu0 %v2260
    %2439 = vmatpush1.msra.mxu0 %v2259
    %2440 = vmatprep.subr.mxu0 %v2263
    %2441 = vmatpush1.msra.mxu0 %v2262
    %2442 = vmatprep.subr.mxu0 %v2266
    %2443 = vmatpush1.msra.mxu0 %v2265
    %2444 = vmatprep.subr.mxu0 %v2269
    %2445 = vmatpush1.msra.mxu0 %v2268
    %2446 = vmatprep.subr.mxu0 %v2272
    %2447 = vmatpush1.msra.mxu0 %v2271
    %2448 = vmatprep.subr.mxu0 %v2275
    %2449 = vmatpush1.msra.mxu0 %v2274
    %2450 = vmatprep.subr.mxu0 %v2278
    %2451 = vmatpush1.msra.mxu0 %v2277
    %2452 = vmatprep.subr.mxu0 %v2281
    %2453 = vmatpush1.msra.mxu0 %v2280
    %2454 = vmatprep.subr.mxu0 %v2284
    %2455 = vmatpush1.msra.mxu0 %v2283
    %2456 = vmatprep.subr.mxu0 %v2287
    %2457 = vmatpush1.msra.mxu0 %v2286
    %2458 = vmatprep.subr.mxu0 %v2290
    %2459 = vmatpush1.msra.mxu0 %v2289
    %2460 = vmatprep.subr.mxu0 %v2293
    %2461 = vmatpush1.msra.mxu0 %v2292
    %2462 = vmatprep.subr.mxu0 %v2296
    %2463 = vmatpush1.msra.mxu0 %v2295
    %2464 = vmatprep.subr.mxu0 %v2299
    %2465 = vmatpush1.msra.mxu0 %v2298
    %2466 = vmatprep.subr.mxu0 %v2302
    %2467 = vmatpush1.msra.mxu0 %v2301
    %2468 = vmatprep.subr.mxu0 %v2305
    %2469 = vmatpush1.msra.mxu0 %v2304
    %2470 = vmatprep.subr.mxu0 %v2308
    %2471 = vmatpush1.msra.mxu0 %v2307
    %2472 = vmatprep.subr.mxu0 %v2311
    %2473 = vmatpush1.msra.mxu0 %v2310
    %2474 = vmatprep.subr.mxu0 %v2314
    %2475 = vmatpush1.msra.mxu0 %v2313
    %2476 = vmatprep.subr.mxu0 %v2317
    %2477 = vmatpush1.msra.mxu0 %v2316
    %2478 = vmatprep.subr.mxu0 %v2320
    %2479 = vmatpush1.msra.mxu0 %v2319
    %2480 = vmatprep.subr.mxu0 %v2323
    %2481 = vmatpush1.msra.mxu0 %v2322
    %2482 = vmatprep.subr.mxu0 %v2326
    %2483 = vmatpush1.msra.mxu0 %v2325
    %2484 = vmatprep.subr.mxu0 %v2329
    %2485 = vmatpush1.msra.mxu0 %v2328
    %2486 = vmatprep.subr.mxu0 %v2332
    %2487 = vmatpush1.msra.mxu0 %v2331
    %2488 = vmatprep.subr.mxu0 %v2335
    %2489 = vmatpush1.msra.mxu0 %v2334
    %2490 = vmatprep.subr.mxu0 %v2338
    %2491 = vmatpush1.msra.mxu0 %v2337
    %2492 = vmatprep.subr.mxu0 %v2341
    %2493 = vmatpush1.msra.mxu0 %v2340
    %2494 = vmatprep.subr.mxu0 %v2344
    %2495 = vmatpush1.msra.mxu0 %v2343
    %2496 = vmatprep.subr.mxu0 %v2347
    %2497 = vmatpush1.msra.mxu0 %v2346
    %2498 = vmatprep.subr.mxu0 %v2350
    %2499 = vmatpush1.msra.mxu0 %v2349
    %2500 = vmatprep.subr.mxu0 %v2353
    %2501 = vmatpush1.msra.mxu0 %v2352
    %2502 = vmatprep.mubr.f32.mxu0 %v2158
    %2503 = vmatmul.mubr.f32.gmra.mrb[0].mxu0 %v2157
    %v2504 = vpop.f32.mrb[0].mxu0
    %v2505 = vadd.f32 %v2428, %v2504
    %v2506 = vpop.f32.mrb[0].mxu0
    %v2507 = vadd.f32 %v2430, %v2506
    %2508 = vmatprep.mubr.f32.mxu0 %v2162
    %2509 = vmatmul.mubr.f32.gmra.mrb[0].mxu0 %v2161
    %v2510 = vpop.f32.mrb[0].mxu0
    %v2511 = vadd.f32 %v2434, %v2510
    %v2512 = vpop.f32.mrb[0].mxu0
    %v2513 = vadd.f32 %v2436, %v2512
    %2514 = vdwg.mxu0
    %2515 = vmatprep.subr.mxu0 0.0
    %2516 = vmatpush1.msra.mxu0 %v2165
    %2517 = vmatprep.subr.mxu0 0.0
    %2518 = vmatpush1.msra.mxu0 %v2168
    %2519 = vmatprep.subr.mxu0 0.0
    %2520 = vmatpush1.msra.mxu0 %v2171
    %2521 = vmatprep.subr.mxu0 0.0
    %2522 = vmatpush1.msra.mxu0 %v2174
    %2523 = vmatprep.subr.mxu0 0.0
    %2524 = vmatpush1.msra.mxu0 %v2177
    %2525 = vmatprep.subr.mxu0 0.0
    %2526 = vmatpush1.msra.mxu0 %v2180
    %2527 = vmatprep.subr.mxu0 0.0
    %2528 = vmatpush1.msra.mxu0 %v2183
    %2529 = vmatprep.subr.mxu0 0.0
    %2530 = vmatpush1.msra.mxu0 %v2186
    %2531 = vmatprep.subr.mxu0 0.0
    %2532 = vmatpush1.msra.mxu0 %v2189
    %2533 = vmatprep.subr.mxu0 0.0
    %2534 = vmatpush1.msra.mxu0 %v2192
    %2535 = vmatprep.subr.mxu0 0.0
    %2536 = vmatpush1.msra.mxu0 %v2195
    %2537 = vmatprep.subr.mxu0 0.0
    %2538 = vmatpush1.msra.mxu0 %v2198
    %2539 = vmatprep.subr.mxu0 0.0
    %2540 = vmatpush1.msra.mxu0 %v2201
    %2541 = vmatprep.subr.mxu0 0.0
    %2542 = vmatpush1.msra.mxu0 %v2204
    %2543 = vmatprep.subr.mxu0 0.0
    %2544 = vmatpush1.msra.mxu0 %v2207
    %2545 = vmatprep.subr.mxu0 0.0
    %2546 = vmatpush1.msra.mxu0 %v2210
    %2547 = vmatprep.subr.mxu0 0.0
    %2548 = vmatpush1.msra.mxu0 %v2213
    %2549 = vmatprep.subr.mxu0 0.0
    %2550 = vmatpush1.msra.mxu0 %v2216
    %2551 = vmatprep.subr.mxu0 0.0
    %2552 = vmatpush1.msra.mxu0 %v2219
    %2553 = vmatprep.subr.mxu0 0.0
    %2554 = vmatpush1.msra.mxu0 %v2222
    %2555 = vmatprep.subr.mxu0 0.0
    %2556 = vmatpush1.msra.mxu0 %v2225
    %2557 = vmatprep.subr.mxu0 0.0
    %2558 = vmatpush1.msra.mxu0 %v2228
    %2559 = vmatprep.subr.mxu0 0.0
    %2560 = vmatpush1.msra.mxu0 %v2231
    %2561 = vmatprep.subr.mxu0 0.0
    %2562 = vmatpush1.msra.mxu0 %v2234
    %2563 = vmatprep.subr.mxu0 0.0
    %2564 = vmatpush1.msra.mxu0 %v2237
    %2565 = vmatprep.subr.mxu0 0.0
    %2566 = vmatpush1.msra.mxu0 %v2240
    %2567 = vmatprep.subr.mxu0 0.0
    %2568 = vmatpush1.msra.mxu0 %v2243
    %2569 = vmatprep.subr.mxu0 0.0
    %2570 = vmatpush1.msra.mxu0 %v2246
    %2571 = vmatprep.subr.mxu0 0.0
    %2572 = vmatpush1.msra.mxu0 %v2249
    %2573 = vmatprep.subr.mxu0 0.0
    %2574 = vmatpush1.msra.mxu0 %v2252
    %2575 = vmatprep.subr.mxu0 0.0
    %2576 = vmatpush1.msra.mxu0 %v2255
    %2577 = vmatprep.subr.mxu0 0.0
    %2578 = vmatpush1.msra.mxu0 %v2258
    %2579 = vmatprep.mubr.f32.mxu0 %v2156
    %2580 = vmatmul.mubr.f32.gmra.mrb[0].mxu0 %v2155
    %v2581 = vpop.f32.mrb[0].mxu0
    %v2582 = vadd.f32 %v2357, %v2581
    %v2583 = vpop.f32.mrb[0].mxu0
    %2584 = vmatprep.mubr.f32.mxu0 %v2160
    %2585 = vmatmul.mubr.f32.gmra.mrb[0].mxu0 %v2159
    %v2586 = vpop.f32.mrb[0].mxu0
    %v2587 = vadd.f32 %v2360, %v2586
    %v2588 = vpop.f32.mrb[0].mxu0
    %2589 = vdwg.mxu0
    %2590 = vmatprep.subr.mxu0 0.0
    %2591 = vmatpush1.msra.mxu0 %v2261
    %2592 = vmatprep.subr.mxu0 0.0
    %2593 = vmatpush1.msra.mxu0 %v2264
    %2594 = vmatprep.subr.mxu0 0.0
    %2595 = vmatpush1.msra.mxu0 %v2267
    %2596 = vmatprep.subr.mxu0 0.0
    %2597 = vmatpush1.msra.mxu0 %v2270
    %2598 = vmatprep.subr.mxu0 0.0
    %2599 = vmatpush1.msra.mxu0 %v2273
    %2600 = vmatprep.subr.mxu0 0.0
    %2601 = vmatpush1.msra.mxu0 %v2276
    %2602 = vmatprep.subr.mxu0 0.0
    %2603 = vmatpush1.msra.mxu0 %v2279
    %2604 = vmatprep.subr.mxu0 0.0
    %2605 = vmatpush1.msra.mxu0 %v2282
    %2606 = vmatprep.subr.mxu0 0.0
    %2607 = vmatpush1.msra.mxu0 %v2285
    %2608 = vmatprep.subr.mxu0 0.0
    %2609 = vmatpush1.msra.mxu0 %v2288
    %2610 = vmatprep.subr.mxu0 0.0
    %2611 = vmatpush1.msra.mxu0 %v2291
    %2612 = vmatprep.subr.mxu0 0.0
    %2613 = vmatpush1.msra.mxu0 %v2294
    %2614 = vmatprep.subr.mxu0 0.0
    %2615 = vmatpush1.msra.mxu0 %v2297
    %2616 = vmatprep.subr.mxu0 0.0
    %2617 = vmatpush1.msra.mxu0 %v2300
    %2618 = vmatprep.subr.mxu0 0.0
    %2619 = vmatpush1.msra.mxu0 %v2303
    %2620 = vmatprep.subr.mxu0 0.0
    %2621 = vmatpush1.msra.mxu0 %v2306
    %2622 = vmatprep.subr.mxu0 0.0
    %2623 = vmatpush1.msra.mxu0 %v2309
    %2624 = vmatprep.subr.mxu0 0.0
    %2625 = vmatpush1.msra.mxu0 %v2312
    %2626 = vmatprep.subr.mxu0 0.0
    %2627 = vmatpush1.msra.mxu0 %v2315
    %2628 = vmatprep.subr.mxu0 0.0
    %2629 = vmatpush1.msra.mxu0 %v2318
    %2630 = vmatprep.subr.mxu0 0.0
    %2631 = vmatpush1.msra.mxu0 %v2321
    %2632 = vmatprep.subr.mxu0 0.0
    %2633 = vmatpush1.msra.mxu0 %v2324
    %2634 = vmatprep.subr.mxu0 0.0
    %2635 = vmatpush1.msra.mxu0 %v2327
    %2636 = vmatprep.subr.mxu0 0.0
    %2637 = vmatpush1.msra.mxu0 %v2330
    %2638 = vmatprep.subr.mxu0 0.0
    %2639 = vmatpush1.msra.mxu0 %v2333
    %2640 = vmatprep.subr.mxu0 0.0
    %2641 = vmatpush1.msra.mxu0 %v2336
    %2642 = vmatprep.subr.mxu0 0.0
    %2643 = vmatpush1.msra.mxu0 %v2339
    %2644 = vmatprep.subr.mxu0 0.0
    %2645 = vmatpush1.msra.mxu0 %v2342
    %2646 = vmatprep.subr.mxu0 0.0
    %2647 = vmatpush1.msra.mxu0 %v2345
    %2648 = vmatprep.subr.mxu0 0.0
    %2649 = vmatpush1.msra.mxu0 %v2348
    %2650 = vmatprep.subr.mxu0 0.0
    %2651 = vmatpush1.msra.mxu0 %v2351
    %2652 = vmatprep.subr.mxu0 0.0
    %2653 = vmatpush1.msra.mxu0 %v2354
    %2654 = vmatprep.mubr.f32.mxu0 %v2158
    %2655 = vmatmul.mubr.f32.gmra.mrb[0].mxu0 %v2157
    %v2656 = vpop.f32.mrb[0].mxu0
    %v2657 = vadd.f32 %v2582, %v2656
    %v2658 = vpop.f32.mrb[0].mxu0
    %2659 = vmatprep.mubr.f32.mxu0 %v2162
    %2660 = vmatmul.mubr.f32.gmra.mrb[0].mxu0 %v2161
    %v2661 = vpop.f32.mrb[0].mxu0
    %v2662 = vadd.f32 %v2587, %v2661
    %v2663 = vpop.f32.mrb[0].mxu0
    %2664 = vdwg.mxu0
    %v2665 = vxor.u32 %v2505, 2147483648
    %v2666 = vxor.u32 %v2511, 2147483648
    %v2667 = vmul.f32 %v2665, 1.442695
    %v2668 = vpow.pop %v2667
    %v2669 = vmul.f32 %v2666, 1.442695
    %v2670 = vpow.pop %v2669
    %v2671 = vadd.f32 %v2668, 1.0
    %v2672 = vadd.f32 %v2670, 1.0
    %v2673 = vrcp.pop %v2671
    %v2674 = vmul.f32 1.0, %v2673
    %v2675 = vrcp.pop %v2672
    %v2676 = vmul.f32 1.0, %v2675
    %v2677 = vxor.u32 %v2507, 2147483648
    %v2678 = vxor.u32 %v2513, 2147483648
    %v2679 = vmul.f32 %v2677, 1.442695
    %v2680 = vpow.pop %v2679
    %v2681 = vmul.f32 %v2678, 1.442695
    %v2682 = vpow.pop %v2681
    %v2683 = vadd.f32 %v2680, 1.0
    %v2684 = vadd.f32 %v2682, 1.0
    %v2685 = vrcp.pop %v2683
    %v2686 = vmul.f32 1.0, %v2685
    %v2687 = vrcp.pop %v2684
    %v2688 = vmul.f32 1.0, %v2687
    %v2689 = vmul.f32 %v2686, %v1896
    %v2690 = vmul.f32 %v2688, %v1897
    %v2691 = vld [vmem:[#allocation12] sm:$0xff]
    %v2692 = vld [vmem:[#allocation12 + $0x8] sm:$0xff]
    %v2693 = vld [vmem:[#allocation12 + $0x10] sm:$0xff]
    %v2694 = vld [vmem:[#allocation12 + $0x18] sm:$0xff]
    %v2695 = vld [vmem:[#allocation12 + $0x20] sm:$0xff]
    %v2696 = vld [vmem:[#allocation12 + $0x28] sm:$0xff]
    %v2697 = vld [vmem:[#allocation12 + $0x30] sm:$0xff]
    %v2698 = vld [vmem:[#allocation12 + $0x38] sm:$0xff]
    %v2699 = vld [vmem:[#allocation12 + $0x40] sm:$0xff]
    %v2700 = vld [vmem:[#allocation12 + $0x48] sm:$0xff]
    %v2701 = vld [vmem:[#allocation12 + $0x50] sm:$0xff]
    %v2702 = vld [vmem:[#allocation12 + $0x58] sm:$0xff]
    %v2703 = vld [vmem:[#allocation12 + $0x60] sm:$0xff]
    %v2704 = vld [vmem:[#allocation12 + $0x68] sm:$0xff]
    %v2705 = vld [vmem:[#allocation12 + $0x70] sm:$0xff]
    %v2706 = vld [vmem:[#allocation12 + $0x78] sm:$0xff]
    %2707 = vmatprep.subr.mxu0 0.0
    %2708 = vmatpush1.msra.mxu0 %v2691
    %2709 = vmatprep.subr.mxu0 0.0
    %2710 = vmatpush1.msra.mxu0 %v2692
    %2711 = vmatprep.subr.mxu0 0.0
    %2712 = vmatpush1.msra.mxu0 %v2693
    %2713 = vmatprep.subr.mxu0 0.0
    %2714 = vmatpush1.msra.mxu0 %v2694
    %2715 = vmatprep.subr.mxu0 0.0
    %2716 = vmatpush1.msra.mxu0 %v2695
    %2717 = vmatprep.subr.mxu0 0.0
    %2718 = vmatpush1.msra.mxu0 %v2696
    %2719 = vmatprep.subr.mxu0 0.0
    %2720 = vmatpush1.msra.mxu0 %v2697
    %2721 = vmatprep.subr.mxu0 0.0
    %2722 = vmatpush1.msra.mxu0 %v2698
    %2723 = vmatprep.subr.mxu0 0.0
    %2724 = vmatpush1.msra.mxu0 %v2699
    %2725 = vmatprep.subr.mxu0 0.0
    %2726 = vmatpush1.msra.mxu0 %v2700
    %2727 = vmatprep.subr.mxu0 0.0
    %2728 = vmatpush1.msra.mxu0 %v2701
    %2729 = vmatprep.subr.mxu0 0.0
    %2730 = vmatpush1.msra.mxu0 %v2702
    %2731 = vmatprep.subr.mxu0 0.0
    %2732 = vmatpush1.msra.mxu0 %v2703
    %2733 = vmatprep.subr.mxu0 0.0
    %2734 = vmatpush1.msra.mxu0 %v2704
    %2735 = vmatprep.subr.mxu0 0.0
    %2736 = vmatpush1.msra.mxu0 %v2705
    %2737 = vmatprep.subr.mxu0 0.0
    %2738 = vmatpush1.msra.mxu0 %v2706
    %2739 = vmatprep.subr.mxu0 0.0
    %2740 = vmatpush1.msra.mxu0 0.0
    %2741 = vmatprep.subr.mxu0 0.0
    %2742 = vmatpush1.msra.mxu0 0.0
    %2743 = vmatprep.subr.mxu0 0.0
    %2744 = vmatpush1.msra.mxu0 0.0
    %2745 = vmatprep.subr.mxu0 0.0
    %2746 = vmatpush1.msra.mxu0 0.0
    %2747 = vmatprep.subr.mxu0 0.0
    %2748 = vmatpush1.msra.mxu0 0.0
    %2749 = vmatprep.subr.mxu0 0.0
    %2750 = vmatpush1.msra.mxu0 0.0
    %2751 = vmatprep.subr.mxu0 0.0
    %2752 = vmatpush1.msra.mxu0 0.0
    %2753 = vmatprep.subr.mxu0 0.0
    %2754 = vmatpush1.msra.mxu0 0.0
    %2755 = vmatprep.subr.mxu0 0.0
    %2756 = vmatpush1.msra.mxu0 0.0
    %2757 = vmatprep.subr.mxu0 0.0
    %2758 = vmatpush1.msra.mxu0 0.0
    %2759 = vmatprep.subr.mxu0 0.0
    %2760 = vmatpush1.msra.mxu0 0.0
    %2761 = vmatprep.subr.mxu0 0.0
    %2762 = vmatpush1.msra.mxu0 0.0
    %2763 = vmatprep.subr.mxu0 0.0
    %2764 = vmatpush1.msra.mxu0 0.0
    %2765 = vmatprep.subr.mxu0 0.0
    %2766 = vmatpush1.msra.mxu0 0.0
    %2767 = vmatprep.subr.mxu0 0.0
    %2768 = vmatpush1.msra.mxu0 0.0
    %2769 = vmatprep.subr.mxu0 0.0
    %2770 = vmatpush1.msra.mxu0 0.0
    %2771 = vmatprep.mubr.f32.mxu0 0.0
    %2772 = vmatmul.mubr.f32.gmra.mrb[0].mxu0 %v2689
    %v2773 = vpop.f32.mrb[0].mxu0
    %v2774 = vadd.f32 0.0, %v2773
    %v2775 = vpop.f32.mrb[0].mxu0
    %2776 = vmatprep.mubr.f32.mxu0 0.0
    %2777 = vmatmul.mubr.f32.gmra.mrb[0].mxu0 %v2690
    %v2778 = vpop.f32.mrb[0].mxu0
    %v2779 = vadd.f32 0.0, %v2778
    %v2780 = vpop.f32.mrb[0].mxu0
    %2781 = vdwg.mxu0
    %v2782 = vadd.f32 %v2657, %v2774
    %v2783 = vadd.f32 %v2662, %v2779
    %v2784 = vtanh.pop %v2782
    %v2785 = vtanh.pop %v2783
    %v2786 = vsub.f32 1.0, %v2674
    %v2787 = vsub.f32 1.0, %v2676
    %v2788 = vmul.f32 %v2786, %v1896
    %v2789 = vmul.f32 %v2787, %v1897
    %v2790 = vmul.f32 %v2674, %v2784
    %v2791 = vmul.f32 %v2676, %v2785
    %v2792 = vadd.f32 %v2788, %v2790
    %v2793 = vadd.f32 %v2789, %v2791
    %2794 = vst [vmem:[#allocation2] sm:$0xff] %v2792
    %2795 = vst [vmem:[#allocation2 + $0x8] sm:$0xff] %v2793
    %v2796 = vld [vmem:[#allocation2] sm:$0xff]
    %v2797 = vld [vmem:[#allocation2 + $0x8] sm:$0xff]
    %v2798 = vld [vmem:[#allocation4] sm:$0xff]
    %v2799 = vld [vmem:[#allocation4 + $0x8] sm:$0xff]
    %v2801 = vsel %vm97, %v2798, 0
    %v2804 = vsel %vm97, %v2799, 0
    %2806 = vmatprep.subr.mxu0 0.0
    %2807 = vmatpush1.msra.mxu0 %v2796
    %2808 = vmatprep.subr.mxu0 0.0
    %2809 = vmatpush1.msra.mxu0 %v2797
    %2810 = vmatprep.subr.mxu0 0.0
    %2811 = vmatpush1.msra.mxu0 0.0
    %2812 = vmatprep.subr.mxu0 0.0
    %2813 = vmatpush1.msra.mxu0 0.0
    %2814 = vmatprep.subr.mxu0 0.0
    %2815 = vmatpush1.msra.mxu0 0.0
    %2816 = vmatprep.subr.mxu0 0.0
    %2817 = vmatpush1.msra.mxu0 0.0
    %2818 = vmatprep.subr.mxu0 0.0
    %2819 = vmatpush1.msra.mxu0 0.0
    %2820 = vmatprep.subr.mxu0 0.0
    %2821 = vmatpush1.msra.mxu0 0.0
    %2822 = vmatprep.subr.mxu0 0.0
    %2823 = vmatpush1.msra.mxu0 0.0
    %2824 = vmatprep.subr.mxu0 0.0
    %2825 = vmatpush1.msra.mxu0 0.0
    %2826 = vmatprep.subr.mxu0 0.0
    %2827 = vmatpush1.msra.mxu0 0.0
    %2828 = vmatprep.subr.mxu0 0.0
    %2829 = vmatpush1.msra.mxu0 0.0
    %2830 = vmatprep.subr.mxu0 0.0
    %2831 = vmatpush1.msra.mxu0 0.0
    %2832 = vmatprep.subr.mxu0 0.0
    %2833 = vmatpush1.msra.mxu0 0.0
    %2834 = vmatprep.subr.mxu0 0.0
    %2835 = vmatpush1.msra.mxu0 0.0
    %2836 = vmatprep.subr.mxu0 0.0
    %2837 = vmatpush1.msra.mxu0 0.0
    %2838 = vmatprep.subr.mxu0 0.0
    %2839 = vmatpush1.msra.mxu0 0.0
    %2840 = vmatprep.subr.mxu0 0.0
    %2841 = vmatpush1.msra.mxu0 0.0
    %2842 = vmatprep.subr.mxu0 0.0
    %2843 = vmatpush1.msra.mxu0 0.0
    %2844 = vmatprep.subr.mxu0 0.0
    %2845 = vmatpush1.msra.mxu0 0.0
    %2846 = vmatprep.subr.mxu0 0.0
    %2847 = vmatpush1.msra.mxu0 0.0
    %2848 = vmatprep.subr.mxu0 0.0
    %2849 = vmatpush1.msra.mxu0 0.0
    %2850 = vmatprep.subr.mxu0 0.0
    %2851 = vmatpush1.msra.mxu0 0.0
    %2852 = vmatprep.subr.mxu0 0.0
    %2853 = vmatpush1.msra.mxu0 0.0
    %2854 = vmatprep.subr.mxu0 0.0
    %2855 = vmatpush1.msra.mxu0 0.0
    %2856 = vmatprep.subr.mxu0 0.0
    %2857 = vmatpush1.msra.mxu0 0.0
    %2858 = vmatprep.subr.mxu0 0.0
    %2859 = vmatpush1.msra.mxu0 0.0
    %2860 = vmatprep.subr.mxu0 0.0
    %2861 = vmatpush1.msra.mxu0 0.0
    %2862 = vmatprep.subr.mxu0 0.0
    %2863 = vmatpush1.msra.mxu0 0.0
    %2864 = vmatprep.subr.mxu0 0.0
    %2865 = vmatpush1.msra.mxu0 0.0
    %2866 = vmatprep.subr.mxu0 0.0
    %2867 = vmatpush1.msra.mxu0 0.0
    %2868 = vmatprep.subr.mxu0 0.0
    %2869 = vmatpush1.msra.mxu0 0.0
    %2870 = vmatprep.mubr.f32.mxu0 0.0
    %2871 = vmatmul.mubr.f32.gmra.mrb[0].mxu0 %v2801
    %v2872 = vpop.f32.mrb[0].mxu0
    %v2873 = vadd.f32 0.0, %v2872
    %v2874 = vpop.f32.mrb[0].mxu0
    %2875 = vmatprep.mubr.f32.mxu0 0.0
    %2876 = vmatmul.mubr.f32.gmra.mrb[0].mxu0 %v2804
    %v2877 = vpop.f32.mrb[0].mxu0
    %v2878 = vadd.f32 0.0, %v2877
    %v2879 = vpop.f32.mrb[0].mxu0
    %2880 = vdwg.mxu0
    %2881 = vst [vmem:[#allocation3] sm:$0xff] %v2873
    %2882 = vst [vmem:[#allocation3 + $0x20] sm:$0xff] %v2878
    %v2883 = vld [vmem:[%s181] sm:$0xff]
    %v2884 = vld [vmem:[%s181 + $0x8] sm:$0xff]
    %v2886 = vsel %vm97, %v2883, 0
    %v2889 = vsel %vm97, %v2884, 0
    %2891 = vmatprep.subr.mxu0 0.0
    %2892 = vmatpush1.msra.mxu0 %v2796
    %2893 = vmatprep.subr.mxu0 0.0
    %2894 = vmatpush1.msra.mxu0 %v2797
    %2895 = vmatprep.subr.mxu0 0.0
    %2896 = vmatpush1.msra.mxu0 0.0
    %2897 = vmatprep.subr.mxu0 0.0
    %2898 = vmatpush1.msra.mxu0 0.0
    %2899 = vmatprep.subr.mxu0 0.0
    %2900 = vmatpush1.msra.mxu0 0.0
    %2901 = vmatprep.subr.mxu0 0.0
    %2902 = vmatpush1.msra.mxu0 0.0
    %2903 = vmatprep.subr.mxu0 0.0
    %2904 = vmatpush1.msra.mxu0 0.0
    %2905 = vmatprep.subr.mxu0 0.0
    %2906 = vmatpush1.msra.mxu0 0.0
    %2907 = vmatprep.subr.mxu0 0.0
    %2908 = vmatpush1.msra.mxu0 0.0
    %2909 = vmatprep.subr.mxu0 0.0
    %2910 = vmatpush1.msra.mxu0 0.0
    %2911 = vmatprep.subr.mxu0 0.0
    %2912 = vmatpush1.msra.mxu0 0.0
    %2913 = vmatprep.subr.mxu0 0.0
    %2914 = vmatpush1.msra.mxu0 0.0
    %2915 = vmatprep.subr.mxu0 0.0
    %2916 = vmatpush1.msra.mxu0 0.0
    %2917 = vmatprep.subr.mxu0 0.0
    %2918 = vmatpush1.msra.mxu0 0.0
    %2919 = vmatprep.subr.mxu0 0.0
    %2920 = vmatpush1.msra.mxu0 0.0
    %2921 = vmatprep.subr.mxu0 0.0
    %2922 = vmatpush1.msra.mxu0 0.0
    %2923 = vmatprep.subr.mxu0 0.0
    %2924 = vmatpush1.msra.mxu0 0.0
    %2925 = vmatprep.subr.mxu0 0.0
    %2926 = vmatpush1.msra.mxu0 0.0
    %2927 = vmatprep.subr.mxu0 0.0
    %2928 = vmatpush1.msra.mxu0 0.0
    %2929 = vmatprep.subr.mxu0 0.0
    %2930 = vmatpush1.msra.mxu0 0.0
    %2931 = vmatprep.subr.mxu0 0.0
    %2932 = vmatpush1.msra.mxu0 0.0
    %2933 = vmatprep.subr.mxu0 0.0
    %2934 = vmatpush1.msra.mxu0 0.0
    %2935 = vmatprep.subr.mxu0 0.0
    %2936 = vmatpush1.msra.mxu0 0.0
    %2937 = vmatprep.subr.mxu0 0.0
    %2938 = vmatpush1.msra.mxu0 0.0
    %2939 = vmatprep.subr.mxu0 0.0
    %2940 = vmatpush1.msra.mxu0 0.0
    %2941 = vmatprep.subr.mxu0 0.0
    %2942 = vmatpush1.msra.mxu0 0.0
    %2943 = vmatprep.subr.mxu0 0.0
    %2944 = vmatpush1.msra.mxu0 0.0
    %2945 = vmatprep.subr.mxu0 0.0
    %2946 = vmatpush1.msra.mxu0 0.0
    %2947 = vmatprep.subr.mxu0 0.0
    %2948 = vmatpush1.msra.mxu0 0.0
    %2949 = vmatprep.subr.mxu0 0.0
    %2950 = vmatpush1.msra.mxu0 0.0
    %2951 = vmatprep.subr.mxu0 0.0
    %2952 = vmatpush1.msra.mxu0 0.0
    %2953 = vmatprep.subr.mxu0 0.0
    %2954 = vmatpush1.msra.mxu0 0.0
    %2955 = vmatprep.mubr.f32.mxu0 0.0
    %2956 = vmatmul.mubr.f32.gmra.mrb[0].mxu0 %v2886
    %v2957 = vpop.f32.mrb[0].mxu0
    %v2958 = vadd.f32 0.0, %v2957
    %v2959 = vpop.f32.mrb[0].mxu0
    %2960 = vmatprep.mubr.f32.mxu0 0.0
    %2961 = vmatmul.mubr.f32.gmra.mrb[0].mxu0 %v2889
    %v2962 = vpop.f32.mrb[0].mxu0
    %v2963 = vadd.f32 0.0, %v2962
    %v2964 = vpop.f32.mrb[0].mxu0
    %2965 = vdwg.mxu0
    %2966 = vst [vmem:[#allocation3 + $0x8] sm:$0xff] %v2958
    %2967 = vst [vmem:[#allocation3 + $0x28] sm:$0xff] %v2963
    %v2968 = vld [vmem:[%s267] sm:$0xff]
    %v2969 = vld [vmem:[%s267 + $0x8] sm:$0xff]
    %v2971 = vsel %vm97, %v2968, 0
    %v2974 = vsel %vm97, %v2969, 0
    %2976 = vmatprep.subr.mxu0 0.0
    %2977 = vmatpush1.msra.mxu0 %v2796
    %2978 = vmatprep.subr.mxu0 0.0
    %2979 = vmatpush1.msra.mxu0 %v2797
    %2980 = vmatprep.subr.mxu0 0.0
    %2981 = vmatpush1.msra.mxu0 0.0
    %2982 = vmatprep.subr.mxu0 0.0
    %2983 = vmatpush1.msra.mxu0 0.0
    %2984 = vmatprep.subr.mxu0 0.0
    %2985 = vmatpush1.msra.mxu0 0.0
    %2986 = vmatprep.subr.mxu0 0.0
    %2987 = vmatpush1.msra.mxu0 0.0
    %2988 = vmatprep.subr.mxu0 0.0
    %2989 = vmatpush1.msra.mxu0 0.0
    %2990 = vmatprep.subr.mxu0 0.0
    %2991 = vmatpush1.msra.mxu0 0.0
    %2992 = vmatprep.subr.mxu0 0.0
    %2993 = vmatpush1.msra.mxu0 0.0
    %2994 = vmatprep.subr.mxu0 0.0
    %2995 = vmatpush1.msra.mxu0 0.0
    %2996 = vmatprep.subr.mxu0 0.0
    %2997 = vmatpush1.msra.mxu0 0.0
    %2998 = vmatprep.subr.mxu0 0.0
    %2999 = vmatpush1.msra.mxu0 0.0
    %3000 = vmatprep.subr.mxu0 0.0
    %3001 = vmatpush1.msra.mxu0 0.0
    %3002 = vmatprep.subr.mxu0 0.0
    %3003 = vmatpush1.msra.mxu0 0.0
    %3004 = vmatprep.subr.mxu0 0.0
    %3005 = vmatpush1.msra.mxu0 0.0
    %3006 = vmatprep.subr.mxu0 0.0
    %3007 = vmatpush1.msra.mxu0 0.0
    %3008 = vmatprep.subr.mxu0 0.0
    %3009 = vmatpush1.msra.mxu0 0.0
    %3010 = vmatprep.subr.mxu0 0.0
    %3011 = vmatpush1.msra.mxu0 0.0
    %3012 = vmatprep.subr.mxu0 0.0
    %3013 = vmatpush1.msra.mxu0 0.0
    %3014 = vmatprep.subr.mxu0 0.0
    %3015 = vmatpush1.msra.mxu0 0.0
    %3016 = vmatprep.subr.mxu0 0.0
    %3017 = vmatpush1.msra.mxu0 0.0
    %3018 = vmatprep.subr.mxu0 0.0
    %3019 = vmatpush1.msra.mxu0 0.0
    %3020 = vmatprep.subr.mxu0 0.0
    %3021 = vmatpush1.msra.mxu0 0.0
    %3022 = vmatprep.subr.mxu0 0.0
    %3023 = vmatpush1.msra.mxu0 0.0
    %3024 = vmatprep.subr.mxu0 0.0
    %3025 = vmatpush1.msra.mxu0 0.0
    %3026 = vmatprep.subr.mxu0 0.0
    %3027 = vmatpush1.msra.mxu0 0.0
    %3028 = vmatprep.subr.mxu0 0.0
    %3029 = vmatpush1.msra.mxu0 0.0
    %3030 = vmatprep.subr.mxu0 0.0
    %3031 = vmatpush1.msra.mxu0 0.0
    %3032 = vmatprep.subr.mxu0 0.0
    %3033 = vmatpush1.msra.mxu0 0.0
    %3034 = vmatprep.subr.mxu0 0.0
    %3035 = vmatpush1.msra.mxu0 0.0
    %3036 = vmatprep.subr.mxu0 0.0
    %3037 = vmatpush1.msra.mxu0 0.0
    %3038 = vmatprep.subr.mxu0 0.0
    %3039 = vmatpush1.msra.mxu0 0.0
    %3040 = vmatprep.mubr.f32.mxu0 0.0
    %3041 = vmatmul.mubr.f32.gmra.mrb[0].mxu0 %v2971
    %v3042 = vpop.f32.mrb[0].mxu0
    %v3043 = vadd.f32 0.0, %v3042
    %v3044 = vpop.f32.mrb[0].mxu0
    %3045 = vmatprep.mubr.f32.mxu0 0.0
    %3046 = vmatmul.mubr.f32.gmra.mrb[0].mxu0 %v2974
    %v3047 = vpop.f32.mrb[0].mxu0
    %v3048 = vadd.f32 0.0, %v3047
    %v3049 = vpop.f32.mrb[0].mxu0
    %3050 = vdwg.mxu0
    %3051 = vst [vmem:[#allocation3 + $0x10] sm:$0xff] %v3043
    %3052 = vst [vmem:[#allocation3 + $0x30] sm:$0xff] %v3048
    %3053 = vst [vmem:[#allocation3 + $0x18] sm:$0xff] %v2796
    %3054 = vst [vmem:[#allocation3 + $0x38] sm:$0xff] %v2797
    %v3055 = vld [vmem:[#allocation3] sm:$0xff]
    %v3056 = vld [vmem:[#allocation3 + $0x8] sm:$0xff]
    %v3057 = vld [vmem:[#allocation3 + $0x10] sm:$0xff]
    %v3058 = vld [vmem:[#allocation3 + $0x18] sm:$0xff]
    %v3059 = vld [vmem:[#allocation3 + $0x20] sm:$0xff]
    %v3060 = vld [vmem:[#allocation3 + $0x28] sm:$0xff]
    %v3061 = vld [vmem:[#allocation3 + $0x30] sm:$0xff]
    %v3062 = vld [vmem:[#allocation3 + $0x38] sm:$0xff]
    %v3063 = vld [vmem:[#allocation10] sm:$0xff]
    %v3064 = vld [vmem:[#allocation10 + $0x8] sm:$0xff]
    %v3065 = vld [vmem:[#allocation10 + $0x10] sm:$0xff]
    %v3066 = vld [vmem:[#allocation10 + $0x18] sm:$0xff]
    %v3067 = vld [vmem:[#allocation10 + $0x20] sm:$0xff]
    %v3068 = vld [vmem:[#allocation10 + $0x28] sm:$0xff]
    %v3069 = vld [vmem:[#allocation10 + $0x30] sm:$0xff]
    %v3070 = vld [vmem:[#allocation10 + $0x38] sm:$0xff]
    %v3071 = vld [vmem:[#allocation10 + $0x40] sm:$0xff]
    %v3072 = vld [vmem:[#allocation10 + $0x48] sm:$0xff]
    %v3073 = vld [vmem:[#allocation10 + $0x50] sm:$0xff]
    %v3074 = vld [vmem:[#allocation10 + $0x58] sm:$0xff]
    %v3075 = vld [vmem:[#allocation10 + $0x60] sm:$0xff]
    %v3076 = vld [vmem:[#allocation10 + $0x68] sm:$0xff]
    %v3077 = vld [vmem:[#allocation10 + $0x70] sm:$0xff]
    %v3078 = vld [vmem:[#allocation10 + $0x78] sm:$0xff]
    %v3079 = vld [vmem:[#allocation10 + $0x80] sm:$0xff]
    %v3080 = vld [vmem:[#allocation10 + $0x88] sm:$0xff]
    %v3081 = vld [vmem:[#allocation10 + $0x90] sm:$0xff]
    %v3082 = vld [vmem:[#allocation10 + $0x98] sm:$0xff]
    %v3083 = vld [vmem:[#allocation10 + $0xa0] sm:$0xff]
    %v3084 = vld [vmem:[#allocation10 + $0xa8] sm:$0xff]
    %v3085 = vld [vmem:[#allocation10 + $0xb0] sm:$0xff]
    %v3086 = vld [vmem:[#allocation10 + $0xb8] sm:$0xff]
    %v3087 = vld [vmem:[#allocation10 + $0xc0] sm:$0xff]
    %v3088 = vld [vmem:[#allocation10 + $0xc8] sm:$0xff]
    %v3089 = vld [vmem:[#allocation10 + $0xd0] sm:$0xff]
    %v3090 = vld [vmem:[#allocation10 + $0xd8] sm:$0xff]
    %v3091 = vld [vmem:[#allocation10 + $0xe0] sm:$0xff]
    %v3092 = vld [vmem:[#allocation10 + $0xe8] sm:$0xff]
    %v3093 = vld [vmem:[#allocation10 + $0xf0] sm:$0xff]
    %v3094 = vld [vmem:[#allocation10 + $0xf8] sm:$0xff]
    %v3095 = vld [vmem:[#allocation10 + $0x100] sm:$0xff]
    %v3096 = vld [vmem:[#allocation10 + $0x108] sm:$0xff]
    %v3097 = vld [vmem:[#allocation10 + $0x110] sm:$0xff]
    %v3098 = vld [vmem:[#allocation10 + $0x118] sm:$0xff]
    %v3099 = vld [vmem:[#allocation10 + $0x120] sm:$0xff]
    %v3100 = vld [vmem:[#allocation10 + $0x128] sm:$0xff]
    %v3101 = vld [vmem:[#allocation10 + $0x130] sm:$0xff]
    %v3102 = vld [vmem:[#allocation10 + $0x138] sm:$0xff]
    %v3103 = vld [vmem:[#allocation10 + $0x140] sm:$0xff]
    %v3104 = vld [vmem:[#allocation10 + $0x148] sm:$0xff]
    %v3105 = vld [vmem:[#allocation10 + $0x150] sm:$0xff]
    %v3106 = vld [vmem:[#allocation10 + $0x158] sm:$0xff]
    %v3107 = vld [vmem:[#allocation10 + $0x160] sm:$0xff]
    %v3108 = vld [vmem:[#allocation10 + $0x168] sm:$0xff]
    %v3109 = vld [vmem:[#allocation10 + $0x170] sm:$0xff]
    %v3110 = vld [vmem:[#allocation10 + $0x178] sm:$0xff]
    %v3111 = vld [vmem:[#allocation10 + $0x180] sm:$0xff]
    %v3112 = vld [vmem:[#allocation10 + $0x188] sm:$0xff]
    %v3113 = vld [vmem:[#allocation10 + $0x190] sm:$0xff]
    %v3114 = vld [vmem:[#allocation10 + $0x198] sm:$0xff]
    %v3115 = vld [vmem:[#allocation10 + $0x1a0] sm:$0xff]
    %v3116 = vld [vmem:[#allocation10 + $0x1a8] sm:$0xff]
    %v3117 = vld [vmem:[#allocation10 + $0x1b0] sm:$0xff]
    %v3118 = vld [vmem:[#allocation10 + $0x1b8] sm:$0xff]
    %v3119 = vld [vmem:[#allocation10 + $0x1c0] sm:$0xff]
    %v3120 = vld [vmem:[#allocation10 + $0x1c8] sm:$0xff]
    %v3121 = vld [vmem:[#allocation10 + $0x1d0] sm:$0xff]
    %v3122 = vld [vmem:[#allocation10 + $0x1d8] sm:$0xff]
    %v3123 = vld [vmem:[#allocation10 + $0x1e0] sm:$0xff]
    %v3124 = vld [vmem:[#allocation10 + $0x1e8] sm:$0xff]
    %v3125 = vld [vmem:[#allocation10 + $0x1f0] sm:$0xff]
    %v3126 = vld [vmem:[#allocation10 + $0x1f8] sm:$0xff]
    %v3127 = vld [vmem:[#allocation10 + $0x200] sm:$0xff]
    %v3128 = vld [vmem:[#allocation10 + $0x208] sm:$0xff]
    %v3129 = vld [vmem:[#allocation10 + $0x210] sm:$0xff]
    %v3130 = vld [vmem:[#allocation10 + $0x218] sm:$0xff]
    %v3131 = vld [vmem:[#allocation10 + $0x220] sm:$0xff]
    %v3132 = vld [vmem:[#allocation10 + $0x228] sm:$0xff]
    %v3133 = vld [vmem:[#allocation10 + $0x230] sm:$0xff]
    %v3134 = vld [vmem:[#allocation10 + $0x238] sm:$0xff]
    %v3135 = vld [vmem:[#allocation10 + $0x240] sm:$0xff]
    %v3136 = vld [vmem:[#allocation10 + $0x248] sm:$0xff]
    %v3137 = vld [vmem:[#allocation10 + $0x250] sm:$0xff]
    %v3138 = vld [vmem:[#allocation10 + $0x258] sm:$0xff]
    %v3139 = vld [vmem:[#allocation10 + $0x260] sm:$0xff]
    %v3140 = vld [vmem:[#allocation10 + $0x268] sm:$0xff]
    %v3141 = vld [vmem:[#allocation10 + $0x270] sm:$0xff]
    %v3142 = vld [vmem:[#allocation10 + $0x278] sm:$0xff]
    %v3143 = vld [vmem:[#allocation10 + $0x280] sm:$0xff]
    %v3144 = vld [vmem:[#allocation10 + $0x288] sm:$0xff]
    %v3145 = vld [vmem:[#allocation10 + $0x290] sm:$0xff]
    %v3146 = vld [vmem:[#allocation10 + $0x298] sm:$0xff]
    %v3147 = vld [vmem:[#allocation10 + $0x2a0] sm:$0xff]
    %v3148 = vld [vmem:[#allocation10 + $0x2a8] sm:$0xff]
    %v3149 = vld [vmem:[#allocation10 + $0x2b0] sm:$0xff]
    %v3150 = vld [vmem:[#allocation10 + $0x2b8] sm:$0xff]
    %v3151 = vld [vmem:[#allocation10 + $0x2c0] sm:$0xff]
    %v3152 = vld [vmem:[#allocation10 + $0x2c8] sm:$0xff]
    %v3153 = vld [vmem:[#allocation10 + $0x2d0] sm:$0xff]
    %v3154 = vld [vmem:[#allocation10 + $0x2d8] sm:$0xff]
    %v3155 = vld [vmem:[#allocation10 + $0x2e0] sm:$0xff]
    %v3156 = vld [vmem:[#allocation10 + $0x2e8] sm:$0xff]
    %v3157 = vld [vmem:[#allocation10 + $0x2f0] sm:$0xff]
    %v3158 = vld [vmem:[#allocation10 + $0x2f8] sm:$0xff]
    %v3159 = vld [vmem:[#allocation10 + $0x300] sm:$0xff]
    %v3160 = vld [vmem:[#allocation10 + $0x308] sm:$0xff]
    %v3161 = vld [vmem:[#allocation10 + $0x310] sm:$0xff]
    %v3162 = vld [vmem:[#allocation10 + $0x318] sm:$0xff]
    %v3163 = vld [vmem:[#allocation10 + $0x320] sm:$0xff]
    %v3164 = vld [vmem:[#allocation10 + $0x328] sm:$0xff]
    %v3165 = vld [vmem:[#allocation10 + $0x330] sm:$0xff]
    %v3166 = vld [vmem:[#allocation10 + $0x338] sm:$0xff]
    %v3167 = vld [vmem:[#allocation10 + $0x340] sm:$0xff]
    %v3168 = vld [vmem:[#allocation10 + $0x348] sm:$0xff]
    %v3169 = vld [vmem:[#allocation10 + $0x350] sm:$0xff]
    %v3170 = vld [vmem:[#allocation10 + $0x358] sm:$0xff]
    %v3171 = vld [vmem:[#allocation10 + $0x360] sm:$0xff]
    %v3172 = vld [vmem:[#allocation10 + $0x368] sm:$0xff]
    %v3173 = vld [vmem:[#allocation10 + $0x370] sm:$0xff]
    %v3174 = vld [vmem:[#allocation10 + $0x378] sm:$0xff]
    %v3175 = vld [vmem:[#allocation10 + $0x380] sm:$0xff]
    %v3176 = vld [vmem:[#allocation10 + $0x388] sm:$0xff]
    %v3177 = vld [vmem:[#allocation10 + $0x390] sm:$0xff]
    %v3178 = vld [vmem:[#allocation10 + $0x398] sm:$0xff]
    %v3179 = vld [vmem:[#allocation10 + $0x3a0] sm:$0xff]
    %v3180 = vld [vmem:[#allocation10 + $0x3a8] sm:$0xff]
    %v3181 = vld [vmem:[#allocation10 + $0x3b0] sm:$0xff]
    %v3182 = vld [vmem:[#allocation10 + $0x3b8] sm:$0xff]
    %v3183 = vld [vmem:[#allocation10 + $0x3c0] sm:$0xff]
    %v3184 = vld [vmem:[#allocation10 + $0x3c8] sm:$0xff]
    %v3185 = vld [vmem:[#allocation10 + $0x3d0] sm:$0xff]
    %v3186 = vld [vmem:[#allocation10 + $0x3d8] sm:$0xff]
    %v3187 = vld [vmem:[#allocation10 + $0x3e0] sm:$0xff]
    %v3188 = vld [vmem:[#allocation10 + $0x3e8] sm:$0xff]
    %v3189 = vld [vmem:[#allocation10 + $0x3f0] sm:$0xff]
    %v3190 = vld [vmem:[#allocation10 + $0x3f8] sm:$0xff]
    %v3191 = vld [vmem:[#allocation10 + $0x400] sm:$0xff]
    %v3192 = vld [vmem:[#allocation10 + $0x408] sm:$0xff]
    %v3193 = vld [vmem:[#allocation10 + $0x410] sm:$0xff]
    %v3194 = vld [vmem:[#allocation10 + $0x418] sm:$0xff]
    %v3195 = vld [vmem:[#allocation10 + $0x420] sm:$0xff]
    %v3196 = vld [vmem:[#allocation10 + $0x428] sm:$0xff]
    %v3197 = vld [vmem:[#allocation10 + $0x430] sm:$0xff]
    %v3198 = vld [vmem:[#allocation10 + $0x438] sm:$0xff]
    %v3199 = vld [vmem:[#allocation10 + $0x440] sm:$0xff]
    %v3200 = vld [vmem:[#allocation10 + $0x448] sm:$0xff]
    %v3201 = vld [vmem:[#allocation10 + $0x450] sm:$0xff]
    %v3202 = vld [vmem:[#allocation10 + $0x458] sm:$0xff]
    %v3203 = vld [vmem:[#allocation10 + $0x460] sm:$0xff]
    %v3204 = vld [vmem:[#allocation10 + $0x468] sm:$0xff]
    %v3205 = vld [vmem:[#allocation10 + $0x470] sm:$0xff]
    %v3206 = vld [vmem:[#allocation10 + $0x478] sm:$0xff]
    %v3207 = vld [vmem:[#allocation10 + $0x480] sm:$0xff]
    %v3208 = vld [vmem:[#allocation10 + $0x488] sm:$0xff]
    %v3209 = vld [vmem:[#allocation10 + $0x490] sm:$0xff]
    %v3210 = vld [vmem:[#allocation10 + $0x498] sm:$0xff]
    %v3211 = vld [vmem:[#allocation10 + $0x4a0] sm:$0xff]
    %v3212 = vld [vmem:[#allocation10 + $0x4a8] sm:$0xff]
    %v3213 = vld [vmem:[#allocation10 + $0x4b0] sm:$0xff]
    %v3214 = vld [vmem:[#allocation10 + $0x4b8] sm:$0xff]
    %v3215 = vld [vmem:[#allocation10 + $0x4c0] sm:$0xff]
    %v3216 = vld [vmem:[#allocation10 + $0x4c8] sm:$0xff]
    %v3217 = vld [vmem:[#allocation10 + $0x4d0] sm:$0xff]
    %v3218 = vld [vmem:[#allocation10 + $0x4d8] sm:$0xff]
    %v3219 = vld [vmem:[#allocation10 + $0x4e0] sm:$0xff]
    %v3220 = vld [vmem:[#allocation10 + $0x4e8] sm:$0xff]
    %v3221 = vld [vmem:[#allocation10 + $0x4f0] sm:$0xff]
    %v3222 = vld [vmem:[#allocation10 + $0x4f8] sm:$0xff]
    %v3223 = vld [vmem:[#allocation10 + $0x500] sm:$0xff]
    %v3224 = vld [vmem:[#allocation10 + $0x508] sm:$0xff]
    %v3225 = vld [vmem:[#allocation10 + $0x510] sm:$0xff]
    %v3226 = vld [vmem:[#allocation10 + $0x518] sm:$0xff]
    %v3227 = vld [vmem:[#allocation10 + $0x520] sm:$0xff]
    %v3228 = vld [vmem:[#allocation10 + $0x528] sm:$0xff]
    %v3229 = vld [vmem:[#allocation10 + $0x530] sm:$0xff]
    %v3230 = vld [vmem:[#allocation10 + $0x538] sm:$0xff]
    %v3231 = vld [vmem:[#allocation10 + $0x540] sm:$0xff]
    %v3232 = vld [vmem:[#allocation10 + $0x548] sm:$0xff]
    %v3233 = vld [vmem:[#allocation10 + $0x550] sm:$0xff]
    %v3234 = vld [vmem:[#allocation10 + $0x558] sm:$0xff]
    %v3235 = vld [vmem:[#allocation10 + $0x560] sm:$0xff]
    %v3236 = vld [vmem:[#allocation10 + $0x568] sm:$0xff]
    %v3237 = vld [vmem:[#allocation10 + $0x570] sm:$0xff]
    %v3238 = vld [vmem:[#allocation10 + $0x578] sm:$0xff]
    %v3239 = vld [vmem:[#allocation10 + $0x580] sm:$0xff]
    %v3240 = vld [vmem:[#allocation10 + $0x588] sm:$0xff]
    %v3241 = vld [vmem:[#allocation10 + $0x590] sm:$0xff]
    %v3242 = vld [vmem:[#allocation10 + $0x598] sm:$0xff]
    %v3243 = vld [vmem:[#allocation10 + $0x5a0] sm:$0xff]
    %v3244 = vld [vmem:[#allocation10 + $0x5a8] sm:$0xff]
    %v3245 = vld [vmem:[#allocation10 + $0x5b0] sm:$0xff]
    %v3246 = vld [vmem:[#allocation10 + $0x5b8] sm:$0xff]
    %v3247 = vld [vmem:[#allocation10 + $0x5c0] sm:$0xff]
    %v3248 = vld [vmem:[#allocation10 + $0x5c8] sm:$0xff]
    %v3249 = vld [vmem:[#allocation10 + $0x5d0] sm:$0xff]
    %v3250 = vld [vmem:[#allocation10 + $0x5d8] sm:$0xff]
    %v3251 = vld [vmem:[#allocation10 + $0x5e0] sm:$0xff]
    %v3252 = vld [vmem:[#allocation10 + $0x5e8] sm:$0xff]
    %v3253 = vld [vmem:[#allocation10 + $0x5f0] sm:$0xff]
    %v3254 = vld [vmem:[#allocation10 + $0x5f8] sm:$0xff]
    %v3255 = vld [vmem:[#allocation9] sm:$0xff]
    %v3256 = vld [vmem:[#allocation9 + $0x8] sm:$0xff]
    %v3257 = vld [vmem:[#allocation9 + $0x10] sm:$0xff]
    %v3258 = vld [vmem:[#allocation9 + $0x18] sm:$0xff]
    %v3259 = vld [vmem:[#allocation9 + $0x20] sm:$0xff]
    %v3260 = vld [vmem:[#allocation9 + $0x28] sm:$0xff]
    %3261 = vmatprep.subr.mxu0 %v3064
    %3262 = vmatpush1.msra.mxu0 %v3063
    %3263 = vmatprep.subr.mxu0 %v3067
    %3264 = vmatpush1.msra.mxu0 %v3066
    %3265 = vmatprep.subr.mxu0 %v3070
    %3266 = vmatpush1.msra.mxu0 %v3069
    %3267 = vmatprep.subr.mxu0 %v3073
    %3268 = vmatpush1.msra.mxu0 %v3072
    %3269 = vmatprep.subr.mxu0 %v3076
    %3270 = vmatpush1.msra.mxu0 %v3075
    %3271 = vmatprep.subr.mxu0 %v3079
    %3272 = vmatpush1.msra.mxu0 %v3078
    %3273 = vmatprep.subr.mxu0 %v3082
    %3274 = vmatpush1.msra.mxu0 %v3081
    %3275 = vmatprep.subr.mxu0 %v3085
    %3276 = vmatpush1.msra.mxu0 %v3084
    %3277 = vmatprep.subr.mxu0 %v3088
    %3278 = vmatpush1.msra.mxu0 %v3087
    %3279 = vmatprep.subr.mxu0 %v3091
    %3280 = vmatpush1.msra.mxu0 %v3090
    %3281 = vmatprep.subr.mxu0 %v3094
    %3282 = vmatpush1.msra.mxu0 %v3093
    %3283 = vmatprep.subr.mxu0 %v3097
    %3284 = vmatpush1.msra.mxu0 %v3096
    %3285 = vmatprep.subr.mxu0 %v3100
    %3286 = vmatpush1.msra.mxu0 %v3099
    %3287 = vmatprep.subr.mxu0 %v3103
    %3288 = vmatpush1.msra.mxu0 %v3102
    %3289 = vmatprep.subr.mxu0 %v3106
    %3290 = vmatpush1.msra.mxu0 %v3105
    %3291 = vmatprep.subr.mxu0 %v3109
    %3292 = vmatpush1.msra.mxu0 %v3108
    %3293 = vmatprep.subr.mxu0 %v3112
    %3294 = vmatpush1.msra.mxu0 %v3111
    %3295 = vmatprep.subr.mxu0 %v3115
    %3296 = vmatpush1.msra.mxu0 %v3114
    %3297 = vmatprep.subr.mxu0 %v3118
    %3298 = vmatpush1.msra.mxu0 %v3117
    %3299 = vmatprep.subr.mxu0 %v3121
    %3300 = vmatpush1.msra.mxu0 %v3120
    %3301 = vmatprep.subr.mxu0 %v3124
    %3302 = vmatpush1.msra.mxu0 %v3123
    %3303 = vmatprep.subr.mxu0 %v3127
    %3304 = vmatpush1.msra.mxu0 %v3126
    %3305 = vmatprep.subr.mxu0 %v3130
    %3306 = vmatpush1.msra.mxu0 %v3129
    %3307 = vmatprep.subr.mxu0 %v3133
    %3308 = vmatpush1.msra.mxu0 %v3132
    %3309 = vmatprep.subr.mxu0 %v3136
    %3310 = vmatpush1.msra.mxu0 %v3135
    %3311 = vmatprep.subr.mxu0 %v3139
    %3312 = vmatpush1.msra.mxu0 %v3138
    %3313 = vmatprep.subr.mxu0 %v3142
    %3314 = vmatpush1.msra.mxu0 %v3141
    %3315 = vmatprep.subr.mxu0 %v3145
    %3316 = vmatpush1.msra.mxu0 %v3144
    %3317 = vmatprep.subr.mxu0 %v3148
    %3318 = vmatpush1.msra.mxu0 %v3147
    %3319 = vmatprep.subr.mxu0 %v3151
    %3320 = vmatpush1.msra.mxu0 %v3150
    %3321 = vmatprep.subr.mxu0 %v3154
    %3322 = vmatpush1.msra.mxu0 %v3153
    %3323 = vmatprep.subr.mxu0 %v3157
    %3324 = vmatpush1.msra.mxu0 %v3156
    %3325 = vmatprep.mubr.f32.mxu0 %v3056
    %3326 = vmatmul.mubr.f32.gmra.mrb[0].mxu0 %v3055
    %v3327 = vpop.f32.mrb[0].mxu0
    %v3328 = vadd.f32 %v3255, %v3327
    %v3329 = vpop.f32.mrb[0].mxu0
    %v3330 = vadd.f32 %v3256, %v3329
    %3331 = vmatprep.mubr.f32.mxu0 %v3060
    %3332 = vmatmul.mubr.f32.gmra.mrb[0].mxu0 %v3059
    %v3333 = vpop.f32.mrb[0].mxu0
    %v3334 = vadd.f32 %v3258, %v3333
    %v3335 = vpop.f32.mrb[0].mxu0
    %v3336 = vadd.f32 %v3259, %v3335
    %3337 = vdwg.mxu0
    %3338 = vmatprep.subr.mxu0 %v3160
    %3339 = vmatpush1.msra.mxu0 %v3159
    %3340 = vmatprep.subr.mxu0 %v3163
    %3341 = vmatpush1.msra.mxu0 %v3162
    %3342 = vmatprep.subr.mxu0 %v3166
    %3343 = vmatpush1.msra.mxu0 %v3165
    %3344 = vmatprep.subr.mxu0 %v3169
    %3345 = vmatpush1.msra.mxu0 %v3168
    %3346 = vmatprep.subr.mxu0 %v3172
    %3347 = vmatpush1.msra.mxu0 %v3171
    %3348 = vmatprep.subr.mxu0 %v3175
    %3349 = vmatpush1.msra.mxu0 %v3174
    %3350 = vmatprep.subr.mxu0 %v3178
    %3351 = vmatpush1.msra.mxu0 %v3177
    %3352 = vmatprep.subr.mxu0 %v3181
    %3353 = vmatpush1.msra.mxu0 %v3180
    %3354 = vmatprep.subr.mxu0 %v3184
    %3355 = vmatpush1.msra.mxu0 %v3183
    %3356 = vmatprep.subr.mxu0 %v3187
    %3357 = vmatpush1.msra.mxu0 %v3186
    %3358 = vmatprep.subr.mxu0 %v3190
    %3359 = vmatpush1.msra.mxu0 %v3189
    %3360 = vmatprep.subr.mxu0 %v3193
    %3361 = vmatpush1.msra.mxu0 %v3192
    %3362 = vmatprep.subr.mxu0 %v3196
    %3363 = vmatpush1.msra.mxu0 %v3195
    %3364 = vmatprep.subr.mxu0 %v3199
    %3365 = vmatpush1.msra.mxu0 %v3198
    %3366 = vmatprep.subr.mxu0 %v3202
    %3367 = vmatpush1.msra.mxu0 %v3201
    %3368 = vmatprep.subr.mxu0 %v3205
    %3369 = vmatpush1.msra.mxu0 %v3204
    %3370 = vmatprep.subr.mxu0 %v3208
    %3371 = vmatpush1.msra.mxu0 %v3207
    %3372 = vmatprep.subr.mxu0 %v3211
    %3373 = vmatpush1.msra.mxu0 %v3210
    %3374 = vmatprep.subr.mxu0 %v3214
    %3375 = vmatpush1.msra.mxu0 %v3213
    %3376 = vmatprep.subr.mxu0 %v3217
    %3377 = vmatpush1.msra.mxu0 %v3216
    %3378 = vmatprep.subr.mxu0 %v3220
    %3379 = vmatpush1.msra.mxu0 %v3219
    %3380 = vmatprep.subr.mxu0 %v3223
    %3381 = vmatpush1.msra.mxu0 %v3222
    %3382 = vmatprep.subr.mxu0 %v3226
    %3383 = vmatpush1.msra.mxu0 %v3225
    %3384 = vmatprep.subr.mxu0 %v3229
    %3385 = vmatpush1.msra.mxu0 %v3228
    %3386 = vmatprep.subr.mxu0 %v3232
    %3387 = vmatpush1.msra.mxu0 %v3231
    %3388 = vmatprep.subr.mxu0 %v3235
    %3389 = vmatpush1.msra.mxu0 %v3234
    %3390 = vmatprep.subr.mxu0 %v3238
    %3391 = vmatpush1.msra.mxu0 %v3237
    %3392 = vmatprep.subr.mxu0 %v3241
    %3393 = vmatpush1.msra.mxu0 %v3240
    %3394 = vmatprep.subr.mxu0 %v3244
    %3395 = vmatpush1.msra.mxu0 %v3243
    %3396 = vmatprep.subr.mxu0 %v3247
    %3397 = vmatpush1.msra.mxu0 %v3246
    %3398 = vmatprep.subr.mxu0 %v3250
    %3399 = vmatpush1.msra.mxu0 %v3249
    %3400 = vmatprep.subr.mxu0 %v3253
    %3401 = vmatpush1.msra.mxu0 %v3252
    %3402 = vmatprep.mubr.f32.mxu0 %v3058
    %3403 = vmatmul.mubr.f32.gmra.mrb[0].mxu0 %v3057
    %v3404 = vpop.f32.mrb[0].mxu0
    %v3405 = vadd.f32 %v3328, %v3404
    %v3406 = vpop.f32.mrb[0].mxu0
    %v3407 = vadd.f32 %v3330, %v3406
    %3408 = vmatprep.mubr.f32.mxu0 %v3062
    %3409 = vmatmul.mubr.f32.gmra.mrb[0].mxu0 %v3061
    %v3410 = vpop.f32.mrb[0].mxu0
    %v3411 = vadd.f32 %v3334, %v3410
    %v3412 = vpop.f32.mrb[0].mxu0
    %v3413 = vadd.f32 %v3336, %v3412
    %3414 = vdwg.mxu0
    %3415 = vmatprep.subr.mxu0 0.0
    %3416 = vmatpush1.msra.mxu0 %v3065
    %3417 = vmatprep.subr.mxu0 0.0
    %3418 = vmatpush1.msra.mxu0 %v3068
    %3419 = vmatprep.subr.mxu0 0.0
    %3420 = vmatpush1.msra.mxu0 %v3071
    %3421 = vmatprep.subr.mxu0 0.0
    %3422 = vmatpush1.msra.mxu0 %v3074
    %3423 = vmatprep.subr.mxu0 0.0
    %3424 = vmatpush1.msra.mxu0 %v3077
    %3425 = vmatprep.subr.mxu0 0.0
    %3426 = vmatpush1.msra.mxu0 %v3080
    %3427 = vmatprep.subr.mxu0 0.0
    %3428 = vmatpush1.msra.mxu0 %v3083
    %3429 = vmatprep.subr.mxu0 0.0
    %3430 = vmatpush1.msra.mxu0 %v3086
    %3431 = vmatprep.subr.mxu0 0.0
    %3432 = vmatpush1.msra.mxu0 %v3089
    %3433 = vmatprep.subr.mxu0 0.0
    %3434 = vmatpush1.msra.mxu0 %v3092
    %3435 = vmatprep.subr.mxu0 0.0
    %3436 = vmatpush1.msra.mxu0 %v3095
    %3437 = vmatprep.subr.mxu0 0.0
    %3438 = vmatpush1.msra.mxu0 %v3098
    %3439 = vmatprep.subr.mxu0 0.0
    %3440 = vmatpush1.msra.mxu0 %v3101
    %3441 = vmatprep.subr.mxu0 0.0
    %3442 = vmatpush1.msra.mxu0 %v3104
    %3443 = vmatprep.subr.mxu0 0.0
    %3444 = vmatpush1.msra.mxu0 %v3107
    %3445 = vmatprep.subr.mxu0 0.0
    %3446 = vmatpush1.msra.mxu0 %v3110
    %3447 = vmatprep.subr.mxu0 0.0
    %3448 = vmatpush1.msra.mxu0 %v3113
    %3449 = vmatprep.subr.mxu0 0.0
    %3450 = vmatpush1.msra.mxu0 %v3116
    %3451 = vmatprep.subr.mxu0 0.0
    %3452 = vmatpush1.msra.mxu0 %v3119
    %3453 = vmatprep.subr.mxu0 0.0
    %3454 = vmatpush1.msra.mxu0 %v3122
    %3455 = vmatprep.subr.mxu0 0.0
    %3456 = vmatpush1.msra.mxu0 %v3125
    %3457 = vmatprep.subr.mxu0 0.0
    %3458 = vmatpush1.msra.mxu0 %v3128
    %3459 = vmatprep.subr.mxu0 0.0
    %3460 = vmatpush1.msra.mxu0 %v3131
    %3461 = vmatprep.subr.mxu0 0.0
    %3462 = vmatpush1.msra.mxu0 %v3134
    %3463 = vmatprep.subr.mxu0 0.0
    %3464 = vmatpush1.msra.mxu0 %v3137
    %3465 = vmatprep.subr.mxu0 0.0
    %3466 = vmatpush1.msra.mxu0 %v3140
    %3467 = vmatprep.subr.mxu0 0.0
    %3468 = vmatpush1.msra.mxu0 %v3143
    %3469 = vmatprep.subr.mxu0 0.0
    %3470 = vmatpush1.msra.mxu0 %v3146
    %3471 = vmatprep.subr.mxu0 0.0
    %3472 = vmatpush1.msra.mxu0 %v3149
    %3473 = vmatprep.subr.mxu0 0.0
    %3474 = vmatpush1.msra.mxu0 %v3152
    %3475 = vmatprep.subr.mxu0 0.0
    %3476 = vmatpush1.msra.mxu0 %v3155
    %3477 = vmatprep.subr.mxu0 0.0
    %3478 = vmatpush1.msra.mxu0 %v3158
    %3479 = vmatprep.mubr.f32.mxu0 %v3056
    %3480 = vmatmul.mubr.f32.gmra.mrb[0].mxu0 %v3055
    %v3481 = vpop.f32.mrb[0].mxu0
    %v3482 = vadd.f32 %v3257, %v3481
    %v3483 = vpop.f32.mrb[0].mxu0
    %3484 = vmatprep.mubr.f32.mxu0 %v3060
    %3485 = vmatmul.mubr.f32.gmra.mrb[0].mxu0 %v3059
    %v3486 = vpop.f32.mrb[0].mxu0
    %v3487 = vadd.f32 %v3260, %v3486
    %v3488 = vpop.f32.mrb[0].mxu0
    %3489 = vdwg.mxu0
    %3490 = vmatprep.subr.mxu0 0.0
    %3491 = vmatpush1.msra.mxu0 %v3161
    %3492 = vmatprep.subr.mxu0 0.0
    %3493 = vmatpush1.msra.mxu0 %v3164
    %3494 = vmatprep.subr.mxu0 0.0
    %3495 = vmatpush1.msra.mxu0 %v3167
    %3496 = vmatprep.subr.mxu0 0.0
    %3497 = vmatpush1.msra.mxu0 %v3170
    %3498 = vmatprep.subr.mxu0 0.0
    %3499 = vmatpush1.msra.mxu0 %v3173
    %3500 = vmatprep.subr.mxu0 0.0
    %3501 = vmatpush1.msra.mxu0 %v3176
    %3502 = vmatprep.subr.mxu0 0.0
    %3503 = vmatpush1.msra.mxu0 %v3179
    %3504 = vmatprep.subr.mxu0 0.0
    %3505 = vmatpush1.msra.mxu0 %v3182
    %3506 = vmatprep.subr.mxu0 0.0
    %3507 = vmatpush1.msra.mxu0 %v3185
    %3508 = vmatprep.subr.mxu0 0.0
    %3509 = vmatpush1.msra.mxu0 %v3188
    %3510 = vmatprep.subr.mxu0 0.0
    %3511 = vmatpush1.msra.mxu0 %v3191
    %3512 = vmatprep.subr.mxu0 0.0
    %3513 = vmatpush1.msra.mxu0 %v3194
    %3514 = vmatprep.subr.mxu0 0.0
    %3515 = vmatpush1.msra.mxu0 %v3197
    %3516 = vmatprep.subr.mxu0 0.0
    %3517 = vmatpush1.msra.mxu0 %v3200
    %3518 = vmatprep.subr.mxu0 0.0
    %3519 = vmatpush1.msra.mxu0 %v3203
    %3520 = vmatprep.subr.mxu0 0.0
    %3521 = vmatpush1.msra.mxu0 %v3206
    %3522 = vmatprep.subr.mxu0 0.0
    %3523 = vmatpush1.msra.mxu0 %v3209
    %3524 = vmatprep.subr.mxu0 0.0
    %3525 = vmatpush1.msra.mxu0 %v3212
    %3526 = vmatprep.subr.mxu0 0.0
    %3527 = vmatpush1.msra.mxu0 %v3215
    %3528 = vmatprep.subr.mxu0 0.0
    %3529 = vmatpush1.msra.mxu0 %v3218
    %3530 = vmatprep.subr.mxu0 0.0
    %3531 = vmatpush1.msra.mxu0 %v3221
    %3532 = vmatprep.subr.mxu0 0.0
    %3533 = vmatpush1.msra.mxu0 %v3224
    %3534 = vmatprep.subr.mxu0 0.0
    %3535 = vmatpush1.msra.mxu0 %v3227
    %3536 = vmatprep.subr.mxu0 0.0
    %3537 = vmatpush1.msra.mxu0 %v3230
    %3538 = vmatprep.subr.mxu0 0.0
    %3539 = vmatpush1.msra.mxu0 %v3233
    %3540 = vmatprep.subr.mxu0 0.0
    %3541 = vmatpush1.msra.mxu0 %v3236
    %3542 = vmatprep.subr.mxu0 0.0
    %3543 = vmatpush1.msra.mxu0 %v3239
    %3544 = vmatprep.subr.mxu0 0.0
    %3545 = vmatpush1.msra.mxu0 %v3242
    %3546 = vmatprep.subr.mxu0 0.0
    %3547 = vmatpush1.msra.mxu0 %v3245
    %3548 = vmatprep.subr.mxu0 0.0
    %3549 = vmatpush1.msra.mxu0 %v3248
    %3550 = vmatprep.subr.mxu0 0.0
    %3551 = vmatpush1.msra.mxu0 %v3251
    %3552 = vmatprep.subr.mxu0 0.0
    %3553 = vmatpush1.msra.mxu0 %v3254
    %3554 = vmatprep.mubr.f32.mxu0 %v3058
    %3555 = vmatmul.mubr.f32.gmra.mrb[0].mxu0 %v3057
    %v3556 = vpop.f32.mrb[0].mxu0
    %v3557 = vadd.f32 %v3482, %v3556
    %v3558 = vpop.f32.mrb[0].mxu0
    %3559 = vmatprep.mubr.f32.mxu0 %v3062
    %3560 = vmatmul.mubr.f32.gmra.mrb[0].mxu0 %v3061
    %v3561 = vpop.f32.mrb[0].mxu0
    %v3562 = vadd.f32 %v3487, %v3561
    %v3563 = vpop.f32.mrb[0].mxu0
    %3564 = vdwg.mxu0
    %v3565 = vxor.u32 %v3405, 2147483648
    %v3566 = vxor.u32 %v3411, 2147483648
    %v3567 = vmul.f32 %v3565, 1.442695
    %v3568 = vpow.pop %v3567
    %v3569 = vmul.f32 %v3566, 1.442695
    %v3570 = vpow.pop %v3569
    %v3571 = vadd.f32 %v3568, 1.0
    %v3572 = vadd.f32 %v3570, 1.0
    %v3573 = vrcp.pop %v3571
    %v3574 = vmul.f32 1.0, %v3573
    %v3575 = vrcp.pop %v3572
    %v3576 = vmul.f32 1.0, %v3575
    %v3577 = vxor.u32 %v3407, 2147483648
    %v3578 = vxor.u32 %v3413, 2147483648
    %v3579 = vmul.f32 %v3577, 1.442695
    %v3580 = vpow.pop %v3579
    %v3581 = vmul.f32 %v3578, 1.442695
    %v3582 = vpow.pop %v3581
    %v3583 = vadd.f32 %v3580, 1.0
    %v3584 = vadd.f32 %v3582, 1.0
    %v3585 = vrcp.pop %v3583
    %v3586 = vmul.f32 1.0, %v3585
    %v3587 = vrcp.pop %v3584
    %v3588 = vmul.f32 1.0, %v3587
    %v3589 = vmul.f32 %v3586, %v2796
    %v3590 = vmul.f32 %v3588, %v2797
    %v3591 = vld [vmem:[#allocation12] sm:$0xff]
    %v3592 = vld [vmem:[#allocation12 + $0x8] sm:$0xff]
    %v3593 = vld [vmem:[#allocation12 + $0x10] sm:$0xff]
    %v3594 = vld [vmem:[#allocation12 + $0x18] sm:$0xff]
    %v3595 = vld [vmem:[#allocation12 + $0x20] sm:$0xff]
    %v3596 = vld [vmem:[#allocation12 + $0x28] sm:$0xff]
    %v3597 = vld [vmem:[#allocation12 + $0x30] sm:$0xff]
    %v3598 = vld [vmem:[#allocation12 + $0x38] sm:$0xff]
    %v3599 = vld [vmem:[#allocation12 + $0x40] sm:$0xff]
    %v3600 = vld [vmem:[#allocation12 + $0x48] sm:$0xff]
    %v3601 = vld [vmem:[#allocation12 + $0x50] sm:$0xff]
    %v3602 = vld [vmem:[#allocation12 + $0x58] sm:$0xff]
    %v3603 = vld [vmem:[#allocation12 + $0x60] sm:$0xff]
    %v3604 = vld [vmem:[#allocation12 + $0x68] sm:$0xff]
    %v3605 = vld [vmem:[#allocation12 + $0x70] sm:$0xff]
    %v3606 = vld [vmem:[#allocation12 + $0x78] sm:$0xff]
    %3607 = vmatprep.subr.mxu0 0.0
    %3608 = vmatpush1.msra.mxu0 %v3591
    %3609 = vmatprep.subr.mxu0 0.0
    %3610 = vmatpush1.msra.mxu0 %v3592
    %3611 = vmatprep.subr.mxu0 0.0
    %3612 = vmatpush1.msra.mxu0 %v3593
    %3613 = vmatprep.subr.mxu0 0.0
    %3614 = vmatpush1.msra.mxu0 %v3594
    %3615 = vmatprep.subr.mxu0 0.0
    %3616 = vmatpush1.msra.mxu0 %v3595
    %3617 = vmatprep.subr.mxu0 0.0
    %3618 = vmatpush1.msra.mxu0 %v3596
    %3619 = vmatprep.subr.mxu0 0.0
    %3620 = vmatpush1.msra.mxu0 %v3597
    %3621 = vmatprep.subr.mxu0 0.0
    %3622 = vmatpush1.msra.mxu0 %v3598
    %3623 = vmatprep.subr.mxu0 0.0
    %3624 = vmatpush1.msra.mxu0 %v3599
    %3625 = vmatprep.subr.mxu0 0.0
    %3626 = vmatpush1.msra.mxu0 %v3600
    %3627 = vmatprep.subr.mxu0 0.0
    %3628 = vmatpush1.msra.mxu0 %v3601
    %3629 = vmatprep.subr.mxu0 0.0
    %3630 = vmatpush1.msra.mxu0 %v3602
    %3631 = vmatprep.subr.mxu0 0.0
    %3632 = vmatpush1.msra.mxu0 %v3603
    %3633 = vmatprep.subr.mxu0 0.0
    %3634 = vmatpush1.msra.mxu0 %v3604
    %3635 = vmatprep.subr.mxu0 0.0
    %3636 = vmatpush1.msra.mxu0 %v3605
    %3637 = vmatprep.subr.mxu0 0.0
    %3638 = vmatpush1.msra.mxu0 %v3606
    %3639 = vmatprep.subr.mxu0 0.0
    %3640 = vmatpush1.msra.mxu0 0.0
    %3641 = vmatprep.subr.mxu0 0.0
    %3642 = vmatpush1.msra.mxu0 0.0
    %3643 = vmatprep.subr.mxu0 0.0
    %3644 = vmatpush1.msra.mxu0 0.0
    %3645 = vmatprep.subr.mxu0 0.0
    %3646 = vmatpush1.msra.mxu0 0.0
    %3647 = vmatprep.subr.mxu0 0.0
    %3648 = vmatpush1.msra.mxu0 0.0
    %3649 = vmatprep.subr.mxu0 0.0
    %3650 = vmatpush1.msra.mxu0 0.0
    %3651 = vmatprep.subr.mxu0 0.0
    %3652 = vmatpush1.msra.mxu0 0.0
    %3653 = vmatprep.subr.mxu0 0.0
    %3654 = vmatpush1.msra.mxu0 0.0
    %3655 = vmatprep.subr.mxu0 0.0
    %3656 = vmatpush1.msra.mxu0 0.0
    %3657 = vmatprep.subr.mxu0 0.0
    %3658 = vmatpush1.msra.mxu0 0.0
    %3659 = vmatprep.subr.mxu0 0.0
    %3660 = vmatpush1.msra.mxu0 0.0
    %3661 = vmatprep.subr.mxu0 0.0
    %3662 = vmatpush1.msra.mxu0 0.0
    %3663 = vmatprep.subr.mxu0 0.0
    %3664 = vmatpush1.msra.mxu0 0.0
    %3665 = vmatprep.subr.mxu0 0.0
    %3666 = vmatpush1.msra.mxu0 0.0
    %3667 = vmatprep.subr.mxu0 0.0
    %3668 = vmatpush1.msra.mxu0 0.0
    %3669 = vmatprep.subr.mxu0 0.0
    %3670 = vmatpush1.msra.mxu0 0.0
    %3671 = vmatprep.mubr.f32.mxu0 0.0
    %3672 = vmatmul.mubr.f32.gmra.mrb[0].mxu0 %v3589
    %v3673 = vpop.f32.mrb[0].mxu0
    %v3674 = vadd.f32 0.0, %v3673
    %v3675 = vpop.f32.mrb[0].mxu0
    %3676 = vmatprep.mubr.f32.mxu0 0.0
    %3677 = vmatmul.mubr.f32.gmra.mrb[0].mxu0 %v3590
    %v3678 = vpop.f32.mrb[0].mxu0
    %v3679 = vadd.f32 0.0, %v3678
    %v3680 = vpop.f32.mrb[0].mxu0
    %3681 = vdwg.mxu0
    %v3682 = vadd.f32 %v3557, %v3674
    %v3683 = vadd.f32 %v3562, %v3679
    %v3684 = vtanh.pop %v3682
    %v3685 = vtanh.pop %v3683
    %v3686 = vsub.f32 1.0, %v3574
    %v3687 = vsub.f32 1.0, %v3576
    %v3688 = vmul.f32 %v3686, %v2796
    %v3689 = vmul.f32 %v3687, %v2797
    %v3690 = vmul.f32 %v3574, %v3684
    %v3691 = vmul.f32 %v3576, %v3685
    %v3692 = vadd.f32 %v3688, %v3690
    %v3693 = vadd.f32 %v3689, %v3691
    %3694 = vst [vmem:[#allocation2] sm:$0xff] %v3692
    %3695 = vst [vmem:[#allocation2 + $0x8] sm:$0xff] %v3693
    %v3696 = vld [vmem:[#allocation2] sm:$0xff]
    %v3697 = vld [vmem:[#allocation2 + $0x8] sm:$0xff]
    %v3698 = vld [vmem:[#allocation4] sm:$0xff]
    %v3699 = vld [vmem:[#allocation4 + $0x8] sm:$0xff]
    %v3701 = vsel %vm97, %v3698, 0
    %v3704 = vsel %vm97, %v3699, 0
    %3706 = vmatprep.subr.mxu0 0.0
    %3707 = vmatpush1.msra.mxu0 %v3696
    %3708 = vmatprep.subr.mxu0 0.0
    %3709 = vmatpush1.msra.mxu0 %v3697
    %3710 = vmatprep.subr.mxu0 0.0
    %3711 = vmatpush1.msra.mxu0 0.0
    %3712 = vmatprep.subr.mxu0 0.0
    %3713 = vmatpush1.msra.mxu0 0.0
    %3714 = vmatprep.subr.mxu0 0.0
    %3715 = vmatpush1.msra.mxu0 0.0
    %3716 = vmatprep.subr.mxu0 0.0
    %3717 = vmatpush1.msra.mxu0 0.0
    %3718 = vmatprep.subr.mxu0 0.0
    %3719 = vmatpush1.msra.mxu0 0.0
    %3720 = vmatprep.subr.mxu0 0.0
    %3721 = vmatpush1.msra.mxu0 0.0
    %3722 = vmatprep.subr.mxu0 0.0
    %3723 = vmatpush1.msra.mxu0 0.0
    %3724 = vmatprep.subr.mxu0 0.0
    %3725 = vmatpush1.msra.mxu0 0.0
    %3726 = vmatprep.subr.mxu0 0.0
    %3727 = vmatpush1.msra.mxu0 0.0
    %3728 = vmatprep.subr.mxu0 0.0
    %3729 = vmatpush1.msra.mxu0 0.0
    %3730 = vmatprep.subr.mxu0 0.0
    %3731 = vmatpush1.msra.mxu0 0.0
    %3732 = vmatprep.subr.mxu0 0.0
    %3733 = vmatpush1.msra.mxu0 0.0
    %3734 = vmatprep.subr.mxu0 0.0
    %3735 = vmatpush1.msra.mxu0 0.0
    %3736 = vmatprep.subr.mxu0 0.0
    %3737 = vmatpush1.msra.mxu0 0.0
    %3738 = vmatprep.subr.mxu0 0.0
    %3739 = vmatpush1.msra.mxu0 0.0
    %3740 = vmatprep.subr.mxu0 0.0
    %3741 = vmatpush1.msra.mxu0 0.0
    %3742 = vmatprep.subr.mxu0 0.0
    %3743 = vmatpush1.msra.mxu0 0.0
    %3744 = vmatprep.subr.mxu0 0.0
    %3745 = vmatpush1.msra.mxu0 0.0
    %3746 = vmatprep.subr.mxu0 0.0
    %3747 = vmatpush1.msra.mxu0 0.0
    %3748 = vmatprep.subr.mxu0 0.0
    %3749 = vmatpush1.msra.mxu0 0.0
    %3750 = vmatprep.subr.mxu0 0.0
    %3751 = vmatpush1.msra.mxu0 0.0
    %3752 = vmatprep.subr.mxu0 0.0
    %3753 = vmatpush1.msra.mxu0 0.0
    %3754 = vmatprep.subr.mxu0 0.0
    %3755 = vmatpush1.msra.mxu0 0.0
    %3756 = vmatprep.subr.mxu0 0.0
    %3757 = vmatpush1.msra.mxu0 0.0
    %3758 = vmatprep.subr.mxu0 0.0
    %3759 = vmatpush1.msra.mxu0 0.0
    %3760 = vmatprep.subr.mxu0 0.0
    %3761 = vmatpush1.msra.mxu0 0.0
    %3762 = vmatprep.subr.mxu0 0.0
    %3763 = vmatpush1.msra.mxu0 0.0
    %3764 = vmatprep.subr.mxu0 0.0
    %3765 = vmatpush1.msra.mxu0 0.0
    %3766 = vmatprep.subr.mxu0 0.0
    %3767 = vmatpush1.msra.mxu0 0.0
    %3768 = vmatprep.subr.mxu0 0.0
    %3769 = vmatpush1.msra.mxu0 0.0
    %3770 = vmatprep.mubr.f32.mxu0 0.0
    %3771 = vmatmul.mubr.f32.gmra.mrb[0].mxu0 %v3701
    %v3772 = vpop.f32.mrb[0].mxu0
    %v3773 = vadd.f32 0.0, %v3772
    %v3774 = vpop.f32.mrb[0].mxu0
    %3775 = vmatprep.mubr.f32.mxu0 0.0
    %3776 = vmatmul.mubr.f32.gmra.mrb[0].mxu0 %v3704
    %v3777 = vpop.f32.mrb[0].mxu0
    %v3778 = vadd.f32 0.0, %v3777
    %v3779 = vpop.f32.mrb[0].mxu0
    %3780 = vdwg.mxu0
    %3781 = vst [vmem:[#allocation3] sm:$0xff] %v3773
    %3782 = vst [vmem:[#allocation3 + $0x20] sm:$0xff] %v3778
    %v3783 = vld [vmem:[%s181] sm:$0xff]
    %v3784 = vld [vmem:[%s181 + $0x8] sm:$0xff]
    %v3786 = vsel %vm97, %v3783, 0
    %v3789 = vsel %vm97, %v3784, 0
    %3791 = vmatprep.subr.mxu0 0.0
    %3792 = vmatpush1.msra.mxu0 %v3696
    %3793 = vmatprep.subr.mxu0 0.0
    %3794 = vmatpush1.msra.mxu0 %v3697
    %3795 = vmatprep.subr.mxu0 0.0
    %3796 = vmatpush1.msra.mxu0 0.0
    %3797 = vmatprep.subr.mxu0 0.0
    %3798 = vmatpush1.msra.mxu0 0.0
    %3799 = vmatprep.subr.mxu0 0.0
    %3800 = vmatpush1.msra.mxu0 0.0
    %3801 = vmatprep.subr.mxu0 0.0
    %3802 = vmatpush1.msra.mxu0 0.0
    %3803 = vmatprep.subr.mxu0 0.0
    %3804 = vmatpush1.msra.mxu0 0.0
    %3805 = vmatprep.subr.mxu0 0.0
    %3806 = vmatpush1.msra.mxu0 0.0
    %3807 = vmatprep.subr.mxu0 0.0
    %3808 = vmatpush1.msra.mxu0 0.0
    %3809 = vmatprep.subr.mxu0 0.0
    %3810 = vmatpush1.msra.mxu0 0.0
    %3811 = vmatprep.subr.mxu0 0.0
    %3812 = vmatpush1.msra.mxu0 0.0
    %3813 = vmatprep.subr.mxu0 0.0
    %3814 = vmatpush1.msra.mxu0 0.0
    %3815 = vmatprep.subr.mxu0 0.0
    %3816 = vmatpush1.msra.mxu0 0.0
    %3817 = vmatprep.subr.mxu0 0.0
    %3818 = vmatpush1.msra.mxu0 0.0
    %3819 = vmatprep.subr.mxu0 0.0
    %3820 = vmatpush1.msra.mxu0 0.0
    %3821 = vmatprep.subr.mxu0 0.0
    %3822 = vmatpush1.msra.mxu0 0.0
    %3823 = vmatprep.subr.mxu0 0.0
    %3824 = vmatpush1.msra.mxu0 0.0
    %3825 = vmatprep.subr.mxu0 0.0
    %3826 = vmatpush1.msra.mxu0 0.0
    %3827 = vmatprep.subr.mxu0 0.0
    %3828 = vmatpush1.msra.mxu0 0.0
    %3829 = vmatprep.subr.mxu0 0.0
    %3830 = vmatpush1.msra.mxu0 0.0
    %3831 = vmatprep.subr.mxu0 0.0
    %3832 = vmatpush1.msra.mxu0 0.0
    %3833 = vmatprep.subr.mxu0 0.0
    %3834 = vmatpush1.msra.mxu0 0.0
    %3835 = vmatprep.subr.mxu0 0.0
    %3836 = vmatpush1.msra.mxu0 0.0
    %3837 = vmatprep.subr.mxu0 0.0
    %3838 = vmatpush1.msra.mxu0 0.0
    %3839 = vmatprep.subr.mxu0 0.0
    %3840 = vmatpush1.msra.mxu0 0.0
    %3841 = vmatprep.subr.mxu0 0.0
    %3842 = vmatpush1.msra.mxu0 0.0
    %3843 = vmatprep.subr.mxu0 0.0
    %3844 = vmatpush1.msra.mxu0 0.0
    %3845 = vmatprep.subr.mxu0 0.0
    %3846 = vmatpush1.msra.mxu0 0.0
    %3847 = vmatprep.subr.mxu0 0.0
    %3848 = vmatpush1.msra.mxu0 0.0
    %3849 = vmatprep.subr.mxu0 0.0
    %3850 = vmatpush1.msra.mxu0 0.0
    %3851 = vmatprep.subr.mxu0 0.0
    %3852 = vmatpush1.msra.mxu0 0.0
    %3853 = vmatprep.subr.mxu0 0.0
    %3854 = vmatpush1.msra.mxu0 0.0
    %3855 = vmatprep.mubr.f32.mxu0 0.0
    %3856 = vmatmul.mubr.f32.gmra.mrb[0].mxu0 %v3786
    %v3857 = vpop.f32.mrb[0].mxu0
    %v3858 = vadd.f32 0.0, %v3857
    %v3859 = vpop.f32.mrb[0].mxu0
    %3860 = vmatprep.mubr.f32.mxu0 0.0
    %3861 = vmatmul.mubr.f32.gmra.mrb[0].mxu0 %v3789
    %v3862 = vpop.f32.mrb[0].mxu0
    %v3863 = vadd.f32 0.0, %v3862
    %v3864 = vpop.f32.mrb[0].mxu0
    %3865 = vdwg.mxu0
    %3866 = vst [vmem:[#allocation3 + $0x8] sm:$0xff] %v3858
    %3867 = vst [vmem:[#allocation3 + $0x28] sm:$0xff] %v3863
    %v3868 = vld [vmem:[%s267] sm:$0xff]
    %v3869 = vld [vmem:[%s267 + $0x8] sm:$0xff]
    %v3871 = vsel %vm97, %v3868, 0
    %v3874 = vsel %vm97, %v3869, 0
    %3876 = vmatprep.subr.mxu0 0.0
    %3877 = vmatpush1.msra.mxu0 %v3696
    %3878 = vmatprep.subr.mxu0 0.0
    %3879 = vmatpush1.msra.mxu0 %v3697
    %3880 = vmatprep.subr.mxu0 0.0
    %3881 = vmatpush1.msra.mxu0 0.0
    %3882 = vmatprep.subr.mxu0 0.0
    %3883 = vmatpush1.msra.mxu0 0.0
    %3884 = vmatprep.subr.mxu0 0.0
    %3885 = vmatpush1.msra.mxu0 0.0
    %3886 = vmatprep.subr.mxu0 0.0
    %3887 = vmatpush1.msra.mxu0 0.0
    %3888 = vmatprep.subr.mxu0 0.0
    %3889 = vmatpush1.msra.mxu0 0.0
    %3890 = vmatprep.subr.mxu0 0.0
    %3891 = vmatpush1.msra.mxu0 0.0
    %3892 = vmatprep.subr.mxu0 0.0
    %3893 = vmatpush1.msra.mxu0 0.0
    %3894 = vmatprep.subr.mxu0 0.0
    %3895 = vmatpush1.msra.mxu0 0.0
    %3896 = vmatprep.subr.mxu0 0.0
    %3897 = vmatpush1.msra.mxu0 0.0
    %3898 = vmatprep.subr.mxu0 0.0
    %3899 = vmatpush1.msra.mxu0 0.0
    %3900 = vmatprep.subr.mxu0 0.0
    %3901 = vmatpush1.msra.mxu0 0.0
    %3902 = vmatprep.subr.mxu0 0.0
    %3903 = vmatpush1.msra.mxu0 0.0
    %3904 = vmatprep.subr.mxu0 0.0
    %3905 = vmatpush1.msra.mxu0 0.0
    %3906 = vmatprep.subr.mxu0 0.0
    %3907 = vmatpush1.msra.mxu0 0.0
    %3908 = vmatprep.subr.mxu0 0.0
    %3909 = vmatpush1.msra.mxu0 0.0
    %3910 = vmatprep.subr.mxu0 0.0
    %3911 = vmatpush1.msra.mxu0 0.0
    %3912 = vmatprep.subr.mxu0 0.0
    %3913 = vmatpush1.msra.mxu0 0.0
    %3914 = vmatprep.subr.mxu0 0.0
    %3915 = vmatpush1.msra.mxu0 0.0
    %3916 = vmatprep.subr.mxu0 0.0
    %3917 = vmatpush1.msra.mxu0 0.0
    %3918 = vmatprep.subr.mxu0 0.0
    %3919 = vmatpush1.msra.mxu0 0.0
    %3920 = vmatprep.subr.mxu0 0.0
    %3921 = vmatpush1.msra.mxu0 0.0
    %3922 = vmatprep.subr.mxu0 0.0
    %3923 = vmatpush1.msra.mxu0 0.0
    %3924 = vmatprep.subr.mxu0 0.0
    %3925 = vmatpush1.msra.mxu0 0.0
    %3926 = vmatprep.subr.mxu0 0.0
    %3927 = vmatpush1.msra.mxu0 0.0
    %3928 = vmatprep.subr.mxu0 0.0
    %3929 = vmatpush1.msra.mxu0 0.0
    %3930 = vmatprep.subr.mxu0 0.0
    %3931 = vmatpush1.msra.mxu0 0.0
    %3932 = vmatprep.subr.mxu0 0.0
    %3933 = vmatpush1.msra.mxu0 0.0
    %3934 = vmatprep.subr.mxu0 0.0
    %3935 = vmatpush1.msra.mxu0 0.0
    %3936 = vmatprep.subr.mxu0 0.0
    %3937 = vmatpush1.msra.mxu0 0.0
    %3938 = vmatprep.subr.mxu0 0.0
    %3939 = vmatpush1.msra.mxu0 0.0
    %3940 = vmatprep.mubr.f32.mxu0 0.0
    %3941 = vmatmul.mubr.f32.gmra.mrb[0].mxu0 %v3871
    %v3942 = vpop.f32.mrb[0].mxu0
    %v3943 = vadd.f32 0.0, %v3942
    %v3944 = vpop.f32.mrb[0].mxu0
    %3945 = vmatprep.mubr.f32.mxu0 0.0
    %3946 = vmatmul.mubr.f32.gmra.mrb[0].mxu0 %v3874
    %v3947 = vpop.f32.mrb[0].mxu0
    %v3948 = vadd.f32 0.0, %v3947
    %v3949 = vpop.f32.mrb[0].mxu0
    %3950 = vdwg.mxu0
    %3951 = vst [vmem:[#allocation3 + $0x10] sm:$0xff] %v3943
    %3952 = vst [vmem:[#allocation3 + $0x30] sm:$0xff] %v3948
    %3953 = vst [vmem:[#allocation3 + $0x18] sm:$0xff] %v3696
    %3954 = vst [vmem:[#allocation3 + $0x38] sm:$0xff] %v3697
    %v3955 = vld [vmem:[#allocation3] sm:$0xff]
    %v3956 = vld [vmem:[#allocation3 + $0x8] sm:$0xff]
    %v3957 = vld [vmem:[#allocation3 + $0x10] sm:$0xff]
    %v3958 = vld [vmem:[#allocation3 + $0x18] sm:$0xff]
    %v3959 = vld [vmem:[#allocation3 + $0x20] sm:$0xff]
    %v3960 = vld [vmem:[#allocation3 + $0x28] sm:$0xff]
    %v3961 = vld [vmem:[#allocation3 + $0x30] sm:$0xff]
    %v3962 = vld [vmem:[#allocation3 + $0x38] sm:$0xff]
    %v3963 = vld [vmem:[#allocation10] sm:$0xff]
    %v3964 = vld [vmem:[#allocation10 + $0x8] sm:$0xff]
    %v3965 = vld [vmem:[#allocation10 + $0x10] sm:$0xff]
    %v3966 = vld [vmem:[#allocation10 + $0x18] sm:$0xff]
    %v3967 = vld [vmem:[#allocation10 + $0x20] sm:$0xff]
    %v3968 = vld [vmem:[#allocation10 + $0x28] sm:$0xff]
    %v3969 = vld [vmem:[#allocation10 + $0x30] sm:$0xff]
    %v3970 = vld [vmem:[#allocation10 + $0x38] sm:$0xff]
    %v3971 = vld [vmem:[#allocation10 + $0x40] sm:$0xff]
    %v3972 = vld [vmem:[#allocation10 + $0x48] sm:$0xff]
    %v3973 = vld [vmem:[#allocation10 + $0x50] sm:$0xff]
    %v3974 = vld [vmem:[#allocation10 + $0x58] sm:$0xff]
    %v3975 = vld [vmem:[#allocation10 + $0x60] sm:$0xff]
    %v3976 = vld [vmem:[#allocation10 + $0x68] sm:$0xff]
    %v3977 = vld [vmem:[#allocation10 + $0x70] sm:$0xff]
    %v3978 = vld [vmem:[#allocation10 + $0x78] sm:$0xff]
    %v3979 = vld [vmem:[#allocation10 + $0x80] sm:$0xff]
    %v3980 = vld [vmem:[#allocation10 + $0x88] sm:$0xff]
    %v3981 = vld [vmem:[#allocation10 + $0x90] sm:$0xff]
    %v3982 = vld [vmem:[#allocation10 + $0x98] sm:$0xff]
    %v3983 = vld [vmem:[#allocation10 + $0xa0] sm:$0xff]
    %v3984 = vld [vmem:[#allocation10 + $0xa8] sm:$0xff]
    %v3985 = vld [vmem:[#allocation10 + $0xb0] sm:$0xff]
    %v3986 = vld [vmem:[#allocation10 + $0xb8] sm:$0xff]
    %v3987 = vld [vmem:[#allocation10 + $0xc0] sm:$0xff]
    %v3988 = vld [vmem:[#allocation10 + $0xc8] sm:$0xff]
    %v3989 = vld [vmem:[#allocation10 + $0xd0] sm:$0xff]
    %v3990 = vld [vmem:[#allocation10 + $0xd8] sm:$0xff]
    %v3991 = vld [vmem:[#allocation10 + $0xe0] sm:$0xff]
    %v3992 = vld [vmem:[#allocation10 + $0xe8] sm:$0xff]
    %v3993 = vld [vmem:[#allocation10 + $0xf0] sm:$0xff]
    %v3994 = vld [vmem:[#allocation10 + $0xf8] sm:$0xff]
    %v3995 = vld [vmem:[#allocation10 + $0x100] sm:$0xff]
    %v3996 = vld [vmem:[#allocation10 + $0x108] sm:$0xff]
    %v3997 = vld [vmem:[#allocation10 + $0x110] sm:$0xff]
    %v3998 = vld [vmem:[#allocation10 + $0x118] sm:$0xff]
    %v3999 = vld [vmem:[#allocation10 + $0x120] sm:$0xff]
    %v4000 = vld [vmem:[#allocation10 + $0x128] sm:$0xff]
    %v4001 = vld [vmem:[#allocation10 + $0x130] sm:$0xff]
    %v4002 = vld [vmem:[#allocation10 + $0x138] sm:$0xff]
    %v4003 = vld [vmem:[#allocation10 + $0x140] sm:$0xff]
    %v4004 = vld [vmem:[#allocation10 + $0x148] sm:$0xff]
    %v4005 = vld [vmem:[#allocation10 + $0x150] sm:$0xff]
    %v4006 = vld [vmem:[#allocation10 + $0x158] sm:$0xff]
    %v4007 = vld [vmem:[#allocation10 + $0x160] sm:$0xff]
    %v4008 = vld [vmem:[#allocation10 + $0x168] sm:$0xff]
    %v4009 = vld [vmem:[#allocation10 + $0x170] sm:$0xff]
    %v4010 = vld [vmem:[#allocation10 + $0x178] sm:$0xff]
    %v4011 = vld [vmem:[#allocation10 + $0x180] sm:$0xff]
    %v4012 = vld [vmem:[#allocation10 + $0x188] sm:$0xff]
    %v4013 = vld [vmem:[#allocation10 + $0x190] sm:$0xff]
    %v4014 = vld [vmem:[#allocation10 + $0x198] sm:$0xff]
    %v4015 = vld [vmem:[#allocation10 + $0x1a0] sm:$0xff]
    %v4016 = vld [vmem:[#allocation10 + $0x1a8] sm:$0xff]
    %v4017 = vld [vmem:[#allocation10 + $0x1b0] sm:$0xff]
    %v4018 = vld [vmem:[#allocation10 + $0x1b8] sm:$0xff]
    %v4019 = vld [vmem:[#allocation10 + $0x1c0] sm:$0xff]
    %v4020 = vld [vmem:[#allocation10 + $0x1c8] sm:$0xff]
    %v4021 = vld [vmem:[#allocation10 + $0x1d0] sm:$0xff]
    %v4022 = vld [vmem:[#allocation10 + $0x1d8] sm:$0xff]
    %v4023 = vld [vmem:[#allocation10 + $0x1e0] sm:$0xff]
    %v4024 = vld [vmem:[#allocation10 + $0x1e8] sm:$0xff]
    %v4025 = vld [vmem:[#allocation10 + $0x1f0] sm:$0xff]
    %v4026 = vld [vmem:[#allocation10 + $0x1f8] sm:$0xff]
    %v4027 = vld [vmem:[#allocation10 + $0x200] sm:$0xff]
    %v4028 = vld [vmem:[#allocation10 + $0x208] sm:$0xff]
    %v4029 = vld [vmem:[#allocation10 + $0x210] sm:$0xff]
    %v4030 = vld [vmem:[#allocation10 + $0x218] sm:$0xff]
    %v4031 = vld [vmem:[#allocation10 + $0x220] sm:$0xff]
    %v4032 = vld [vmem:[#allocation10 + $0x228] sm:$0xff]
    %v4033 = vld [vmem:[#allocation10 + $0x230] sm:$0xff]
    %v4034 = vld [vmem:[#allocation10 + $0x238] sm:$0xff]
    %v4035 = vld [vmem:[#allocation10 + $0x240] sm:$0xff]
    %v4036 = vld [vmem:[#allocation10 + $0x248] sm:$0xff]
    %v4037 = vld [vmem:[#allocation10 + $0x250] sm:$0xff]
    %v4038 = vld [vmem:[#allocation10 + $0x258] sm:$0xff]
    %v4039 = vld [vmem:[#allocation10 + $0x260] sm:$0xff]
    %v4040 = vld [vmem:[#allocation10 + $0x268] sm:$0xff]
    %v4041 = vld [vmem:[#allocation10 + $0x270] sm:$0xff]
    %v4042 = vld [vmem:[#allocation10 + $0x278] sm:$0xff]
    %v4043 = vld [vmem:[#allocation10 + $0x280] sm:$0xff]
    %v4044 = vld [vmem:[#allocation10 + $0x288] sm:$0xff]
    %v4045 = vld [vmem:[#allocation10 + $0x290] sm:$0xff]
    %v4046 = vld [vmem:[#allocation10 + $0x298] sm:$0xff]
    %v4047 = vld [vmem:[#allocation10 + $0x2a0] sm:$0xff]
    %v4048 = vld [vmem:[#allocation10 + $0x2a8] sm:$0xff]
    %v4049 = vld [vmem:[#allocation10 + $0x2b0] sm:$0xff]
    %v4050 = vld [vmem:[#allocation10 + $0x2b8] sm:$0xff]
    %v4051 = vld [vmem:[#allocation10 + $0x2c0] sm:$0xff]
    %v4052 = vld [vmem:[#allocation10 + $0x2c8] sm:$0xff]
    %v4053 = vld [vmem:[#allocation10 + $0x2d0] sm:$0xff]
    %v4054 = vld [vmem:[#allocation10 + $0x2d8] sm:$0xff]
    %v4055 = vld [vmem:[#allocation10 + $0x2e0] sm:$0xff]
    %v4056 = vld [vmem:[#allocation10 + $0x2e8] sm:$0xff]
    %v4057 = vld [vmem:[#allocation10 + $0x2f0] sm:$0xff]
    %v4058 = vld [vmem:[#allocation10 + $0x2f8] sm:$0xff]
    %v4059 = vld [vmem:[#allocation10 + $0x300] sm:$0xff]
    %v4060 = vld [vmem:[#allocation10 + $0x308] sm:$0xff]
    %v4061 = vld [vmem:[#allocation10 + $0x310] sm:$0xff]
    %v4062 = vld [vmem:[#allocation10 + $0x318] sm:$0xff]
    %v4063 = vld [vmem:[#allocation10 + $0x320] sm:$0xff]
    %v4064 = vld [vmem:[#allocation10 + $0x328] sm:$0xff]
    %v4065 = vld [vmem:[#allocation10 + $0x330] sm:$0xff]
    %v4066 = vld [vmem:[#allocation10 + $0x338] sm:$0xff]
    %v4067 = vld [vmem:[#allocation10 + $0x340] sm:$0xff]
    %v4068 = vld [vmem:[#allocation10 + $0x348] sm:$0xff]
    %v4069 = vld [vmem:[#allocation10 + $0x350] sm:$0xff]
    %v4070 = vld [vmem:[#allocation10 + $0x358] sm:$0xff]
    %v4071 = vld [vmem:[#allocation10 + $0x360] sm:$0xff]
    %v4072 = vld [vmem:[#allocation10 + $0x368] sm:$0xff]
    %v4073 = vld [vmem:[#allocation10 + $0x370] sm:$0xff]
    %v4074 = vld [vmem:[#allocation10 + $0x378] sm:$0xff]
    %v4075 = vld [vmem:[#allocation10 + $0x380] sm:$0xff]
    %v4076 = vld [vmem:[#allocation10 + $0x388] sm:$0xff]
    %v4077 = vld [vmem:[#allocation10 + $0x390] sm:$0xff]
    %v4078 = vld [vmem:[#allocation10 + $0x398] sm:$0xff]
    %v4079 = vld [vmem:[#allocation10 + $0x3a0] sm:$0xff]
    %v4080 = vld [vmem:[#allocation10 + $0x3a8] sm:$0xff]
    %v4081 = vld [vmem:[#allocation10 + $0x3b0] sm:$0xff]
    %v4082 = vld [vmem:[#allocation10 + $0x3b8] sm:$0xff]
    %v4083 = vld [vmem:[#allocation10 + $0x3c0] sm:$0xff]
    %v4084 = vld [vmem:[#allocation10 + $0x3c8] sm:$0xff]
    %v4085 = vld [vmem:[#allocation10 + $0x3d0] sm:$0xff]
    %v4086 = vld [vmem:[#allocation10 + $0x3d8] sm:$0xff]
    %v4087 = vld [vmem:[#allocation10 + $0x3e0] sm:$0xff]
    %v4088 = vld [vmem:[#allocation10 + $0x3e8] sm:$0xff]
    %v4089 = vld [vmem:[#allocation10 + $0x3f0] sm:$0xff]
    %v4090 = vld [vmem:[#allocation10 + $0x3f8] sm:$0xff]
    %v4091 = vld [vmem:[#allocation10 + $0x400] sm:$0xff]
    %v4092 = vld [vmem:[#allocation10 + $0x408] sm:$0xff]
    %v4093 = vld [vmem:[#allocation10 + $0x410] sm:$0xff]
    %v4094 = vld [vmem:[#allocation10 + $0x418] sm:$0xff]
    %v4095 = vld [vmem:[#allocation10 + $0x420] sm:$0xff]
    %v4096 = vld [vmem:[#allocation10 + $0x428] sm:$0xff]
    %v4097 = vld [vmem:[#allocation10 + $0x430] sm:$0xff]
    %v4098 = vld [vmem:[#allocation10 + $0x438] sm:$0xff]
    %v4099 = vld [vmem:[#allocation10 + $0x440] sm:$0xff]
    %v4100 = vld [vmem:[#allocation10 + $0x448] sm:$0xff]
    %v4101 = vld [vmem:[#allocation10 + $0x450] sm:$0xff]
    %v4102 = vld [vmem:[#allocation10 + $0x458] sm:$0xff]
    %v4103 = vld [vmem:[#allocation10 + $0x460] sm:$0xff]
    %v4104 = vld [vmem:[#allocation10 + $0x468] sm:$0xff]
    %v4105 = vld [vmem:[#allocation10 + $0x470] sm:$0xff]
    %v4106 = vld [vmem:[#allocation10 + $0x478] sm:$0xff]
    %v4107 = vld [vmem:[#allocation10 + $0x480] sm:$0xff]
    %v4108 = vld [vmem:[#allocation10 + $0x488] sm:$0xff]
    %v4109 = vld [vmem:[#allocation10 + $0x490] sm:$0xff]
    %v4110 = vld [vmem:[#allocation10 + $0x498] sm:$0xff]
    %v4111 = vld [vmem:[#allocation10 + $0x4a0] sm:$0xff]
    %v4112 = vld [vmem:[#allocation10 + $0x4a8] sm:$0xff]
    %v4113 = vld [vmem:[#allocation10 + $0x4b0] sm:$0xff]
    %v4114 = vld [vmem:[#allocation10 + $0x4b8] sm:$0xff]
    %v4115 = vld [vmem:[#allocation10 + $0x4c0] sm:$0xff]
    %v4116 = vld [vmem:[#allocation10 + $0x4c8] sm:$0xff]
    %v4117 = vld [vmem:[#allocation10 + $0x4d0] sm:$0xff]
    %v4118 = vld [vmem:[#allocation10 + $0x4d8] sm:$0xff]
    %v4119 = vld [vmem:[#allocation10 + $0x4e0] sm:$0xff]
    %v4120 = vld [vmem:[#allocation10 + $0x4e8] sm:$0xff]
    %v4121 = vld [vmem:[#allocation10 + $0x4f0] sm:$0xff]
    %v4122 = vld [vmem:[#allocation10 + $0x4f8] sm:$0xff]
    %v4123 = vld [vmem:[#allocation10 + $0x500] sm:$0xff]
    %v4124 = vld [vmem:[#allocation10 + $0x508] sm:$0xff]
    %v4125 = vld [vmem:[#allocation10 + $0x510] sm:$0xff]
    %v4126 = vld [vmem:[#allocation10 + $0x518] sm:$0xff]
    %v4127 = vld [vmem:[#allocation10 + $0x520] sm:$0xff]
    %v4128 = vld [vmem:[#allocation10 + $0x528] sm:$0xff]
    %v4129 = vld [vmem:[#allocation10 + $0x530] sm:$0xff]
    %v4130 = vld [vmem:[#allocation10 + $0x538] sm:$0xff]
    %v4131 = vld [vmem:[#allocation10 + $0x540] sm:$0xff]
    %v4132 = vld [vmem:[#allocation10 + $0x548] sm:$0xff]
    %v4133 = vld [vmem:[#allocation10 + $0x550] sm:$0xff]
    %v4134 = vld [vmem:[#allocation10 + $0x558] sm:$0xff]
    %v4135 = vld [vmem:[#allocation10 + $0x560] sm:$0xff]
    %v4136 = vld [vmem:[#allocation10 + $0x568] sm:$0xff]
    %v4137 = vld [vmem:[#allocation10 + $0x570] sm:$0xff]
    %v4138 = vld [vmem:[#allocation10 + $0x578] sm:$0xff]
    %v4139 = vld [vmem:[#allocation10 + $0x580] sm:$0xff]
    %v4140 = vld [vmem:[#allocation10 + $0x588] sm:$0xff]
    %v4141 = vld [vmem:[#allocation10 + $0x590] sm:$0xff]
    %v4142 = vld [vmem:[#allocation10 + $0x598] sm:$0xff]
    %v4143 = vld [vmem:[#allocation10 + $0x5a0] sm:$0xff]
    %v4144 = vld [vmem:[#allocation10 + $0x5a8] sm:$0xff]
    %v4145 = vld [vmem:[#allocation10 + $0x5b0] sm:$0xff]
    %v4146 = vld [vmem:[#allocation10 + $0x5b8] sm:$0xff]
    %v4147 = vld [vmem:[#allocation10 + $0x5c0] sm:$0xff]
    %v4148 = vld [vmem:[#allocation10 + $0x5c8] sm:$0xff]
    %v4149 = vld [vmem:[#allocation10 + $0x5d0] sm:$0xff]
    %v4150 = vld [vmem:[#allocation10 + $0x5d8] sm:$0xff]
    %v4151 = vld [vmem:[#allocation10 + $0x5e0] sm:$0xff]
    %v4152 = vld [vmem:[#allocation10 + $0x5e8] sm:$0xff]
    %v4153 = vld [vmem:[#allocation10 + $0x5f0] sm:$0xff]
    %v4154 = vld [vmem:[#allocation10 + $0x5f8] sm:$0xff]
    %v4155 = vld [vmem:[#allocation9] sm:$0xff]
    %v4156 = vld [vmem:[#allocation9 + $0x8] sm:$0xff]
    %v4157 = vld [vmem:[#allocation9 + $0x10] sm:$0xff]
    %v4158 = vld [vmem:[#allocation9 + $0x18] sm:$0xff]
    %v4159 = vld [vmem:[#allocation9 + $0x20] sm:$0xff]
    %v4160 = vld [vmem:[#allocation9 + $0x28] sm:$0xff]
    %4161 = vmatprep.subr.mxu0 %v3964
    %4162 = vmatpush1.msra.mxu0 %v3963
    %4163 = vmatprep.subr.mxu0 %v3967
    %4164 = vmatpush1.msra.mxu0 %v3966
    %4165 = vmatprep.subr.mxu0 %v3970
    %4166 = vmatpush1.msra.mxu0 %v3969
    %4167 = vmatprep.subr.mxu0 %v3973
    %4168 = vmatpush1.msra.mxu0 %v3972
    %4169 = vmatprep.subr.mxu0 %v3976
    %4170 = vmatpush1.msra.mxu0 %v3975
    %4171 = vmatprep.subr.mxu0 %v3979
    %4172 = vmatpush1.msra.mxu0 %v3978
    %4173 = vmatprep.subr.mxu0 %v3982
    %4174 = vmatpush1.msra.mxu0 %v3981
    %4175 = vmatprep.subr.mxu0 %v3985
    %4176 = vmatpush1.msra.mxu0 %v3984
    %4177 = vmatprep.subr.mxu0 %v3988
    %4178 = vmatpush1.msra.mxu0 %v3987
    %4179 = vmatprep.subr.mxu0 %v3991
    %4180 = vmatpush1.msra.mxu0 %v3990
    %4181 = vmatprep.subr.mxu0 %v3994
    %4182 = vmatpush1.msra.mxu0 %v3993
    %4183 = vmatprep.subr.mxu0 %v3997
    %4184 = vmatpush1.msra.mxu0 %v3996
    %4185 = vmatprep.subr.mxu0 %v4000
    %4186 = vmatpush1.msra.mxu0 %v3999
    %4187 = vmatprep.subr.mxu0 %v4003
    %4188 = vmatpush1.msra.mxu0 %v4002
    %4189 = vmatprep.subr.mxu0 %v4006
    %4190 = vmatpush1.msra.mxu0 %v4005
    %4191 = vmatprep.subr.mxu0 %v4009
    %4192 = vmatpush1.msra.mxu0 %v4008
    %4193 = vmatprep.subr.mxu0 %v4012
    %4194 = vmatpush1.msra.mxu0 %v4011
    %4195 = vmatprep.subr.mxu0 %v4015
    %4196 = vmatpush1.msra.mxu0 %v4014
    %4197 = vmatprep.subr.mxu0 %v4018
    %4198 = vmatpush1.msra.mxu0 %v4017
    %4199 = vmatprep.subr.mxu0 %v4021
    %4200 = vmatpush1.msra.mxu0 %v4020
    %4201 = vmatprep.subr.mxu0 %v4024
    %4202 = vmatpush1.msra.mxu0 %v4023
    %4203 = vmatprep.subr.mxu0 %v4027
    %4204 = vmatpush1.msra.mxu0 %v4026
    %4205 = vmatprep.subr.mxu0 %v4030
    %4206 = vmatpush1.msra.mxu0 %v4029
    %4207 = vmatprep.subr.mxu0 %v4033
    %4208 = vmatpush1.msra.mxu0 %v4032
    %4209 = vmatprep.subr.mxu0 %v4036
    %4210 = vmatpush1.msra.mxu0 %v4035
    %4211 = vmatprep.subr.mxu0 %v4039
    %4212 = vmatpush1.msra.mxu0 %v4038
    %4213 = vmatprep.subr.mxu0 %v4042
    %4214 = vmatpush1.msra.mxu0 %v4041
    %4215 = vmatprep.subr.mxu0 %v4045
    %4216 = vmatpush1.msra.mxu0 %v4044
    %4217 = vmatprep.subr.mxu0 %v4048
    %4218 = vmatpush1.msra.mxu0 %v4047
    %4219 = vmatprep.subr.mxu0 %v4051
    %4220 = vmatpush1.msra.mxu0 %v4050
    %4221 = vmatprep.subr.mxu0 %v4054
    %4222 = vmatpush1.msra.mxu0 %v4053
    %4223 = vmatprep.subr.mxu0 %v4057
    %4224 = vmatpush1.msra.mxu0 %v4056
    %4225 = vmatprep.mubr.f32.mxu0 %v3956
    %4226 = vmatmul.mubr.f32.gmra.mrb[0].mxu0 %v3955
    %v4227 = vpop.f32.mrb[0].mxu0
    %v4228 = vadd.f32 %v4155, %v4227
    %v4229 = vpop.f32.mrb[0].mxu0
    %v4230 = vadd.f32 %v4156, %v4229
    %4231 = vmatprep.mubr.f32.mxu0 %v3960
    %4232 = vmatmul.mubr.f32.gmra.mrb[0].mxu0 %v3959
    %v4233 = vpop.f32.mrb[0].mxu0
    %v4234 = vadd.f32 %v4158, %v4233
    %v4235 = vpop.f32.mrb[0].mxu0
    %v4236 = vadd.f32 %v4159, %v4235
    %4237 = vdwg.mxu0
    %4238 = vmatprep.subr.mxu0 %v4060
    %4239 = vmatpush1.msra.mxu0 %v4059
    %4240 = vmatprep.subr.mxu0 %v4063
    %4241 = vmatpush1.msra.mxu0 %v4062
    %4242 = vmatprep.subr.mxu0 %v4066
    %4243 = vmatpush1.msra.mxu0 %v4065
    %4244 = vmatprep.subr.mxu0 %v4069
    %4245 = vmatpush1.msra.mxu0 %v4068
    %4246 = vmatprep.subr.mxu0 %v4072
    %4247 = vmatpush1.msra.mxu0 %v4071
    %4248 = vmatprep.subr.mxu0 %v4075
    %4249 = vmatpush1.msra.mxu0 %v4074
    %4250 = vmatprep.subr.mxu0 %v4078
    %4251 = vmatpush1.msra.mxu0 %v4077
    %4252 = vmatprep.subr.mxu0 %v4081
    %4253 = vmatpush1.msra.mxu0 %v4080
    %4254 = vmatprep.subr.mxu0 %v4084
    %4255 = vmatpush1.msra.mxu0 %v4083
    %4256 = vmatprep.subr.mxu0 %v4087
    %4257 = vmatpush1.msra.mxu0 %v4086
    %4258 = vmatprep.subr.mxu0 %v4090
    %4259 = vmatpush1.msra.mxu0 %v4089
    %4260 = vmatprep.subr.mxu0 %v4093
    %4261 = vmatpush1.msra.mxu0 %v4092
    %4262 = vmatprep.subr.mxu0 %v4096
    %4263 = vmatpush1.msra.mxu0 %v4095
    %4264 = vmatprep.subr.mxu0 %v4099
    %4265 = vmatpush1.msra.mxu0 %v4098
    %4266 = vmatprep.subr.mxu0 %v4102
    %4267 = vmatpush1.msra.mxu0 %v4101
    %4268 = vmatprep.subr.mxu0 %v4105
    %4269 = vmatpush1.msra.mxu0 %v4104
    %4270 = vmatprep.subr.mxu0 %v4108
    %4271 = vmatpush1.msra.mxu0 %v4107
    %4272 = vmatprep.subr.mxu0 %v4111
    %4273 = vmatpush1.msra.mxu0 %v4110
    %4274 = vmatprep.subr.mxu0 %v4114
    %4275 = vmatpush1.msra.mxu0 %v4113
    %4276 = vmatprep.subr.mxu0 %v4117
    %4277 = vmatpush1.msra.mxu0 %v4116
    %4278 = vmatprep.subr.mxu0 %v4120
    %4279 = vmatpush1.msra.mxu0 %v4119
    %4280 = vmatprep.subr.mxu0 %v4123
    %4281 = vmatpush1.msra.mxu0 %v4122
    %4282 = vmatprep.subr.mxu0 %v4126
    %4283 = vmatpush1.msra.mxu0 %v4125
    %4284 = vmatprep.subr.mxu0 %v4129
    %4285 = vmatpush1.msra.mxu0 %v4128
    %4286 = vmatprep.subr.mxu0 %v4132
    %4287 = vmatpush1.msra.mxu0 %v4131
    %4288 = vmatprep.subr.mxu0 %v4135
    %4289 = vmatpush1.msra.mxu0 %v4134
    %4290 = vmatprep.subr.mxu0 %v4138
    %4291 = vmatpush1.msra.mxu0 %v4137
    %4292 = vmatprep.subr.mxu0 %v4141
    %4293 = vmatpush1.msra.mxu0 %v4140
    %4294 = vmatprep.subr.mxu0 %v4144
    %4295 = vmatpush1.msra.mxu0 %v4143
    %4296 = vmatprep.subr.mxu0 %v4147
    %4297 = vmatpush1.msra.mxu0 %v4146
    %4298 = vmatprep.subr.mxu0 %v4150
    %4299 = vmatpush1.msra.mxu0 %v4149
    %4300 = vmatprep.subr.mxu0 %v4153
    %4301 = vmatpush1.msra.mxu0 %v4152
    %4302 = vmatprep.mubr.f32.mxu0 %v3958
    %4303 = vmatmul.mubr.f32.gmra.mrb[0].mxu0 %v3957
    %v4304 = vpop.f32.mrb[0].mxu0
    %v4305 = vadd.f32 %v4228, %v4304
    %v4306 = vpop.f32.mrb[0].mxu0
    %v4307 = vadd.f32 %v4230, %v4306
    %4308 = vmatprep.mubr.f32.mxu0 %v3962
    %4309 = vmatmul.mubr.f32.gmra.mrb[0].mxu0 %v3961
    %v4310 = vpop.f32.mrb[0].mxu0
    %v4311 = vadd.f32 %v4234, %v4310
    %v4312 = vpop.f32.mrb[0].mxu0
    %v4313 = vadd.f32 %v4236, %v4312
    %4314 = vdwg.mxu0
    %4315 = vmatprep.subr.mxu0 0.0
    %4316 = vmatpush1.msra.mxu0 %v3965
    %4317 = vmatprep.subr.mxu0 0.0
    %4318 = vmatpush1.msra.mxu0 %v3968
    %4319 = vmatprep.subr.mxu0 0.0
    %4320 = vmatpush1.msra.mxu0 %v3971
    %4321 = vmatprep.subr.mxu0 0.0
    %4322 = vmatpush1.msra.mxu0 %v3974
    %4323 = vmatprep.subr.mxu0 0.0
    %4324 = vmatpush1.msra.mxu0 %v3977
    %4325 = vmatprep.subr.mxu0 0.0
    %4326 = vmatpush1.msra.mxu0 %v3980
    %4327 = vmatprep.subr.mxu0 0.0
    %4328 = vmatpush1.msra.mxu0 %v3983
    %4329 = vmatprep.subr.mxu0 0.0
    %4330 = vmatpush1.msra.mxu0 %v3986
    %4331 = vmatprep.subr.mxu0 0.0
    %4332 = vmatpush1.msra.mxu0 %v3989
    %4333 = vmatprep.subr.mxu0 0.0
    %4334 = vmatpush1.msra.mxu0 %v3992
    %4335 = vmatprep.subr.mxu0 0.0
    %4336 = vmatpush1.msra.mxu0 %v3995
    %4337 = vmatprep.subr.mxu0 0.0
    %4338 = vmatpush1.msra.mxu0 %v3998
    %4339 = vmatprep.subr.mxu0 0.0
    %4340 = vmatpush1.msra.mxu0 %v4001
    %4341 = vmatprep.subr.mxu0 0.0
    %4342 = vmatpush1.msra.mxu0 %v4004
    %4343 = vmatprep.subr.mxu0 0.0
    %4344 = vmatpush1.msra.mxu0 %v4007
    %4345 = vmatprep.subr.mxu0 0.0
    %4346 = vmatpush1.msra.mxu0 %v4010
    %4347 = vmatprep.subr.mxu0 0.0
    %4348 = vmatpush1.msra.mxu0 %v4013
    %4349 = vmatprep.subr.mxu0 0.0
    %4350 = vmatpush1.msra.mxu0 %v4016
    %4351 = vmatprep.subr.mxu0 0.0
    %4352 = vmatpush1.msra.mxu0 %v4019
    %4353 = vmatprep.subr.mxu0 0.0
    %4354 = vmatpush1.msra.mxu0 %v4022
    %4355 = vmatprep.subr.mxu0 0.0
    %4356 = vmatpush1.msra.mxu0 %v4025
    %4357 = vmatprep.subr.mxu0 0.0
    %4358 = vmatpush1.msra.mxu0 %v4028
    %4359 = vmatprep.subr.mxu0 0.0
    %4360 = vmatpush1.msra.mxu0 %v4031
    %4361 = vmatprep.subr.mxu0 0.0
    %4362 = vmatpush1.msra.mxu0 %v4034
    %4363 = vmatprep.subr.mxu0 0.0
    %4364 = vmatpush1.msra.mxu0 %v4037
    %4365 = vmatprep.subr.mxu0 0.0
    %4366 = vmatpush1.msra.mxu0 %v4040
    %4367 = vmatprep.subr.mxu0 0.0
    %4368 = vmatpush1.msra.mxu0 %v4043
    %4369 = vmatprep.subr.mxu0 0.0
    %4370 = vmatpush1.msra.mxu0 %v4046
    %4371 = vmatprep.subr.mxu0 0.0
    %4372 = vmatpush1.msra.mxu0 %v4049
    %4373 = vmatprep.subr.mxu0 0.0
    %4374 = vmatpush1.msra.mxu0 %v4052
    %4375 = vmatprep.subr.mxu0 0.0
    %4376 = vmatpush1.msra.mxu0 %v4055
    %4377 = vmatprep.subr.mxu0 0.0
    %4378 = vmatpush1.msra.mxu0 %v4058
    %4379 = vmatprep.mubr.f32.mxu0 %v3956
    %4380 = vmatmul.mubr.f32.gmra.mrb[0].mxu0 %v3955
    %v4381 = vpop.f32.mrb[0].mxu0
    %v4382 = vadd.f32 %v4157, %v4381
    %v4383 = vpop.f32.mrb[0].mxu0
    %4384 = vmatprep.mubr.f32.mxu0 %v3960
    %4385 = vmatmul.mubr.f32.gmra.mrb[0].mxu0 %v3959
    %v4386 = vpop.f32.mrb[0].mxu0
    %v4387 = vadd.f32 %v4160, %v4386
    %v4388 = vpop.f32.mrb[0].mxu0
    %4389 = vdwg.mxu0
    %4390 = vmatprep.subr.mxu0 0.0
    %4391 = vmatpush1.msra.mxu0 %v4061
    %4392 = vmatprep.subr.mxu0 0.0
    %4393 = vmatpush1.msra.mxu0 %v4064
    %4394 = vmatprep.subr.mxu0 0.0
    %4395 = vmatpush1.msra.mxu0 %v4067
    %4396 = vmatprep.subr.mxu0 0.0
    %4397 = vmatpush1.msra.mxu0 %v4070
    %4398 = vmatprep.subr.mxu0 0.0
    %4399 = vmatpush1.msra.mxu0 %v4073
    %4400 = vmatprep.subr.mxu0 0.0
    %4401 = vmatpush1.msra.mxu0 %v4076
    %4402 = vmatprep.subr.mxu0 0.0
    %4403 = vmatpush1.msra.mxu0 %v4079
    %4404 = vmatprep.subr.mxu0 0.0
    %4405 = vmatpush1.msra.mxu0 %v4082
    %4406 = vmatprep.subr.mxu0 0.0
    %4407 = vmatpush1.msra.mxu0 %v4085
    %4408 = vmatprep.subr.mxu0 0.0
    %4409 = vmatpush1.msra.mxu0 %v4088
    %4410 = vmatprep.subr.mxu0 0.0
    %4411 = vmatpush1.msra.mxu0 %v4091
    %4412 = vmatprep.subr.mxu0 0.0
    %4413 = vmatpush1.msra.mxu0 %v4094
    %4414 = vmatprep.subr.mxu0 0.0
    %4415 = vmatpush1.msra.mxu0 %v4097
    %4416 = vmatprep.subr.mxu0 0.0
    %4417 = vmatpush1.msra.mxu0 %v4100
    %4418 = vmatprep.subr.mxu0 0.0
    %4419 = vmatpush1.msra.mxu0 %v4103
    %4420 = vmatprep.subr.mxu0 0.0
    %4421 = vmatpush1.msra.mxu0 %v4106
    %4422 = vmatprep.subr.mxu0 0.0
    %4423 = vmatpush1.msra.mxu0 %v4109
    %4424 = vmatprep.subr.mxu0 0.0
    %4425 = vmatpush1.msra.mxu0 %v4112
    %4426 = vmatprep.subr.mxu0 0.0
    %4427 = vmatpush1.msra.mxu0 %v4115
    %4428 = vmatprep.subr.mxu0 0.0
    %4429 = vmatpush1.msra.mxu0 %v4118
    %4430 = vmatprep.subr.mxu0 0.0
    %4431 = vmatpush1.msra.mxu0 %v4121
    %4432 = vmatprep.subr.mxu0 0.0
    %4433 = vmatpush1.msra.mxu0 %v4124
    %4434 = vmatprep.subr.mxu0 0.0
    %4435 = vmatpush1.msra.mxu0 %v4127
    %4436 = vmatprep.subr.mxu0 0.0
    %4437 = vmatpush1.msra.mxu0 %v4130
    %4438 = vmatprep.subr.mxu0 0.0
    %4439 = vmatpush1.msra.mxu0 %v4133
    %4440 = vmatprep.subr.mxu0 0.0
    %4441 = vmatpush1.msra.mxu0 %v4136
    %4442 = vmatprep.subr.mxu0 0.0
    %4443 = vmatpush1.msra.mxu0 %v4139
    %4444 = vmatprep.subr.mxu0 0.0
    %4445 = vmatpush1.msra.mxu0 %v4142
    %4446 = vmatprep.subr.mxu0 0.0
    %4447 = vmatpush1.msra.mxu0 %v4145
    %4448 = vmatprep.subr.mxu0 0.0
    %4449 = vmatpush1.msra.mxu0 %v4148
    %4450 = vmatprep.subr.mxu0 0.0
    %4451 = vmatpush1.msra.mxu0 %v4151
    %4452 = vmatprep.subr.mxu0 0.0
    %4453 = vmatpush1.msra.mxu0 %v4154
    %4454 = vmatprep.mubr.f32.mxu0 %v3958
    %4455 = vmatmul.mubr.f32.gmra.mrb[0].mxu0 %v3957
    %v4456 = vpop.f32.mrb[0].mxu0
    %v4457 = vadd.f32 %v4382, %v4456
    %v4458 = vpop.f32.mrb[0].mxu0
    %4459 = vmatprep.mubr.f32.mxu0 %v3962
    %4460 = vmatmul.mubr.f32.gmra.mrb[0].mxu0 %v3961
    %v4461 = vpop.f32.mrb[0].mxu0
    %v4462 = vadd.f32 %v4387, %v4461
    %v4463 = vpop.f32.mrb[0].mxu0
    %4464 = vdwg.mxu0
    %v4465 = vxor.u32 %v4305, 2147483648
    %v4466 = vxor.u32 %v4311, 2147483648
    %v4467 = vmul.f32 %v4465, 1.442695
    %v4468 = vpow.pop %v4467
    %v4469 = vmul.f32 %v4466, 1.442695
    %v4470 = vpow.pop %v4469
    %v4471 = vadd.f32 %v4468, 1.0
    %v4472 = vadd.f32 %v4470, 1.0
    %v4473 = vrcp.pop %v4471
    %v4474 = vmul.f32 1.0, %v4473
    %v4475 = vrcp.pop %v4472
    %v4476 = vmul.f32 1.0, %v4475
    %v4477 = vxor.u32 %v4307, 2147483648
    %v4478 = vxor.u32 %v4313, 2147483648
    %v4479 = vmul.f32 %v4477, 1.442695
    %v4480 = vpow.pop %v4479
    %v4481 = vmul.f32 %v4478, 1.442695
    %v4482 = vpow.pop %v4481
    %v4483 = vadd.f32 %v4480, 1.0
    %v4484 = vadd.f32 %v4482, 1.0
    %v4485 = vrcp.pop %v4483
    %v4486 = vmul.f32 1.0, %v4485
    %v4487 = vrcp.pop %v4484
    %v4488 = vmul.f32 1.0, %v4487
    %v4489 = vmul.f32 %v4486, %v3696
    %v4490 = vmul.f32 %v4488, %v3697
    %v4491 = vld [vmem:[#allocation12] sm:$0xff]
    %v4492 = vld [vmem:[#allocation12 + $0x8] sm:$0xff]
    %v4493 = vld [vmem:[#allocation12 + $0x10] sm:$0xff]
    %v4494 = vld [vmem:[#allocation12 + $0x18] sm:$0xff]
    %v4495 = vld [vmem:[#allocation12 + $0x20] sm:$0xff]
    %v4496 = vld [vmem:[#allocation12 + $0x28] sm:$0xff]
    %v4497 = vld [vmem:[#allocation12 + $0x30] sm:$0xff]
    %v4498 = vld [vmem:[#allocation12 + $0x38] sm:$0xff]
    %v4499 = vld [vmem:[#allocation12 + $0x40] sm:$0xff]
    %v4500 = vld [vmem:[#allocation12 + $0x48] sm:$0xff]
    %v4501 = vld [vmem:[#allocation12 + $0x50] sm:$0xff]
    %v4502 = vld [vmem:[#allocation12 + $0x58] sm:$0xff]
    %v4503 = vld [vmem:[#allocation12 + $0x60] sm:$0xff]
    %v4504 = vld [vmem:[#allocation12 + $0x68] sm:$0xff]
    %v4505 = vld [vmem:[#allocation12 + $0x70] sm:$0xff]
    %v4506 = vld [vmem:[#allocation12 + $0x78] sm:$0xff]
    %4507 = vmatprep.subr.mxu0 0.0
    %4508 = vmatpush1.msra.mxu0 %v4491
    %4509 = vmatprep.subr.mxu0 0.0
    %4510 = vmatpush1.msra.mxu0 %v4492
    %4511 = vmatprep.subr.mxu0 0.0
    %4512 = vmatpush1.msra.mxu0 %v4493
    %4513 = vmatprep.subr.mxu0 0.0
    %4514 = vmatpush1.msra.mxu0 %v4494
    %4515 = vmatprep.subr.mxu0 0.0
    %4516 = vmatpush1.msra.mxu0 %v4495
    %4517 = vmatprep.subr.mxu0 0.0
    %4518 = vmatpush1.msra.mxu0 %v4496
    %4519 = vmatprep.subr.mxu0 0.0
    %4520 = vmatpush1.msra.mxu0 %v4497
    %4521 = vmatprep.subr.mxu0 0.0
    %4522 = vmatpush1.msra.mxu0 %v4498
    %4523 = vmatprep.subr.mxu0 0.0
    %4524 = vmatpush1.msra.mxu0 %v4499
    %4525 = vmatprep.subr.mxu0 0.0
    %4526 = vmatpush1.msra.mxu0 %v4500
    %4527 = vmatprep.subr.mxu0 0.0
    %4528 = vmatpush1.msra.mxu0 %v4501
    %4529 = vmatprep.subr.mxu0 0.0
    %4530 = vmatpush1.msra.mxu0 %v4502
    %4531 = vmatprep.subr.mxu0 0.0
    %4532 = vmatpush1.msra.mxu0 %v4503
    %4533 = vmatprep.subr.mxu0 0.0
    %4534 = vmatpush1.msra.mxu0 %v4504
    %4535 = vmatprep.subr.mxu0 0.0
    %4536 = vmatpush1.msra.mxu0 %v4505
    %4537 = vmatprep.subr.mxu0 0.0
    %4538 = vmatpush1.msra.mxu0 %v4506
    %4539 = vmatprep.subr.mxu0 0.0
    %4540 = vmatpush1.msra.mxu0 0.0
    %4541 = vmatprep.subr.mxu0 0.0
    %4542 = vmatpush1.msra.mxu0 0.0
    %4543 = vmatprep.subr.mxu0 0.0
    %4544 = vmatpush1.msra.mxu0 0.0
    %4545 = vmatprep.subr.mxu0 0.0
    %4546 = vmatpush1.msra.mxu0 0.0
    %4547 = vmatprep.subr.mxu0 0.0
    %4548 = vmatpush1.msra.mxu0 0.0
    %4549 = vmatprep.subr.mxu0 0.0
    %4550 = vmatpush1.msra.mxu0 0.0
    %4551 = vmatprep.subr.mxu0 0.0
    %4552 = vmatpush1.msra.mxu0 0.0
    %4553 = vmatprep.subr.mxu0 0.0
    %4554 = vmatpush1.msra.mxu0 0.0
    %4555 = vmatprep.subr.mxu0 0.0
    %4556 = vmatpush1.msra.mxu0 0.0
    %4557 = vmatprep.subr.mxu0 0.0
    %4558 = vmatpush1.msra.mxu0 0.0
    %4559 = vmatprep.subr.mxu0 0.0
    %4560 = vmatpush1.msra.mxu0 0.0
    %4561 = vmatprep.subr.mxu0 0.0
    %4562 = vmatpush1.msra.mxu0 0.0
    %4563 = vmatprep.subr.mxu0 0.0
    %4564 = vmatpush1.msra.mxu0 0.0
    %4565 = vmatprep.subr.mxu0 0.0
    %4566 = vmatpush1.msra.mxu0 0.0
    %4567 = vmatprep.subr.mxu0 0.0
    %4568 = vmatpush1.msra.mxu0 0.0
    %4569 = vmatprep.subr.mxu0 0.0
    %4570 = vmatpush1.msra.mxu0 0.0
    %4571 = vmatprep.mubr.f32.mxu0 0.0
    %4572 = vmatmul.mubr.f32.gmra.mrb[0].mxu0 %v4489
    %v4573 = vpop.f32.mrb[0].mxu0
    %v4574 = vadd.f32 0.0, %v4573
    %v4575 = vpop.f32.mrb[0].mxu0
    %4576 = vmatprep.mubr.f32.mxu0 0.0
    %4577 = vmatmul.mubr.f32.gmra.mrb[0].mxu0 %v4490
    %v4578 = vpop.f32.mrb[0].mxu0
    %v4579 = vadd.f32 0.0, %v4578
    %v4580 = vpop.f32.mrb[0].mxu0
    %4581 = vdwg.mxu0
    %v4582 = vadd.f32 %v4457, %v4574
    %v4583 = vadd.f32 %v4462, %v4579
    %v4584 = vtanh.pop %v4582
    %v4585 = vtanh.pop %v4583
    %v4586 = vsub.f32 1.0, %v4474
    %v4587 = vsub.f32 1.0, %v4476
    %v4588 = vmul.f32 %v4586, %v3696
    %v4589 = vmul.f32 %v4587, %v3697
    %v4590 = vmul.f32 %v4474, %v4584
    %v4591 = vmul.f32 %v4476, %v4585
    %v4592 = vadd.f32 %v4588, %v4590
    %v4593 = vadd.f32 %v4589, %v4591
    %4594 = vst [vmem:[#allocation2] sm:$0xff] %v4592
    %4595 = vst [vmem:[#allocation2 + $0x8] sm:$0xff] %v4593
    %v4596 = vld [vmem:[#allocation2] sm:$0xff]
    %v4597 = vld [vmem:[#allocation2 + $0x8] sm:$0xff]
    %v4598 = vld [vmem:[#allocation4] sm:$0xff]
    %v4599 = vld [vmem:[#allocation4 + $0x8] sm:$0xff]
    %v4601 = vsel %vm97, %v4598, 0
    %v4604 = vsel %vm97, %v4599, 0
    %4606 = vmatprep.subr.mxu0 0.0
    %4607 = vmatpush1.msra.mxu0 %v4596
    %4608 = vmatprep.subr.mxu0 0.0
    %4609 = vmatpush1.msra.mxu0 %v4597
    %4610 = vmatprep.subr.mxu0 0.0
    %4611 = vmatpush1.msra.mxu0 0.0
    %4612 = vmatprep.subr.mxu0 0.0
    %4613 = vmatpush1.msra.mxu0 0.0
    %4614 = vmatprep.subr.mxu0 0.0
    %4615 = vmatpush1.msra.mxu0 0.0
    %4616 = vmatprep.subr.mxu0 0.0
    %4617 = vmatpush1.msra.mxu0 0.0
    %4618 = vmatprep.subr.mxu0 0.0
    %4619 = vmatpush1.msra.mxu0 0.0
    %4620 = vmatprep.subr.mxu0 0.0
    %4621 = vmatpush1.msra.mxu0 0.0
    %4622 = vmatprep.subr.mxu0 0.0
    %4623 = vmatpush1.msra.mxu0 0.0
    %4624 = vmatprep.subr.mxu0 0.0
    %4625 = vmatpush1.msra.mxu0 0.0
    %4626 = vmatprep.subr.mxu0 0.0
    %4627 = vmatpush1.msra.mxu0 0.0
    %4628 = vmatprep.subr.mxu0 0.0
    %4629 = vmatpush1.msra.mxu0 0.0
    %4630 = vmatprep.subr.mxu0 0.0
    %4631 = vmatpush1.msra.mxu0 0.0
    %4632 = vmatprep.subr.mxu0 0.0
    %4633 = vmatpush1.msra.mxu0 0.0
    %4634 = vmatprep.subr.mxu0 0.0
    %4635 = vmatpush1.msra.mxu0 0.0
    %4636 = vmatprep.subr.mxu0 0.0
    %4637 = vmatpush1.msra.mxu0 0.0
    %4638 = vmatprep.subr.mxu0 0.0
    %4639 = vmatpush1.msra.mxu0 0.0
    %4640 = vmatprep.subr.mxu0 0.0
    %4641 = vmatpush1.msra.mxu0 0.0
    %4642 = vmatprep.subr.mxu0 0.0
    %4643 = vmatpush1.msra.mxu0 0.0
    %4644 = vmatprep.subr.mxu0 0.0
    %4645 = vmatpush1.msra.mxu0 0.0
    %4646 = vmatprep.subr.mxu0 0.0
    %4647 = vmatpush1.msra.mxu0 0.0
    %4648 = vmatprep.subr.mxu0 0.0
    %4649 = vmatpush1.msra.mxu0 0.0
    %4650 = vmatprep.subr.mxu0 0.0
    %4651 = vmatpush1.msra.mxu0 0.0
    %4652 = vmatprep.subr.mxu0 0.0
    %4653 = vmatpush1.msra.mxu0 0.0
    %4654 = vmatprep.subr.mxu0 0.0
    %4655 = vmatpush1.msra.mxu0 0.0
    %4656 = vmatprep.subr.mxu0 0.0
    %4657 = vmatpush1.msra.mxu0 0.0
    %4658 = vmatprep.subr.mxu0 0.0
    %4659 = vmatpush1.msra.mxu0 0.0
    %4660 = vmatprep.subr.mxu0 0.0
    %4661 = vmatpush1.msra.mxu0 0.0
    %4662 = vmatprep.subr.mxu0 0.0
    %4663 = vmatpush1.msra.mxu0 0.0
    %4664 = vmatprep.subr.mxu0 0.0
    %4665 = vmatpush1.msra.mxu0 0.0
    %4666 = vmatprep.subr.mxu0 0.0
    %4667 = vmatpush1.msra.mxu0 0.0
    %4668 = vmatprep.subr.mxu0 0.0
    %4669 = vmatpush1.msra.mxu0 0.0
    %4670 = vmatprep.mubr.f32.mxu0 0.0
    %4671 = vmatmul.mubr.f32.gmra.mrb[0].mxu0 %v4601
    %v4672 = vpop.f32.mrb[0].mxu0
    %v4673 = vadd.f32 0.0, %v4672
    %v4674 = vpop.f32.mrb[0].mxu0
    %4675 = vmatprep.mubr.f32.mxu0 0.0
    %4676 = vmatmul.mubr.f32.gmra.mrb[0].mxu0 %v4604
    %v4677 = vpop.f32.mrb[0].mxu0
    %v4678 = vadd.f32 0.0, %v4677
    %v4679 = vpop.f32.mrb[0].mxu0
    %4680 = vdwg.mxu0
    %4681 = vst [vmem:[#allocation3] sm:$0xff] %v4673
    %4682 = vst [vmem:[#allocation3 + $0x20] sm:$0xff] %v4678
    %v4683 = vld [vmem:[%s181] sm:$0xff]
    %v4684 = vld [vmem:[%s181 + $0x8] sm:$0xff]
    %v4686 = vsel %vm97, %v4683, 0
    %v4689 = vsel %vm97, %v4684, 0
    %4691 = vmatprep.subr.mxu0 0.0
    %4692 = vmatpush1.msra.mxu0 %v4596
    %4693 = vmatprep.subr.mxu0 0.0
    %4694 = vmatpush1.msra.mxu0 %v4597
    %4695 = vmatprep.subr.mxu0 0.0
    %4696 = vmatpush1.msra.mxu0 0.0
    %4697 = vmatprep.subr.mxu0 0.0
    %4698 = vmatpush1.msra.mxu0 0.0
    %4699 = vmatprep.subr.mxu0 0.0
    %4700 = vmatpush1.msra.mxu0 0.0
    %4701 = vmatprep.subr.mxu0 0.0
    %4702 = vmatpush1.msra.mxu0 0.0
    %4703 = vmatprep.subr.mxu0 0.0
    %4704 = vmatpush1.msra.mxu0 0.0
    %4705 = vmatprep.subr.mxu0 0.0
    %4706 = vmatpush1.msra.mxu0 0.0
    %4707 = vmatprep.subr.mxu0 0.0
    %4708 = vmatpush1.msra.mxu0 0.0
    %4709 = vmatprep.subr.mxu0 0.0
    %4710 = vmatpush1.msra.mxu0 0.0
    %4711 = vmatprep.subr.mxu0 0.0
    %4712 = vmatpush1.msra.mxu0 0.0
    %4713 = vmatprep.subr.mxu0 0.0
    %4714 = vmatpush1.msra.mxu0 0.0
    %4715 = vmatprep.subr.mxu0 0.0
    %4716 = vmatpush1.msra.mxu0 0.0
    %4717 = vmatprep.subr.mxu0 0.0
    %4718 = vmatpush1.msra.mxu0 0.0
    %4719 = vmatprep.subr.mxu0 0.0
    %4720 = vmatpush1.msra.mxu0 0.0
    %4721 = vmatprep.subr.mxu0 0.0
    %4722 = vmatpush1.msra.mxu0 0.0
    %4723 = vmatprep.subr.mxu0 0.0
    %4724 = vmatpush1.msra.mxu0 0.0
    %4725 = vmatprep.subr.mxu0 0.0
    %4726 = vmatpush1.msra.mxu0 0.0
    %4727 = vmatprep.subr.mxu0 0.0
    %4728 = vmatpush1.msra.mxu0 0.0
    %4729 = vmatprep.subr.mxu0 0.0
    %4730 = vmatpush1.msra.mxu0 0.0
    %4731 = vmatprep.subr.mxu0 0.0
    %4732 = vmatpush1.msra.mxu0 0.0
    %4733 = vmatprep.subr.mxu0 0.0
    %4734 = vmatpush1.msra.mxu0 0.0
    %4735 = vmatprep.subr.mxu0 0.0
    %4736 = vmatpush1.msra.mxu0 0.0
    %4737 = vmatprep.subr.mxu0 0.0
    %4738 = vmatpush1.msra.mxu0 0.0
    %4739 = vmatprep.subr.mxu0 0.0
    %4740 = vmatpush1.msra.mxu0 0.0
    %4741 = vmatprep.subr.mxu0 0.0
    %4742 = vmatpush1.msra.mxu0 0.0
    %4743 = vmatprep.subr.mxu0 0.0
    %4744 = vmatpush1.msra.mxu0 0.0
    %4745 = vmatprep.subr.mxu0 0.0
    %4746 = vmatpush1.msra.mxu0 0.0
    %4747 = vmatprep.subr.mxu0 0.0
    %4748 = vmatpush1.msra.mxu0 0.0
    %4749 = vmatprep.subr.mxu0 0.0
    %4750 = vmatpush1.msra.mxu0 0.0
    %4751 = vmatprep.subr.mxu0 0.0
    %4752 = vmatpush1.msra.mxu0 0.0
    %4753 = vmatprep.subr.mxu0 0.0
    %4754 = vmatpush1.msra.mxu0 0.0
    %4755 = vmatprep.mubr.f32.mxu0 0.0
    %4756 = vmatmul.mubr.f32.gmra.mrb[0].mxu0 %v4686
    %v4757 = vpop.f32.mrb[0].mxu0
    %v4758 = vadd.f32 0.0, %v4757
    %v4759 = vpop.f32.mrb[0].mxu0
    %4760 = vmatprep.mubr.f32.mxu0 0.0
    %4761 = vmatmul.mubr.f32.gmra.mrb[0].mxu0 %v4689
    %v4762 = vpop.f32.mrb[0].mxu0
    %v4763 = vadd.f32 0.0, %v4762
    %v4764 = vpop.f32.mrb[0].mxu0
    %4765 = vdwg.mxu0
    %4766 = vst [vmem:[#allocation3 + $0x8] sm:$0xff] %v4758
    %4767 = vst [vmem:[#allocation3 + $0x28] sm:$0xff] %v4763
    %v4768 = vld [vmem:[%s267] sm:$0xff]
    %v4769 = vld [vmem:[%s267 + $0x8] sm:$0xff]
    %v4771 = vsel %vm97, %v4768, 0
    %v4774 = vsel %vm97, %v4769, 0
    %4776 = vmatprep.subr.mxu0 0.0
    %4777 = vmatpush1.msra.mxu0 %v4596
    %4778 = vmatprep.subr.mxu0 0.0
    %4779 = vmatpush1.msra.mxu0 %v4597
    %4780 = vmatprep.subr.mxu0 0.0
    %4781 = vmatpush1.msra.mxu0 0.0
    %4782 = vmatprep.subr.mxu0 0.0
    %4783 = vmatpush1.msra.mxu0 0.0
    %4784 = vmatprep.subr.mxu0 0.0
    %4785 = vmatpush1.msra.mxu0 0.0
    %4786 = vmatprep.subr.mxu0 0.0
    %4787 = vmatpush1.msra.mxu0 0.0
    %4788 = vmatprep.subr.mxu0 0.0
    %4789 = vmatpush1.msra.mxu0 0.0
    %4790 = vmatprep.subr.mxu0 0.0
    %4791 = vmatpush1.msra.mxu0 0.0
    %4792 = vmatprep.subr.mxu0 0.0
    %4793 = vmatpush1.msra.mxu0 0.0
    %4794 = vmatprep.subr.mxu0 0.0
    %4795 = vmatpush1.msra.mxu0 0.0
    %4796 = vmatprep.subr.mxu0 0.0
    %4797 = vmatpush1.msra.mxu0 0.0
    %4798 = vmatprep.subr.mxu0 0.0
    %4799 = vmatpush1.msra.mxu0 0.0
    %4800 = vmatprep.subr.mxu0 0.0
    %4801 = vmatpush1.msra.mxu0 0.0
    %4802 = vmatprep.subr.mxu0 0.0
    %4803 = vmatpush1.msra.mxu0 0.0
    %4804 = vmatprep.subr.mxu0 0.0
    %4805 = vmatpush1.msra.mxu0 0.0
    %4806 = vmatprep.subr.mxu0 0.0
    %4807 = vmatpush1.msra.mxu0 0.0
    %4808 = vmatprep.subr.mxu0 0.0
    %4809 = vmatpush1.msra.mxu0 0.0
    %4810 = vmatprep.subr.mxu0 0.0
    %4811 = vmatpush1.msra.mxu0 0.0
    %4812 = vmatprep.subr.mxu0 0.0
    %4813 = vmatpush1.msra.mxu0 0.0
    %4814 = vmatprep.subr.mxu0 0.0
    %4815 = vmatpush1.msra.mxu0 0.0
    %4816 = vmatprep.subr.mxu0 0.0
    %4817 = vmatpush1.msra.mxu0 0.0
    %4818 = vmatprep.subr.mxu0 0.0
    %4819 = vmatpush1.msra.mxu0 0.0
    %4820 = vmatprep.subr.mxu0 0.0
    %4821 = vmatpush1.msra.mxu0 0.0
    %4822 = vmatprep.subr.mxu0 0.0
    %4823 = vmatpush1.msra.mxu0 0.0
    %4824 = vmatprep.subr.mxu0 0.0
    %4825 = vmatpush1.msra.mxu0 0.0
    %4826 = vmatprep.subr.mxu0 0.0
    %4827 = vmatpush1.msra.mxu0 0.0
    %4828 = vmatprep.subr.mxu0 0.0
    %4829 = vmatpush1.msra.mxu0 0.0
    %4830 = vmatprep.subr.mxu0 0.0
    %4831 = vmatpush1.msra.mxu0 0.0
    %4832 = vmatprep.subr.mxu0 0.0
    %4833 = vmatpush1.msra.mxu0 0.0
    %4834 = vmatprep.subr.mxu0 0.0
    %4835 = vmatpush1.msra.mxu0 0.0
    %4836 = vmatprep.subr.mxu0 0.0
    %4837 = vmatpush1.msra.mxu0 0.0
    %4838 = vmatprep.subr.mxu0 0.0
    %4839 = vmatpush1.msra.mxu0 0.0
    %4840 = vmatprep.mubr.f32.mxu0 0.0
    %4841 = vmatmul.mubr.f32.gmra.mrb[0].mxu0 %v4771
    %v4842 = vpop.f32.mrb[0].mxu0
    %v4843 = vadd.f32 0.0, %v4842
    %v4844 = vpop.f32.mrb[0].mxu0
    %4845 = vmatprep.mubr.f32.mxu0 0.0
    %4846 = vmatmul.mubr.f32.gmra.mrb[0].mxu0 %v4774
    %v4847 = vpop.f32.mrb[0].mxu0
    %v4848 = vadd.f32 0.0, %v4847
    %v4849 = vpop.f32.mrb[0].mxu0
    %4850 = vdwg.mxu0
    %4851 = vst [vmem:[#allocation3 + $0x10] sm:$0xff] %v4843
    %4852 = vst [vmem:[#allocation3 + $0x30] sm:$0xff] %v4848
    %4853 = vst [vmem:[#allocation3 + $0x18] sm:$0xff] %v4596
    %4854 = vst [vmem:[#allocation3 + $0x38] sm:$0xff] %v4597
    %v4855 = vld [vmem:[#allocation3] sm:$0xff]
    %v4856 = vld [vmem:[#allocation3 + $0x8] sm:$0xff]
    %v4857 = vld [vmem:[#allocation3 + $0x10] sm:$0xff]
    %v4858 = vld [vmem:[#allocation3 + $0x18] sm:$0xff]
    %v4859 = vld [vmem:[#allocation3 + $0x20] sm:$0xff]
    %v4860 = vld [vmem:[#allocation3 + $0x28] sm:$0xff]
    %v4861 = vld [vmem:[#allocation3 + $0x30] sm:$0xff]
    %v4862 = vld [vmem:[#allocation3 + $0x38] sm:$0xff]
    %v4863 = vld [vmem:[#allocation10] sm:$0xff]
    %v4864 = vld [vmem:[#allocation10 + $0x8] sm:$0xff]
    %v4865 = vld [vmem:[#allocation10 + $0x10] sm:$0xff]
    %v4866 = vld [vmem:[#allocation10 + $0x18] sm:$0xff]
    %v4867 = vld [vmem:[#allocation10 + $0x20] sm:$0xff]
    %v4868 = vld [vmem:[#allocation10 + $0x28] sm:$0xff]
    %v4869 = vld [vmem:[#allocation10 + $0x30] sm:$0xff]
    %v4870 = vld [vmem:[#allocation10 + $0x38] sm:$0xff]
    %v4871 = vld [vmem:[#allocation10 + $0x40] sm:$0xff]
    %v4872 = vld [vmem:[#allocation10 + $0x48] sm:$0xff]
    %v4873 = vld [vmem:[#allocation10 + $0x50] sm:$0xff]
    %v4874 = vld [vmem:[#allocation10 + $0x58] sm:$0xff]
    %v4875 = vld [vmem:[#allocation10 + $0x60] sm:$0xff]
    %v4876 = vld [vmem:[#allocation10 + $0x68] sm:$0xff]
    %v4877 = vld [vmem:[#allocation10 + $0x70] sm:$0xff]
    %v4878 = vld [vmem:[#allocation10 + $0x78] sm:$0xff]
    %v4879 = vld [vmem:[#allocation10 + $0x80] sm:$0xff]
    %v4880 = vld [vmem:[#allocation10 + $0x88] sm:$0xff]
    %v4881 = vld [vmem:[#allocation10 + $0x90] sm:$0xff]
    %v4882 = vld [vmem:[#allocation10 + $0x98] sm:$0xff]
    %v4883 = vld [vmem:[#allocation10 + $0xa0] sm:$0xff]
    %v4884 = vld [vmem:[#allocation10 + $0xa8] sm:$0xff]
    %v4885 = vld [vmem:[#allocation10 + $0xb0] sm:$0xff]
    %v4886 = vld [vmem:[#allocation10 + $0xb8] sm:$0xff]
    %v4887 = vld [vmem:[#allocation10 + $0xc0] sm:$0xff]
    %v4888 = vld [vmem:[#allocation10 + $0xc8] sm:$0xff]
    %v4889 = vld [vmem:[#allocation10 + $0xd0] sm:$0xff]
    %v4890 = vld [vmem:[#allocation10 + $0xd8] sm:$0xff]
    %v4891 = vld [vmem:[#allocation10 + $0xe0] sm:$0xff]
    %v4892 = vld [vmem:[#allocation10 + $0xe8] sm:$0xff]
    %v4893 = vld [vmem:[#allocation10 + $0xf0] sm:$0xff]
    %v4894 = vld [vmem:[#allocation10 + $0xf8] sm:$0xff]
    %v4895 = vld [vmem:[#allocation10 + $0x100] sm:$0xff]
    %v4896 = vld [vmem:[#allocation10 + $0x108] sm:$0xff]
    %v4897 = vld [vmem:[#allocation10 + $0x110] sm:$0xff]
    %v4898 = vld [vmem:[#allocation10 + $0x118] sm:$0xff]
    %v4899 = vld [vmem:[#allocation10 + $0x120] sm:$0xff]
    %v4900 = vld [vmem:[#allocation10 + $0x128] sm:$0xff]
    %v4901 = vld [vmem:[#allocation10 + $0x130] sm:$0xff]
    %v4902 = vld [vmem:[#allocation10 + $0x138] sm:$0xff]
    %v4903 = vld [vmem:[#allocation10 + $0x140] sm:$0xff]
    %v4904 = vld [vmem:[#allocation10 + $0x148] sm:$0xff]
    %v4905 = vld [vmem:[#allocation10 + $0x150] sm:$0xff]
    %v4906 = vld [vmem:[#allocation10 + $0x158] sm:$0xff]
    %v4907 = vld [vmem:[#allocation10 + $0x160] sm:$0xff]
    %v4908 = vld [vmem:[#allocation10 + $0x168] sm:$0xff]
    %v4909 = vld [vmem:[#allocation10 + $0x170] sm:$0xff]
    %v4910 = vld [vmem:[#allocation10 + $0x178] sm:$0xff]
    %v4911 = vld [vmem:[#allocation10 + $0x180] sm:$0xff]
    %v4912 = vld [vmem:[#allocation10 + $0x188] sm:$0xff]
    %v4913 = vld [vmem:[#allocation10 + $0x190] sm:$0xff]
    %v4914 = vld [vmem:[#allocation10 + $0x198] sm:$0xff]
    %v4915 = vld [vmem:[#allocation10 + $0x1a0] sm:$0xff]
    %v4916 = vld [vmem:[#allocation10 + $0x1a8] sm:$0xff]
    %v4917 = vld [vmem:[#allocation10 + $0x1b0] sm:$0xff]
    %v4918 = vld [vmem:[#allocation10 + $0x1b8] sm:$0xff]
    %v4919 = vld [vmem:[#allocation10 + $0x1c0] sm:$0xff]
    %v4920 = vld [vmem:[#allocation10 + $0x1c8] sm:$0xff]
    %v4921 = vld [vmem:[#allocation10 + $0x1d0] sm:$0xff]
    %v4922 = vld [vmem:[#allocation10 + $0x1d8] sm:$0xff]
    %v4923 = vld [vmem:[#allocation10 + $0x1e0] sm:$0xff]
    %v4924 = vld [vmem:[#allocation10 + $0x1e8] sm:$0xff]
    %v4925 = vld [vmem:[#allocation10 + $0x1f0] sm:$0xff]
    %v4926 = vld [vmem:[#allocation10 + $0x1f8] sm:$0xff]
    %v4927 = vld [vmem:[#allocation10 + $0x200] sm:$0xff]
    %v4928 = vld [vmem:[#allocation10 + $0x208] sm:$0xff]
    %v4929 = vld [vmem:[#allocation10 + $0x210] sm:$0xff]
    %v4930 = vld [vmem:[#allocation10 + $0x218] sm:$0xff]
    %v4931 = vld [vmem:[#allocation10 + $0x220] sm:$0xff]
    %v4932 = vld [vmem:[#allocation10 + $0x228] sm:$0xff]
    %v4933 = vld [vmem:[#allocation10 + $0x230] sm:$0xff]
    %v4934 = vld [vmem:[#allocation10 + $0x238] sm:$0xff]
    %v4935 = vld [vmem:[#allocation10 + $0x240] sm:$0xff]
    %v4936 = vld [vmem:[#allocation10 + $0x248] sm:$0xff]
    %v4937 = vld [vmem:[#allocation10 + $0x250] sm:$0xff]
    %v4938 = vld [vmem:[#allocation10 + $0x258] sm:$0xff]
    %v4939 = vld [vmem:[#allocation10 + $0x260] sm:$0xff]
    %v4940 = vld [vmem:[#allocation10 + $0x268] sm:$0xff]
    %v4941 = vld [vmem:[#allocation10 + $0x270] sm:$0xff]
    %v4942 = vld [vmem:[#allocation10 + $0x278] sm:$0xff]
    %v4943 = vld [vmem:[#allocation10 + $0x280] sm:$0xff]
    %v4944 = vld [vmem:[#allocation10 + $0x288] sm:$0xff]
    %v4945 = vld [vmem:[#allocation10 + $0x290] sm:$0xff]
    %v4946 = vld [vmem:[#allocation10 + $0x298] sm:$0xff]
    %v4947 = vld [vmem:[#allocation10 + $0x2a0] sm:$0xff]
    %v4948 = vld [vmem:[#allocation10 + $0x2a8] sm:$0xff]
    %v4949 = vld [vmem:[#allocation10 + $0x2b0] sm:$0xff]
    %v4950 = vld [vmem:[#allocation10 + $0x2b8] sm:$0xff]
    %v4951 = vld [vmem:[#allocation10 + $0x2c0] sm:$0xff]
    %v4952 = vld [vmem:[#allocation10 + $0x2c8] sm:$0xff]
    %v4953 = vld [vmem:[#allocation10 + $0x2d0] sm:$0xff]
    %v4954 = vld [vmem:[#allocation10 + $0x2d8] sm:$0xff]
    %v4955 = vld [vmem:[#allocation10 + $0x2e0] sm:$0xff]
    %v4956 = vld [vmem:[#allocation10 + $0x2e8] sm:$0xff]
    %v4957 = vld [vmem:[#allocation10 + $0x2f0] sm:$0xff]
    %v4958 = vld [vmem:[#allocation10 + $0x2f8] sm:$0xff]
    %v4959 = vld [vmem:[#allocation10 + $0x300] sm:$0xff]
    %v4960 = vld [vmem:[#allocation10 + $0x308] sm:$0xff]
    %v4961 = vld [vmem:[#allocation10 + $0x310] sm:$0xff]
    %v4962 = vld [vmem:[#allocation10 + $0x318] sm:$0xff]
    %v4963 = vld [vmem:[#allocation10 + $0x320] sm:$0xff]
    %v4964 = vld [vmem:[#allocation10 + $0x328] sm:$0xff]
    %v4965 = vld [vmem:[#allocation10 + $0x330] sm:$0xff]
    %v4966 = vld [vmem:[#allocation10 + $0x338] sm:$0xff]
    %v4967 = vld [vmem:[#allocation10 + $0x340] sm:$0xff]
    %v4968 = vld [vmem:[#allocation10 + $0x348] sm:$0xff]
    %v4969 = vld [vmem:[#allocation10 + $0x350] sm:$0xff]
    %v4970 = vld [vmem:[#allocation10 + $0x358] sm:$0xff]
    %v4971 = vld [vmem:[#allocation10 + $0x360] sm:$0xff]
    %v4972 = vld [vmem:[#allocation10 + $0x368] sm:$0xff]
    %v4973 = vld [vmem:[#allocation10 + $0x370] sm:$0xff]
    %v4974 = vld [vmem:[#allocation10 + $0x378] sm:$0xff]
    %v4975 = vld [vmem:[#allocation10 + $0x380] sm:$0xff]
    %v4976 = vld [vmem:[#allocation10 + $0x388] sm:$0xff]
    %v4977 = vld [vmem:[#allocation10 + $0x390] sm:$0xff]
    %v4978 = vld [vmem:[#allocation10 + $0x398] sm:$0xff]
    %v4979 = vld [vmem:[#allocation10 + $0x3a0] sm:$0xff]
    %v4980 = vld [vmem:[#allocation10 + $0x3a8] sm:$0xff]
    %v4981 = vld [vmem:[#allocation10 + $0x3b0] sm:$0xff]
    %v4982 = vld [vmem:[#allocation10 + $0x3b8] sm:$0xff]
    %v4983 = vld [vmem:[#allocation10 + $0x3c0] sm:$0xff]
    %v4984 = vld [vmem:[#allocation10 + $0x3c8] sm:$0xff]
    %v4985 = vld [vmem:[#allocation10 + $0x3d0] sm:$0xff]
    %v4986 = vld [vmem:[#allocation10 + $0x3d8] sm:$0xff]
    %v4987 = vld [vmem:[#allocation10 + $0x3e0] sm:$0xff]
    %v4988 = vld [vmem:[#allocation10 + $0x3e8] sm:$0xff]
    %v4989 = vld [vmem:[#allocation10 + $0x3f0] sm:$0xff]
    %v4990 = vld [vmem:[#allocation10 + $0x3f8] sm:$0xff]
    %v4991 = vld [vmem:[#allocation10 + $0x400] sm:$0xff]
    %v4992 = vld [vmem:[#allocation10 + $0x408] sm:$0xff]
    %v4993 = vld [vmem:[#allocation10 + $0x410] sm:$0xff]
    %v4994 = vld [vmem:[#allocation10 + $0x418] sm:$0xff]
    %v4995 = vld [vmem:[#allocation10 + $0x420] sm:$0xff]
    %v4996 = vld [vmem:[#allocation10 + $0x428] sm:$0xff]
    %v4997 = vld [vmem:[#allocation10 + $0x430] sm:$0xff]
    %v4998 = vld [vmem:[#allocation10 + $0x438] sm:$0xff]
    %v4999 = vld [vmem:[#allocation10 + $0x440] sm:$0xff]
    %v5000 = vld [vmem:[#allocation10 + $0x448] sm:$0xff]
    %v5001 = vld [vmem:[#allocation10 + $0x450] sm:$0xff]
    %v5002 = vld [vmem:[#allocation10 + $0x458] sm:$0xff]
    %v5003 = vld [vmem:[#allocation10 + $0x460] sm:$0xff]
    %v5004 = vld [vmem:[#allocation10 + $0x468] sm:$0xff]
    %v5005 = vld [vmem:[#allocation10 + $0x470] sm:$0xff]
    %v5006 = vld [vmem:[#allocation10 + $0x478] sm:$0xff]
    %v5007 = vld [vmem:[#allocation10 + $0x480] sm:$0xff]
    %v5008 = vld [vmem:[#allocation10 + $0x488] sm:$0xff]
    %v5009 = vld [vmem:[#allocation10 + $0x490] sm:$0xff]
    %v5010 = vld [vmem:[#allocation10 + $0x498] sm:$0xff]
    %v5011 = vld [vmem:[#allocation10 + $0x4a0] sm:$0xff]
    %v5012 = vld [vmem:[#allocation10 + $0x4a8] sm:$0xff]
    %v5013 = vld [vmem:[#allocation10 + $0x4b0] sm:$0xff]
    %v5014 = vld [vmem:[#allocation10 + $0x4b8] sm:$0xff]
    %v5015 = vld [vmem:[#allocation10 + $0x4c0] sm:$0xff]
    %v5016 = vld [vmem:[#allocation10 + $0x4c8] sm:$0xff]
    %v5017 = vld [vmem:[#allocation10 + $0x4d0] sm:$0xff]
    %v5018 = vld [vmem:[#allocation10 + $0x4d8] sm:$0xff]
    %v5019 = vld [vmem:[#allocation10 + $0x4e0] sm:$0xff]
    %v5020 = vld [vmem:[#allocation10 + $0x4e8] sm:$0xff]
    %v5021 = vld [vmem:[#allocation10 + $0x4f0] sm:$0xff]
    %v5022 = vld [vmem:[#allocation10 + $0x4f8] sm:$0xff]
    %v5023 = vld [vmem:[#allocation10 + $0x500] sm:$0xff]
    %v5024 = vld [vmem:[#allocation10 + $0x508] sm:$0xff]
    %v5025 = vld [vmem:[#allocation10 + $0x510] sm:$0xff]
    %v5026 = vld [vmem:[#allocation10 + $0x518] sm:$0xff]
    %v5027 = vld [vmem:[#allocation10 + $0x520] sm:$0xff]
    %v5028 = vld [vmem:[#allocation10 + $0x528] sm:$0xff]
    %v5029 = vld [vmem:[#allocation10 + $0x530] sm:$0xff]
    %v5030 = vld [vmem:[#allocation10 + $0x538] sm:$0xff]
    %v5031 = vld [vmem:[#allocation10 + $0x540] sm:$0xff]
    %v5032 = vld [vmem:[#allocation10 + $0x548] sm:$0xff]
    %v5033 = vld [vmem:[#allocation10 + $0x550] sm:$0xff]
    %v5034 = vld [vmem:[#allocation10 + $0x558] sm:$0xff]
    %v5035 = vld [vmem:[#allocation10 + $0x560] sm:$0xff]
    %v5036 = vld [vmem:[#allocation10 + $0x568] sm:$0xff]
    %v5037 = vld [vmem:[#allocation10 + $0x570] sm:$0xff]
    %v5038 = vld [vmem:[#allocation10 + $0x578] sm:$0xff]
    %v5039 = vld [vmem:[#allocation10 + $0x580] sm:$0xff]
    %v5040 = vld [vmem:[#allocation10 + $0x588] sm:$0xff]
    %v5041 = vld [vmem:[#allocation10 + $0x590] sm:$0xff]
    %v5042 = vld [vmem:[#allocation10 + $0x598] sm:$0xff]
    %v5043 = vld [vmem:[#allocation10 + $0x5a0] sm:$0xff]
    %v5044 = vld [vmem:[#allocation10 + $0x5a8] sm:$0xff]
    %v5045 = vld [vmem:[#allocation10 + $0x5b0] sm:$0xff]
    %v5046 = vld [vmem:[#allocation10 + $0x5b8] sm:$0xff]
    %v5047 = vld [vmem:[#allocation10 + $0x5c0] sm:$0xff]
    %v5048 = vld [vmem:[#allocation10 + $0x5c8] sm:$0xff]
    %v5049 = vld [vmem:[#allocation10 + $0x5d0] sm:$0xff]
    %v5050 = vld [vmem:[#allocation10 + $0x5d8] sm:$0xff]
    %v5051 = vld [vmem:[#allocation10 + $0x5e0] sm:$0xff]
    %v5052 = vld [vmem:[#allocation10 + $0x5e8] sm:$0xff]
    %v5053 = vld [vmem:[#allocation10 + $0x5f0] sm:$0xff]
    %v5054 = vld [vmem:[#allocation10 + $0x5f8] sm:$0xff]
    %v5055 = vld [vmem:[#allocation9] sm:$0xff]
    %v5056 = vld [vmem:[#allocation9 + $0x8] sm:$0xff]
    %v5057 = vld [vmem:[#allocation9 + $0x10] sm:$0xff]
    %v5058 = vld [vmem:[#allocation9 + $0x18] sm:$0xff]
    %v5059 = vld [vmem:[#allocation9 + $0x20] sm:$0xff]
    %v5060 = vld [vmem:[#allocation9 + $0x28] sm:$0xff]
    %5061 = vmatprep.subr.mxu0 %v4864
    %5062 = vmatpush1.msra.mxu0 %v4863
    %5063 = vmatprep.subr.mxu0 %v4867
    %5064 = vmatpush1.msra.mxu0 %v4866
    %5065 = vmatprep.subr.mxu0 %v4870
    %5066 = vmatpush1.msra.mxu0 %v4869
    %5067 = vmatprep.subr.mxu0 %v4873
    %5068 = vmatpush1.msra.mxu0 %v4872
    %5069 = vmatprep.subr.mxu0 %v4876
    %5070 = vmatpush1.msra.mxu0 %v4875
    %5071 = vmatprep.subr.mxu0 %v4879
    %5072 = vmatpush1.msra.mxu0 %v4878
    %5073 = vmatprep.subr.mxu0 %v4882
    %5074 = vmatpush1.msra.mxu0 %v4881
    %5075 = vmatprep.subr.mxu0 %v4885
    %5076 = vmatpush1.msra.mxu0 %v4884
    %5077 = vmatprep.subr.mxu0 %v4888
    %5078 = vmatpush1.msra.mxu0 %v4887
    %5079 = vmatprep.subr.mxu0 %v4891
    %5080 = vmatpush1.msra.mxu0 %v4890
    %5081 = vmatprep.subr.mxu0 %v4894
    %5082 = vmatpush1.msra.mxu0 %v4893
    %5083 = vmatprep.subr.mxu0 %v4897
    %5084 = vmatpush1.msra.mxu0 %v4896
    %5085 = vmatprep.subr.mxu0 %v4900
    %5086 = vmatpush1.msra.mxu0 %v4899
    %5087 = vmatprep.subr.mxu0 %v4903
    %5088 = vmatpush1.msra.mxu0 %v4902
    %5089 = vmatprep.subr.mxu0 %v4906
    %5090 = vmatpush1.msra.mxu0 %v4905
    %5091 = vmatprep.subr.mxu0 %v4909
    %5092 = vmatpush1.msra.mxu0 %v4908
    %5093 = vmatprep.subr.mxu0 %v4912
    %5094 = vmatpush1.msra.mxu0 %v4911
    %5095 = vmatprep.subr.mxu0 %v4915
    %5096 = vmatpush1.msra.mxu0 %v4914
    %5097 = vmatprep.subr.mxu0 %v4918
    %5098 = vmatpush1.msra.mxu0 %v4917
    %5099 = vmatprep.subr.mxu0 %v4921
    %5100 = vmatpush1.msra.mxu0 %v4920
    %5101 = vmatprep.subr.mxu0 %v4924
    %5102 = vmatpush1.msra.mxu0 %v4923
    %5103 = vmatprep.subr.mxu0 %v4927
    %5104 = vmatpush1.msra.mxu0 %v4926
    %5105 = vmatprep.subr.mxu0 %v4930
    %5106 = vmatpush1.msra.mxu0 %v4929
    %5107 = vmatprep.subr.mxu0 %v4933
    %5108 = vmatpush1.msra.mxu0 %v4932
    %5109 = vmatprep.subr.mxu0 %v4936
    %5110 = vmatpush1.msra.mxu0 %v4935
    %5111 = vmatprep.subr.mxu0 %v4939
    %5112 = vmatpush1.msra.mxu0 %v4938
    %5113 = vmatprep.subr.mxu0 %v4942
    %5114 = vmatpush1.msra.mxu0 %v4941
    %5115 = vmatprep.subr.mxu0 %v4945
    %5116 = vmatpush1.msra.mxu0 %v4944
    %5117 = vmatprep.subr.mxu0 %v4948
    %5118 = vmatpush1.msra.mxu0 %v4947
    %5119 = vmatprep.subr.mxu0 %v4951
    %5120 = vmatpush1.msra.mxu0 %v4950
    %5121 = vmatprep.subr.mxu0 %v4954
    %5122 = vmatpush1.msra.mxu0 %v4953
    %5123 = vmatprep.subr.mxu0 %v4957
    %5124 = vmatpush1.msra.mxu0 %v4956
    %5125 = vmatprep.mubr.f32.mxu0 %v4856
    %5126 = vmatmul.mubr.f32.gmra.mrb[0].mxu0 %v4855
    %v5127 = vpop.f32.mrb[0].mxu0
    %v5128 = vadd.f32 %v5055, %v5127
    %v5129 = vpop.f32.mrb[0].mxu0
    %v5130 = vadd.f32 %v5056, %v5129
    %5131 = vmatprep.mubr.f32.mxu0 %v4860
    %5132 = vmatmul.mubr.f32.gmra.mrb[0].mxu0 %v4859
    %v5133 = vpop.f32.mrb[0].mxu0
    %v5134 = vadd.f32 %v5058, %v5133
    %v5135 = vpop.f32.mrb[0].mxu0
    %v5136 = vadd.f32 %v5059, %v5135
    %5137 = vdwg.mxu0
    %5138 = vmatprep.subr.mxu0 %v4960
    %5139 = vmatpush1.msra.mxu0 %v4959
    %5140 = vmatprep.subr.mxu0 %v4963
    %5141 = vmatpush1.msra.mxu0 %v4962
    %5142 = vmatprep.subr.mxu0 %v4966
    %5143 = vmatpush1.msra.mxu0 %v4965
    %5144 = vmatprep.subr.mxu0 %v4969
    %5145 = vmatpush1.msra.mxu0 %v4968
    %5146 = vmatprep.subr.mxu0 %v4972
    %5147 = vmatpush1.msra.mxu0 %v4971
    %5148 = vmatprep.subr.mxu0 %v4975
    %5149 = vmatpush1.msra.mxu0 %v4974
    %5150 = vmatprep.subr.mxu0 %v4978
    %5151 = vmatpush1.msra.mxu0 %v4977
    %5152 = vmatprep.subr.mxu0 %v4981
    %5153 = vmatpush1.msra.mxu0 %v4980
    %5154 = vmatprep.subr.mxu0 %v4984
    %5155 = vmatpush1.msra.mxu0 %v4983
    %5156 = vmatprep.subr.mxu0 %v4987
    %5157 = vmatpush1.msra.mxu0 %v4986
    %5158 = vmatprep.subr.mxu0 %v4990
    %5159 = vmatpush1.msra.mxu0 %v4989
    %5160 = vmatprep.subr.mxu0 %v4993
    %5161 = vmatpush1.msra.mxu0 %v4992
    %5162 = vmatprep.subr.mxu0 %v4996
    %5163 = vmatpush1.msra.mxu0 %v4995
    %5164 = vmatprep.subr.mxu0 %v4999
    %5165 = vmatpush1.msra.mxu0 %v4998
    %5166 = vmatprep.subr.mxu0 %v5002
    %5167 = vmatpush1.msra.mxu0 %v5001
    %5168 = vmatprep.subr.mxu0 %v5005
    %5169 = vmatpush1.msra.mxu0 %v5004
    %5170 = vmatprep.subr.mxu0 %v5008
    %5171 = vmatpush1.msra.mxu0 %v5007
    %5172 = vmatprep.subr.mxu0 %v5011
    %5173 = vmatpush1.msra.mxu0 %v5010
    %5174 = vmatprep.subr.mxu0 %v5014
    %5175 = vmatpush1.msra.mxu0 %v5013
    %5176 = vmatprep.subr.mxu0 %v5017
    %5177 = vmatpush1.msra.mxu0 %v5016
    %5178 = vmatprep.subr.mxu0 %v5020
    %5179 = vmatpush1.msra.mxu0 %v5019
    %5180 = vmatprep.subr.mxu0 %v5023
    %5181 = vmatpush1.msra.mxu0 %v5022
    %5182 = vmatprep.subr.mxu0 %v5026
    %5183 = vmatpush1.msra.mxu0 %v5025
    %5184 = vmatprep.subr.mxu0 %v5029
    %5185 = vmatpush1.msra.mxu0 %v5028
    %5186 = vmatprep.subr.mxu0 %v5032
    %5187 = vmatpush1.msra.mxu0 %v5031
    %5188 = vmatprep.subr.mxu0 %v5035
    %5189 = vmatpush1.msra.mxu0 %v5034
    %5190 = vmatprep.subr.mxu0 %v5038
    %5191 = vmatpush1.msra.mxu0 %v5037
    %5192 = vmatprep.subr.mxu0 %v5041
    %5193 = vmatpush1.msra.mxu0 %v5040
    %5194 = vmatprep.subr.mxu0 %v5044
    %5195 = vmatpush1.msra.mxu0 %v5043
    %5196 = vmatprep.subr.mxu0 %v5047
    %5197 = vmatpush1.msra.mxu0 %v5046
    %5198 = vmatprep.subr.mxu0 %v5050
    %5199 = vmatpush1.msra.mxu0 %v5049
    %5200 = vmatprep.subr.mxu0 %v5053
    %5201 = vmatpush1.msra.mxu0 %v5052
    %5202 = vmatprep.mubr.f32.mxu0 %v4858
    %5203 = vmatmul.mubr.f32.gmra.mrb[0].mxu0 %v4857
    %v5204 = vpop.f32.mrb[0].mxu0
    %v5205 = vadd.f32 %v5128, %v5204
    %v5206 = vpop.f32.mrb[0].mxu0
    %v5207 = vadd.f32 %v5130, %v5206
    %5208 = vmatprep.mubr.f32.mxu0 %v4862
    %5209 = vmatmul.mubr.f32.gmra.mrb[0].mxu0 %v4861
    %v5210 = vpop.f32.mrb[0].mxu0
    %v5211 = vadd.f32 %v5134, %v5210
    %v5212 = vpop.f32.mrb[0].mxu0
    %v5213 = vadd.f32 %v5136, %v5212
    %5214 = vdwg.mxu0
    %5215 = vmatprep.subr.mxu0 0.0
    %5216 = vmatpush1.msra.mxu0 %v4865
    %5217 = vmatprep.subr.mxu0 0.0
    %5218 = vmatpush1.msra.mxu0 %v4868
    %5219 = vmatprep.subr.mxu0 0.0
    %5220 = vmatpush1.msra.mxu0 %v4871
    %5221 = vmatprep.subr.mxu0 0.0
    %5222 = vmatpush1.msra.mxu0 %v4874
    %5223 = vmatprep.subr.mxu0 0.0
    %5224 = vmatpush1.msra.mxu0 %v4877
    %5225 = vmatprep.subr.mxu0 0.0
    %5226 = vmatpush1.msra.mxu0 %v4880
    %5227 = vmatprep.subr.mxu0 0.0
    %5228 = vmatpush1.msra.mxu0 %v4883
    %5229 = vmatprep.subr.mxu0 0.0
    %5230 = vmatpush1.msra.mxu0 %v4886
    %5231 = vmatprep.subr.mxu0 0.0
    %5232 = vmatpush1.msra.mxu0 %v4889
    %5233 = vmatprep.subr.mxu0 0.0
    %5234 = vmatpush1.msra.mxu0 %v4892
    %5235 = vmatprep.subr.mxu0 0.0
    %5236 = vmatpush1.msra.mxu0 %v4895
    %5237 = vmatprep.subr.mxu0 0.0
    %5238 = vmatpush1.msra.mxu0 %v4898
    %5239 = vmatprep.subr.mxu0 0.0
    %5240 = vmatpush1.msra.mxu0 %v4901
    %5241 = vmatprep.subr.mxu0 0.0
    %5242 = vmatpush1.msra.mxu0 %v4904
    %5243 = vmatprep.subr.mxu0 0.0
    %5244 = vmatpush1.msra.mxu0 %v4907
    %5245 = vmatprep.subr.mxu0 0.0
    %5246 = vmatpush1.msra.mxu0 %v4910
    %5247 = vmatprep.subr.mxu0 0.0
    %5248 = vmatpush1.msra.mxu0 %v4913
    %5249 = vmatprep.subr.mxu0 0.0
    %5250 = vmatpush1.msra.mxu0 %v4916
    %5251 = vmatprep.subr.mxu0 0.0
    %5252 = vmatpush1.msra.mxu0 %v4919
    %5253 = vmatprep.subr.mxu0 0.0
    %5254 = vmatpush1.msra.mxu0 %v4922
    %5255 = vmatprep.subr.mxu0 0.0
    %5256 = vmatpush1.msra.mxu0 %v4925
    %5257 = vmatprep.subr.mxu0 0.0
    %5258 = vmatpush1.msra.mxu0 %v4928
    %5259 = vmatprep.subr.mxu0 0.0
    %5260 = vmatpush1.msra.mxu0 %v4931
    %5261 = vmatprep.subr.mxu0 0.0
    %5262 = vmatpush1.msra.mxu0 %v4934
    %5263 = vmatprep.subr.mxu0 0.0
    %5264 = vmatpush1.msra.mxu0 %v4937
    %5265 = vmatprep.subr.mxu0 0.0
    %5266 = vmatpush1.msra.mxu0 %v4940
    %5267 = vmatprep.subr.mxu0 0.0
    %5268 = vmatpush1.msra.mxu0 %v4943
    %5269 = vmatprep.subr.mxu0 0.0
    %5270 = vmatpush1.msra.mxu0 %v4946
    %5271 = vmatprep.subr.mxu0 0.0
    %5272 = vmatpush1.msra.mxu0 %v4949
    %5273 = vmatprep.subr.mxu0 0.0
    %5274 = vmatpush1.msra.mxu0 %v4952
    %5275 = vmatprep.subr.mxu0 0.0
    %5276 = vmatpush1.msra.mxu0 %v4955
    %5277 = vmatprep.subr.mxu0 0.0
    %5278 = vmatpush1.msra.mxu0 %v4958
    %5279 = vmatprep.mubr.f32.mxu0 %v4856
    %5280 = vmatmul.mubr.f32.gmra.mrb[0].mxu0 %v4855
    %v5281 = vpop.f32.mrb[0].mxu0
    %v5282 = vadd.f32 %v5057, %v5281
    %v5283 = vpop.f32.mrb[0].mxu0
    %5284 = vmatprep.mubr.f32.mxu0 %v4860
    %5285 = vmatmul.mubr.f32.gmra.mrb[0].mxu0 %v4859
    %v5286 = vpop.f32.mrb[0].mxu0
    %v5287 = vadd.f32 %v5060, %v5286
    %v5288 = vpop.f32.mrb[0].mxu0
    %5289 = vdwg.mxu0
    %5290 = vmatprep.subr.mxu0 0.0
    %5291 = vmatpush1.msra.mxu0 %v4961
    %5292 = vmatprep.subr.mxu0 0.0
    %5293 = vmatpush1.msra.mxu0 %v4964
    %5294 = vmatprep.subr.mxu0 0.0
    %5295 = vmatpush1.msra.mxu0 %v4967
    %5296 = vmatprep.subr.mxu0 0.0
    %5297 = vmatpush1.msra.mxu0 %v4970
    %5298 = vmatprep.subr.mxu0 0.0
    %5299 = vmatpush1.msra.mxu0 %v4973
    %5300 = vmatprep.subr.mxu0 0.0
    %5301 = vmatpush1.msra.mxu0 %v4976
    %5302 = vmatprep.subr.mxu0 0.0
    %5303 = vmatpush1.msra.mxu0 %v4979
    %5304 = vmatprep.subr.mxu0 0.0
    %5305 = vmatpush1.msra.mxu0 %v4982
    %5306 = vmatprep.subr.mxu0 0.0
    %5307 = vmatpush1.msra.mxu0 %v4985
    %5308 = vmatprep.subr.mxu0 0.0
    %5309 = vmatpush1.msra.mxu0 %v4988
    %5310 = vmatprep.subr.mxu0 0.0
    %5311 = vmatpush1.msra.mxu0 %v4991
    %5312 = vmatprep.subr.mxu0 0.0
    %5313 = vmatpush1.msra.mxu0 %v4994
    %5314 = vmatprep.subr.mxu0 0.0
    %5315 = vmatpush1.msra.mxu0 %v4997
    %5316 = vmatprep.subr.mxu0 0.0
    %5317 = vmatpush1.msra.mxu0 %v5000
    %5318 = vmatprep.subr.mxu0 0.0
    %5319 = vmatpush1.msra.mxu0 %v5003
    %5320 = vmatprep.subr.mxu0 0.0
    %5321 = vmatpush1.msra.mxu0 %v5006
    %5322 = vmatprep.subr.mxu0 0.0
    %5323 = vmatpush1.msra.mxu0 %v5009
    %5324 = vmatprep.subr.mxu0 0.0
    %5325 = vmatpush1.msra.mxu0 %v5012
    %5326 = vmatprep.subr.mxu0 0.0
    %5327 = vmatpush1.msra.mxu0 %v5015
    %5328 = vmatprep.subr.mxu0 0.0
    %5329 = vmatpush1.msra.mxu0 %v5018
    %5330 = vmatprep.subr.mxu0 0.0
    %5331 = vmatpush1.msra.mxu0 %v5021
    %5332 = vmatprep.subr.mxu0 0.0
    %5333 = vmatpush1.msra.mxu0 %v5024
    %5334 = vmatprep.subr.mxu0 0.0
    %5335 = vmatpush1.msra.mxu0 %v5027
    %5336 = vmatprep.subr.mxu0 0.0
    %5337 = vmatpush1.msra.mxu0 %v5030
    %5338 = vmatprep.subr.mxu0 0.0
    %5339 = vmatpush1.msra.mxu0 %v5033
    %5340 = vmatprep.subr.mxu0 0.0
    %5341 = vmatpush1.msra.mxu0 %v5036
    %5342 = vmatprep.subr.mxu0 0.0
    %5343 = vmatpush1.msra.mxu0 %v5039
    %5344 = vmatprep.subr.mxu0 0.0
    %5345 = vmatpush1.msra.mxu0 %v5042
    %5346 = vmatprep.subr.mxu0 0.0
    %5347 = vmatpush1.msra.mxu0 %v5045
    %5348 = vmatprep.subr.mxu0 0.0
    %5349 = vmatpush1.msra.mxu0 %v5048
    %5350 = vmatprep.subr.mxu0 0.0
    %5351 = vmatpush1.msra.mxu0 %v5051
    %5352 = vmatprep.subr.mxu0 0.0
    %5353 = vmatpush1.msra.mxu0 %v5054
    %5354 = vmatprep.mubr.f32.mxu0 %v4858
    %5355 = vmatmul.mubr.f32.gmra.mrb[0].mxu0 %v4857
    %v5356 = vpop.f32.mrb[0].mxu0
    %v5357 = vadd.f32 %v5282, %v5356
    %v5358 = vpop.f32.mrb[0].mxu0
    %5359 = vmatprep.mubr.f32.mxu0 %v4862
    %5360 = vmatmul.mubr.f32.gmra.mrb[0].mxu0 %v4861
    %v5361 = vpop.f32.mrb[0].mxu0
    %v5362 = vadd.f32 %v5287, %v5361
    %v5363 = vpop.f32.mrb[0].mxu0
    %5364 = vdwg.mxu0
    %v5365 = vxor.u32 %v5205, 2147483648
    %v5366 = vxor.u32 %v5211, 2147483648
    %v5367 = vmul.f32 %v5365, 1.442695
    %v5368 = vpow.pop %v5367
    %v5369 = vmul.f32 %v5366, 1.442695
    %v5370 = vpow.pop %v5369
    %v5371 = vadd.f32 %v5368, 1.0
    %v5372 = vadd.f32 %v5370, 1.0
    %v5373 = vrcp.pop %v5371
    %v5374 = vmul.f32 1.0, %v5373
    %v5375 = vrcp.pop %v5372
    %v5376 = vmul.f32 1.0, %v5375
    %v5377 = vxor.u32 %v5207, 2147483648
    %v5378 = vxor.u32 %v5213, 2147483648
    %v5379 = vmul.f32 %v5377, 1.442695
    %v5380 = vpow.pop %v5379
    %v5381 = vmul.f32 %v5378, 1.442695
    %v5382 = vpow.pop %v5381
    %v5383 = vadd.f32 %v5380, 1.0
    %v5384 = vadd.f32 %v5382, 1.0
    %v5385 = vrcp.pop %v5383
    %v5386 = vmul.f32 1.0, %v5385
    %v5387 = vrcp.pop %v5384
    %v5388 = vmul.f32 1.0, %v5387
    %v5389 = vmul.f32 %v5386, %v4596
    %v5390 = vmul.f32 %v5388, %v4597
    %v5391 = vld [vmem:[#allocation12] sm:$0xff]
    %v5392 = vld [vmem:[#allocation12 + $0x8] sm:$0xff]
    %v5393 = vld [vmem:[#allocation12 + $0x10] sm:$0xff]
    %v5394 = vld [vmem:[#allocation12 + $0x18] sm:$0xff]
    %v5395 = vld [vmem:[#allocation12 + $0x20] sm:$0xff]
    %v5396 = vld [vmem:[#allocation12 + $0x28] sm:$0xff]
    %v5397 = vld [vmem:[#allocation12 + $0x30] sm:$0xff]
    %v5398 = vld [vmem:[#allocation12 + $0x38] sm:$0xff]
    %v5399 = vld [vmem:[#allocation12 + $0x40] sm:$0xff]
    %v5400 = vld [vmem:[#allocation12 + $0x48] sm:$0xff]
    %v5401 = vld [vmem:[#allocation12 + $0x50] sm:$0xff]
    %v5402 = vld [vmem:[#allocation12 + $0x58] sm:$0xff]
    %v5403 = vld [vmem:[#allocation12 + $0x60] sm:$0xff]
    %v5404 = vld [vmem:[#allocation12 + $0x68] sm:$0xff]
    %v5405 = vld [vmem:[#allocation12 + $0x70] sm:$0xff]
    %v5406 = vld [vmem:[#allocation12 + $0x78] sm:$0xff]
    %5407 = vmatprep.subr.mxu0 0.0
    %5408 = vmatpush1.msra.mxu0 %v5391
    %5409 = vmatprep.subr.mxu0 0.0
    %5410 = vmatpush1.msra.mxu0 %v5392
    %5411 = vmatprep.subr.mxu0 0.0
    %5412 = vmatpush1.msra.mxu0 %v5393
    %5413 = vmatprep.subr.mxu0 0.0
    %5414 = vmatpush1.msra.mxu0 %v5394
    %5415 = vmatprep.subr.mxu0 0.0
    %5416 = vmatpush1.msra.mxu0 %v5395
    %5417 = vmatprep.subr.mxu0 0.0
    %5418 = vmatpush1.msra.mxu0 %v5396
    %5419 = vmatprep.subr.mxu0 0.0
    %5420 = vmatpush1.msra.mxu0 %v5397
    %5421 = vmatprep.subr.mxu0 0.0
    %5422 = vmatpush1.msra.mxu0 %v5398
    %5423 = vmatprep.subr.mxu0 0.0
    %5424 = vmatpush1.msra.mxu0 %v5399
    %5425 = vmatprep.subr.mxu0 0.0
    %5426 = vmatpush1.msra.mxu0 %v5400
    %5427 = vmatprep.subr.mxu0 0.0
    %5428 = vmatpush1.msra.mxu0 %v5401
    %5429 = vmatprep.subr.mxu0 0.0
    %5430 = vmatpush1.msra.mxu0 %v5402
    %5431 = vmatprep.subr.mxu0 0.0
    %5432 = vmatpush1.msra.mxu0 %v5403
    %5433 = vmatprep.subr.mxu0 0.0
    %5434 = vmatpush1.msra.mxu0 %v5404
    %5435 = vmatprep.subr.mxu0 0.0
    %5436 = vmatpush1.msra.mxu0 %v5405
    %5437 = vmatprep.subr.mxu0 0.0
    %5438 = vmatpush1.msra.mxu0 %v5406
    %5439 = vmatprep.subr.mxu0 0.0
    %5440 = vmatpush1.msra.mxu0 0.0
    %5441 = vmatprep.subr.mxu0 0.0
    %5442 = vmatpush1.msra.mxu0 0.0
    %5443 = vmatprep.subr.mxu0 0.0
    %5444 = vmatpush1.msra.mxu0 0.0
    %5445 = vmatprep.subr.mxu0 0.0
    %5446 = vmatpush1.msra.mxu0 0.0
    %5447 = vmatprep.subr.mxu0 0.0
    %5448 = vmatpush1.msra.mxu0 0.0
    %5449 = vmatprep.subr.mxu0 0.0
    %5450 = vmatpush1.msra.mxu0 0.0
    %5451 = vmatprep.subr.mxu0 0.0
    %5452 = vmatpush1.msra.mxu0 0.0
    %5453 = vmatprep.subr.mxu0 0.0
    %5454 = vmatpush1.msra.mxu0 0.0
    %5455 = vmatprep.subr.mxu0 0.0
    %5456 = vmatpush1.msra.mxu0 0.0
    %5457 = vmatprep.subr.mxu0 0.0
    %5458 = vmatpush1.msra.mxu0 0.0
    %5459 = vmatprep.subr.mxu0 0.0
    %5460 = vmatpush1.msra.mxu0 0.0
    %5461 = vmatprep.subr.mxu0 0.0
    %5462 = vmatpush1.msra.mxu0 0.0
    %5463 = vmatprep.subr.mxu0 0.0
    %5464 = vmatpush1.msra.mxu0 0.0
    %5465 = vmatprep.subr.mxu0 0.0
    %5466 = vmatpush1.msra.mxu0 0.0
    %5467 = vmatprep.subr.mxu0 0.0
    %5468 = vmatpush1.msra.mxu0 0.0
    %5469 = vmatprep.subr.mxu0 0.0
    %5470 = vmatpush1.msra.mxu0 0.0
    %5471 = vmatprep.mubr.f32.mxu0 0.0
    %5472 = vmatmul.mubr.f32.gmra.mrb[0].mxu0 %v5389
    %v5473 = vpop.f32.mrb[0].mxu0
    %v5474 = vadd.f32 0.0, %v5473
    %v5475 = vpop.f32.mrb[0].mxu0
    %5476 = vmatprep.mubr.f32.mxu0 0.0
    %5477 = vmatmul.mubr.f32.gmra.mrb[0].mxu0 %v5390
    %v5478 = vpop.f32.mrb[0].mxu0
    %v5479 = vadd.f32 0.0, %v5478
    %v5480 = vpop.f32.mrb[0].mxu0
    %5481 = vdwg.mxu0
    %v5482 = vadd.f32 %v5357, %v5474
    %v5483 = vadd.f32 %v5362, %v5479
    %v5484 = vtanh.pop %v5482
    %v5485 = vtanh.pop %v5483
    %v5486 = vsub.f32 1.0, %v5374
    %v5487 = vsub.f32 1.0, %v5376
    %v5488 = vmul.f32 %v5486, %v4596
    %v5489 = vmul.f32 %v5487, %v4597
    %v5490 = vmul.f32 %v5374, %v5484
    %v5491 = vmul.f32 %v5376, %v5485
    %v5492 = vadd.f32 %v5488, %v5490
    %v5493 = vadd.f32 %v5489, %v5491
    %5494 = vst [vmem:[#allocation2] sm:$0xff] %v5492
    %5495 = vst [vmem:[#allocation2 + $0x8] sm:$0xff] %v5493
    %v5496 = vld [vmem:[#allocation2] sm:$0xff]
    %v5497 = vld [vmem:[#allocation2 + $0x8] sm:$0xff]
    %v5498 = vld [vmem:[#allocation4] sm:$0xff]
    %v5499 = vld [vmem:[#allocation4 + $0x8] sm:$0xff]
    %v5501 = vsel %vm97, %v5498, 0
    %v5504 = vsel %vm97, %v5499, 0
    %5506 = vmatprep.subr.mxu0 0.0
    %5507 = vmatpush1.msra.mxu0 %v5496
    %5508 = vmatprep.subr.mxu0 0.0
    %5509 = vmatpush1.msra.mxu0 %v5497
    %5510 = vmatprep.subr.mxu0 0.0
    %5511 = vmatpush1.msra.mxu0 0.0
    %5512 = vmatprep.subr.mxu0 0.0
    %5513 = vmatpush1.msra.mxu0 0.0
    %5514 = vmatprep.subr.mxu0 0.0
    %5515 = vmatpush1.msra.mxu0 0.0
    %5516 = vmatprep.subr.mxu0 0.0
    %5517 = vmatpush1.msra.mxu0 0.0
    %5518 = vmatprep.subr.mxu0 0.0
    %5519 = vmatpush1.msra.mxu0 0.0
    %5520 = vmatprep.subr.mxu0 0.0
    %5521 = vmatpush1.msra.mxu0 0.0
    %5522 = vmatprep.subr.mxu0 0.0
    %5523 = vmatpush1.msra.mxu0 0.0
    %5524 = vmatprep.subr.mxu0 0.0
    %5525 = vmatpush1.msra.mxu0 0.0
    %5526 = vmatprep.subr.mxu0 0.0
    %5527 = vmatpush1.msra.mxu0 0.0
    %5528 = vmatprep.subr.mxu0 0.0
    %5529 = vmatpush1.msra.mxu0 0.0
    %5530 = vmatprep.subr.mxu0 0.0
    %5531 = vmatpush1.msra.mxu0 0.0
    %5532 = vmatprep.subr.mxu0 0.0
    %5533 = vmatpush1.msra.mxu0 0.0
    %5534 = vmatprep.subr.mxu0 0.0
    %5535 = vmatpush1.msra.mxu0 0.0
    %5536 = vmatprep.subr.mxu0 0.0
    %5537 = vmatpush1.msra.mxu0 0.0
    %5538 = vmatprep.subr.mxu0 0.0
    %5539 = vmatpush1.msra.mxu0 0.0
    %5540 = vmatprep.subr.mxu0 0.0
    %5541 = vmatpush1.msra.mxu0 0.0
    %5542 = vmatprep.subr.mxu0 0.0
    %5543 = vmatpush1.msra.mxu0 0.0
    %5544 = vmatprep.subr.mxu0 0.0
    %5545 = vmatpush1.msra.mxu0 0.0
    %5546 = vmatprep.subr.mxu0 0.0
    %5547 = vmatpush1.msra.mxu0 0.0
    %5548 = vmatprep.subr.mxu0 0.0
    %5549 = vmatpush1.msra.mxu0 0.0
    %5550 = vmatprep.subr.mxu0 0.0
    %5551 = vmatpush1.msra.mxu0 0.0
    %5552 = vmatprep.subr.mxu0 0.0
    %5553 = vmatpush1.msra.mxu0 0.0
    %5554 = vmatprep.subr.mxu0 0.0
    %5555 = vmatpush1.msra.mxu0 0.0
    %5556 = vmatprep.subr.mxu0 0.0
    %5557 = vmatpush1.msra.mxu0 0.0
    %5558 = vmatprep.subr.mxu0 0.0
    %5559 = vmatpush1.msra.mxu0 0.0
    %5560 = vmatprep.subr.mxu0 0.0
    %5561 = vmatpush1.msra.mxu0 0.0
    %5562 = vmatprep.subr.mxu0 0.0
    %5563 = vmatpush1.msra.mxu0 0.0
    %5564 = vmatprep.subr.mxu0 0.0
    %5565 = vmatpush1.msra.mxu0 0.0
    %5566 = vmatprep.subr.mxu0 0.0
    %5567 = vmatpush1.msra.mxu0 0.0
    %5568 = vmatprep.subr.mxu0 0.0
    %5569 = vmatpush1.msra.mxu0 0.0
    %5570 = vmatprep.mubr.f32.mxu0 0.0
    %5571 = vmatmul.mubr.f32.gmra.mrb[0].mxu0 %v5501
    %v5572 = vpop.f32.mrb[0].mxu0
    %v5573 = vadd.f32 0.0, %v5572
    %v5574 = vpop.f32.mrb[0].mxu0
    %5575 = vmatprep.mubr.f32.mxu0 0.0
    %5576 = vmatmul.mubr.f32.gmra.mrb[0].mxu0 %v5504
    %v5577 = vpop.f32.mrb[0].mxu0
    %v5578 = vadd.f32 0.0, %v5577
    %v5579 = vpop.f32.mrb[0].mxu0
    %5580 = vdwg.mxu0
    %5581 = vst [vmem:[#allocation3] sm:$0xff] %v5573
    %5582 = vst [vmem:[#allocation3 + $0x20] sm:$0xff] %v5578
    %v5583 = vld [vmem:[%s181] sm:$0xff]
    %v5584 = vld [vmem:[%s181 + $0x8] sm:$0xff]
    %v5586 = vsel %vm97, %v5583, 0
    %v5589 = vsel %vm97, %v5584, 0
    %5591 = vmatprep.subr.mxu0 0.0
    %5592 = vmatpush1.msra.mxu0 %v5496
    %5593 = vmatprep.subr.mxu0 0.0
    %5594 = vmatpush1.msra.mxu0 %v5497
    %5595 = vmatprep.subr.mxu0 0.0
    %5596 = vmatpush1.msra.mxu0 0.0
    %5597 = vmatprep.subr.mxu0 0.0
    %5598 = vmatpush1.msra.mxu0 0.0
    %5599 = vmatprep.subr.mxu0 0.0
    %5600 = vmatpush1.msra.mxu0 0.0
    %5601 = vmatprep.subr.mxu0 0.0
    %5602 = vmatpush1.msra.mxu0 0.0
    %5603 = vmatprep.subr.mxu0 0.0
    %5604 = vmatpush1.msra.mxu0 0.0
    %5605 = vmatprep.subr.mxu0 0.0
    %5606 = vmatpush1.msra.mxu0 0.0
    %5607 = vmatprep.subr.mxu0 0.0
    %5608 = vmatpush1.msra.mxu0 0.0
    %5609 = vmatprep.subr.mxu0 0.0
    %5610 = vmatpush1.msra.mxu0 0.0
    %5611 = vmatprep.subr.mxu0 0.0
    %5612 = vmatpush1.msra.mxu0 0.0
    %5613 = vmatprep.subr.mxu0 0.0
    %5614 = vmatpush1.msra.mxu0 0.0
    %5615 = vmatprep.subr.mxu0 0.0
    %5616 = vmatpush1.msra.mxu0 0.0
    %5617 = vmatprep.subr.mxu0 0.0
    %5618 = vmatpush1.msra.mxu0 0.0
    %5619 = vmatprep.subr.mxu0 0.0
    %5620 = vmatpush1.msra.mxu0 0.0
    %5621 = vmatprep.subr.mxu0 0.0
    %5622 = vmatpush1.msra.mxu0 0.0
    %5623 = vmatprep.subr.mxu0 0.0
    %5624 = vmatpush1.msra.mxu0 0.0
    %5625 = vmatprep.subr.mxu0 0.0
    %5626 = vmatpush1.msra.mxu0 0.0
    %5627 = vmatprep.subr.mxu0 0.0
    %5628 = vmatpush1.msra.mxu0 0.0
    %5629 = vmatprep.subr.mxu0 0.0
    %5630 = vmatpush1.msra.mxu0 0.0
    %5631 = vmatprep.subr.mxu0 0.0
    %5632 = vmatpush1.msra.mxu0 0.0
    %5633 = vmatprep.subr.mxu0 0.0
    %5634 = vmatpush1.msra.mxu0 0.0
    %5635 = vmatprep.subr.mxu0 0.0
    %5636 = vmatpush1.msra.mxu0 0.0
    %5637 = vmatprep.subr.mxu0 0.0
    %5638 = vmatpush1.msra.mxu0 0.0
    %5639 = vmatprep.subr.mxu0 0.0
    %5640 = vmatpush1.msra.mxu0 0.0
    %5641 = vmatprep.subr.mxu0 0.0
    %5642 = vmatpush1.msra.mxu0 0.0
    %5643 = vmatprep.subr.mxu0 0.0
    %5644 = vmatpush1.msra.mxu0 0.0
    %5645 = vmatprep.subr.mxu0 0.0
    %5646 = vmatpush1.msra.mxu0 0.0
    %5647 = vmatprep.subr.mxu0 0.0
    %5648 = vmatpush1.msra.mxu0 0.0
    %5649 = vmatprep.subr.mxu0 0.0
    %5650 = vmatpush1.msra.mxu0 0.0
    %5651 = vmatprep.subr.mxu0 0.0
    %5652 = vmatpush1.msra.mxu0 0.0
    %5653 = vmatprep.subr.mxu0 0.0
    %5654 = vmatpush1.msra.mxu0 0.0
    %5655 = vmatprep.mubr.f32.mxu0 0.0
    %5656 = vmatmul.mubr.f32.gmra.mrb[0].mxu0 %v5586
    %v5657 = vpop.f32.mrb[0].mxu0
    %v5658 = vadd.f32 0.0, %v5657
    %v5659 = vpop.f32.mrb[0].mxu0
    %5660 = vmatprep.mubr.f32.mxu0 0.0
    %5661 = vmatmul.mubr.f32.gmra.mrb[0].mxu0 %v5589
    %v5662 = vpop.f32.mrb[0].mxu0
    %v5663 = vadd.f32 0.0, %v5662
    %v5664 = vpop.f32.mrb[0].mxu0
    %5665 = vdwg.mxu0
    %5666 = vst [vmem:[#allocation3 + $0x8] sm:$0xff] %v5658
    %5667 = vst [vmem:[#allocation3 + $0x28] sm:$0xff] %v5663
    %v5668 = vld [vmem:[%s267] sm:$0xff]
    %v5669 = vld [vmem:[%s267 + $0x8] sm:$0xff]
    %v5671 = vsel %vm97, %v5668, 0
    %v5674 = vsel %vm97, %v5669, 0
    %5676 = vmatprep.subr.mxu0 0.0
    %5677 = vmatpush1.msra.mxu0 %v5496
    %5678 = vmatprep.subr.mxu0 0.0
    %5679 = vmatpush1.msra.mxu0 %v5497
    %5680 = vmatprep.subr.mxu0 0.0
    %5681 = vmatpush1.msra.mxu0 0.0
    %5682 = vmatprep.subr.mxu0 0.0
    %5683 = vmatpush1.msra.mxu0 0.0
    %5684 = vmatprep.subr.mxu0 0.0
    %5685 = vmatpush1.msra.mxu0 0.0
    %5686 = vmatprep.subr.mxu0 0.0
    %5687 = vmatpush1.msra.mxu0 0.0
    %5688 = vmatprep.subr.mxu0 0.0
    %5689 = vmatpush1.msra.mxu0 0.0
    %5690 = vmatprep.subr.mxu0 0.0
    %5691 = vmatpush1.msra.mxu0 0.0
    %5692 = vmatprep.subr.mxu0 0.0
    %5693 = vmatpush1.msra.mxu0 0.0
    %5694 = vmatprep.subr.mxu0 0.0
    %5695 = vmatpush1.msra.mxu0 0.0
    %5696 = vmatprep.subr.mxu0 0.0
    %5697 = vmatpush1.msra.mxu0 0.0
    %5698 = vmatprep.subr.mxu0 0.0
    %5699 = vmatpush1.msra.mxu0 0.0
    %5700 = vmatprep.subr.mxu0 0.0
    %5701 = vmatpush1.msra.mxu0 0.0
    %5702 = vmatprep.subr.mxu0 0.0
    %5703 = vmatpush1.msra.mxu0 0.0
    %5704 = vmatprep.subr.mxu0 0.0
    %5705 = vmatpush1.msra.mxu0 0.0
    %5706 = vmatprep.subr.mxu0 0.0
    %5707 = vmatpush1.msra.mxu0 0.0
    %5708 = vmatprep.subr.mxu0 0.0
    %5709 = vmatpush1.msra.mxu0 0.0
    %5710 = vmatprep.subr.mxu0 0.0
    %5711 = vmatpush1.msra.mxu0 0.0
    %5712 = vmatprep.subr.mxu0 0.0
    %5713 = vmatpush1.msra.mxu0 0.0
    %5714 = vmatprep.subr.mxu0 0.0
    %5715 = vmatpush1.msra.mxu0 0.0
    %5716 = vmatprep.subr.mxu0 0.0
    %5717 = vmatpush1.msra.mxu0 0.0
    %5718 = vmatprep.subr.mxu0 0.0
    %5719 = vmatpush1.msra.mxu0 0.0
    %5720 = vmatprep.subr.mxu0 0.0
    %5721 = vmatpush1.msra.mxu0 0.0
    %5722 = vmatprep.subr.mxu0 0.0
    %5723 = vmatpush1.msra.mxu0 0.0
    %5724 = vmatprep.subr.mxu0 0.0
    %5725 = vmatpush1.msra.mxu0 0.0
    %5726 = vmatprep.subr.mxu0 0.0
    %5727 = vmatpush1.msra.mxu0 0.0
    %5728 = vmatprep.subr.mxu0 0.0
    %5729 = vmatpush1.msra.mxu0 0.0
    %5730 = vmatprep.subr.mxu0 0.0
    %5731 = vmatpush1.msra.mxu0 0.0
    %5732 = vmatprep.subr.mxu0 0.0
    %5733 = vmatpush1.msra.mxu0 0.0
    %5734 = vmatprep.subr.mxu0 0.0
    %5735 = vmatpush1.msra.mxu0 0.0
    %5736 = vmatprep.subr.mxu0 0.0
    %5737 = vmatpush1.msra.mxu0 0.0
    %5738 = vmatprep.subr.mxu0 0.0
    %5739 = vmatpush1.msra.mxu0 0.0
    %5740 = vmatprep.mubr.f32.mxu0 0.0
    %5741 = vmatmul.mubr.f32.gmra.mrb[0].mxu0 %v5671
    %v5742 = vpop.f32.mrb[0].mxu0
    %v5743 = vadd.f32 0.0, %v5742
    %v5744 = vpop.f32.mrb[0].mxu0
    %5745 = vmatprep.mubr.f32.mxu0 0.0
    %5746 = vmatmul.mubr.f32.gmra.mrb[0].mxu0 %v5674
    %v5747 = vpop.f32.mrb[0].mxu0
    %v5748 = vadd.f32 0.0, %v5747
    %v5749 = vpop.f32.mrb[0].mxu0
    %5750 = vdwg.mxu0
    %5751 = vst [vmem:[#allocation3 + $0x10] sm:$0xff] %v5743
    %5752 = vst [vmem:[#allocation3 + $0x30] sm:$0xff] %v5748
    %5753 = vst [vmem:[#allocation3 + $0x18] sm:$0xff] %v5496
    %5754 = vst [vmem:[#allocation3 + $0x38] sm:$0xff] %v5497
    %v5755 = vld [vmem:[#allocation3] sm:$0xff]
    %v5756 = vld [vmem:[#allocation3 + $0x8] sm:$0xff]
    %v5757 = vld [vmem:[#allocation3 + $0x10] sm:$0xff]
    %v5758 = vld [vmem:[#allocation3 + $0x18] sm:$0xff]
    %v5759 = vld [vmem:[#allocation3 + $0x20] sm:$0xff]
    %v5760 = vld [vmem:[#allocation3 + $0x28] sm:$0xff]
    %v5761 = vld [vmem:[#allocation3 + $0x30] sm:$0xff]
    %v5762 = vld [vmem:[#allocation3 + $0x38] sm:$0xff]
    %v5763 = vld [vmem:[#allocation10] sm:$0xff]
    %v5764 = vld [vmem:[#allocation10 + $0x8] sm:$0xff]
    %v5765 = vld [vmem:[#allocation10 + $0x10] sm:$0xff]
    %v5766 = vld [vmem:[#allocation10 + $0x18] sm:$0xff]
    %v5767 = vld [vmem:[#allocation10 + $0x20] sm:$0xff]
    %v5768 = vld [vmem:[#allocation10 + $0x28] sm:$0xff]
    %v5769 = vld [vmem:[#allocation10 + $0x30] sm:$0xff]
    %v5770 = vld [vmem:[#allocation10 + $0x38] sm:$0xff]
    %v5771 = vld [vmem:[#allocation10 + $0x40] sm:$0xff]
    %v5772 = vld [vmem:[#allocation10 + $0x48] sm:$0xff]
    %v5773 = vld [vmem:[#allocation10 + $0x50] sm:$0xff]
    %v5774 = vld [vmem:[#allocation10 + $0x58] sm:$0xff]
    %v5775 = vld [vmem:[#allocation10 + $0x60] sm:$0xff]
    %v5776 = vld [vmem:[#allocation10 + $0x68] sm:$0xff]
    %v5777 = vld [vmem:[#allocation10 + $0x70] sm:$0xff]
    %v5778 = vld [vmem:[#allocation10 + $0x78] sm:$0xff]
    %v5779 = vld [vmem:[#allocation10 + $0x80] sm:$0xff]
    %v5780 = vld [vmem:[#allocation10 + $0x88] sm:$0xff]
    %v5781 = vld [vmem:[#allocation10 + $0x90] sm:$0xff]
    %v5782 = vld [vmem:[#allocation10 + $0x98] sm:$0xff]
    %v5783 = vld [vmem:[#allocation10 + $0xa0] sm:$0xff]
    %v5784 = vld [vmem:[#allocation10 + $0xa8] sm:$0xff]
    %v5785 = vld [vmem:[#allocation10 + $0xb0] sm:$0xff]
    %v5786 = vld [vmem:[#allocation10 + $0xb8] sm:$0xff]
    %v5787 = vld [vmem:[#allocation10 + $0xc0] sm:$0xff]
    %v5788 = vld [vmem:[#allocation10 + $0xc8] sm:$0xff]
    %v5789 = vld [vmem:[#allocation10 + $0xd0] sm:$0xff]
    %v5790 = vld [vmem:[#allocation10 + $0xd8] sm:$0xff]
    %v5791 = vld [vmem:[#allocation10 + $0xe0] sm:$0xff]
    %v5792 = vld [vmem:[#allocation10 + $0xe8] sm:$0xff]
    %v5793 = vld [vmem:[#allocation10 + $0xf0] sm:$0xff]
    %v5794 = vld [vmem:[#allocation10 + $0xf8] sm:$0xff]
    %v5795 = vld [vmem:[#allocation10 + $0x100] sm:$0xff]
    %v5796 = vld [vmem:[#allocation10 + $0x108] sm:$0xff]
    %v5797 = vld [vmem:[#allocation10 + $0x110] sm:$0xff]
    %v5798 = vld [vmem:[#allocation10 + $0x118] sm:$0xff]
    %v5799 = vld [vmem:[#allocation10 + $0x120] sm:$0xff]
    %v5800 = vld [vmem:[#allocation10 + $0x128] sm:$0xff]
    %v5801 = vld [vmem:[#allocation10 + $0x130] sm:$0xff]
    %v5802 = vld [vmem:[#allocation10 + $0x138] sm:$0xff]
    %v5803 = vld [vmem:[#allocation10 + $0x140] sm:$0xff]
    %v5804 = vld [vmem:[#allocation10 + $0x148] sm:$0xff]
    %v5805 = vld [vmem:[#allocation10 + $0x150] sm:$0xff]
    %v5806 = vld [vmem:[#allocation10 + $0x158] sm:$0xff]
    %v5807 = vld [vmem:[#allocation10 + $0x160] sm:$0xff]
    %v5808 = vld [vmem:[#allocation10 + $0x168] sm:$0xff]
    %v5809 = vld [vmem:[#allocation10 + $0x170] sm:$0xff]
    %v5810 = vld [vmem:[#allocation10 + $0x178] sm:$0xff]
    %v5811 = vld [vmem:[#allocation10 + $0x180] sm:$0xff]
    %v5812 = vld [vmem:[#allocation10 + $0x188] sm:$0xff]
    %v5813 = vld [vmem:[#allocation10 + $0x190] sm:$0xff]
    %v5814 = vld [vmem:[#allocation10 + $0x198] sm:$0xff]
    %v5815 = vld [vmem:[#allocation10 + $0x1a0] sm:$0xff]
    %v5816 = vld [vmem:[#allocation10 + $0x1a8] sm:$0xff]
    %v5817 = vld [vmem:[#allocation10 + $0x1b0] sm:$0xff]
    %v5818 = vld [vmem:[#allocation10 + $0x1b8] sm:$0xff]
    %v5819 = vld [vmem:[#allocation10 + $0x1c0] sm:$0xff]
    %v5820 = vld [vmem:[#allocation10 + $0x1c8] sm:$0xff]
    %v5821 = vld [vmem:[#allocation10 + $0x1d0] sm:$0xff]
    %v5822 = vld [vmem:[#allocation10 + $0x1d8] sm:$0xff]
    %v5823 = vld [vmem:[#allocation10 + $0x1e0] sm:$0xff]
    %v5824 = vld [vmem:[#allocation10 + $0x1e8] sm:$0xff]
    %v5825 = vld [vmem:[#allocation10 + $0x1f0] sm:$0xff]
    %v5826 = vld [vmem:[#allocation10 + $0x1f8] sm:$0xff]
    %v5827 = vld [vmem:[#allocation10 + $0x200] sm:$0xff]
    %v5828 = vld [vmem:[#allocation10 + $0x208] sm:$0xff]
    %v5829 = vld [vmem:[#allocation10 + $0x210] sm:$0xff]
    %v5830 = vld [vmem:[#allocation10 + $0x218] sm:$0xff]
    %v5831 = vld [vmem:[#allocation10 + $0x220] sm:$0xff]
    %v5832 = vld [vmem:[#allocation10 + $0x228] sm:$0xff]
    %v5833 = vld [vmem:[#allocation10 + $0x230] sm:$0xff]
    %v5834 = vld [vmem:[#allocation10 + $0x238] sm:$0xff]
    %v5835 = vld [vmem:[#allocation10 + $0x240] sm:$0xff]
    %v5836 = vld [vmem:[#allocation10 + $0x248] sm:$0xff]
    %v5837 = vld [vmem:[#allocation10 + $0x250] sm:$0xff]
    %v5838 = vld [vmem:[#allocation10 + $0x258] sm:$0xff]
    %v5839 = vld [vmem:[#allocation10 + $0x260] sm:$0xff]
    %v5840 = vld [vmem:[#allocation10 + $0x268] sm:$0xff]
    %v5841 = vld [vmem:[#allocation10 + $0x270] sm:$0xff]
    %v5842 = vld [vmem:[#allocation10 + $0x278] sm:$0xff]
    %v5843 = vld [vmem:[#allocation10 + $0x280] sm:$0xff]
    %v5844 = vld [vmem:[#allocation10 + $0x288] sm:$0xff]
    %v5845 = vld [vmem:[#allocation10 + $0x290] sm:$0xff]
    %v5846 = vld [vmem:[#allocation10 + $0x298] sm:$0xff]
    %v5847 = vld [vmem:[#allocation10 + $0x2a0] sm:$0xff]
    %v5848 = vld [vmem:[#allocation10 + $0x2a8] sm:$0xff]
    %v5849 = vld [vmem:[#allocation10 + $0x2b0] sm:$0xff]
    %v5850 = vld [vmem:[#allocation10 + $0x2b8] sm:$0xff]
    %v5851 = vld [vmem:[#allocation10 + $0x2c0] sm:$0xff]
    %v5852 = vld [vmem:[#allocation10 + $0x2c8] sm:$0xff]
    %v5853 = vld [vmem:[#allocation10 + $0x2d0] sm:$0xff]
    %v5854 = vld [vmem:[#allocation10 + $0x2d8] sm:$0xff]
    %v5855 = vld [vmem:[#allocation10 + $0x2e0] sm:$0xff]
    %v5856 = vld [vmem:[#allocation10 + $0x2e8] sm:$0xff]
    %v5857 = vld [vmem:[#allocation10 + $0x2f0] sm:$0xff]
    %v5858 = vld [vmem:[#allocation10 + $0x2f8] sm:$0xff]
    %v5859 = vld [vmem:[#allocation10 + $0x300] sm:$0xff]
    %v5860 = vld [vmem:[#allocation10 + $0x308] sm:$0xff]
    %v5861 = vld [vmem:[#allocation10 + $0x310] sm:$0xff]
    %v5862 = vld [vmem:[#allocation10 + $0x318] sm:$0xff]
    %v5863 = vld [vmem:[#allocation10 + $0x320] sm:$0xff]
    %v5864 = vld [vmem:[#allocation10 + $0x328] sm:$0xff]
    %v5865 = vld [vmem:[#allocation10 + $0x330] sm:$0xff]
    %v5866 = vld [vmem:[#allocation10 + $0x338] sm:$0xff]
    %v5867 = vld [vmem:[#allocation10 + $0x340] sm:$0xff]
    %v5868 = vld [vmem:[#allocation10 + $0x348] sm:$0xff]
    %v5869 = vld [vmem:[#allocation10 + $0x350] sm:$0xff]
    %v5870 = vld [vmem:[#allocation10 + $0x358] sm:$0xff]
    %v5871 = vld [vmem:[#allocation10 + $0x360] sm:$0xff]
    %v5872 = vld [vmem:[#allocation10 + $0x368] sm:$0xff]
    %v5873 = vld [vmem:[#allocation10 + $0x370] sm:$0xff]
    %v5874 = vld [vmem:[#allocation10 + $0x378] sm:$0xff]
    %v5875 = vld [vmem:[#allocation10 + $0x380] sm:$0xff]
    %v5876 = vld [vmem:[#allocation10 + $0x388] sm:$0xff]
    %v5877 = vld [vmem:[#allocation10 + $0x390] sm:$0xff]
    %v5878 = vld [vmem:[#allocation10 + $0x398] sm:$0xff]
    %v5879 = vld [vmem:[#allocation10 + $0x3a0] sm:$0xff]
    %v5880 = vld [vmem:[#allocation10 + $0x3a8] sm:$0xff]
    %v5881 = vld [vmem:[#allocation10 + $0x3b0] sm:$0xff]
    %v5882 = vld [vmem:[#allocation10 + $0x3b8] sm:$0xff]
    %v5883 = vld [vmem:[#allocation10 + $0x3c0] sm:$0xff]
    %v5884 = vld [vmem:[#allocation10 + $0x3c8] sm:$0xff]
    %v5885 = vld [vmem:[#allocation10 + $0x3d0] sm:$0xff]
    %v5886 = vld [vmem:[#allocation10 + $0x3d8] sm:$0xff]
    %v5887 = vld [vmem:[#allocation10 + $0x3e0] sm:$0xff]
    %v5888 = vld [vmem:[#allocation10 + $0x3e8] sm:$0xff]
    %v5889 = vld [vmem:[#allocation10 + $0x3f0] sm:$0xff]
    %v5890 = vld [vmem:[#allocation10 + $0x3f8] sm:$0xff]
    %v5891 = vld [vmem:[#allocation10 + $0x400] sm:$0xff]
    %v5892 = vld [vmem:[#allocation10 + $0x408] sm:$0xff]
    %v5893 = vld [vmem:[#allocation10 + $0x410] sm:$0xff]
    %v5894 = vld [vmem:[#allocation10 + $0x418] sm:$0xff]
    %v5895 = vld [vmem:[#allocation10 + $0x420] sm:$0xff]
    %v5896 = vld [vmem:[#allocation10 + $0x428] sm:$0xff]
    %v5897 = vld [vmem:[#allocation10 + $0x430] sm:$0xff]
    %v5898 = vld [vmem:[#allocation10 + $0x438] sm:$0xff]
    %v5899 = vld [vmem:[#allocation10 + $0x440] sm:$0xff]
    %v5900 = vld [vmem:[#allocation10 + $0x448] sm:$0xff]
    %v5901 = vld [vmem:[#allocation10 + $0x450] sm:$0xff]
    %v5902 = vld [vmem:[#allocation10 + $0x458] sm:$0xff]
    %v5903 = vld [vmem:[#allocation10 + $0x460] sm:$0xff]
    %v5904 = vld [vmem:[#allocation10 + $0x468] sm:$0xff]
    %v5905 = vld [vmem:[#allocation10 + $0x470] sm:$0xff]
    %v5906 = vld [vmem:[#allocation10 + $0x478] sm:$0xff]
    %v5907 = vld [vmem:[#allocation10 + $0x480] sm:$0xff]
    %v5908 = vld [vmem:[#allocation10 + $0x488] sm:$0xff]
    %v5909 = vld [vmem:[#allocation10 + $0x490] sm:$0xff]
    %v5910 = vld [vmem:[#allocation10 + $0x498] sm:$0xff]
    %v5911 = vld [vmem:[#allocation10 + $0x4a0] sm:$0xff]
    %v5912 = vld [vmem:[#allocation10 + $0x4a8] sm:$0xff]
    %v5913 = vld [vmem:[#allocation10 + $0x4b0] sm:$0xff]
    %v5914 = vld [vmem:[#allocation10 + $0x4b8] sm:$0xff]
    %v5915 = vld [vmem:[#allocation10 + $0x4c0] sm:$0xff]
    %v5916 = vld [vmem:[#allocation10 + $0x4c8] sm:$0xff]
    %v5917 = vld [vmem:[#allocation10 + $0x4d0] sm:$0xff]
    %v5918 = vld [vmem:[#allocation10 + $0x4d8] sm:$0xff]
    %v5919 = vld [vmem:[#allocation10 + $0x4e0] sm:$0xff]
    %v5920 = vld [vmem:[#allocation10 + $0x4e8] sm:$0xff]
    %v5921 = vld [vmem:[#allocation10 + $0x4f0] sm:$0xff]
    %v5922 = vld [vmem:[#allocation10 + $0x4f8] sm:$0xff]
    %v5923 = vld [vmem:[#allocation10 + $0x500] sm:$0xff]
    %v5924 = vld [vmem:[#allocation10 + $0x508] sm:$0xff]
    %v5925 = vld [vmem:[#allocation10 + $0x510] sm:$0xff]
    %v5926 = vld [vmem:[#allocation10 + $0x518] sm:$0xff]
    %v5927 = vld [vmem:[#allocation10 + $0x520] sm:$0xff]
    %v5928 = vld [vmem:[#allocation10 + $0x528] sm:$0xff]
    %v5929 = vld [vmem:[#allocation10 + $0x530] sm:$0xff]
    %v5930 = vld [vmem:[#allocation10 + $0x538] sm:$0xff]
    %v5931 = vld [vmem:[#allocation10 + $0x540] sm:$0xff]
    %v5932 = vld [vmem:[#allocation10 + $0x548] sm:$0xff]
    %v5933 = vld [vmem:[#allocation10 + $0x550] sm:$0xff]
    %v5934 = vld [vmem:[#allocation10 + $0x558] sm:$0xff]
    %v5935 = vld [vmem:[#allocation10 + $0x560] sm:$0xff]
    %v5936 = vld [vmem:[#allocation10 + $0x568] sm:$0xff]
    %v5937 = vld [vmem:[#allocation10 + $0x570] sm:$0xff]
    %v5938 = vld [vmem:[#allocation10 + $0x578] sm:$0xff]
    %v5939 = vld [vmem:[#allocation10 + $0x580] sm:$0xff]
    %v5940 = vld [vmem:[#allocation10 + $0x588] sm:$0xff]
    %v5941 = vld [vmem:[#allocation10 + $0x590] sm:$0xff]
    %v5942 = vld [vmem:[#allocation10 + $0x598] sm:$0xff]
    %v5943 = vld [vmem:[#allocation10 + $0x5a0] sm:$0xff]
    %v5944 = vld [vmem:[#allocation10 + $0x5a8] sm:$0xff]
    %v5945 = vld [vmem:[#allocation10 + $0x5b0] sm:$0xff]
    %v5946 = vld [vmem:[#allocation10 + $0x5b8] sm:$0xff]
    %v5947 = vld [vmem:[#allocation10 + $0x5c0] sm:$0xff]
    %v5948 = vld [vmem:[#allocation10 + $0x5c8] sm:$0xff]
    %v5949 = vld [vmem:[#allocation10 + $0x5d0] sm:$0xff]
    %v5950 = vld [vmem:[#allocation10 + $0x5d8] sm:$0xff]
    %v5951 = vld [vmem:[#allocation10 + $0x5e0] sm:$0xff]
    %v5952 = vld [vmem:[#allocation10 + $0x5e8] sm:$0xff]
    %v5953 = vld [vmem:[#allocation10 + $0x5f0] sm:$0xff]
    %v5954 = vld [vmem:[#allocation10 + $0x5f8] sm:$0xff]
    %v5955 = vld [vmem:[#allocation9] sm:$0xff]
    %v5956 = vld [vmem:[#allocation9 + $0x8] sm:$0xff]
    %v5957 = vld [vmem:[#allocation9 + $0x10] sm:$0xff]
    %v5958 = vld [vmem:[#allocation9 + $0x18] sm:$0xff]
    %v5959 = vld [vmem:[#allocation9 + $0x20] sm:$0xff]
    %v5960 = vld [vmem:[#allocation9 + $0x28] sm:$0xff]
    %5961 = vmatprep.subr.mxu0 %v5764
    %5962 = vmatpush1.msra.mxu0 %v5763
    %5963 = vmatprep.subr.mxu0 %v5767
    %5964 = vmatpush1.msra.mxu0 %v5766
    %5965 = vmatprep.subr.mxu0 %v5770
    %5966 = vmatpush1.msra.mxu0 %v5769
    %5967 = vmatprep.subr.mxu0 %v5773
    %5968 = vmatpush1.msra.mxu0 %v5772
    %5969 = vmatprep.subr.mxu0 %v5776
    %5970 = vmatpush1.msra.mxu0 %v5775
    %5971 = vmatprep.subr.mxu0 %v5779
    %5972 = vmatpush1.msra.mxu0 %v5778
    %5973 = vmatprep.subr.mxu0 %v5782
    %5974 = vmatpush1.msra.mxu0 %v5781
    %5975 = vmatprep.subr.mxu0 %v5785
    %5976 = vmatpush1.msra.mxu0 %v5784
    %5977 = vmatprep.subr.mxu0 %v5788
    %5978 = vmatpush1.msra.mxu0 %v5787
    %5979 = vmatprep.subr.mxu0 %v5791
    %5980 = vmatpush1.msra.mxu0 %v5790
    %5981 = vmatprep.subr.mxu0 %v5794
    %5982 = vmatpush1.msra.mxu0 %v5793
    %5983 = vmatprep.subr.mxu0 %v5797
    %5984 = vmatpush1.msra.mxu0 %v5796
    %5985 = vmatprep.subr.mxu0 %v5800
    %5986 = vmatpush1.msra.mxu0 %v5799
    %5987 = vmatprep.subr.mxu0 %v5803
    %5988 = vmatpush1.msra.mxu0 %v5802
    %5989 = vmatprep.subr.mxu0 %v5806
    %5990 = vmatpush1.msra.mxu0 %v5805
    %5991 = vmatprep.subr.mxu0 %v5809
    %5992 = vmatpush1.msra.mxu0 %v5808
    %5993 = vmatprep.subr.mxu0 %v5812
    %5994 = vmatpush1.msra.mxu0 %v5811
    %5995 = vmatprep.subr.mxu0 %v5815
    %5996 = vmatpush1.msra.mxu0 %v5814
    %5997 = vmatprep.subr.mxu0 %v5818
    %5998 = vmatpush1.msra.mxu0 %v5817
    %5999 = vmatprep.subr.mxu0 %v5821
    %6000 = vmatpush1.msra.mxu0 %v5820
    %6001 = vmatprep.subr.mxu0 %v5824
    %6002 = vmatpush1.msra.mxu0 %v5823
    %6003 = vmatprep.subr.mxu0 %v5827
    %6004 = vmatpush1.msra.mxu0 %v5826
    %6005 = vmatprep.subr.mxu0 %v5830
    %6006 = vmatpush1.msra.mxu0 %v5829
    %6007 = vmatprep.subr.mxu0 %v5833
    %6008 = vmatpush1.msra.mxu0 %v5832
    %6009 = vmatprep.subr.mxu0 %v5836
    %6010 = vmatpush1.msra.mxu0 %v5835
    %6011 = vmatprep.subr.mxu0 %v5839
    %6012 = vmatpush1.msra.mxu0 %v5838
    %6013 = vmatprep.subr.mxu0 %v5842
    %6014 = vmatpush1.msra.mxu0 %v5841
    %6015 = vmatprep.subr.mxu0 %v5845
    %6016 = vmatpush1.msra.mxu0 %v5844
    %6017 = vmatprep.subr.mxu0 %v5848
    %6018 = vmatpush1.msra.mxu0 %v5847
    %6019 = vmatprep.subr.mxu0 %v5851
    %6020 = vmatpush1.msra.mxu0 %v5850
    %6021 = vmatprep.subr.mxu0 %v5854
    %6022 = vmatpush1.msra.mxu0 %v5853
    %6023 = vmatprep.subr.mxu0 %v5857
    %6024 = vmatpush1.msra.mxu0 %v5856
    %6025 = vmatprep.mubr.f32.mxu0 %v5756
    %6026 = vmatmul.mubr.f32.gmra.mrb[0].mxu0 %v5755
    %v6027 = vpop.f32.mrb[0].mxu0
    %v6028 = vadd.f32 %v5955, %v6027
    %v6029 = vpop.f32.mrb[0].mxu0
    %v6030 = vadd.f32 %v5956, %v6029
    %6031 = vmatprep.mubr.f32.mxu0 %v5760
    %6032 = vmatmul.mubr.f32.gmra.mrb[0].mxu0 %v5759
    %v6033 = vpop.f32.mrb[0].mxu0
    %v6034 = vadd.f32 %v5958, %v6033
    %v6035 = vpop.f32.mrb[0].mxu0
    %v6036 = vadd.f32 %v5959, %v6035
    %6037 = vdwg.mxu0
    %6038 = vmatprep.subr.mxu0 %v5860
    %6039 = vmatpush1.msra.mxu0 %v5859
    %6040 = vmatprep.subr.mxu0 %v5863
    %6041 = vmatpush1.msra.mxu0 %v5862
    %6042 = vmatprep.subr.mxu0 %v5866
    %6043 = vmatpush1.msra.mxu0 %v5865
    %6044 = vmatprep.subr.mxu0 %v5869
    %6045 = vmatpush1.msra.mxu0 %v5868
    %6046 = vmatprep.subr.mxu0 %v5872
    %6047 = vmatpush1.msra.mxu0 %v5871
    %6048 = vmatprep.subr.mxu0 %v5875
    %6049 = vmatpush1.msra.mxu0 %v5874
    %6050 = vmatprep.subr.mxu0 %v5878
    %6051 = vmatpush1.msra.mxu0 %v5877
    %6052 = vmatprep.subr.mxu0 %v5881
    %6053 = vmatpush1.msra.mxu0 %v5880
    %6054 = vmatprep.subr.mxu0 %v5884
    %6055 = vmatpush1.msra.mxu0 %v5883
    %6056 = vmatprep.subr.mxu0 %v5887
    %6057 = vmatpush1.msra.mxu0 %v5886
    %6058 = vmatprep.subr.mxu0 %v5890
    %6059 = vmatpush1.msra.mxu0 %v5889
    %6060 = vmatprep.subr.mxu0 %v5893
    %6061 = vmatpush1.msra.mxu0 %v5892
    %6062 = vmatprep.subr.mxu0 %v5896
    %6063 = vmatpush1.msra.mxu0 %v5895
    %6064 = vmatprep.subr.mxu0 %v5899
    %6065 = vmatpush1.msra.mxu0 %v5898
    %6066 = vmatprep.subr.mxu0 %v5902
    %6067 = vmatpush1.msra.mxu0 %v5901
    %6068 = vmatprep.subr.mxu0 %v5905
    %6069 = vmatpush1.msra.mxu0 %v5904
    %6070 = vmatprep.subr.mxu0 %v5908
    %6071 = vmatpush1.msra.mxu0 %v5907
    %6072 = vmatprep.subr.mxu0 %v5911
    %6073 = vmatpush1.msra.mxu0 %v5910
    %6074 = vmatprep.subr.mxu0 %v5914
    %6075 = vmatpush1.msra.mxu0 %v5913
    %6076 = vmatprep.subr.mxu0 %v5917
    %6077 = vmatpush1.msra.mxu0 %v5916
    %6078 = vmatprep.subr.mxu0 %v5920
    %6079 = vmatpush1.msra.mxu0 %v5919
    %6080 = vmatprep.subr.mxu0 %v5923
    %6081 = vmatpush1.msra.mxu0 %v5922
    %6082 = vmatprep.subr.mxu0 %v5926
    %6083 = vmatpush1.msra.mxu0 %v5925
    %6084 = vmatprep.subr.mxu0 %v5929
    %6085 = vmatpush1.msra.mxu0 %v5928
    %6086 = vmatprep.subr.mxu0 %v5932
    %6087 = vmatpush1.msra.mxu0 %v5931
    %6088 = vmatprep.subr.mxu0 %v5935
    %6089 = vmatpush1.msra.mxu0 %v5934
    %6090 = vmatprep.subr.mxu0 %v5938
    %6091 = vmatpush1.msra.mxu0 %v5937
    %6092 = vmatprep.subr.mxu0 %v5941
    %6093 = vmatpush1.msra.mxu0 %v5940
    %6094 = vmatprep.subr.mxu0 %v5944
    %6095 = vmatpush1.msra.mxu0 %v5943
    %6096 = vmatprep.subr.mxu0 %v5947
    %6097 = vmatpush1.msra.mxu0 %v5946
    %6098 = vmatprep.subr.mxu0 %v5950
    %6099 = vmatpush1.msra.mxu0 %v5949
    %6100 = vmatprep.subr.mxu0 %v5953
    %6101 = vmatpush1.msra.mxu0 %v5952
    %6102 = vmatprep.mubr.f32.mxu0 %v5758
    %6103 = vmatmul.mubr.f32.gmra.mrb[0].mxu0 %v5757
    %v6104 = vpop.f32.mrb[0].mxu0
    %v6105 = vadd.f32 %v6028, %v6104
    %v6106 = vpop.f32.mrb[0].mxu0
    %v6107 = vadd.f32 %v6030, %v6106
    %6108 = vmatprep.mubr.f32.mxu0 %v5762
    %6109 = vmatmul.mubr.f32.gmra.mrb[0].mxu0 %v5761
    %v6110 = vpop.f32.mrb[0].mxu0
    %v6111 = vadd.f32 %v6034, %v6110
    %v6112 = vpop.f32.mrb[0].mxu0
    %v6113 = vadd.f32 %v6036, %v6112
    %6114 = vdwg.mxu0
    %6115 = vmatprep.subr.mxu0 0.0
    %6116 = vmatpush1.msra.mxu0 %v5765
    %6117 = vmatprep.subr.mxu0 0.0
    %6118 = vmatpush1.msra.mxu0 %v5768
    %6119 = vmatprep.subr.mxu0 0.0
    %6120 = vmatpush1.msra.mxu0 %v5771
    %6121 = vmatprep.subr.mxu0 0.0
    %6122 = vmatpush1.msra.mxu0 %v5774
    %6123 = vmatprep.subr.mxu0 0.0
    %6124 = vmatpush1.msra.mxu0 %v5777
    %6125 = vmatprep.subr.mxu0 0.0
    %6126 = vmatpush1.msra.mxu0 %v5780
    %6127 = vmatprep.subr.mxu0 0.0
    %6128 = vmatpush1.msra.mxu0 %v5783
    %6129 = vmatprep.subr.mxu0 0.0
    %6130 = vmatpush1.msra.mxu0 %v5786
    %6131 = vmatprep.subr.mxu0 0.0
    %6132 = vmatpush1.msra.mxu0 %v5789
    %6133 = vmatprep.subr.mxu0 0.0
    %6134 = vmatpush1.msra.mxu0 %v5792
    %6135 = vmatprep.subr.mxu0 0.0
    %6136 = vmatpush1.msra.mxu0 %v5795
    %6137 = vmatprep.subr.mxu0 0.0
    %6138 = vmatpush1.msra.mxu0 %v5798
    %6139 = vmatprep.subr.mxu0 0.0
    %6140 = vmatpush1.msra.mxu0 %v5801
    %6141 = vmatprep.subr.mxu0 0.0
    %6142 = vmatpush1.msra.mxu0 %v5804
    %6143 = vmatprep.subr.mxu0 0.0
    %6144 = vmatpush1.msra.mxu0 %v5807
    %6145 = vmatprep.subr.mxu0 0.0
    %6146 = vmatpush1.msra.mxu0 %v5810
    %6147 = vmatprep.subr.mxu0 0.0
    %6148 = vmatpush1.msra.mxu0 %v5813
    %6149 = vmatprep.subr.mxu0 0.0
    %6150 = vmatpush1.msra.mxu0 %v5816
    %6151 = vmatprep.subr.mxu0 0.0
    %6152 = vmatpush1.msra.mxu0 %v5819
    %6153 = vmatprep.subr.mxu0 0.0
    %6154 = vmatpush1.msra.mxu0 %v5822
    %6155 = vmatprep.subr.mxu0 0.0
    %6156 = vmatpush1.msra.mxu0 %v5825
    %6157 = vmatprep.subr.mxu0 0.0
    %6158 = vmatpush1.msra.mxu0 %v5828
    %6159 = vmatprep.subr.mxu0 0.0
    %6160 = vmatpush1.msra.mxu0 %v5831
    %6161 = vmatprep.subr.mxu0 0.0
    %6162 = vmatpush1.msra.mxu0 %v5834
    %6163 = vmatprep.subr.mxu0 0.0
    %6164 = vmatpush1.msra.mxu0 %v5837
    %6165 = vmatprep.subr.mxu0 0.0
    %6166 = vmatpush1.msra.mxu0 %v5840
    %6167 = vmatprep.subr.mxu0 0.0
    %6168 = vmatpush1.msra.mxu0 %v5843
    %6169 = vmatprep.subr.mxu0 0.0
    %6170 = vmatpush1.msra.mxu0 %v5846
    %6171 = vmatprep.subr.mxu0 0.0
    %6172 = vmatpush1.msra.mxu0 %v5849
    %6173 = vmatprep.subr.mxu0 0.0
    %6174 = vmatpush1.msra.mxu0 %v5852
    %6175 = vmatprep.subr.mxu0 0.0
    %6176 = vmatpush1.msra.mxu0 %v5855
    %6177 = vmatprep.subr.mxu0 0.0
    %6178 = vmatpush1.msra.mxu0 %v5858
    %6179 = vmatprep.mubr.f32.mxu0 %v5756
    %6180 = vmatmul.mubr.f32.gmra.mrb[0].mxu0 %v5755
    %v6181 = vpop.f32.mrb[0].mxu0
    %v6182 = vadd.f32 %v5957, %v6181
    %v6183 = vpop.f32.mrb[0].mxu0
    %6184 = vmatprep.mubr.f32.mxu0 %v5760
    %6185 = vmatmul.mubr.f32.gmra.mrb[0].mxu0 %v5759
    %v6186 = vpop.f32.mrb[0].mxu0
    %v6187 = vadd.f32 %v5960, %v6186
    %v6188 = vpop.f32.mrb[0].mxu0
    %6189 = vdwg.mxu0
    %6190 = vmatprep.subr.mxu0 0.0
    %6191 = vmatpush1.msra.mxu0 %v5861
    %6192 = vmatprep.subr.mxu0 0.0
    %6193 = vmatpush1.msra.mxu0 %v5864
    %6194 = vmatprep.subr.mxu0 0.0
    %6195 = vmatpush1.msra.mxu0 %v5867
    %6196 = vmatprep.subr.mxu0 0.0
    %6197 = vmatpush1.msra.mxu0 %v5870
    %6198 = vmatprep.subr.mxu0 0.0
    %6199 = vmatpush1.msra.mxu0 %v5873
    %6200 = vmatprep.subr.mxu0 0.0
    %6201 = vmatpush1.msra.mxu0 %v5876
    %6202 = vmatprep.subr.mxu0 0.0
    %6203 = vmatpush1.msra.mxu0 %v5879
    %6204 = vmatprep.subr.mxu0 0.0
    %6205 = vmatpush1.msra.mxu0 %v5882
    %6206 = vmatprep.subr.mxu0 0.0
    %6207 = vmatpush1.msra.mxu0 %v5885
    %6208 = vmatprep.subr.mxu0 0.0
    %6209 = vmatpush1.msra.mxu0 %v5888
    %6210 = vmatprep.subr.mxu0 0.0
    %6211 = vmatpush1.msra.mxu0 %v5891
    %6212 = vmatprep.subr.mxu0 0.0
    %6213 = vmatpush1.msra.mxu0 %v5894
    %6214 = vmatprep.subr.mxu0 0.0
    %6215 = vmatpush1.msra.mxu0 %v5897
    %6216 = vmatprep.subr.mxu0 0.0
    %6217 = vmatpush1.msra.mxu0 %v5900
    %6218 = vmatprep.subr.mxu0 0.0
    %6219 = vmatpush1.msra.mxu0 %v5903
    %6220 = vmatprep.subr.mxu0 0.0
    %6221 = vmatpush1.msra.mxu0 %v5906
    %6222 = vmatprep.subr.mxu0 0.0
    %6223 = vmatpush1.msra.mxu0 %v5909
    %6224 = vmatprep.subr.mxu0 0.0
    %6225 = vmatpush1.msra.mxu0 %v5912
    %6226 = vmatprep.subr.mxu0 0.0
    %6227 = vmatpush1.msra.mxu0 %v5915
    %6228 = vmatprep.subr.mxu0 0.0
    %6229 = vmatpush1.msra.mxu0 %v5918
    %6230 = vmatprep.subr.mxu0 0.0
    %6231 = vmatpush1.msra.mxu0 %v5921
    %6232 = vmatprep.subr.mxu0 0.0
    %6233 = vmatpush1.msra.mxu0 %v5924
    %6234 = vmatprep.subr.mxu0 0.0
    %6235 = vmatpush1.msra.mxu0 %v5927
    %6236 = vmatprep.subr.mxu0 0.0
    %6237 = vmatpush1.msra.mxu0 %v5930
    %6238 = vmatprep.subr.mxu0 0.0
    %6239 = vmatpush1.msra.mxu0 %v5933
    %6240 = vmatprep.subr.mxu0 0.0
    %6241 = vmatpush1.msra.mxu0 %v5936
    %6242 = vmatprep.subr.mxu0 0.0
    %6243 = vmatpush1.msra.mxu0 %v5939
    %6244 = vmatprep.subr.mxu0 0.0
    %6245 = vmatpush1.msra.mxu0 %v5942
    %6246 = vmatprep.subr.mxu0 0.0
    %6247 = vmatpush1.msra.mxu0 %v5945
    %6248 = vmatprep.subr.mxu0 0.0
    %6249 = vmatpush1.msra.mxu0 %v5948
    %6250 = vmatprep.subr.mxu0 0.0
    %6251 = vmatpush1.msra.mxu0 %v5951
    %6252 = vmatprep.subr.mxu0 0.0
    %6253 = vmatpush1.msra.mxu0 %v5954
    %6254 = vmatprep.mubr.f32.mxu0 %v5758
    %6255 = vmatmul.mubr.f32.gmra.mrb[0].mxu0 %v5757
    %v6256 = vpop.f32.mrb[0].mxu0
    %v6257 = vadd.f32 %v6182, %v6256
    %v6258 = vpop.f32.mrb[0].mxu0
    %6259 = vmatprep.mubr.f32.mxu0 %v5762
    %6260 = vmatmul.mubr.f32.gmra.mrb[0].mxu0 %v5761
    %v6261 = vpop.f32.mrb[0].mxu0
    %v6262 = vadd.f32 %v6187, %v6261
    %v6263 = vpop.f32.mrb[0].mxu0
    %6264 = vdwg.mxu0
    %v6265 = vxor.u32 %v6105, 2147483648
    %v6266 = vxor.u32 %v6111, 2147483648
    %v6267 = vmul.f32 %v6265, 1.442695
    %v6268 = vpow.pop %v6267
    %v6269 = vmul.f32 %v6266, 1.442695
    %v6270 = vpow.pop %v6269
    %v6271 = vadd.f32 %v6268, 1.0
    %v6272 = vadd.f32 %v6270, 1.0
    %v6273 = vrcp.pop %v6271
    %v6274 = vmul.f32 1.0, %v6273
    %v6275 = vrcp.pop %v6272
    %v6276 = vmul.f32 1.0, %v6275
    %v6277 = vxor.u32 %v6107, 2147483648
    %v6278 = vxor.u32 %v6113, 2147483648
    %v6279 = vmul.f32 %v6277, 1.442695
    %v6280 = vpow.pop %v6279
    %v6281 = vmul.f32 %v6278, 1.442695
    %v6282 = vpow.pop %v6281
    %v6283 = vadd.f32 %v6280, 1.0
    %v6284 = vadd.f32 %v6282, 1.0
    %v6285 = vrcp.pop %v6283
    %v6286 = vmul.f32 1.0, %v6285
    %v6287 = vrcp.pop %v6284
    %v6288 = vmul.f32 1.0, %v6287
    %v6289 = vmul.f32 %v6286, %v5496
    %v6290 = vmul.f32 %v6288, %v5497
    %v6291 = vld [vmem:[#allocation12] sm:$0xff]
    %v6292 = vld [vmem:[#allocation12 + $0x8] sm:$0xff]
    %v6293 = vld [vmem:[#allocation12 + $0x10] sm:$0xff]
    %v6294 = vld [vmem:[#allocation12 + $0x18] sm:$0xff]
    %v6295 = vld [vmem:[#allocation12 + $0x20] sm:$0xff]
    %v6296 = vld [vmem:[#allocation12 + $0x28] sm:$0xff]
    %v6297 = vld [vmem:[#allocation12 + $0x30] sm:$0xff]
    %v6298 = vld [vmem:[#allocation12 + $0x38] sm:$0xff]
    %v6299 = vld [vmem:[#allocation12 + $0x40] sm:$0xff]
    %v6300 = vld [vmem:[#allocation12 + $0x48] sm:$0xff]
    %v6301 = vld [vmem:[#allocation12 + $0x50] sm:$0xff]
    %v6302 = vld [vmem:[#allocation12 + $0x58] sm:$0xff]
    %v6303 = vld [vmem:[#allocation12 + $0x60] sm:$0xff]
    %v6304 = vld [vmem:[#allocation12 + $0x68] sm:$0xff]
    %v6305 = vld [vmem:[#allocation12 + $0x70] sm:$0xff]
    %v6306 = vld [vmem:[#allocation12 + $0x78] sm:$0xff]
    %6307 = vmatprep.subr.mxu0 0.0
    %6308 = vmatpush1.msra.mxu0 %v6291
    %6309 = vmatprep.subr.mxu0 0.0
    %6310 = vmatpush1.msra.mxu0 %v6292
    %6311 = vmatprep.subr.mxu0 0.0
    %6312 = vmatpush1.msra.mxu0 %v6293
    %6313 = vmatprep.subr.mxu0 0.0
    %6314 = vmatpush1.msra.mxu0 %v6294
    %6315 = vmatprep.subr.mxu0 0.0
    %6316 = vmatpush1.msra.mxu0 %v6295
    %6317 = vmatprep.subr.mxu0 0.0
    %6318 = vmatpush1.msra.mxu0 %v6296
    %6319 = vmatprep.subr.mxu0 0.0
    %6320 = vmatpush1.msra.mxu0 %v6297
    %6321 = vmatprep.subr.mxu0 0.0
    %6322 = vmatpush1.msra.mxu0 %v6298
    %6323 = vmatprep.subr.mxu0 0.0
    %6324 = vmatpush1.msra.mxu0 %v6299
    %6325 = vmatprep.subr.mxu0 0.0
    %6326 = vmatpush1.msra.mxu0 %v6300
    %6327 = vmatprep.subr.mxu0 0.0
    %6328 = vmatpush1.msra.mxu0 %v6301
    %6329 = vmatprep.subr.mxu0 0.0
    %6330 = vmatpush1.msra.mxu0 %v6302
    %6331 = vmatprep.subr.mxu0 0.0
    %6332 = vmatpush1.msra.mxu0 %v6303
    %6333 = vmatprep.subr.mxu0 0.0
    %6334 = vmatpush1.msra.mxu0 %v6304
    %6335 = vmatprep.subr.mxu0 0.0
    %6336 = vmatpush1.msra.mxu0 %v6305
    %6337 = vmatprep.subr.mxu0 0.0
    %6338 = vmatpush1.msra.mxu0 %v6306
    %6339 = vmatprep.subr.mxu0 0.0
    %6340 = vmatpush1.msra.mxu0 0.0
    %6341 = vmatprep.subr.mxu0 0.0
    %6342 = vmatpush1.msra.mxu0 0.0
    %6343 = vmatprep.subr.mxu0 0.0
    %6344 = vmatpush1.msra.mxu0 0.0
    %6345 = vmatprep.subr.mxu0 0.0
    %6346 = vmatpush1.msra.mxu0 0.0
    %6347 = vmatprep.subr.mxu0 0.0
    %6348 = vmatpush1.msra.mxu0 0.0
    %6349 = vmatprep.subr.mxu0 0.0
    %6350 = vmatpush1.msra.mxu0 0.0
    %6351 = vmatprep.subr.mxu0 0.0
    %6352 = vmatpush1.msra.mxu0 0.0
    %6353 = vmatprep.subr.mxu0 0.0
    %6354 = vmatpush1.msra.mxu0 0.0
    %6355 = vmatprep.subr.mxu0 0.0
    %6356 = vmatpush1.msra.mxu0 0.0
    %6357 = vmatprep.subr.mxu0 0.0
    %6358 = vmatpush1.msra.mxu0 0.0
    %6359 = vmatprep.subr.mxu0 0.0
    %6360 = vmatpush1.msra.mxu0 0.0
    %6361 = vmatprep.subr.mxu0 0.0
    %6362 = vmatpush1.msra.mxu0 0.0
    %6363 = vmatprep.subr.mxu0 0.0
    %6364 = vmatpush1.msra.mxu0 0.0
    %6365 = vmatprep.subr.mxu0 0.0
    %6366 = vmatpush1.msra.mxu0 0.0
    %6367 = vmatprep.subr.mxu0 0.0
    %6368 = vmatpush1.msra.mxu0 0.0
    %6369 = vmatprep.subr.mxu0 0.0
    %6370 = vmatpush1.msra.mxu0 0.0
    %6371 = vmatprep.mubr.f32.mxu0 0.0
    %6372 = vmatmul.mubr.f32.gmra.mrb[0].mxu0 %v6289
    %v6373 = vpop.f32.mrb[0].mxu0
    %v6374 = vadd.f32 0.0, %v6373
    %v6375 = vpop.f32.mrb[0].mxu0
    %6376 = vmatprep.mubr.f32.mxu0 0.0
    %6377 = vmatmul.mubr.f32.gmra.mrb[0].mxu0 %v6290
    %v6378 = vpop.f32.mrb[0].mxu0
    %v6379 = vadd.f32 0.0, %v6378
    %v6380 = vpop.f32.mrb[0].mxu0
    %6381 = vdwg.mxu0
    %v6382 = vadd.f32 %v6257, %v6374
    %v6383 = vadd.f32 %v6262, %v6379
    %v6384 = vtanh.pop %v6382
    %v6385 = vtanh.pop %v6383
    %v6386 = vsub.f32 1.0, %v6274
    %v6387 = vsub.f32 1.0, %v6276
    %v6388 = vmul.f32 %v6386, %v5496
    %v6389 = vmul.f32 %v6387, %v5497
    %v6390 = vmul.f32 %v6274, %v6384
    %v6391 = vmul.f32 %v6276, %v6385
    %v6392 = vadd.f32 %v6388, %v6390
    %v6393 = vadd.f32 %v6389, %v6391
    %6394 = vst [vmem:[#allocation2] sm:$0xff] %v6392
    %6395 = vst [vmem:[#allocation2 + $0x8] sm:$0xff] %v6393
    %v6396 = vld [vmem:[#allocation2] sm:$0xff]
    %v6397 = vld [vmem:[#allocation2 + $0x8] sm:$0xff]
    %v6398 = vld [vmem:[#allocation4] sm:$0xff]
    %v6399 = vld [vmem:[#allocation4 + $0x8] sm:$0xff]
    %v6401 = vsel %vm97, %v6398, 0
    %v6404 = vsel %vm97, %v6399, 0
    %6406 = vmatprep.subr.mxu0 0.0
    %6407 = vmatpush1.msra.mxu0 %v6396
    %6408 = vmatprep.subr.mxu0 0.0
    %6409 = vmatpush1.msra.mxu0 %v6397
    %6410 = vmatprep.subr.mxu0 0.0
    %6411 = vmatpush1.msra.mxu0 0.0
    %6412 = vmatprep.subr.mxu0 0.0
    %6413 = vmatpush1.msra.mxu0 0.0
    %6414 = vmatprep.subr.mxu0 0.0
    %6415 = vmatpush1.msra.mxu0 0.0
    %6416 = vmatprep.subr.mxu0 0.0
    %6417 = vmatpush1.msra.mxu0 0.0
    %6418 = vmatprep.subr.mxu0 0.0
    %6419 = vmatpush1.msra.mxu0 0.0
    %6420 = vmatprep.subr.mxu0 0.0
    %6421 = vmatpush1.msra.mxu0 0.0
    %6422 = vmatprep.subr.mxu0 0.0
    %6423 = vmatpush1.msra.mxu0 0.0
    %6424 = vmatprep.subr.mxu0 0.0
    %6425 = vmatpush1.msra.mxu0 0.0
    %6426 = vmatprep.subr.mxu0 0.0
    %6427 = vmatpush1.msra.mxu0 0.0
    %6428 = vmatprep.subr.mxu0 0.0
    %6429 = vmatpush1.msra.mxu0 0.0
    %6430 = vmatprep.subr.mxu0 0.0
    %6431 = vmatpush1.msra.mxu0 0.0
    %6432 = vmatprep.subr.mxu0 0.0
    %6433 = vmatpush1.msra.mxu0 0.0
    %6434 = vmatprep.subr.mxu0 0.0
    %6435 = vmatpush1.msra.mxu0 0.0
    %6436 = vmatprep.subr.mxu0 0.0
    %6437 = vmatpush1.msra.mxu0 0.0
    %6438 = vmatprep.subr.mxu0 0.0
    %6439 = vmatpush1.msra.mxu0 0.0
    %6440 = vmatprep.subr.mxu0 0.0
    %6441 = vmatpush1.msra.mxu0 0.0
    %6442 = vmatprep.subr.mxu0 0.0
    %6443 = vmatpush1.msra.mxu0 0.0
    %6444 = vmatprep.subr.mxu0 0.0
    %6445 = vmatpush1.msra.mxu0 0.0
    %6446 = vmatprep.subr.mxu0 0.0
    %6447 = vmatpush1.msra.mxu0 0.0
    %6448 = vmatprep.subr.mxu0 0.0
    %6449 = vmatpush1.msra.mxu0 0.0
    %6450 = vmatprep.subr.mxu0 0.0
    %6451 = vmatpush1.msra.mxu0 0.0
    %6452 = vmatprep.subr.mxu0 0.0
    %6453 = vmatpush1.msra.mxu0 0.0
    %6454 = vmatprep.subr.mxu0 0.0
    %6455 = vmatpush1.msra.mxu0 0.0
    %6456 = vmatprep.subr.mxu0 0.0
    %6457 = vmatpush1.msra.mxu0 0.0
    %6458 = vmatprep.subr.mxu0 0.0
    %6459 = vmatpush1.msra.mxu0 0.0
    %6460 = vmatprep.subr.mxu0 0.0
    %6461 = vmatpush1.msra.mxu0 0.0
    %6462 = vmatprep.subr.mxu0 0.0
    %6463 = vmatpush1.msra.mxu0 0.0
    %6464 = vmatprep.subr.mxu0 0.0
    %6465 = vmatpush1.msra.mxu0 0.0
    %6466 = vmatprep.subr.mxu0 0.0
    %6467 = vmatpush1.msra.mxu0 0.0
    %6468 = vmatprep.subr.mxu0 0.0
    %6469 = vmatpush1.msra.mxu0 0.0
    %6470 = vmatprep.mubr.f32.mxu0 0.0
    %6471 = vmatmul.mubr.f32.gmra.mrb[0].mxu0 %v6401
    %v6472 = vpop.f32.mrb[0].mxu0
    %v6473 = vadd.f32 0.0, %v6472
    %v6474 = vpop.f32.mrb[0].mxu0
    %6475 = vmatprep.mubr.f32.mxu0 0.0
    %6476 = vmatmul.mubr.f32.gmra.mrb[0].mxu0 %v6404
    %v6477 = vpop.f32.mrb[0].mxu0
    %v6478 = vadd.f32 0.0, %v6477
    %v6479 = vpop.f32.mrb[0].mxu0
    %6480 = vdwg.mxu0
    %6481 = vst [vmem:[#allocation3] sm:$0xff] %v6473
    %6482 = vst [vmem:[#allocation3 + $0x20] sm:$0xff] %v6478
    %v6483 = vld [vmem:[%s181] sm:$0xff]
    %v6484 = vld [vmem:[%s181 + $0x8] sm:$0xff]
    %v6486 = vsel %vm97, %v6483, 0
    %v6489 = vsel %vm97, %v6484, 0
    %6491 = vmatprep.subr.mxu0 0.0
    %6492 = vmatpush1.msra.mxu0 %v6396
    %6493 = vmatprep.subr.mxu0 0.0
    %6494 = vmatpush1.msra.mxu0 %v6397
    %6495 = vmatprep.subr.mxu0 0.0
    %6496 = vmatpush1.msra.mxu0 0.0
    %6497 = vmatprep.subr.mxu0 0.0
    %6498 = vmatpush1.msra.mxu0 0.0
    %6499 = vmatprep.subr.mxu0 0.0
    %6500 = vmatpush1.msra.mxu0 0.0
    %6501 = vmatprep.subr.mxu0 0.0
    %6502 = vmatpush1.msra.mxu0 0.0
    %6503 = vmatprep.subr.mxu0 0.0
    %6504 = vmatpush1.msra.mxu0 0.0
    %6505 = vmatprep.subr.mxu0 0.0
    %6506 = vmatpush1.msra.mxu0 0.0
    %6507 = vmatprep.subr.mxu0 0.0
    %6508 = vmatpush1.msra.mxu0 0.0
    %6509 = vmatprep.subr.mxu0 0.0
    %6510 = vmatpush1.msra.mxu0 0.0
    %6511 = vmatprep.subr.mxu0 0.0
    %6512 = vmatpush1.msra.mxu0 0.0
    %6513 = vmatprep.subr.mxu0 0.0
    %6514 = vmatpush1.msra.mxu0 0.0
    %6515 = vmatprep.subr.mxu0 0.0
    %6516 = vmatpush1.msra.mxu0 0.0
    %6517 = vmatprep.subr.mxu0 0.0
    %6518 = vmatpush1.msra.mxu0 0.0
    %6519 = vmatprep.subr.mxu0 0.0
    %6520 = vmatpush1.msra.mxu0 0.0
    %6521 = vmatprep.subr.mxu0 0.0
    %6522 = vmatpush1.msra.mxu0 0.0
    %6523 = vmatprep.subr.mxu0 0.0
    %6524 = vmatpush1.msra.mxu0 0.0
    %6525 = vmatprep.subr.mxu0 0.0
    %6526 = vmatpush1.msra.mxu0 0.0
    %6527 = vmatprep.subr.mxu0 0.0
    %6528 = vmatpush1.msra.mxu0 0.0
    %6529 = vmatprep.subr.mxu0 0.0
    %6530 = vmatpush1.msra.mxu0 0.0
    %6531 = vmatprep.subr.mxu0 0.0
    %6532 = vmatpush1.msra.mxu0 0.0
    %6533 = vmatprep.subr.mxu0 0.0
    %6534 = vmatpush1.msra.mxu0 0.0
    %6535 = vmatprep.subr.mxu0 0.0
    %6536 = vmatpush1.msra.mxu0 0.0
    %6537 = vmatprep.subr.mxu0 0.0
    %6538 = vmatpush1.msra.mxu0 0.0
    %6539 = vmatprep.subr.mxu0 0.0
    %6540 = vmatpush1.msra.mxu0 0.0
    %6541 = vmatprep.subr.mxu0 0.0
    %6542 = vmatpush1.msra.mxu0 0.0
    %6543 = vmatprep.subr.mxu0 0.0
    %6544 = vmatpush1.msra.mxu0 0.0
    %6545 = vmatprep.subr.mxu0 0.0
    %6546 = vmatpush1.msra.mxu0 0.0
    %6547 = vmatprep.subr.mxu0 0.0
    %6548 = vmatpush1.msra.mxu0 0.0
    %6549 = vmatprep.subr.mxu0 0.0
    %6550 = vmatpush1.msra.mxu0 0.0
    %6551 = vmatprep.subr.mxu0 0.0
    %6552 = vmatpush1.msra.mxu0 0.0
    %6553 = vmatprep.subr.mxu0 0.0
    %6554 = vmatpush1.msra.mxu0 0.0
    %6555 = vmatprep.mubr.f32.mxu0 0.0
    %6556 = vmatmul.mubr.f32.gmra.mrb[0].mxu0 %v6486
    %v6557 = vpop.f32.mrb[0].mxu0
    %v6558 = vadd.f32 0.0, %v6557
    %v6559 = vpop.f32.mrb[0].mxu0
    %6560 = vmatprep.mubr.f32.mxu0 0.0
    %6561 = vmatmul.mubr.f32.gmra.mrb[0].mxu0 %v6489
    %v6562 = vpop.f32.mrb[0].mxu0
    %v6563 = vadd.f32 0.0, %v6562
    %v6564 = vpop.f32.mrb[0].mxu0
    %6565 = vdwg.mxu0
    %6566 = vst [vmem:[#allocation3 + $0x8] sm:$0xff] %v6558
    %6567 = vst [vmem:[#allocation3 + $0x28] sm:$0xff] %v6563
    %v6568 = vld [vmem:[%s267] sm:$0xff]
    %v6569 = vld [vmem:[%s267 + $0x8] sm:$0xff]
    %v6571 = vsel %vm97, %v6568, 0
    %v6574 = vsel %vm97, %v6569, 0
    %6576 = vmatprep.subr.mxu0 0.0
    %6577 = vmatpush1.msra.mxu0 %v6396
    %6578 = vmatprep.subr.mxu0 0.0
    %6579 = vmatpush1.msra.mxu0 %v6397
    %6580 = vmatprep.subr.mxu0 0.0
    %6581 = vmatpush1.msra.mxu0 0.0
    %6582 = vmatprep.subr.mxu0 0.0
    %6583 = vmatpush1.msra.mxu0 0.0
    %6584 = vmatprep.subr.mxu0 0.0
    %6585 = vmatpush1.msra.mxu0 0.0
    %6586 = vmatprep.subr.mxu0 0.0
    %6587 = vmatpush1.msra.mxu0 0.0
    %6588 = vmatprep.subr.mxu0 0.0
    %6589 = vmatpush1.msra.mxu0 0.0
    %6590 = vmatprep.subr.mxu0 0.0
    %6591 = vmatpush1.msra.mxu0 0.0
    %6592 = vmatprep.subr.mxu0 0.0
    %6593 = vmatpush1.msra.mxu0 0.0
    %6594 = vmatprep.subr.mxu0 0.0
    %6595 = vmatpush1.msra.mxu0 0.0
    %6596 = vmatprep.subr.mxu0 0.0
    %6597 = vmatpush1.msra.mxu0 0.0
    %6598 = vmatprep.subr.mxu0 0.0
    %6599 = vmatpush1.msra.mxu0 0.0
    %6600 = vmatprep.subr.mxu0 0.0
    %6601 = vmatpush1.msra.mxu0 0.0
    %6602 = vmatprep.subr.mxu0 0.0
    %6603 = vmatpush1.msra.mxu0 0.0
    %6604 = vmatprep.subr.mxu0 0.0
    %6605 = vmatpush1.msra.mxu0 0.0
    %6606 = vmatprep.subr.mxu0 0.0
    %6607 = vmatpush1.msra.mxu0 0.0
    %6608 = vmatprep.subr.mxu0 0.0
    %6609 = vmatpush1.msra.mxu0 0.0
    %6610 = vmatprep.subr.mxu0 0.0
    %6611 = vmatpush1.msra.mxu0 0.0
    %6612 = vmatprep.subr.mxu0 0.0
    %6613 = vmatpush1.msra.mxu0 0.0
    %6614 = vmatprep.subr.mxu0 0.0
    %6615 = vmatpush1.msra.mxu0 0.0
    %6616 = vmatprep.subr.mxu0 0.0
    %6617 = vmatpush1.msra.mxu0 0.0
    %6618 = vmatprep.subr.mxu0 0.0
    %6619 = vmatpush1.msra.mxu0 0.0
    %6620 = vmatprep.subr.mxu0 0.0
    %6621 = vmatpush1.msra.mxu0 0.0
    %6622 = vmatprep.subr.mxu0 0.0
    %6623 = vmatpush1.msra.mxu0 0.0
    %6624 = vmatprep.subr.mxu0 0.0
    %6625 = vmatpush1.msra.mxu0 0.0
    %6626 = vmatprep.subr.mxu0 0.0
    %6627 = vmatpush1.msra.mxu0 0.0
    %6628 = vmatprep.subr.mxu0 0.0
    %6629 = vmatpush1.msra.mxu0 0.0
    %6630 = vmatprep.subr.mxu0 0.0
    %6631 = vmatpush1.msra.mxu0 0.0
    %6632 = vmatprep.subr.mxu0 0.0
    %6633 = vmatpush1.msra.mxu0 0.0
    %6634 = vmatprep.subr.mxu0 0.0
    %6635 = vmatpush1.msra.mxu0 0.0
    %6636 = vmatprep.subr.mxu0 0.0
    %6637 = vmatpush1.msra.mxu0 0.0
    %6638 = vmatprep.subr.mxu0 0.0
    %6639 = vmatpush1.msra.mxu0 0.0
    %6640 = vmatprep.mubr.f32.mxu0 0.0
    %6641 = vmatmul.mubr.f32.gmra.mrb[0].mxu0 %v6571
    %v6642 = vpop.f32.mrb[0].mxu0
    %v6643 = vadd.f32 0.0, %v6642
    %v6644 = vpop.f32.mrb[0].mxu0
    %6645 = vmatprep.mubr.f32.mxu0 0.0
    %6646 = vmatmul.mubr.f32.gmra.mrb[0].mxu0 %v6574
    %v6647 = vpop.f32.mrb[0].mxu0
    %v6648 = vadd.f32 0.0, %v6647
    %v6649 = vpop.f32.mrb[0].mxu0
    %6650 = vdwg.mxu0
    %6651 = vst [vmem:[#allocation3 + $0x10] sm:$0xff] %v6643
    %6652 = vst [vmem:[#allocation3 + $0x30] sm:$0xff] %v6648
    %6653 = vst [vmem:[#allocation3 + $0x18] sm:$0xff] %v6396
    %6654 = vst [vmem:[#allocation3 + $0x38] sm:$0xff] %v6397
    %v6655 = vld [vmem:[#allocation3] sm:$0xff]
    %v6656 = vld [vmem:[#allocation3 + $0x8] sm:$0xff]
    %v6657 = vld [vmem:[#allocation3 + $0x10] sm:$0xff]
    %v6658 = vld [vmem:[#allocation3 + $0x18] sm:$0xff]
    %v6659 = vld [vmem:[#allocation3 + $0x20] sm:$0xff]
    %v6660 = vld [vmem:[#allocation3 + $0x28] sm:$0xff]
    %v6661 = vld [vmem:[#allocation3 + $0x30] sm:$0xff]
    %v6662 = vld [vmem:[#allocation3 + $0x38] sm:$0xff]
    %v6663 = vld [vmem:[#allocation10] sm:$0xff]
    %v6664 = vld [vmem:[#allocation10 + $0x8] sm:$0xff]
    %v6665 = vld [vmem:[#allocation10 + $0x10] sm:$0xff]
    %v6666 = vld [vmem:[#allocation10 + $0x18] sm:$0xff]
    %v6667 = vld [vmem:[#allocation10 + $0x20] sm:$0xff]
    %v6668 = vld [vmem:[#allocation10 + $0x28] sm:$0xff]
    %v6669 = vld [vmem:[#allocation10 + $0x30] sm:$0xff]
    %v6670 = vld [vmem:[#allocation10 + $0x38] sm:$0xff]
    %v6671 = vld [vmem:[#allocation10 + $0x40] sm:$0xff]
    %v6672 = vld [vmem:[#allocation10 + $0x48] sm:$0xff]
    %v6673 = vld [vmem:[#allocation10 + $0x50] sm:$0xff]
    %v6674 = vld [vmem:[#allocation10 + $0x58] sm:$0xff]
    %v6675 = vld [vmem:[#allocation10 + $0x60] sm:$0xff]
    %v6676 = vld [vmem:[#allocation10 + $0x68] sm:$0xff]
    %v6677 = vld [vmem:[#allocation10 + $0x70] sm:$0xff]
    %v6678 = vld [vmem:[#allocation10 + $0x78] sm:$0xff]
    %v6679 = vld [vmem:[#allocation10 + $0x80] sm:$0xff]
    %v6680 = vld [vmem:[#allocation10 + $0x88] sm:$0xff]
    %v6681 = vld [vmem:[#allocation10 + $0x90] sm:$0xff]
    %v6682 = vld [vmem:[#allocation10 + $0x98] sm:$0xff]
    %v6683 = vld [vmem:[#allocation10 + $0xa0] sm:$0xff]
    %v6684 = vld [vmem:[#allocation10 + $0xa8] sm:$0xff]
    %v6685 = vld [vmem:[#allocation10 + $0xb0] sm:$0xff]
    %v6686 = vld [vmem:[#allocation10 + $0xb8] sm:$0xff]
    %v6687 = vld [vmem:[#allocation10 + $0xc0] sm:$0xff]
    %v6688 = vld [vmem:[#allocation10 + $0xc8] sm:$0xff]
    %v6689 = vld [vmem:[#allocation10 + $0xd0] sm:$0xff]
    %v6690 = vld [vmem:[#allocation10 + $0xd8] sm:$0xff]
    %v6691 = vld [vmem:[#allocation10 + $0xe0] sm:$0xff]
    %v6692 = vld [vmem:[#allocation10 + $0xe8] sm:$0xff]
    %v6693 = vld [vmem:[#allocation10 + $0xf0] sm:$0xff]
    %v6694 = vld [vmem:[#allocation10 + $0xf8] sm:$0xff]
    %v6695 = vld [vmem:[#allocation10 + $0x100] sm:$0xff]
    %v6696 = vld [vmem:[#allocation10 + $0x108] sm:$0xff]
    %v6697 = vld [vmem:[#allocation10 + $0x110] sm:$0xff]
    %v6698 = vld [vmem:[#allocation10 + $0x118] sm:$0xff]
    %v6699 = vld [vmem:[#allocation10 + $0x120] sm:$0xff]
    %v6700 = vld [vmem:[#allocation10 + $0x128] sm:$0xff]
    %v6701 = vld [vmem:[#allocation10 + $0x130] sm:$0xff]
    %v6702 = vld [vmem:[#allocation10 + $0x138] sm:$0xff]
    %v6703 = vld [vmem:[#allocation10 + $0x140] sm:$0xff]
    %v6704 = vld [vmem:[#allocation10 + $0x148] sm:$0xff]
    %v6705 = vld [vmem:[#allocation10 + $0x150] sm:$0xff]
    %v6706 = vld [vmem:[#allocation10 + $0x158] sm:$0xff]
    %v6707 = vld [vmem:[#allocation10 + $0x160] sm:$0xff]
    %v6708 = vld [vmem:[#allocation10 + $0x168] sm:$0xff]
    %v6709 = vld [vmem:[#allocation10 + $0x170] sm:$0xff]
    %v6710 = vld [vmem:[#allocation10 + $0x178] sm:$0xff]
    %v6711 = vld [vmem:[#allocation10 + $0x180] sm:$0xff]
    %v6712 = vld [vmem:[#allocation10 + $0x188] sm:$0xff]
    %v6713 = vld [vmem:[#allocation10 + $0x190] sm:$0xff]
    %v6714 = vld [vmem:[#allocation10 + $0x198] sm:$0xff]
    %v6715 = vld [vmem:[#allocation10 + $0x1a0] sm:$0xff]
    %v6716 = vld [vmem:[#allocation10 + $0x1a8] sm:$0xff]
    %v6717 = vld [vmem:[#allocation10 + $0x1b0] sm:$0xff]
    %v6718 = vld [vmem:[#allocation10 + $0x1b8] sm:$0xff]
    %v6719 = vld [vmem:[#allocation10 + $0x1c0] sm:$0xff]
    %v6720 = vld [vmem:[#allocation10 + $0x1c8] sm:$0xff]
    %v6721 = vld [vmem:[#allocation10 + $0x1d0] sm:$0xff]
    %v6722 = vld [vmem:[#allocation10 + $0x1d8] sm:$0xff]
    %v6723 = vld [vmem:[#allocation10 + $0x1e0] sm:$0xff]
    %v6724 = vld [vmem:[#allocation10 + $0x1e8] sm:$0xff]
    %v6725 = vld [vmem:[#allocation10 + $0x1f0] sm:$0xff]
    %v6726 = vld [vmem:[#allocation10 + $0x1f8] sm:$0xff]
    %v6727 = vld [vmem:[#allocation10 + $0x200] sm:$0xff]
    %v6728 = vld [vmem:[#allocation10 + $0x208] sm:$0xff]
    %v6729 = vld [vmem:[#allocation10 + $0x210] sm:$0xff]
    %v6730 = vld [vmem:[#allocation10 + $0x218] sm:$0xff]
    %v6731 = vld [vmem:[#allocation10 + $0x220] sm:$0xff]
    %v6732 = vld [vmem:[#allocation10 + $0x228] sm:$0xff]
    %v6733 = vld [vmem:[#allocation10 + $0x230] sm:$0xff]
    %v6734 = vld [vmem:[#allocation10 + $0x238] sm:$0xff]
    %v6735 = vld [vmem:[#allocation10 + $0x240] sm:$0xff]
    %v6736 = vld [vmem:[#allocation10 + $0x248] sm:$0xff]
    %v6737 = vld [vmem:[#allocation10 + $0x250] sm:$0xff]
    %v6738 = vld [vmem:[#allocation10 + $0x258] sm:$0xff]
    %v6739 = vld [vmem:[#allocation10 + $0x260] sm:$0xff]
    %v6740 = vld [vmem:[#allocation10 + $0x268] sm:$0xff]
    %v6741 = vld [vmem:[#allocation10 + $0x270] sm:$0xff]
    %v6742 = vld [vmem:[#allocation10 + $0x278] sm:$0xff]
    %v6743 = vld [vmem:[#allocation10 + $0x280] sm:$0xff]
    %v6744 = vld [vmem:[#allocation10 + $0x288] sm:$0xff]
    %v6745 = vld [vmem:[#allocation10 + $0x290] sm:$0xff]
    %v6746 = vld [vmem:[#allocation10 + $0x298] sm:$0xff]
    %v6747 = vld [vmem:[#allocation10 + $0x2a0] sm:$0xff]
    %v6748 = vld [vmem:[#allocation10 + $0x2a8] sm:$0xff]
    %v6749 = vld [vmem:[#allocation10 + $0x2b0] sm:$0xff]
    %v6750 = vld [vmem:[#allocation10 + $0x2b8] sm:$0xff]
    %v6751 = vld [vmem:[#allocation10 + $0x2c0] sm:$0xff]
    %v6752 = vld [vmem:[#allocation10 + $0x2c8] sm:$0xff]
    %v6753 = vld [vmem:[#allocation10 + $0x2d0] sm:$0xff]
    %v6754 = vld [vmem:[#allocation10 + $0x2d8] sm:$0xff]
    %v6755 = vld [vmem:[#allocation10 + $0x2e0] sm:$0xff]
    %v6756 = vld [vmem:[#allocation10 + $0x2e8] sm:$0xff]
    %v6757 = vld [vmem:[#allocation10 + $0x2f0] sm:$0xff]
    %v6758 = vld [vmem:[#allocation10 + $0x2f8] sm:$0xff]
    %v6759 = vld [vmem:[#allocation10 + $0x300] sm:$0xff]
    %v6760 = vld [vmem:[#allocation10 + $0x308] sm:$0xff]
    %v6761 = vld [vmem:[#allocation10 + $0x310] sm:$0xff]
    %v6762 = vld [vmem:[#allocation10 + $0x318] sm:$0xff]
    %v6763 = vld [vmem:[#allocation10 + $0x320] sm:$0xff]
    %v6764 = vld [vmem:[#allocation10 + $0x328] sm:$0xff]
    %v6765 = vld [vmem:[#allocation10 + $0x330] sm:$0xff]
    %v6766 = vld [vmem:[#allocation10 + $0x338] sm:$0xff]
    %v6767 = vld [vmem:[#allocation10 + $0x340] sm:$0xff]
    %v6768 = vld [vmem:[#allocation10 + $0x348] sm:$0xff]
    %v6769 = vld [vmem:[#allocation10 + $0x350] sm:$0xff]
    %v6770 = vld [vmem:[#allocation10 + $0x358] sm:$0xff]
    %v6771 = vld [vmem:[#allocation10 + $0x360] sm:$0xff]
    %v6772 = vld [vmem:[#allocation10 + $0x368] sm:$0xff]
    %v6773 = vld [vmem:[#allocation10 + $0x370] sm:$0xff]
    %v6774 = vld [vmem:[#allocation10 + $0x378] sm:$0xff]
    %v6775 = vld [vmem:[#allocation10 + $0x380] sm:$0xff]
    %v6776 = vld [vmem:[#allocation10 + $0x388] sm:$0xff]
    %v6777 = vld [vmem:[#allocation10 + $0x390] sm:$0xff]
    %v6778 = vld [vmem:[#allocation10 + $0x398] sm:$0xff]
    %v6779 = vld [vmem:[#allocation10 + $0x3a0] sm:$0xff]
    %v6780 = vld [vmem:[#allocation10 + $0x3a8] sm:$0xff]
    %v6781 = vld [vmem:[#allocation10 + $0x3b0] sm:$0xff]
    %v6782 = vld [vmem:[#allocation10 + $0x3b8] sm:$0xff]
    %v6783 = vld [vmem:[#allocation10 + $0x3c0] sm:$0xff]
    %v6784 = vld [vmem:[#allocation10 + $0x3c8] sm:$0xff]
    %v6785 = vld [vmem:[#allocation10 + $0x3d0] sm:$0xff]
    %v6786 = vld [vmem:[#allocation10 + $0x3d8] sm:$0xff]
    %v6787 = vld [vmem:[#allocation10 + $0x3e0] sm:$0xff]
    %v6788 = vld [vmem:[#allocation10 + $0x3e8] sm:$0xff]
    %v6789 = vld [vmem:[#allocation10 + $0x3f0] sm:$0xff]
    %v6790 = vld [vmem:[#allocation10 + $0x3f8] sm:$0xff]
    %v6791 = vld [vmem:[#allocation10 + $0x400] sm:$0xff]
    %v6792 = vld [vmem:[#allocation10 + $0x408] sm:$0xff]
    %v6793 = vld [vmem:[#allocation10 + $0x410] sm:$0xff]
    %v6794 = vld [vmem:[#allocation10 + $0x418] sm:$0xff]
    %v6795 = vld [vmem:[#allocation10 + $0x420] sm:$0xff]
    %v6796 = vld [vmem:[#allocation10 + $0x428] sm:$0xff]
    %v6797 = vld [vmem:[#allocation10 + $0x430] sm:$0xff]
    %v6798 = vld [vmem:[#allocation10 + $0x438] sm:$0xff]
    %v6799 = vld [vmem:[#allocation10 + $0x440] sm:$0xff]
    %v6800 = vld [vmem:[#allocation10 + $0x448] sm:$0xff]
    %v6801 = vld [vmem:[#allocation10 + $0x450] sm:$0xff]
    %v6802 = vld [vmem:[#allocation10 + $0x458] sm:$0xff]
    %v6803 = vld [vmem:[#allocation10 + $0x460] sm:$0xff]
    %v6804 = vld [vmem:[#allocation10 + $0x468] sm:$0xff]
    %v6805 = vld [vmem:[#allocation10 + $0x470] sm:$0xff]
    %v6806 = vld [vmem:[#allocation10 + $0x478] sm:$0xff]
    %v6807 = vld [vmem:[#allocation10 + $0x480] sm:$0xff]
    %v6808 = vld [vmem:[#allocation10 + $0x488] sm:$0xff]
    %v6809 = vld [vmem:[#allocation10 + $0x490] sm:$0xff]
    %v6810 = vld [vmem:[#allocation10 + $0x498] sm:$0xff]
    %v6811 = vld [vmem:[#allocation10 + $0x4a0] sm:$0xff]
    %v6812 = vld [vmem:[#allocation10 + $0x4a8] sm:$0xff]
    %v6813 = vld [vmem:[#allocation10 + $0x4b0] sm:$0xff]
    %v6814 = vld [vmem:[#allocation10 + $0x4b8] sm:$0xff]
    %v6815 = vld [vmem:[#allocation10 + $0x4c0] sm:$0xff]
    %v6816 = vld [vmem:[#allocation10 + $0x4c8] sm:$0xff]
    %v6817 = vld [vmem:[#allocation10 + $0x4d0] sm:$0xff]
    %v6818 = vld [vmem:[#allocation10 + $0x4d8] sm:$0xff]
    %v6819 = vld [vmem:[#allocation10 + $0x4e0] sm:$0xff]
    %v6820 = vld [vmem:[#allocation10 + $0x4e8] sm:$0xff]
    %v6821 = vld [vmem:[#allocation10 + $0x4f0] sm:$0xff]
    %v6822 = vld [vmem:[#allocation10 + $0x4f8] sm:$0xff]
    %v6823 = vld [vmem:[#allocation10 + $0x500] sm:$0xff]
    %v6824 = vld [vmem:[#allocation10 + $0x508] sm:$0xff]
    %v6825 = vld [vmem:[#allocation10 + $0x510] sm:$0xff]
    %v6826 = vld [vmem:[#allocation10 + $0x518] sm:$0xff]
    %v6827 = vld [vmem:[#allocation10 + $0x520] sm:$0xff]
    %v6828 = vld [vmem:[#allocation10 + $0x528] sm:$0xff]
    %v6829 = vld [vmem:[#allocation10 + $0x530] sm:$0xff]
    %v6830 = vld [vmem:[#allocation10 + $0x538] sm:$0xff]
    %v6831 = vld [vmem:[#allocation10 + $0x540] sm:$0xff]
    %v6832 = vld [vmem:[#allocation10 + $0x548] sm:$0xff]
    %v6833 = vld [vmem:[#allocation10 + $0x550] sm:$0xff]
    %v6834 = vld [vmem:[#allocation10 + $0x558] sm:$0xff]
    %v6835 = vld [vmem:[#allocation10 + $0x560] sm:$0xff]
    %v6836 = vld [vmem:[#allocation10 + $0x568] sm:$0xff]
    %v6837 = vld [vmem:[#allocation10 + $0x570] sm:$0xff]
    %v6838 = vld [vmem:[#allocation10 + $0x578] sm:$0xff]
    %v6839 = vld [vmem:[#allocation10 + $0x580] sm:$0xff]
    %v6840 = vld [vmem:[#allocation10 + $0x588] sm:$0xff]
    %v6841 = vld [vmem:[#allocation10 + $0x590] sm:$0xff]
    %v6842 = vld [vmem:[#allocation10 + $0x598] sm:$0xff]
    %v6843 = vld [vmem:[#allocation10 + $0x5a0] sm:$0xff]
    %v6844 = vld [vmem:[#allocation10 + $0x5a8] sm:$0xff]
    %v6845 = vld [vmem:[#allocation10 + $0x5b0] sm:$0xff]
    %v6846 = vld [vmem:[#allocation10 + $0x5b8] sm:$0xff]
    %v6847 = vld [vmem:[#allocation10 + $0x5c0] sm:$0xff]
    %v6848 = vld [vmem:[#allocation10 + $0x5c8] sm:$0xff]
    %v6849 = vld [vmem:[#allocation10 + $0x5d0] sm:$0xff]
    %v6850 = vld [vmem:[#allocation10 + $0x5d8] sm:$0xff]
    %v6851 = vld [vmem:[#allocation10 + $0x5e0] sm:$0xff]
    %v6852 = vld [vmem:[#allocation10 + $0x5e8] sm:$0xff]
    %v6853 = vld [vmem:[#allocation10 + $0x5f0] sm:$0xff]
    %v6854 = vld [vmem:[#allocation10 + $0x5f8] sm:$0xff]
    %v6855 = vld [vmem:[#allocation9] sm:$0xff]
    %v6856 = vld [vmem:[#allocation9 + $0x8] sm:$0xff]
    %v6857 = vld [vmem:[#allocation9 + $0x10] sm:$0xff]
    %v6858 = vld [vmem:[#allocation9 + $0x18] sm:$0xff]
    %v6859 = vld [vmem:[#allocation9 + $0x20] sm:$0xff]
    %v6860 = vld [vmem:[#allocation9 + $0x28] sm:$0xff]
    %6861 = vmatprep.subr.mxu0 %v6664
    %6862 = vmatpush1.msra.mxu0 %v6663
    %6863 = vmatprep.subr.mxu0 %v6667
    %6864 = vmatpush1.msra.mxu0 %v6666
    %6865 = vmatprep.subr.mxu0 %v6670
    %6866 = vmatpush1.msra.mxu0 %v6669
    %6867 = vmatprep.subr.mxu0 %v6673
    %6868 = vmatpush1.msra.mxu0 %v6672
    %6869 = vmatprep.subr.mxu0 %v6676
    %6870 = vmatpush1.msra.mxu0 %v6675
    %6871 = vmatprep.subr.mxu0 %v6679
    %6872 = vmatpush1.msra.mxu0 %v6678
    %6873 = vmatprep.subr.mxu0 %v6682
    %6874 = vmatpush1.msra.mxu0 %v6681
    %6875 = vmatprep.subr.mxu0 %v6685
    %6876 = vmatpush1.msra.mxu0 %v6684
    %6877 = vmatprep.subr.mxu0 %v6688
    %6878 = vmatpush1.msra.mxu0 %v6687
    %6879 = vmatprep.subr.mxu0 %v6691
    %6880 = vmatpush1.msra.mxu0 %v6690
    %6881 = vmatprep.subr.mxu0 %v6694
    %6882 = vmatpush1.msra.mxu0 %v6693
    %6883 = vmatprep.subr.mxu0 %v6697
    %6884 = vmatpush1.msra.mxu0 %v6696
    %6885 = vmatprep.subr.mxu0 %v6700
    %6886 = vmatpush1.msra.mxu0 %v6699
    %6887 = vmatprep.subr.mxu0 %v6703
    %6888 = vmatpush1.msra.mxu0 %v6702
    %6889 = vmatprep.subr.mxu0 %v6706
    %6890 = vmatpush1.msra.mxu0 %v6705
    %6891 = vmatprep.subr.mxu0 %v6709
    %6892 = vmatpush1.msra.mxu0 %v6708
    %6893 = vmatprep.subr.mxu0 %v6712
    %6894 = vmatpush1.msra.mxu0 %v6711
    %6895 = vmatprep.subr.mxu0 %v6715
    %6896 = vmatpush1.msra.mxu0 %v6714
    %6897 = vmatprep.subr.mxu0 %v6718
    %6898 = vmatpush1.msra.mxu0 %v6717
    %6899 = vmatprep.subr.mxu0 %v6721
    %6900 = vmatpush1.msra.mxu0 %v6720
    %6901 = vmatprep.subr.mxu0 %v6724
    %6902 = vmatpush1.msra.mxu0 %v6723
    %6903 = vmatprep.subr.mxu0 %v6727
    %6904 = vmatpush1.msra.mxu0 %v6726
    %6905 = vmatprep.subr.mxu0 %v6730
    %6906 = vmatpush1.msra.mxu0 %v6729
    %6907 = vmatprep.subr.mxu0 %v6733
    %6908 = vmatpush1.msra.mxu0 %v6732
    %6909 = vmatprep.subr.mxu0 %v6736
    %6910 = vmatpush1.msra.mxu0 %v6735
    %6911 = vmatprep.subr.mxu0 %v6739
    %6912 = vmatpush1.msra.mxu0 %v6738
    %6913 = vmatprep.subr.mxu0 %v6742
    %6914 = vmatpush1.msra.mxu0 %v6741
    %6915 = vmatprep.subr.mxu0 %v6745
    %6916 = vmatpush1.msra.mxu0 %v6744
    %6917 = vmatprep.subr.mxu0 %v6748
    %6918 = vmatpush1.msra.mxu0 %v6747
    %6919 = vmatprep.subr.mxu0 %v6751
    %6920 = vmatpush1.msra.mxu0 %v6750
    %6921 = vmatprep.subr.mxu0 %v6754
    %6922 = vmatpush1.msra.mxu0 %v6753
    %6923 = vmatprep.subr.mxu0 %v6757
    %6924 = vmatpush1.msra.mxu0 %v6756
    %6925 = vmatprep.mubr.f32.mxu0 %v6656
    %6926 = vmatmul.mubr.f32.gmra.mrb[0].mxu0 %v6655
    %v6927 = vpop.f32.mrb[0].mxu0
    %v6928 = vadd.f32 %v6855, %v6927
    %v6929 = vpop.f32.mrb[0].mxu0
    %v6930 = vadd.f32 %v6856, %v6929
    %6931 = vmatprep.mubr.f32.mxu0 %v6660
    %6932 = vmatmul.mubr.f32.gmra.mrb[0].mxu0 %v6659
    %v6933 = vpop.f32.mrb[0].mxu0
    %v6934 = vadd.f32 %v6858, %v6933
    %v6935 = vpop.f32.mrb[0].mxu0
    %v6936 = vadd.f32 %v6859, %v6935
    %6937 = vdwg.mxu0
    %6938 = vmatprep.subr.mxu0 %v6760
    %6939 = vmatpush1.msra.mxu0 %v6759
    %6940 = vmatprep.subr.mxu0 %v6763
    %6941 = vmatpush1.msra.mxu0 %v6762
    %6942 = vmatprep.subr.mxu0 %v6766
    %6943 = vmatpush1.msra.mxu0 %v6765
    %6944 = vmatprep.subr.mxu0 %v6769
    %6945 = vmatpush1.msra.mxu0 %v6768
    %6946 = vmatprep.subr.mxu0 %v6772
    %6947 = vmatpush1.msra.mxu0 %v6771
    %6948 = vmatprep.subr.mxu0 %v6775
    %6949 = vmatpush1.msra.mxu0 %v6774
    %6950 = vmatprep.subr.mxu0 %v6778
    %6951 = vmatpush1.msra.mxu0 %v6777
    %6952 = vmatprep.subr.mxu0 %v6781
    %6953 = vmatpush1.msra.mxu0 %v6780
    %6954 = vmatprep.subr.mxu0 %v6784
    %6955 = vmatpush1.msra.mxu0 %v6783
    %6956 = vmatprep.subr.mxu0 %v6787
    %6957 = vmatpush1.msra.mxu0 %v6786
    %6958 = vmatprep.subr.mxu0 %v6790
    %6959 = vmatpush1.msra.mxu0 %v6789
    %6960 = vmatprep.subr.mxu0 %v6793
    %6961 = vmatpush1.msra.mxu0 %v6792
    %6962 = vmatprep.subr.mxu0 %v6796
    %6963 = vmatpush1.msra.mxu0 %v6795
    %6964 = vmatprep.subr.mxu0 %v6799
    %6965 = vmatpush1.msra.mxu0 %v6798
    %6966 = vmatprep.subr.mxu0 %v6802
    %6967 = vmatpush1.msra.mxu0 %v6801
    %6968 = vmatprep.subr.mxu0 %v6805
    %6969 = vmatpush1.msra.mxu0 %v6804
    %6970 = vmatprep.subr.mxu0 %v6808
    %6971 = vmatpush1.msra.mxu0 %v6807
    %6972 = vmatprep.subr.mxu0 %v6811
    %6973 = vmatpush1.msra.mxu0 %v6810
    %6974 = vmatprep.subr.mxu0 %v6814
    %6975 = vmatpush1.msra.mxu0 %v6813
    %6976 = vmatprep.subr.mxu0 %v6817
    %6977 = vmatpush1.msra.mxu0 %v6816
    %6978 = vmatprep.subr.mxu0 %v6820
    %6979 = vmatpush1.msra.mxu0 %v6819
    %6980 = vmatprep.subr.mxu0 %v6823
    %6981 = vmatpush1.msra.mxu0 %v6822
    %6982 = vmatprep.subr.mxu0 %v6826
    %6983 = vmatpush1.msra.mxu0 %v6825
    %6984 = vmatprep.subr.mxu0 %v6829
    %6985 = vmatpush1.msra.mxu0 %v6828
    %6986 = vmatprep.subr.mxu0 %v6832
    %6987 = vmatpush1.msra.mxu0 %v6831
    %6988 = vmatprep.subr.mxu0 %v6835
    %6989 = vmatpush1.msra.mxu0 %v6834
    %6990 = vmatprep.subr.mxu0 %v6838
    %6991 = vmatpush1.msra.mxu0 %v6837
    %6992 = vmatprep.subr.mxu0 %v6841
    %6993 = vmatpush1.msra.mxu0 %v6840
    %6994 = vmatprep.subr.mxu0 %v6844
    %6995 = vmatpush1.msra.mxu0 %v6843
    %6996 = vmatprep.subr.mxu0 %v6847
    %6997 = vmatpush1.msra.mxu0 %v6846
    %6998 = vmatprep.subr.mxu0 %v6850
    %6999 = vmatpush1.msra.mxu0 %v6849
    %7000 = vmatprep.subr.mxu0 %v6853
    %7001 = vmatpush1.msra.mxu0 %v6852
    %7002 = vmatprep.mubr.f32.mxu0 %v6658
    %7003 = vmatmul.mubr.f32.gmra.mrb[0].mxu0 %v6657
    %v7004 = vpop.f32.mrb[0].mxu0
    %v7005 = vadd.f32 %v6928, %v7004
    %v7006 = vpop.f32.mrb[0].mxu0
    %v7007 = vadd.f32 %v6930, %v7006
    %7008 = vmatprep.mubr.f32.mxu0 %v6662
    %7009 = vmatmul.mubr.f32.gmra.mrb[0].mxu0 %v6661
    %v7010 = vpop.f32.mrb[0].mxu0
    %v7011 = vadd.f32 %v6934, %v7010
    %v7012 = vpop.f32.mrb[0].mxu0
    %v7013 = vadd.f32 %v6936, %v7012
    %7014 = vdwg.mxu0
    %7015 = vmatprep.subr.mxu0 0.0
    %7016 = vmatpush1.msra.mxu0 %v6665
    %7017 = vmatprep.subr.mxu0 0.0
    %7018 = vmatpush1.msra.mxu0 %v6668
    %7019 = vmatprep.subr.mxu0 0.0
    %7020 = vmatpush1.msra.mxu0 %v6671
    %7021 = vmatprep.subr.mxu0 0.0
    %7022 = vmatpush1.msra.mxu0 %v6674
    %7023 = vmatprep.subr.mxu0 0.0
    %7024 = vmatpush1.msra.mxu0 %v6677
    %7025 = vmatprep.subr.mxu0 0.0
    %7026 = vmatpush1.msra.mxu0 %v6680
    %7027 = vmatprep.subr.mxu0 0.0
    %7028 = vmatpush1.msra.mxu0 %v6683
    %7029 = vmatprep.subr.mxu0 0.0
    %7030 = vmatpush1.msra.mxu0 %v6686
    %7031 = vmatprep.subr.mxu0 0.0
    %7032 = vmatpush1.msra.mxu0 %v6689
    %7033 = vmatprep.subr.mxu0 0.0
    %7034 = vmatpush1.msra.mxu0 %v6692
    %7035 = vmatprep.subr.mxu0 0.0
    %7036 = vmatpush1.msra.mxu0 %v6695
    %7037 = vmatprep.subr.mxu0 0.0
    %7038 = vmatpush1.msra.mxu0 %v6698
    %7039 = vmatprep.subr.mxu0 0.0
    %7040 = vmatpush1.msra.mxu0 %v6701
    %7041 = vmatprep.subr.mxu0 0.0
    %7042 = vmatpush1.msra.mxu0 %v6704
    %7043 = vmatprep.subr.mxu0 0.0
    %7044 = vmatpush1.msra.mxu0 %v6707
    %7045 = vmatprep.subr.mxu0 0.0
    %7046 = vmatpush1.msra.mxu0 %v6710
    %7047 = vmatprep.subr.mxu0 0.0
    %7048 = vmatpush1.msra.mxu0 %v6713
    %7049 = vmatprep.subr.mxu0 0.0
    %7050 = vmatpush1.msra.mxu0 %v6716
    %7051 = vmatprep.subr.mxu0 0.0
    %7052 = vmatpush1.msra.mxu0 %v6719
    %7053 = vmatprep.subr.mxu0 0.0
    %7054 = vmatpush1.msra.mxu0 %v6722
    %7055 = vmatprep.subr.mxu0 0.0
    %7056 = vmatpush1.msra.mxu0 %v6725
    %7057 = vmatprep.subr.mxu0 0.0
    %7058 = vmatpush1.msra.mxu0 %v6728
    %7059 = vmatprep.subr.mxu0 0.0
    %7060 = vmatpush1.msra.mxu0 %v6731
    %7061 = vmatprep.subr.mxu0 0.0
    %7062 = vmatpush1.msra.mxu0 %v6734
    %7063 = vmatprep.subr.mxu0 0.0
    %7064 = vmatpush1.msra.mxu0 %v6737
    %7065 = vmatprep.subr.mxu0 0.0
    %7066 = vmatpush1.msra.mxu0 %v6740
    %7067 = vmatprep.subr.mxu0 0.0
    %7068 = vmatpush1.msra.mxu0 %v6743
    %7069 = vmatprep.subr.mxu0 0.0
    %7070 = vmatpush1.msra.mxu0 %v6746
    %7071 = vmatprep.subr.mxu0 0.0
    %7072 = vmatpush1.msra.mxu0 %v6749
    %7073 = vmatprep.subr.mxu0 0.0
    %7074 = vmatpush1.msra.mxu0 %v6752
    %7075 = vmatprep.subr.mxu0 0.0
    %7076 = vmatpush1.msra.mxu0 %v6755
    %7077 = vmatprep.subr.mxu0 0.0
    %7078 = vmatpush1.msra.mxu0 %v6758
    %7079 = vmatprep.mubr.f32.mxu0 %v6656
    %7080 = vmatmul.mubr.f32.gmra.mrb[0].mxu0 %v6655
    %v7081 = vpop.f32.mrb[0].mxu0
    %v7082 = vadd.f32 %v6857, %v7081
    %v7083 = vpop.f32.mrb[0].mxu0
    %7084 = vmatprep.mubr.f32.mxu0 %v6660
    %7085 = vmatmul.mubr.f32.gmra.mrb[0].mxu0 %v6659
    %v7086 = vpop.f32.mrb[0].mxu0
    %v7087 = vadd.f32 %v6860, %v7086
    %v7088 = vpop.f32.mrb[0].mxu0
    %7089 = vdwg.mxu0
    %7090 = vmatprep.subr.mxu0 0.0
    %7091 = vmatpush1.msra.mxu0 %v6761
    %7092 = vmatprep.subr.mxu0 0.0
    %7093 = vmatpush1.msra.mxu0 %v6764
    %7094 = vmatprep.subr.mxu0 0.0
    %7095 = vmatpush1.msra.mxu0 %v6767
    %7096 = vmatprep.subr.mxu0 0.0
    %7097 = vmatpush1.msra.mxu0 %v6770
    %7098 = vmatprep.subr.mxu0 0.0
    %7099 = vmatpush1.msra.mxu0 %v6773
    %7100 = vmatprep.subr.mxu0 0.0
    %7101 = vmatpush1.msra.mxu0 %v6776
    %7102 = vmatprep.subr.mxu0 0.0
    %7103 = vmatpush1.msra.mxu0 %v6779
    %7104 = vmatprep.subr.mxu0 0.0
    %7105 = vmatpush1.msra.mxu0 %v6782
    %7106 = vmatprep.subr.mxu0 0.0
    %7107 = vmatpush1.msra.mxu0 %v6785
    %7108 = vmatprep.subr.mxu0 0.0
    %7109 = vmatpush1.msra.mxu0 %v6788
    %7110 = vmatprep.subr.mxu0 0.0
    %7111 = vmatpush1.msra.mxu0 %v6791
    %7112 = vmatprep.subr.mxu0 0.0
    %7113 = vmatpush1.msra.mxu0 %v6794
    %7114 = vmatprep.subr.mxu0 0.0
    %7115 = vmatpush1.msra.mxu0 %v6797
    %7116 = vmatprep.subr.mxu0 0.0
    %7117 = vmatpush1.msra.mxu0 %v6800
    %7118 = vmatprep.subr.mxu0 0.0
    %7119 = vmatpush1.msra.mxu0 %v6803
    %7120 = vmatprep.subr.mxu0 0.0
    %7121 = vmatpush1.msra.mxu0 %v6806
    %7122 = vmatprep.subr.mxu0 0.0
    %7123 = vmatpush1.msra.mxu0 %v6809
    %7124 = vmatprep.subr.mxu0 0.0
    %7125 = vmatpush1.msra.mxu0 %v6812
    %7126 = vmatprep.subr.mxu0 0.0
    %7127 = vmatpush1.msra.mxu0 %v6815
    %7128 = vmatprep.subr.mxu0 0.0
    %7129 = vmatpush1.msra.mxu0 %v6818
    %7130 = vmatprep.subr.mxu0 0.0
    %7131 = vmatpush1.msra.mxu0 %v6821
    %7132 = vmatprep.subr.mxu0 0.0
    %7133 = vmatpush1.msra.mxu0 %v6824
    %7134 = vmatprep.subr.mxu0 0.0
    %7135 = vmatpush1.msra.mxu0 %v6827
    %7136 = vmatprep.subr.mxu0 0.0
    %7137 = vmatpush1.msra.mxu0 %v6830
    %7138 = vmatprep.subr.mxu0 0.0
    %7139 = vmatpush1.msra.mxu0 %v6833
    %7140 = vmatprep.subr.mxu0 0.0
    %7141 = vmatpush1.msra.mxu0 %v6836
    %7142 = vmatprep.subr.mxu0 0.0
    %7143 = vmatpush1.msra.mxu0 %v6839
    %7144 = vmatprep.subr.mxu0 0.0
    %7145 = vmatpush1.msra.mxu0 %v6842
    %7146 = vmatprep.subr.mxu0 0.0
    %7147 = vmatpush1.msra.mxu0 %v6845
    %7148 = vmatprep.subr.mxu0 0.0
    %7149 = vmatpush1.msra.mxu0 %v6848
    %7150 = vmatprep.subr.mxu0 0.0
    %7151 = vmatpush1.msra.mxu0 %v6851
    %7152 = vmatprep.subr.mxu0 0.0
    %7153 = vmatpush1.msra.mxu0 %v6854
    %7154 = vmatprep.mubr.f32.mxu0 %v6658
    %7155 = vmatmul.mubr.f32.gmra.mrb[0].mxu0 %v6657
    %v7156 = vpop.f32.mrb[0].mxu0
    %v7157 = vadd.f32 %v7082, %v7156
    %v7158 = vpop.f32.mrb[0].mxu0
    %7159 = vmatprep.mubr.f32.mxu0 %v6662
    %7160 = vmatmul.mubr.f32.gmra.mrb[0].mxu0 %v6661
    %v7161 = vpop.f32.mrb[0].mxu0
    %v7162 = vadd.f32 %v7087, %v7161
    %v7163 = vpop.f32.mrb[0].mxu0
    %7164 = vdwg.mxu0
    %v7165 = vxor.u32 %v7005, 2147483648
    %v7166 = vxor.u32 %v7011, 2147483648
    %v7167 = vmul.f32 %v7165, 1.442695
    %v7168 = vpow.pop %v7167
    %v7169 = vmul.f32 %v7166, 1.442695
    %v7170 = vpow.pop %v7169
    %v7171 = vadd.f32 %v7168, 1.0
    %v7172 = vadd.f32 %v7170, 1.0
    %v7173 = vrcp.pop %v7171
    %v7174 = vmul.f32 1.0, %v7173
    %v7175 = vrcp.pop %v7172
    %v7176 = vmul.f32 1.0, %v7175
    %v7177 = vxor.u32 %v7007, 2147483648
    %v7178 = vxor.u32 %v7013, 2147483648
    %v7179 = vmul.f32 %v7177, 1.442695
    %v7180 = vpow.pop %v7179
    %v7181 = vmul.f32 %v7178, 1.442695
    %v7182 = vpow.pop %v7181
    %v7183 = vadd.f32 %v7180, 1.0
    %v7184 = vadd.f32 %v7182, 1.0
    %v7185 = vrcp.pop %v7183
    %v7186 = vmul.f32 1.0, %v7185
    %v7187 = vrcp.pop %v7184
    %v7188 = vmul.f32 1.0, %v7187
    %v7189 = vmul.f32 %v7186, %v6396
    %v7190 = vmul.f32 %v7188, %v6397
    %v7191 = vld [vmem:[#allocation12] sm:$0xff]
    %v7192 = vld [vmem:[#allocation12 + $0x8] sm:$0xff]
    %v7193 = vld [vmem:[#allocation12 + $0x10] sm:$0xff]
    %v7194 = vld [vmem:[#allocation12 + $0x18] sm:$0xff]
    %v7195 = vld [vmem:[#allocation12 + $0x20] sm:$0xff]
    %v7196 = vld [vmem:[#allocation12 + $0x28] sm:$0xff]
    %v7197 = vld [vmem:[#allocation12 + $0x30] sm:$0xff]
    %v7198 = vld [vmem:[#allocation12 + $0x38] sm:$0xff]
    %v7199 = vld [vmem:[#allocation12 + $0x40] sm:$0xff]
    %v7200 = vld [vmem:[#allocation12 + $0x48] sm:$0xff]
    %v7201 = vld [vmem:[#allocation12 + $0x50] sm:$0xff]
    %v7202 = vld [vmem:[#allocation12 + $0x58] sm:$0xff]
    %v7203 = vld [vmem:[#allocation12 + $0x60] sm:$0xff]
    %v7204 = vld [vmem:[#allocation12 + $0x68] sm:$0xff]
    %v7205 = vld [vmem:[#allocation12 + $0x70] sm:$0xff]
    %v7206 = vld [vmem:[#allocation12 + $0x78] sm:$0xff]
    %7207 = vmatprep.subr.mxu0 0.0
    %7208 = vmatpush1.msra.mxu0 %v7191
    %7209 = vmatprep.subr.mxu0 0.0
    %7210 = vmatpush1.msra.mxu0 %v7192
    %7211 = vmatprep.subr.mxu0 0.0
    %7212 = vmatpush1.msra.mxu0 %v7193
    %7213 = vmatprep.subr.mxu0 0.0
    %7214 = vmatpush1.msra.mxu0 %v7194
    %7215 = vmatprep.subr.mxu0 0.0
    %7216 = vmatpush1.msra.mxu0 %v7195
    %7217 = vmatprep.subr.mxu0 0.0
    %7218 = vmatpush1.msra.mxu0 %v7196
    %7219 = vmatprep.subr.mxu0 0.0
    %7220 = vmatpush1.msra.mxu0 %v7197
    %7221 = vmatprep.subr.mxu0 0.0
    %7222 = vmatpush1.msra.mxu0 %v7198
    %7223 = vmatprep.subr.mxu0 0.0
    %7224 = vmatpush1.msra.mxu0 %v7199
    %7225 = vmatprep.subr.mxu0 0.0
    %7226 = vmatpush1.msra.mxu0 %v7200
    %7227 = vmatprep.subr.mxu0 0.0
    %7228 = vmatpush1.msra.mxu0 %v7201
    %7229 = vmatprep.subr.mxu0 0.0
    %7230 = vmatpush1.msra.mxu0 %v7202
    %7231 = vmatprep.subr.mxu0 0.0
    %7232 = vmatpush1.msra.mxu0 %v7203
    %7233 = vmatprep.subr.mxu0 0.0
    %7234 = vmatpush1.msra.mxu0 %v7204
    %7235 = vmatprep.subr.mxu0 0.0
    %7236 = vmatpush1.msra.mxu0 %v7205
    %7237 = vmatprep.subr.mxu0 0.0
    %7238 = vmatpush1.msra.mxu0 %v7206
    %7239 = vmatprep.subr.mxu0 0.0
    %7240 = vmatpush1.msra.mxu0 0.0
    %7241 = vmatprep.subr.mxu0 0.0
    %7242 = vmatpush1.msra.mxu0 0.0
    %7243 = vmatprep.subr.mxu0 0.0
    %7244 = vmatpush1.msra.mxu0 0.0
    %7245 = vmatprep.subr.mxu0 0.0
    %7246 = vmatpush1.msra.mxu0 0.0
    %7247 = vmatprep.subr.mxu0 0.0
    %7248 = vmatpush1.msra.mxu0 0.0
    %7249 = vmatprep.subr.mxu0 0.0
    %7250 = vmatpush1.msra.mxu0 0.0
    %7251 = vmatprep.subr.mxu0 0.0
    %7252 = vmatpush1.msra.mxu0 0.0
    %7253 = vmatprep.subr.mxu0 0.0
    %7254 = vmatpush1.msra.mxu0 0.0
    %7255 = vmatprep.subr.mxu0 0.0
    %7256 = vmatpush1.msra.mxu0 0.0
    %7257 = vmatprep.subr.mxu0 0.0
    %7258 = vmatpush1.msra.mxu0 0.0
    %7259 = vmatprep.subr.mxu0 0.0
    %7260 = vmatpush1.msra.mxu0 0.0
    %7261 = vmatprep.subr.mxu0 0.0
    %7262 = vmatpush1.msra.mxu0 0.0
    %7263 = vmatprep.subr.mxu0 0.0
    %7264 = vmatpush1.msra.mxu0 0.0
    %7265 = vmatprep.subr.mxu0 0.0
    %7266 = vmatpush1.msra.mxu0 0.0
    %7267 = vmatprep.subr.mxu0 0.0
    %7268 = vmatpush1.msra.mxu0 0.0
    %7269 = vmatprep.subr.mxu0 0.0
    %7270 = vmatpush1.msra.mxu0 0.0
    %7271 = vmatprep.mubr.f32.mxu0 0.0
    %7272 = vmatmul.mubr.f32.gmra.mrb[0].mxu0 %v7189
    %v7273 = vpop.f32.mrb[0].mxu0
    %v7274 = vadd.f32 0.0, %v7273
    %v7275 = vpop.f32.mrb[0].mxu0
    %7276 = vmatprep.mubr.f32.mxu0 0.0
    %7277 = vmatmul.mubr.f32.gmra.mrb[0].mxu0 %v7190
    %v7278 = vpop.f32.mrb[0].mxu0
    %v7279 = vadd.f32 0.0, %v7278
    %v7280 = vpop.f32.mrb[0].mxu0
    %7281 = vdwg.mxu0
    %v7282 = vadd.f32 %v7157, %v7274
    %v7283 = vadd.f32 %v7162, %v7279
    %v7284 = vtanh.pop %v7282
    %v7285 = vtanh.pop %v7283
    %v7286 = vsub.f32 1.0, %v7174
    %v7287 = vsub.f32 1.0, %v7176
    %v7288 = vmul.f32 %v7286, %v6396
    %v7289 = vmul.f32 %v7287, %v6397
    %v7290 = vmul.f32 %v7174, %v7284
    %v7291 = vmul.f32 %v7176, %v7285
    %v7292 = vadd.f32 %v7288, %v7290
    %v7293 = vadd.f32 %v7289, %v7291
    %7294 = vst [vmem:[#allocation2] sm:$0xff] %v7292
    %7295 = vst [vmem:[#allocation2 + $0x8] sm:$0xff] %v7293
    %v7296 = vld [vmem:[#allocation2] sm:$0xff]
    %v7297 = vld [vmem:[#allocation2 + $0x8] sm:$0xff]
    %v7298 = vld [vmem:[#allocation4] sm:$0xff]
    %v7299 = vld [vmem:[#allocation4 + $0x8] sm:$0xff]
    %v7301 = vsel %vm97, %v7298, 0
    %v7304 = vsel %vm97, %v7299, 0
    %7306 = vmatprep.subr.mxu0 0.0
    %7307 = vmatpush1.msra.mxu0 %v7296
    %7308 = vmatprep.subr.mxu0 0.0
    %7309 = vmatpush1.msra.mxu0 %v7297
    %7310 = vmatprep.subr.mxu0 0.0
    %7311 = vmatpush1.msra.mxu0 0.0
    %7312 = vmatprep.subr.mxu0 0.0
    %7313 = vmatpush1.msra.mxu0 0.0
    %7314 = vmatprep.subr.mxu0 0.0
    %7315 = vmatpush1.msra.mxu0 0.0
    %7316 = vmatprep.subr.mxu0 0.0
    %7317 = vmatpush1.msra.mxu0 0.0
    %7318 = vmatprep.subr.mxu0 0.0
    %7319 = vmatpush1.msra.mxu0 0.0
    %7320 = vmatprep.subr.mxu0 0.0
    %7321 = vmatpush1.msra.mxu0 0.0
    %7322 = vmatprep.subr.mxu0 0.0
    %7323 = vmatpush1.msra.mxu0 0.0
    %7324 = vmatprep.subr.mxu0 0.0
    %7325 = vmatpush1.msra.mxu0 0.0
    %7326 = vmatprep.subr.mxu0 0.0
    %7327 = vmatpush1.msra.mxu0 0.0
    %7328 = vmatprep.subr.mxu0 0.0
    %7329 = vmatpush1.msra.mxu0 0.0
    %7330 = vmatprep.subr.mxu0 0.0
    %7331 = vmatpush1.msra.mxu0 0.0
    %7332 = vmatprep.subr.mxu0 0.0
    %7333 = vmatpush1.msra.mxu0 0.0
    %7334 = vmatprep.subr.mxu0 0.0
    %7335 = vmatpush1.msra.mxu0 0.0
    %7336 = vmatprep.subr.mxu0 0.0
    %7337 = vmatpush1.msra.mxu0 0.0
    %7338 = vmatprep.subr.mxu0 0.0
    %7339 = vmatpush1.msra.mxu0 0.0
    %7340 = vmatprep.subr.mxu0 0.0
    %7341 = vmatpush1.msra.mxu0 0.0
    %7342 = vmatprep.subr.mxu0 0.0
    %7343 = vmatpush1.msra.mxu0 0.0
    %7344 = vmatprep.subr.mxu0 0.0
    %7345 = vmatpush1.msra.mxu0 0.0
    %7346 = vmatprep.subr.mxu0 0.0
    %7347 = vmatpush1.msra.mxu0 0.0
    %7348 = vmatprep.subr.mxu0 0.0
    %7349 = vmatpush1.msra.mxu0 0.0
    %7350 = vmatprep.subr.mxu0 0.0
    %7351 = vmatpush1.msra.mxu0 0.0
    %7352 = vmatprep.subr.mxu0 0.0
    %7353 = vmatpush1.msra.mxu0 0.0
    %7354 = vmatprep.subr.mxu0 0.0
    %7355 = vmatpush1.msra.mxu0 0.0
    %7356 = vmatprep.subr.mxu0 0.0
    %7357 = vmatpush1.msra.mxu0 0.0
    %7358 = vmatprep.subr.mxu0 0.0
    %7359 = vmatpush1.msra.mxu0 0.0
    %7360 = vmatprep.subr.mxu0 0.0
    %7361 = vmatpush1.msra.mxu0 0.0
    %7362 = vmatprep.subr.mxu0 0.0
    %7363 = vmatpush1.msra.mxu0 0.0
    %7364 = vmatprep.subr.mxu0 0.0
    %7365 = vmatpush1.msra.mxu0 0.0
    %7366 = vmatprep.subr.mxu0 0.0
    %7367 = vmatpush1.msra.mxu0 0.0
    %7368 = vmatprep.subr.mxu0 0.0
    %7369 = vmatpush1.msra.mxu0 0.0
    %7370 = vmatprep.mubr.f32.mxu0 0.0
    %7371 = vmatmul.mubr.f32.gmra.mrb[0].mxu0 %v7301
    %v7372 = vpop.f32.mrb[0].mxu0
    %v7373 = vadd.f32 0.0, %v7372
    %v7374 = vpop.f32.mrb[0].mxu0
    %7375 = vmatprep.mubr.f32.mxu0 0.0
    %7376 = vmatmul.mubr.f32.gmra.mrb[0].mxu0 %v7304
    %v7377 = vpop.f32.mrb[0].mxu0
    %v7378 = vadd.f32 0.0, %v7377
    %v7379 = vpop.f32.mrb[0].mxu0
    %7380 = vdwg.mxu0
    %7381 = vst [vmem:[#allocation3] sm:$0xff] %v7373
    %7382 = vst [vmem:[#allocation3 + $0x20] sm:$0xff] %v7378
    %v7383 = vld [vmem:[%s181] sm:$0xff]
    %v7384 = vld [vmem:[%s181 + $0x8] sm:$0xff]
    %v7386 = vsel %vm97, %v7383, 0
    %v7389 = vsel %vm97, %v7384, 0
    %7391 = vmatprep.subr.mxu0 0.0
    %7392 = vmatpush1.msra.mxu0 %v7296
    %7393 = vmatprep.subr.mxu0 0.0
    %7394 = vmatpush1.msra.mxu0 %v7297
    %7395 = vmatprep.subr.mxu0 0.0
    %7396 = vmatpush1.msra.mxu0 0.0
    %7397 = vmatprep.subr.mxu0 0.0
    %7398 = vmatpush1.msra.mxu0 0.0
    %7399 = vmatprep.subr.mxu0 0.0
    %7400 = vmatpush1.msra.mxu0 0.0
    %7401 = vmatprep.subr.mxu0 0.0
    %7402 = vmatpush1.msra.mxu0 0.0
    %7403 = vmatprep.subr.mxu0 0.0
    %7404 = vmatpush1.msra.mxu0 0.0
    %7405 = vmatprep.subr.mxu0 0.0
    %7406 = vmatpush1.msra.mxu0 0.0
    %7407 = vmatprep.subr.mxu0 0.0
    %7408 = vmatpush1.msra.mxu0 0.0
    %7409 = vmatprep.subr.mxu0 0.0
    %7410 = vmatpush1.msra.mxu0 0.0
    %7411 = vmatprep.subr.mxu0 0.0
    %7412 = vmatpush1.msra.mxu0 0.0
    %7413 = vmatprep.subr.mxu0 0.0
    %7414 = vmatpush1.msra.mxu0 0.0
    %7415 = vmatprep.subr.mxu0 0.0
    %7416 = vmatpush1.msra.mxu0 0.0
    %7417 = vmatprep.subr.mxu0 0.0
    %7418 = vmatpush1.msra.mxu0 0.0
    %7419 = vmatprep.subr.mxu0 0.0
    %7420 = vmatpush1.msra.mxu0 0.0
    %7421 = vmatprep.subr.mxu0 0.0
    %7422 = vmatpush1.msra.mxu0 0.0
    %7423 = vmatprep.subr.mxu0 0.0
    %7424 = vmatpush1.msra.mxu0 0.0
    %7425 = vmatprep.subr.mxu0 0.0
    %7426 = vmatpush1.msra.mxu0 0.0
    %7427 = vmatprep.subr.mxu0 0.0
    %7428 = vmatpush1.msra.mxu0 0.0
    %7429 = vmatprep.subr.mxu0 0.0
    %7430 = vmatpush1.msra.mxu0 0.0
    %7431 = vmatprep.subr.mxu0 0.0
    %7432 = vmatpush1.msra.mxu0 0.0
    %7433 = vmatprep.subr.mxu0 0.0
    %7434 = vmatpush1.msra.mxu0 0.0
    %7435 = vmatprep.subr.mxu0 0.0
    %7436 = vmatpush1.msra.mxu0 0.0
    %7437 = vmatprep.subr.mxu0 0.0
    %7438 = vmatpush1.msra.mxu0 0.0
    %7439 = vmatprep.subr.mxu0 0.0
    %7440 = vmatpush1.msra.mxu0 0.0
    %7441 = vmatprep.subr.mxu0 0.0
    %7442 = vmatpush1.msra.mxu0 0.0
    %7443 = vmatprep.subr.mxu0 0.0
    %7444 = vmatpush1.msra.mxu0 0.0
    %7445 = vmatprep.subr.mxu0 0.0
    %7446 = vmatpush1.msra.mxu0 0.0
    %7447 = vmatprep.subr.mxu0 0.0
    %7448 = vmatpush1.msra.mxu0 0.0
    %7449 = vmatprep.subr.mxu0 0.0
    %7450 = vmatpush1.msra.mxu0 0.0
    %7451 = vmatprep.subr.mxu0 0.0
    %7452 = vmatpush1.msra.mxu0 0.0
    %7453 = vmatprep.subr.mxu0 0.0
    %7454 = vmatpush1.msra.mxu0 0.0
    %7455 = vmatprep.mubr.f32.mxu0 0.0
    %7456 = vmatmul.mubr.f32.gmra.mrb[0].mxu0 %v7386
    %v7457 = vpop.f32.mrb[0].mxu0
    %v7458 = vadd.f32 0.0, %v7457
    %v7459 = vpop.f32.mrb[0].mxu0
    %7460 = vmatprep.mubr.f32.mxu0 0.0
    %7461 = vmatmul.mubr.f32.gmra.mrb[0].mxu0 %v7389
    %v7462 = vpop.f32.mrb[0].mxu0
    %v7463 = vadd.f32 0.0, %v7462
    %v7464 = vpop.f32.mrb[0].mxu0
    %7465 = vdwg.mxu0
    %7466 = vst [vmem:[#allocation3 + $0x8] sm:$0xff] %v7458
    %7467 = vst [vmem:[#allocation3 + $0x28] sm:$0xff] %v7463
    %v7468 = vld [vmem:[%s267] sm:$0xff]
    %v7469 = vld [vmem:[%s267 + $0x8] sm:$0xff]
    %v7471 = vsel %vm97, %v7468, 0
    %v7474 = vsel %vm97, %v7469, 0
    %7476 = vmatprep.subr.mxu0 0.0
    %7477 = vmatpush1.msra.mxu0 %v7296
    %7478 = vmatprep.subr.mxu0 0.0
    %7479 = vmatpush1.msra.mxu0 %v7297
    %7480 = vmatprep.subr.mxu0 0.0
    %7481 = vmatpush1.msra.mxu0 0.0
    %7482 = vmatprep.subr.mxu0 0.0
    %7483 = vmatpush1.msra.mxu0 0.0
    %7484 = vmatprep.subr.mxu0 0.0
    %7485 = vmatpush1.msra.mxu0 0.0
    %7486 = vmatprep.subr.mxu0 0.0
    %7487 = vmatpush1.msra.mxu0 0.0
    %7488 = vmatprep.subr.mxu0 0.0
    %7489 = vmatpush1.msra.mxu0 0.0
    %7490 = vmatprep.subr.mxu0 0.0
    %7491 = vmatpush1.msra.mxu0 0.0
    %7492 = vmatprep.subr.mxu0 0.0
    %7493 = vmatpush1.msra.mxu0 0.0
    %7494 = vmatprep.subr.mxu0 0.0
    %7495 = vmatpush1.msra.mxu0 0.0
    %7496 = vmatprep.subr.mxu0 0.0
    %7497 = vmatpush1.msra.mxu0 0.0
    %7498 = vmatprep.subr.mxu0 0.0
    %7499 = vmatpush1.msra.mxu0 0.0
    %7500 = vmatprep.subr.mxu0 0.0
    %7501 = vmatpush1.msra.mxu0 0.0
    %7502 = vmatprep.subr.mxu0 0.0
    %7503 = vmatpush1.msra.mxu0 0.0
    %7504 = vmatprep.subr.mxu0 0.0
    %7505 = vmatpush1.msra.mxu0 0.0
    %7506 = vmatprep.subr.mxu0 0.0
    %7507 = vmatpush1.msra.mxu0 0.0
    %7508 = vmatprep.subr.mxu0 0.0
    %7509 = vmatpush1.msra.mxu0 0.0
    %7510 = vmatprep.subr.mxu0 0.0
    %7511 = vmatpush1.msra.mxu0 0.0
    %7512 = vmatprep.subr.mxu0 0.0
    %7513 = vmatpush1.msra.mxu0 0.0
    %7514 = vmatprep.subr.mxu0 0.0
    %7515 = vmatpush1.msra.mxu0 0.0
    %7516 = vmatprep.subr.mxu0 0.0
    %7517 = vmatpush1.msra.mxu0 0.0
    %7518 = vmatprep.subr.mxu0 0.0
    %7519 = vmatpush1.msra.mxu0 0.0
    %7520 = vmatprep.subr.mxu0 0.0
    %7521 = vmatpush1.msra.mxu0 0.0
    %7522 = vmatprep.subr.mxu0 0.0
    %7523 = vmatpush1.msra.mxu0 0.0
    %7524 = vmatprep.subr.mxu0 0.0
    %7525 = vmatpush1.msra.mxu0 0.0
    %7526 = vmatprep.subr.mxu0 0.0
    %7527 = vmatpush1.msra.mxu0 0.0
    %7528 = vmatprep.subr.mxu0 0.0
    %7529 = vmatpush1.msra.mxu0 0.0
    %7530 = vmatprep.subr.mxu0 0.0
    %7531 = vmatpush1.msra.mxu0 0.0
    %7532 = vmatprep.subr.mxu0 0.0
    %7533 = vmatpush1.msra.mxu0 0.0
    %7534 = vmatprep.subr.mxu0 0.0
    %7535 = vmatpush1.msra.mxu0 0.0
    %7536 = vmatprep.subr.mxu0 0.0
    %7537 = vmatpush1.msra.mxu0 0.0
    %7538 = vmatprep.subr.mxu0 0.0
    %7539 = vmatpush1.msra.mxu0 0.0
    %7540 = vmatprep.mubr.f32.mxu0 0.0
    %7541 = vmatmul.mubr.f32.gmra.mrb[0].mxu0 %v7471
    %v7542 = vpop.f32.mrb[0].mxu0
    %v7543 = vadd.f32 0.0, %v7542
    %v7544 = vpop.f32.mrb[0].mxu0
    %7545 = vmatprep.mubr.f32.mxu0 0.0
    %7546 = vmatmul.mubr.f32.gmra.mrb[0].mxu0 %v7474
    %v7547 = vpop.f32.mrb[0].mxu0
    %v7548 = vadd.f32 0.0, %v7547
    %v7549 = vpop.f32.mrb[0].mxu0
    %7550 = vdwg.mxu0
    %7551 = vst [vmem:[#allocation3 + $0x10] sm:$0xff] %v7543
    %7552 = vst [vmem:[#allocation3 + $0x30] sm:$0xff] %v7548
    %7553 = vst [vmem:[#allocation3 + $0x18] sm:$0xff] %v7296
    %7554 = vst [vmem:[#allocation3 + $0x38] sm:$0xff] %v7297
    %v7555 = vld [vmem:[#allocation3] sm:$0xff]
    %v7556 = vld [vmem:[#allocation3 + $0x8] sm:$0xff]
    %v7557 = vld [vmem:[#allocation3 + $0x10] sm:$0xff]
    %v7558 = vld [vmem:[#allocation3 + $0x18] sm:$0xff]
    %v7559 = vld [vmem:[#allocation3 + $0x20] sm:$0xff]
    %v7560 = vld [vmem:[#allocation3 + $0x28] sm:$0xff]
    %v7561 = vld [vmem:[#allocation3 + $0x30] sm:$0xff]
    %v7562 = vld [vmem:[#allocation3 + $0x38] sm:$0xff]
    %v7563 = vld [vmem:[#allocation10] sm:$0xff]
    %v7564 = vld [vmem:[#allocation10 + $0x8] sm:$0xff]
    %v7565 = vld [vmem:[#allocation10 + $0x10] sm:$0xff]
    %v7566 = vld [vmem:[#allocation10 + $0x18] sm:$0xff]
    %v7567 = vld [vmem:[#allocation10 + $0x20] sm:$0xff]
    %v7568 = vld [vmem:[#allocation10 + $0x28] sm:$0xff]
    %v7569 = vld [vmem:[#allocation10 + $0x30] sm:$0xff]
    %v7570 = vld [vmem:[#allocation10 + $0x38] sm:$0xff]
    %v7571 = vld [vmem:[#allocation10 + $0x40] sm:$0xff]
    %v7572 = vld [vmem:[#allocation10 + $0x48] sm:$0xff]
    %v7573 = vld [vmem:[#allocation10 + $0x50] sm:$0xff]
    %v7574 = vld [vmem:[#allocation10 + $0x58] sm:$0xff]
    %v7575 = vld [vmem:[#allocation10 + $0x60] sm:$0xff]
    %v7576 = vld [vmem:[#allocation10 + $0x68] sm:$0xff]
    %v7577 = vld [vmem:[#allocation10 + $0x70] sm:$0xff]
    %v7578 = vld [vmem:[#allocation10 + $0x78] sm:$0xff]
    %v7579 = vld [vmem:[#allocation10 + $0x80] sm:$0xff]
    %v7580 = vld [vmem:[#allocation10 + $0x88] sm:$0xff]
    %v7581 = vld [vmem:[#allocation10 + $0x90] sm:$0xff]
    %v7582 = vld [vmem:[#allocation10 + $0x98] sm:$0xff]
    %v7583 = vld [vmem:[#allocation10 + $0xa0] sm:$0xff]
    %v7584 = vld [vmem:[#allocation10 + $0xa8] sm:$0xff]
    %v7585 = vld [vmem:[#allocation10 + $0xb0] sm:$0xff]
    %v7586 = vld [vmem:[#allocation10 + $0xb8] sm:$0xff]
    %v7587 = vld [vmem:[#allocation10 + $0xc0] sm:$0xff]
    %v7588 = vld [vmem:[#allocation10 + $0xc8] sm:$0xff]
    %v7589 = vld [vmem:[#allocation10 + $0xd0] sm:$0xff]
    %v7590 = vld [vmem:[#allocation10 + $0xd8] sm:$0xff]
    %v7591 = vld [vmem:[#allocation10 + $0xe0] sm:$0xff]
    %v7592 = vld [vmem:[#allocation10 + $0xe8] sm:$0xff]
    %v7593 = vld [vmem:[#allocation10 + $0xf0] sm:$0xff]
    %v7594 = vld [vmem:[#allocation10 + $0xf8] sm:$0xff]
    %v7595 = vld [vmem:[#allocation10 + $0x100] sm:$0xff]
    %v7596 = vld [vmem:[#allocation10 + $0x108] sm:$0xff]
    %v7597 = vld [vmem:[#allocation10 + $0x110] sm:$0xff]
    %v7598 = vld [vmem:[#allocation10 + $0x118] sm:$0xff]
    %v7599 = vld [vmem:[#allocation10 + $0x120] sm:$0xff]
    %v7600 = vld [vmem:[#allocation10 + $0x128] sm:$0xff]
    %v7601 = vld [vmem:[#allocation10 + $0x130] sm:$0xff]
    %v7602 = vld [vmem:[#allocation10 + $0x138] sm:$0xff]
    %v7603 = vld [vmem:[#allocation10 + $0x140] sm:$0xff]
    %v7604 = vld [vmem:[#allocation10 + $0x148] sm:$0xff]
    %v7605 = vld [vmem:[#allocation10 + $0x150] sm:$0xff]
    %v7606 = vld [vmem:[#allocation10 + $0x158] sm:$0xff]
    %v7607 = vld [vmem:[#allocation10 + $0x160] sm:$0xff]
    %v7608 = vld [vmem:[#allocation10 + $0x168] sm:$0xff]
    %v7609 = vld [vmem:[#allocation10 + $0x170] sm:$0xff]
    %v7610 = vld [vmem:[#allocation10 + $0x178] sm:$0xff]
    %v7611 = vld [vmem:[#allocation10 + $0x180] sm:$0xff]
    %v7612 = vld [vmem:[#allocation10 + $0x188] sm:$0xff]
    %v7613 = vld [vmem:[#allocation10 + $0x190] sm:$0xff]
    %v7614 = vld [vmem:[#allocation10 + $0x198] sm:$0xff]
    %v7615 = vld [vmem:[#allocation10 + $0x1a0] sm:$0xff]
    %v7616 = vld [vmem:[#allocation10 + $0x1a8] sm:$0xff]
    %v7617 = vld [vmem:[#allocation10 + $0x1b0] sm:$0xff]
    %v7618 = vld [vmem:[#allocation10 + $0x1b8] sm:$0xff]
    %v7619 = vld [vmem:[#allocation10 + $0x1c0] sm:$0xff]
    %v7620 = vld [vmem:[#allocation10 + $0x1c8] sm:$0xff]
    %v7621 = vld [vmem:[#allocation10 + $0x1d0] sm:$0xff]
    %v7622 = vld [vmem:[#allocation10 + $0x1d8] sm:$0xff]
    %v7623 = vld [vmem:[#allocation10 + $0x1e0] sm:$0xff]
    %v7624 = vld [vmem:[#allocation10 + $0x1e8] sm:$0xff]
    %v7625 = vld [vmem:[#allocation10 + $0x1f0] sm:$0xff]
    %v7626 = vld [vmem:[#allocation10 + $0x1f8] sm:$0xff]
    %v7627 = vld [vmem:[#allocation10 + $0x200] sm:$0xff]
    %v7628 = vld [vmem:[#allocation10 + $0x208] sm:$0xff]
    %v7629 = vld [vmem:[#allocation10 + $0x210] sm:$0xff]
    %v7630 = vld [vmem:[#allocation10 + $0x218] sm:$0xff]
    %v7631 = vld [vmem:[#allocation10 + $0x220] sm:$0xff]
    %v7632 = vld [vmem:[#allocation10 + $0x228] sm:$0xff]
    %v7633 = vld [vmem:[#allocation10 + $0x230] sm:$0xff]
    %v7634 = vld [vmem:[#allocation10 + $0x238] sm:$0xff]
    %v7635 = vld [vmem:[#allocation10 + $0x240] sm:$0xff]
    %v7636 = vld [vmem:[#allocation10 + $0x248] sm:$0xff]
    %v7637 = vld [vmem:[#allocation10 + $0x250] sm:$0xff]
    %v7638 = vld [vmem:[#allocation10 + $0x258] sm:$0xff]
    %v7639 = vld [vmem:[#allocation10 + $0x260] sm:$0xff]
    %v7640 = vld [vmem:[#allocation10 + $0x268] sm:$0xff]
    %v7641 = vld [vmem:[#allocation10 + $0x270] sm:$0xff]
    %v7642 = vld [vmem:[#allocation10 + $0x278] sm:$0xff]
    %v7643 = vld [vmem:[#allocation10 + $0x280] sm:$0xff]
    %v7644 = vld [vmem:[#allocation10 + $0x288] sm:$0xff]
    %v7645 = vld [vmem:[#allocation10 + $0x290] sm:$0xff]
    %v7646 = vld [vmem:[#allocation10 + $0x298] sm:$0xff]
    %v7647 = vld [vmem:[#allocation10 + $0x2a0] sm:$0xff]
    %v7648 = vld [vmem:[#allocation10 + $0x2a8] sm:$0xff]
    %v7649 = vld [vmem:[#allocation10 + $0x2b0] sm:$0xff]
    %v7650 = vld [vmem:[#allocation10 + $0x2b8] sm:$0xff]
    %v7651 = vld [vmem:[#allocation10 + $0x2c0] sm:$0xff]
    %v7652 = vld [vmem:[#allocation10 + $0x2c8] sm:$0xff]
    %v7653 = vld [vmem:[#allocation10 + $0x2d0] sm:$0xff]
    %v7654 = vld [vmem:[#allocation10 + $0x2d8] sm:$0xff]
    %v7655 = vld [vmem:[#allocation10 + $0x2e0] sm:$0xff]
    %v7656 = vld [vmem:[#allocation10 + $0x2e8] sm:$0xff]
    %v7657 = vld [vmem:[#allocation10 + $0x2f0] sm:$0xff]
    %v7658 = vld [vmem:[#allocation10 + $0x2f8] sm:$0xff]
    %v7659 = vld [vmem:[#allocation10 + $0x300] sm:$0xff]
    %v7660 = vld [vmem:[#allocation10 + $0x308] sm:$0xff]
    %v7661 = vld [vmem:[#allocation10 + $0x310] sm:$0xff]
    %v7662 = vld [vmem:[#allocation10 + $0x318] sm:$0xff]
    %v7663 = vld [vmem:[#allocation10 + $0x320] sm:$0xff]
    %v7664 = vld [vmem:[#allocation10 + $0x328] sm:$0xff]
    %v7665 = vld [vmem:[#allocation10 + $0x330] sm:$0xff]
    %v7666 = vld [vmem:[#allocation10 + $0x338] sm:$0xff]
    %v7667 = vld [vmem:[#allocation10 + $0x340] sm:$0xff]
    %v7668 = vld [vmem:[#allocation10 + $0x348] sm:$0xff]
    %v7669 = vld [vmem:[#allocation10 + $0x350] sm:$0xff]
    %v7670 = vld [vmem:[#allocation10 + $0x358] sm:$0xff]
    %v7671 = vld [vmem:[#allocation10 + $0x360] sm:$0xff]
    %v7672 = vld [vmem:[#allocation10 + $0x368] sm:$0xff]
    %v7673 = vld [vmem:[#allocation10 + $0x370] sm:$0xff]
    %v7674 = vld [vmem:[#allocation10 + $0x378] sm:$0xff]
    %v7675 = vld [vmem:[#allocation10 + $0x380] sm:$0xff]
    %v7676 = vld [vmem:[#allocation10 + $0x388] sm:$0xff]
    %v7677 = vld [vmem:[#allocation10 + $0x390] sm:$0xff]
    %v7678 = vld [vmem:[#allocation10 + $0x398] sm:$0xff]
    %v7679 = vld [vmem:[#allocation10 + $0x3a0] sm:$0xff]
    %v7680 = vld [vmem:[#allocation10 + $0x3a8] sm:$0xff]
    %v7681 = vld [vmem:[#allocation10 + $0x3b0] sm:$0xff]
    %v7682 = vld [vmem:[#allocation10 + $0x3b8] sm:$0xff]
    %v7683 = vld [vmem:[#allocation10 + $0x3c0] sm:$0xff]
    %v7684 = vld [vmem:[#allocation10 + $0x3c8] sm:$0xff]
    %v7685 = vld [vmem:[#allocation10 + $0x3d0] sm:$0xff]
    %v7686 = vld [vmem:[#allocation10 + $0x3d8] sm:$0xff]
    %v7687 = vld [vmem:[#allocation10 + $0x3e0] sm:$0xff]
    %v7688 = vld [vmem:[#allocation10 + $0x3e8] sm:$0xff]
    %v7689 = vld [vmem:[#allocation10 + $0x3f0] sm:$0xff]
    %v7690 = vld [vmem:[#allocation10 + $0x3f8] sm:$0xff]
    %v7691 = vld [vmem:[#allocation10 + $0x400] sm:$0xff]
    %v7692 = vld [vmem:[#allocation10 + $0x408] sm:$0xff]
    %v7693 = vld [vmem:[#allocation10 + $0x410] sm:$0xff]
    %v7694 = vld [vmem:[#allocation10 + $0x418] sm:$0xff]
    %v7695 = vld [vmem:[#allocation10 + $0x420] sm:$0xff]
    %v7696 = vld [vmem:[#allocation10 + $0x428] sm:$0xff]
    %v7697 = vld [vmem:[#allocation10 + $0x430] sm:$0xff]
    %v7698 = vld [vmem:[#allocation10 + $0x438] sm:$0xff]
    %v7699 = vld [vmem:[#allocation10 + $0x440] sm:$0xff]
    %v7700 = vld [vmem:[#allocation10 + $0x448] sm:$0xff]
    %v7701 = vld [vmem:[#allocation10 + $0x450] sm:$0xff]
    %v7702 = vld [vmem:[#allocation10 + $0x458] sm:$0xff]
    %v7703 = vld [vmem:[#allocation10 + $0x460] sm:$0xff]
    %v7704 = vld [vmem:[#allocation10 + $0x468] sm:$0xff]
    %v7705 = vld [vmem:[#allocation10 + $0x470] sm:$0xff]
    %v7706 = vld [vmem:[#allocation10 + $0x478] sm:$0xff]
    %v7707 = vld [vmem:[#allocation10 + $0x480] sm:$0xff]
    %v7708 = vld [vmem:[#allocation10 + $0x488] sm:$0xff]
    %v7709 = vld [vmem:[#allocation10 + $0x490] sm:$0xff]
    %v7710 = vld [vmem:[#allocation10 + $0x498] sm:$0xff]
    %v7711 = vld [vmem:[#allocation10 + $0x4a0] sm:$0xff]
    %v7712 = vld [vmem:[#allocation10 + $0x4a8] sm:$0xff]
    %v7713 = vld [vmem:[#allocation10 + $0x4b0] sm:$0xff]
    %v7714 = vld [vmem:[#allocation10 + $0x4b8] sm:$0xff]
    %v7715 = vld [vmem:[#allocation10 + $0x4c0] sm:$0xff]
    %v7716 = vld [vmem:[#allocation10 + $0x4c8] sm:$0xff]
    %v7717 = vld [vmem:[#allocation10 + $0x4d0] sm:$0xff]
    %v7718 = vld [vmem:[#allocation10 + $0x4d8] sm:$0xff]
    %v7719 = vld [vmem:[#allocation10 + $0x4e0] sm:$0xff]
    %v7720 = vld [vmem:[#allocation10 + $0x4e8] sm:$0xff]
    %v7721 = vld [vmem:[#allocation10 + $0x4f0] sm:$0xff]
    %v7722 = vld [vmem:[#allocation10 + $0x4f8] sm:$0xff]
    %v7723 = vld [vmem:[#allocation10 + $0x500] sm:$0xff]
    %v7724 = vld [vmem:[#allocation10 + $0x508] sm:$0xff]
    %v7725 = vld [vmem:[#allocation10 + $0x510] sm:$0xff]
    %v7726 = vld [vmem:[#allocation10 + $0x518] sm:$0xff]
    %v7727 = vld [vmem:[#allocation10 + $0x520] sm:$0xff]
    %v7728 = vld [vmem:[#allocation10 + $0x528] sm:$0xff]
    %v7729 = vld [vmem:[#allocation10 + $0x530] sm:$0xff]
    %v7730 = vld [vmem:[#allocation10 + $0x538] sm:$0xff]
    %v7731 = vld [vmem:[#allocation10 + $0x540] sm:$0xff]
    %v7732 = vld [vmem:[#allocation10 + $0x548] sm:$0xff]
    %v7733 = vld [vmem:[#allocation10 + $0x550] sm:$0xff]
    %v7734 = vld [vmem:[#allocation10 + $0x558] sm:$0xff]
    %v7735 = vld [vmem:[#allocation10 + $0x560] sm:$0xff]
    %v7736 = vld [vmem:[#allocation10 + $0x568] sm:$0xff]
    %v7737 = vld [vmem:[#allocation10 + $0x570] sm:$0xff]
    %v7738 = vld [vmem:[#allocation10 + $0x578] sm:$0xff]
    %v7739 = vld [vmem:[#allocation10 + $0x580] sm:$0xff]
    %v7740 = vld [vmem:[#allocation10 + $0x588] sm:$0xff]
    %v7741 = vld [vmem:[#allocation10 + $0x590] sm:$0xff]
    %v7742 = vld [vmem:[#allocation10 + $0x598] sm:$0xff]
    %v7743 = vld [vmem:[#allocation10 + $0x5a0] sm:$0xff]
    %v7744 = vld [vmem:[#allocation10 + $0x5a8] sm:$0xff]
    %v7745 = vld [vmem:[#allocation10 + $0x5b0] sm:$0xff]
    %v7746 = vld [vmem:[#allocation10 + $0x5b8] sm:$0xff]
    %v7747 = vld [vmem:[#allocation10 + $0x5c0] sm:$0xff]
    %v7748 = vld [vmem:[#allocation10 + $0x5c8] sm:$0xff]
    %v7749 = vld [vmem:[#allocation10 + $0x5d0] sm:$0xff]
    %v7750 = vld [vmem:[#allocation10 + $0x5d8] sm:$0xff]
    %v7751 = vld [vmem:[#allocation10 + $0x5e0] sm:$0xff]
    %v7752 = vld [vmem:[#allocation10 + $0x5e8] sm:$0xff]
    %v7753 = vld [vmem:[#allocation10 + $0x5f0] sm:$0xff]
    %v7754 = vld [vmem:[#allocation10 + $0x5f8] sm:$0xff]
    %v7755 = vld [vmem:[#allocation9] sm:$0xff]
    %v7756 = vld [vmem:[#allocation9 + $0x8] sm:$0xff]
    %v7757 = vld [vmem:[#allocation9 + $0x10] sm:$0xff]
    %v7758 = vld [vmem:[#allocation9 + $0x18] sm:$0xff]
    %v7759 = vld [vmem:[#allocation9 + $0x20] sm:$0xff]
    %v7760 = vld [vmem:[#allocation9 + $0x28] sm:$0xff]
    %7761 = vmatprep.subr.mxu0 %v7564
    %7762 = vmatpush1.msra.mxu0 %v7563
    %7763 = vmatprep.subr.mxu0 %v7567
    %7764 = vmatpush1.msra.mxu0 %v7566
    %7765 = vmatprep.subr.mxu0 %v7570
    %7766 = vmatpush1.msra.mxu0 %v7569
    %7767 = vmatprep.subr.mxu0 %v7573
    %7768 = vmatpush1.msra.mxu0 %v7572
    %7769 = vmatprep.subr.mxu0 %v7576
    %7770 = vmatpush1.msra.mxu0 %v7575
    %7771 = vmatprep.subr.mxu0 %v7579
    %7772 = vmatpush1.msra.mxu0 %v7578
    %7773 = vmatprep.subr.mxu0 %v7582
    %7774 = vmatpush1.msra.mxu0 %v7581
    %7775 = vmatprep.subr.mxu0 %v7585
    %7776 = vmatpush1.msra.mxu0 %v7584
    %7777 = vmatprep.subr.mxu0 %v7588
    %7778 = vmatpush1.msra.mxu0 %v7587
    %7779 = vmatprep.subr.mxu0 %v7591
    %7780 = vmatpush1.msra.mxu0 %v7590
    %7781 = vmatprep.subr.mxu0 %v7594
    %7782 = vmatpush1.msra.mxu0 %v7593
    %7783 = vmatprep.subr.mxu0 %v7597
    %7784 = vmatpush1.msra.mxu0 %v7596
    %7785 = vmatprep.subr.mxu0 %v7600
    %7786 = vmatpush1.msra.mxu0 %v7599
    %7787 = vmatprep.subr.mxu0 %v7603
    %7788 = vmatpush1.msra.mxu0 %v7602
    %7789 = vmatprep.subr.mxu0 %v7606
    %7790 = vmatpush1.msra.mxu0 %v7605
    %7791 = vmatprep.subr.mxu0 %v7609
    %7792 = vmatpush1.msra.mxu0 %v7608
    %7793 = vmatprep.subr.mxu0 %v7612
    %7794 = vmatpush1.msra.mxu0 %v7611
    %7795 = vmatprep.subr.mxu0 %v7615
    %7796 = vmatpush1.msra.mxu0 %v7614
    %7797 = vmatprep.subr.mxu0 %v7618
    %7798 = vmatpush1.msra.mxu0 %v7617
    %7799 = vmatprep.subr.mxu0 %v7621
    %7800 = vmatpush1.msra.mxu0 %v7620
    %7801 = vmatprep.subr.mxu0 %v7624
    %7802 = vmatpush1.msra.mxu0 %v7623
    %7803 = vmatprep.subr.mxu0 %v7627
    %7804 = vmatpush1.msra.mxu0 %v7626
    %7805 = vmatprep.subr.mxu0 %v7630
    %7806 = vmatpush1.msra.mxu0 %v7629
    %7807 = vmatprep.subr.mxu0 %v7633
    %7808 = vmatpush1.msra.mxu0 %v7632
    %7809 = vmatprep.subr.mxu0 %v7636
    %7810 = vmatpush1.msra.mxu0 %v7635
    %7811 = vmatprep.subr.mxu0 %v7639
    %7812 = vmatpush1.msra.mxu0 %v7638
    %7813 = vmatprep.subr.mxu0 %v7642
    %7814 = vmatpush1.msra.mxu0 %v7641
    %7815 = vmatprep.subr.mxu0 %v7645
    %7816 = vmatpush1.msra.mxu0 %v7644
    %7817 = vmatprep.subr.mxu0 %v7648
    %7818 = vmatpush1.msra.mxu0 %v7647
    %7819 = vmatprep.subr.mxu0 %v7651
    %7820 = vmatpush1.msra.mxu0 %v7650
    %7821 = vmatprep.subr.mxu0 %v7654
    %7822 = vmatpush1.msra.mxu0 %v7653
    %7823 = vmatprep.subr.mxu0 %v7657
    %7824 = vmatpush1.msra.mxu0 %v7656
    %7825 = vmatprep.mubr.f32.mxu0 %v7556
    %7826 = vmatmul.mubr.f32.gmra.mrb[0].mxu0 %v7555
    %v7827 = vpop.f32.mrb[0].mxu0
    %v7828 = vadd.f32 %v7755, %v7827
    %v7829 = vpop.f32.mrb[0].mxu0
    %v7830 = vadd.f32 %v7756, %v7829
    %7831 = vmatprep.mubr.f32.mxu0 %v7560
    %7832 = vmatmul.mubr.f32.gmra.mrb[0].mxu0 %v7559
    %v7833 = vpop.f32.mrb[0].mxu0
    %v7834 = vadd.f32 %v7758, %v7833
    %v7835 = vpop.f32.mrb[0].mxu0
    %v7836 = vadd.f32 %v7759, %v7835
    %7837 = vdwg.mxu0
    %7838 = vmatprep.subr.mxu0 %v7660
    %7839 = vmatpush1.msra.mxu0 %v7659
    %7840 = vmatprep.subr.mxu0 %v7663
    %7841 = vmatpush1.msra.mxu0 %v7662
    %7842 = vmatprep.subr.mxu0 %v7666
    %7843 = vmatpush1.msra.mxu0 %v7665
    %7844 = vmatprep.subr.mxu0 %v7669
    %7845 = vmatpush1.msra.mxu0 %v7668
    %7846 = vmatprep.subr.mxu0 %v7672
    %7847 = vmatpush1.msra.mxu0 %v7671
    %7848 = vmatprep.subr.mxu0 %v7675
    %7849 = vmatpush1.msra.mxu0 %v7674
    %7850 = vmatprep.subr.mxu0 %v7678
    %7851 = vmatpush1.msra.mxu0 %v7677
    %7852 = vmatprep.subr.mxu0 %v7681
    %7853 = vmatpush1.msra.mxu0 %v7680
    %7854 = vmatprep.subr.mxu0 %v7684
    %7855 = vmatpush1.msra.mxu0 %v7683
    %7856 = vmatprep.subr.mxu0 %v7687
    %7857 = vmatpush1.msra.mxu0 %v7686
    %7858 = vmatprep.subr.mxu0 %v7690
    %7859 = vmatpush1.msra.mxu0 %v7689
    %7860 = vmatprep.subr.mxu0 %v7693
    %7861 = vmatpush1.msra.mxu0 %v7692
    %7862 = vmatprep.subr.mxu0 %v7696
    %7863 = vmatpush1.msra.mxu0 %v7695
    %7864 = vmatprep.subr.mxu0 %v7699
    %7865 = vmatpush1.msra.mxu0 %v7698
    %7866 = vmatprep.subr.mxu0 %v7702
    %7867 = vmatpush1.msra.mxu0 %v7701
    %7868 = vmatprep.subr.mxu0 %v7705
    %7869 = vmatpush1.msra.mxu0 %v7704
    %7870 = vmatprep.subr.mxu0 %v7708
    %7871 = vmatpush1.msra.mxu0 %v7707
    %7872 = vmatprep.subr.mxu0 %v7711
    %7873 = vmatpush1.msra.mxu0 %v7710
    %7874 = vmatprep.subr.mxu0 %v7714
    %7875 = vmatpush1.msra.mxu0 %v7713
    %7876 = vmatprep.subr.mxu0 %v7717
    %7877 = vmatpush1.msra.mxu0 %v7716
    %7878 = vmatprep.subr.mxu0 %v7720
    %7879 = vmatpush1.msra.mxu0 %v7719
    %7880 = vmatprep.subr.mxu0 %v7723
    %7881 = vmatpush1.msra.mxu0 %v7722
    %7882 = vmatprep.subr.mxu0 %v7726
    %7883 = vmatpush1.msra.mxu0 %v7725
    %7884 = vmatprep.subr.mxu0 %v7729
    %7885 = vmatpush1.msra.mxu0 %v7728
    %7886 = vmatprep.subr.mxu0 %v7732
    %7887 = vmatpush1.msra.mxu0 %v7731
    %7888 = vmatprep.subr.mxu0 %v7735
    %7889 = vmatpush1.msra.mxu0 %v7734
    %7890 = vmatprep.subr.mxu0 %v7738
    %7891 = vmatpush1.msra.mxu0 %v7737
    %7892 = vmatprep.subr.mxu0 %v7741
    %7893 = vmatpush1.msra.mxu0 %v7740
    %7894 = vmatprep.subr.mxu0 %v7744
    %7895 = vmatpush1.msra.mxu0 %v7743
    %7896 = vmatprep.subr.mxu0 %v7747
    %7897 = vmatpush1.msra.mxu0 %v7746
    %7898 = vmatprep.subr.mxu0 %v7750
    %7899 = vmatpush1.msra.mxu0 %v7749
    %7900 = vmatprep.subr.mxu0 %v7753
    %7901 = vmatpush1.msra.mxu0 %v7752
    %7902 = vmatprep.mubr.f32.mxu0 %v7558
    %7903 = vmatmul.mubr.f32.gmra.mrb[0].mxu0 %v7557
    %v7904 = vpop.f32.mrb[0].mxu0
    %v7905 = vadd.f32 %v7828, %v7904
    %v7906 = vpop.f32.mrb[0].mxu0
    %v7907 = vadd.f32 %v7830, %v7906
    %7908 = vmatprep.mubr.f32.mxu0 %v7562
    %7909 = vmatmul.mubr.f32.gmra.mrb[0].mxu0 %v7561
    %v7910 = vpop.f32.mrb[0].mxu0
    %v7911 = vadd.f32 %v7834, %v7910
    %v7912 = vpop.f32.mrb[0].mxu0
    %v7913 = vadd.f32 %v7836, %v7912
    %7914 = vdwg.mxu0
    %7915 = vmatprep.subr.mxu0 0.0
    %7916 = vmatpush1.msra.mxu0 %v7565
    %7917 = vmatprep.subr.mxu0 0.0
    %7918 = vmatpush1.msra.mxu0 %v7568
    %7919 = vmatprep.subr.mxu0 0.0
    %7920 = vmatpush1.msra.mxu0 %v7571
    %7921 = vmatprep.subr.mxu0 0.0
    %7922 = vmatpush1.msra.mxu0 %v7574
    %7923 = vmatprep.subr.mxu0 0.0
    %7924 = vmatpush1.msra.mxu0 %v7577
    %7925 = vmatprep.subr.mxu0 0.0
    %7926 = vmatpush1.msra.mxu0 %v7580
    %7927 = vmatprep.subr.mxu0 0.0
    %7928 = vmatpush1.msra.mxu0 %v7583
    %7929 = vmatprep.subr.mxu0 0.0
    %7930 = vmatpush1.msra.mxu0 %v7586
    %7931 = vmatprep.subr.mxu0 0.0
    %7932 = vmatpush1.msra.mxu0 %v7589
    %7933 = vmatprep.subr.mxu0 0.0
    %7934 = vmatpush1.msra.mxu0 %v7592
    %7935 = vmatprep.subr.mxu0 0.0
    %7936 = vmatpush1.msra.mxu0 %v7595
    %7937 = vmatprep.subr.mxu0 0.0
    %7938 = vmatpush1.msra.mxu0 %v7598
    %7939 = vmatprep.subr.mxu0 0.0
    %7940 = vmatpush1.msra.mxu0 %v7601
    %7941 = vmatprep.subr.mxu0 0.0
    %7942 = vmatpush1.msra.mxu0 %v7604
    %7943 = vmatprep.subr.mxu0 0.0
    %7944 = vmatpush1.msra.mxu0 %v7607
    %7945 = vmatprep.subr.mxu0 0.0
    %7946 = vmatpush1.msra.mxu0 %v7610
    %7947 = vmatprep.subr.mxu0 0.0
    %7948 = vmatpush1.msra.mxu0 %v7613
    %7949 = vmatprep.subr.mxu0 0.0
    %7950 = vmatpush1.msra.mxu0 %v7616
    %7951 = vmatprep.subr.mxu0 0.0
    %7952 = vmatpush1.msra.mxu0 %v7619
    %7953 = vmatprep.subr.mxu0 0.0
    %7954 = vmatpush1.msra.mxu0 %v7622
    %7955 = vmatprep.subr.mxu0 0.0
    %7956 = vmatpush1.msra.mxu0 %v7625
    %7957 = vmatprep.subr.mxu0 0.0
    %7958 = vmatpush1.msra.mxu0 %v7628
    %7959 = vmatprep.subr.mxu0 0.0
    %7960 = vmatpush1.msra.mxu0 %v7631
    %7961 = vmatprep.subr.mxu0 0.0
    %7962 = vmatpush1.msra.mxu0 %v7634
    %7963 = vmatprep.subr.mxu0 0.0
    %7964 = vmatpush1.msra.mxu0 %v7637
    %7965 = vmatprep.subr.mxu0 0.0
    %7966 = vmatpush1.msra.mxu0 %v7640
    %7967 = vmatprep.subr.mxu0 0.0
    %7968 = vmatpush1.msra.mxu0 %v7643
    %7969 = vmatprep.subr.mxu0 0.0
    %7970 = vmatpush1.msra.mxu0 %v7646
    %7971 = vmatprep.subr.mxu0 0.0
    %7972 = vmatpush1.msra.mxu0 %v7649
    %7973 = vmatprep.subr.mxu0 0.0
    %7974 = vmatpush1.msra.mxu0 %v7652
    %7975 = vmatprep.subr.mxu0 0.0
    %7976 = vmatpush1.msra.mxu0 %v7655
    %7977 = vmatprep.subr.mxu0 0.0
    %7978 = vmatpush1.msra.mxu0 %v7658
    %7979 = vmatprep.mubr.f32.mxu0 %v7556
    %7980 = vmatmul.mubr.f32.gmra.mrb[0].mxu0 %v7555
    %v7981 = vpop.f32.mrb[0].mxu0
    %v7982 = vadd.f32 %v7757, %v7981
    %v7983 = vpop.f32.mrb[0].mxu0
    %7984 = vmatprep.mubr.f32.mxu0 %v7560
    %7985 = vmatmul.mubr.f32.gmra.mrb[0].mxu0 %v7559
    %v7986 = vpop.f32.mrb[0].mxu0
    %v7987 = vadd.f32 %v7760, %v7986
    %v7988 = vpop.f32.mrb[0].mxu0
    %7989 = vdwg.mxu0
    %7990 = vmatprep.subr.mxu0 0.0
    %7991 = vmatpush1.msra.mxu0 %v7661
    %7992 = vmatprep.subr.mxu0 0.0
    %7993 = vmatpush1.msra.mxu0 %v7664
    %7994 = vmatprep.subr.mxu0 0.0
    %7995 = vmatpush1.msra.mxu0 %v7667
    %7996 = vmatprep.subr.mxu0 0.0
    %7997 = vmatpush1.msra.mxu0 %v7670
    %7998 = vmatprep.subr.mxu0 0.0
    %7999 = vmatpush1.msra.mxu0 %v7673
    %8000 = vmatprep.subr.mxu0 0.0
    %8001 = vmatpush1.msra.mxu0 %v7676
    %8002 = vmatprep.subr.mxu0 0.0
    %8003 = vmatpush1.msra.mxu0 %v7679
    %8004 = vmatprep.subr.mxu0 0.0
    %8005 = vmatpush1.msra.mxu0 %v7682
    %8006 = vmatprep.subr.mxu0 0.0
    %8007 = vmatpush1.msra.mxu0 %v7685
    %8008 = vmatprep.subr.mxu0 0.0
    %8009 = vmatpush1.msra.mxu0 %v7688
    %8010 = vmatprep.subr.mxu0 0.0
    %8011 = vmatpush1.msra.mxu0 %v7691
    %8012 = vmatprep.subr.mxu0 0.0
    %8013 = vmatpush1.msra.mxu0 %v7694
    %8014 = vmatprep.subr.mxu0 0.0
    %8015 = vmatpush1.msra.mxu0 %v7697
    %8016 = vmatprep.subr.mxu0 0.0
    %8017 = vmatpush1.msra.mxu0 %v7700
    %8018 = vmatprep.subr.mxu0 0.0
    %8019 = vmatpush1.msra.mxu0 %v7703
    %8020 = vmatprep.subr.mxu0 0.0
    %8021 = vmatpush1.msra.mxu0 %v7706
    %8022 = vmatprep.subr.mxu0 0.0
    %8023 = vmatpush1.msra.mxu0 %v7709
    %8024 = vmatprep.subr.mxu0 0.0
    %8025 = vmatpush1.msra.mxu0 %v7712
    %8026 = vmatprep.subr.mxu0 0.0
    %8027 = vmatpush1.msra.mxu0 %v7715
    %8028 = vmatprep.subr.mxu0 0.0
    %8029 = vmatpush1.msra.mxu0 %v7718
    %8030 = vmatprep.subr.mxu0 0.0
    %8031 = vmatpush1.msra.mxu0 %v7721
    %8032 = vmatprep.subr.mxu0 0.0
    %8033 = vmatpush1.msra.mxu0 %v7724
    %8034 = vmatprep.subr.mxu0 0.0
    %8035 = vmatpush1.msra.mxu0 %v7727
    %8036 = vmatprep.subr.mxu0 0.0
    %8037 = vmatpush1.msra.mxu0 %v7730
    %8038 = vmatprep.subr.mxu0 0.0
    %8039 = vmatpush1.msra.mxu0 %v7733
    %8040 = vmatprep.subr.mxu0 0.0
    %8041 = vmatpush1.msra.mxu0 %v7736
    %8042 = vmatprep.subr.mxu0 0.0
    %8043 = vmatpush1.msra.mxu0 %v7739
    %8044 = vmatprep.subr.mxu0 0.0
    %8045 = vmatpush1.msra.mxu0 %v7742
    %8046 = vmatprep.subr.mxu0 0.0
    %8047 = vmatpush1.msra.mxu0 %v7745
    %8048 = vmatprep.subr.mxu0 0.0
    %8049 = vmatpush1.msra.mxu0 %v7748
    %8050 = vmatprep.subr.mxu0 0.0
    %8051 = vmatpush1.msra.mxu0 %v7751
    %8052 = vmatprep.subr.mxu0 0.0
    %8053 = vmatpush1.msra.mxu0 %v7754
    %8054 = vmatprep.mubr.f32.mxu0 %v7558
    %8055 = vmatmul.mubr.f32.gmra.mrb[0].mxu0 %v7557
    %v8056 = vpop.f32.mrb[0].mxu0
    %v8057 = vadd.f32 %v7982, %v8056
    %v8058 = vpop.f32.mrb[0].mxu0
    %8059 = vmatprep.mubr.f32.mxu0 %v7562
    %8060 = vmatmul.mubr.f32.gmra.mrb[0].mxu0 %v7561
    %v8061 = vpop.f32.mrb[0].mxu0
    %v8062 = vadd.f32 %v7987, %v8061
    %v8063 = vpop.f32.mrb[0].mxu0
    %8064 = vdwg.mxu0
    %v8065 = vxor.u32 %v7905, 2147483648
    %v8066 = vxor.u32 %v7911, 2147483648
    %v8067 = vmul.f32 %v8065, 1.442695
    %v8068 = vpow.pop %v8067
    %v8069 = vmul.f32 %v8066, 1.442695
    %v8070 = vpow.pop %v8069
    %v8071 = vadd.f32 %v8068, 1.0
    %v8072 = vadd.f32 %v8070, 1.0
    %v8073 = vrcp.pop %v8071
    %v8074 = vmul.f32 1.0, %v8073
    %v8075 = vrcp.pop %v8072
    %v8076 = vmul.f32 1.0, %v8075
    %v8077 = vxor.u32 %v7907, 2147483648
    %v8078 = vxor.u32 %v7913, 2147483648
    %v8079 = vmul.f32 %v8077, 1.442695
    %v8080 = vpow.pop %v8079
    %v8081 = vmul.f32 %v8078, 1.442695
    %v8082 = vpow.pop %v8081
    %v8083 = vadd.f32 %v8080, 1.0
    %v8084 = vadd.f32 %v8082, 1.0
    %v8085 = vrcp.pop %v8083
    %v8086 = vmul.f32 1.0, %v8085
    %v8087 = vrcp.pop %v8084
    %v8088 = vmul.f32 1.0, %v8087
    %v8089 = vmul.f32 %v8086, %v7296
    %v8090 = vmul.f32 %v8088, %v7297
    %v8091 = vld [vmem:[#allocation12] sm:$0xff]
    %v8092 = vld [vmem:[#allocation12 + $0x8] sm:$0xff]
    %v8093 = vld [vmem:[#allocation12 + $0x10] sm:$0xff]
    %v8094 = vld [vmem:[#allocation12 + $0x18] sm:$0xff]
    %v8095 = vld [vmem:[#allocation12 + $0x20] sm:$0xff]
    %v8096 = vld [vmem:[#allocation12 + $0x28] sm:$0xff]
    %v8097 = vld [vmem:[#allocation12 + $0x30] sm:$0xff]
    %v8098 = vld [vmem:[#allocation12 + $0x38] sm:$0xff]
    %v8099 = vld [vmem:[#allocation12 + $0x40] sm:$0xff]
    %v8100 = vld [vmem:[#allocation12 + $0x48] sm:$0xff]
    %v8101 = vld [vmem:[#allocation12 + $0x50] sm:$0xff]
    %v8102 = vld [vmem:[#allocation12 + $0x58] sm:$0xff]
    %v8103 = vld [vmem:[#allocation12 + $0x60] sm:$0xff]
    %v8104 = vld [vmem:[#allocation12 + $0x68] sm:$0xff]
    %v8105 = vld [vmem:[#allocation12 + $0x70] sm:$0xff]
    %v8106 = vld [vmem:[#allocation12 + $0x78] sm:$0xff]
    %8107 = vmatprep.subr.mxu0 0.0
    %8108 = vmatpush1.msra.mxu0 %v8091
    %8109 = vmatprep.subr.mxu0 0.0
    %8110 = vmatpush1.msra.mxu0 %v8092
    %8111 = vmatprep.subr.mxu0 0.0
    %8112 = vmatpush1.msra.mxu0 %v8093
    %8113 = vmatprep.subr.mxu0 0.0
    %8114 = vmatpush1.msra.mxu0 %v8094
    %8115 = vmatprep.subr.mxu0 0.0
    %8116 = vmatpush1.msra.mxu0 %v8095
    %8117 = vmatprep.subr.mxu0 0.0
    %8118 = vmatpush1.msra.mxu0 %v8096
    %8119 = vmatprep.subr.mxu0 0.0
    %8120 = vmatpush1.msra.mxu0 %v8097
    %8121 = vmatprep.subr.mxu0 0.0
    %8122 = vmatpush1.msra.mxu0 %v8098
    %8123 = vmatprep.subr.mxu0 0.0
    %8124 = vmatpush1.msra.mxu0 %v8099
    %8125 = vmatprep.subr.mxu0 0.0
    %8126 = vmatpush1.msra.mxu0 %v8100
    %8127 = vmatprep.subr.mxu0 0.0
    %8128 = vmatpush1.msra.mxu0 %v8101
    %8129 = vmatprep.subr.mxu0 0.0
    %8130 = vmatpush1.msra.mxu0 %v8102
    %8131 = vmatprep.subr.mxu0 0.0
    %8132 = vmatpush1.msra.mxu0 %v8103
    %8133 = vmatprep.subr.mxu0 0.0
    %8134 = vmatpush1.msra.mxu0 %v8104
    %8135 = vmatprep.subr.mxu0 0.0
    %8136 = vmatpush1.msra.mxu0 %v8105
    %8137 = vmatprep.subr.mxu0 0.0
    %8138 = vmatpush1.msra.mxu0 %v8106
    %8139 = vmatprep.subr.mxu0 0.0
    %8140 = vmatpush1.msra.mxu0 0.0
    %8141 = vmatprep.subr.mxu0 0.0
    %8142 = vmatpush1.msra.mxu0 0.0
    %8143 = vmatprep.subr.mxu0 0.0
    %8144 = vmatpush1.msra.mxu0 0.0
    %8145 = vmatprep.subr.mxu0 0.0
    %8146 = vmatpush1.msra.mxu0 0.0
    %8147 = vmatprep.subr.mxu0 0.0
    %8148 = vmatpush1.msra.mxu0 0.0
    %8149 = vmatprep.subr.mxu0 0.0
    %8150 = vmatpush1.msra.mxu0 0.0
    %8151 = vmatprep.subr.mxu0 0.0
    %8152 = vmatpush1.msra.mxu0 0.0
    %8153 = vmatprep.subr.mxu0 0.0
    %8154 = vmatpush1.msra.mxu0 0.0
    %8155 = vmatprep.subr.mxu0 0.0
    %8156 = vmatpush1.msra.mxu0 0.0
    %8157 = vmatprep.subr.mxu0 0.0
    %8158 = vmatpush1.msra.mxu0 0.0
    %8159 = vmatprep.subr.mxu0 0.0
    %8160 = vmatpush1.msra.mxu0 0.0
    %8161 = vmatprep.subr.mxu0 0.0
    %8162 = vmatpush1.msra.mxu0 0.0
    %8163 = vmatprep.subr.mxu0 0.0
    %8164 = vmatpush1.msra.mxu0 0.0
    %8165 = vmatprep.subr.mxu0 0.0
    %8166 = vmatpush1.msra.mxu0 0.0
    %8167 = vmatprep.subr.mxu0 0.0
    %8168 = vmatpush1.msra.mxu0 0.0
    %8169 = vmatprep.subr.mxu0 0.0
    %8170 = vmatpush1.msra.mxu0 0.0
    %8171 = vmatprep.mubr.f32.mxu0 0.0
    %8172 = vmatmul.mubr.f32.gmra.mrb[0].mxu0 %v8089
    %v8173 = vpop.f32.mrb[0].mxu0
    %v8174 = vadd.f32 0.0, %v8173
    %v8175 = vpop.f32.mrb[0].mxu0
    %8176 = vmatprep.mubr.f32.mxu0 0.0
    %8177 = vmatmul.mubr.f32.gmra.mrb[0].mxu0 %v8090
    %v8178 = vpop.f32.mrb[0].mxu0
    %v8179 = vadd.f32 0.0, %v8178
    %v8180 = vpop.f32.mrb[0].mxu0
    %8181 = vdwg.mxu0
    %v8182 = vadd.f32 %v8057, %v8174
    %v8183 = vadd.f32 %v8062, %v8179
    %v8184 = vtanh.pop %v8182
    %v8185 = vtanh.pop %v8183
    %v8186 = vsub.f32 1.0, %v8074
    %v8187 = vsub.f32 1.0, %v8076
    %v8188 = vmul.f32 %v8186, %v7296
    %v8189 = vmul.f32 %v8187, %v7297
    %v8190 = vmul.f32 %v8074, %v8184
    %v8191 = vmul.f32 %v8076, %v8185
    %v8192 = vadd.f32 %v8188, %v8190
    %v8193 = vadd.f32 %v8189, %v8191
    %8194 = vst [vmem:[#allocation2] sm:$0xff] %v8192
    %8195 = vst [vmem:[#allocation2 + $0x8] sm:$0xff] %v8193
    %v8196 = vld [vmem:[#allocation2] sm:$0xff]
    %v8197 = vld [vmem:[#allocation2 + $0x8] sm:$0xff]
    %v8198 = vld [vmem:[#allocation4] sm:$0xff]
    %v8199 = vld [vmem:[#allocation4 + $0x8] sm:$0xff]
    %v8201 = vsel %vm97, %v8198, 0
    %v8204 = vsel %vm97, %v8199, 0
    %8206 = vmatprep.subr.mxu0 0.0
    %8207 = vmatpush1.msra.mxu0 %v8196
    %8208 = vmatprep.subr.mxu0 0.0
    %8209 = vmatpush1.msra.mxu0 %v8197
    %8210 = vmatprep.subr.mxu0 0.0
    %8211 = vmatpush1.msra.mxu0 0.0
    %8212 = vmatprep.subr.mxu0 0.0
    %8213 = vmatpush1.msra.mxu0 0.0
    %8214 = vmatprep.subr.mxu0 0.0
    %8215 = vmatpush1.msra.mxu0 0.0
    %8216 = vmatprep.subr.mxu0 0.0
    %8217 = vmatpush1.msra.mxu0 0.0
    %8218 = vmatprep.subr.mxu0 0.0
    %8219 = vmatpush1.msra.mxu0 0.0
    %8220 = vmatprep.subr.mxu0 0.0
    %8221 = vmatpush1.msra.mxu0 0.0
    %8222 = vmatprep.subr.mxu0 0.0
    %8223 = vmatpush1.msra.mxu0 0.0
    %8224 = vmatprep.subr.mxu0 0.0
    %8225 = vmatpush1.msra.mxu0 0.0
    %8226 = vmatprep.subr.mxu0 0.0
    %8227 = vmatpush1.msra.mxu0 0.0
    %8228 = vmatprep.subr.mxu0 0.0
    %8229 = vmatpush1.msra.mxu0 0.0
    %8230 = vmatprep.subr.mxu0 0.0
    %8231 = vmatpush1.msra.mxu0 0.0
    %8232 = vmatprep.subr.mxu0 0.0
    %8233 = vmatpush1.msra.mxu0 0.0
    %8234 = vmatprep.subr.mxu0 0.0
    %8235 = vmatpush1.msra.mxu0 0.0
    %8236 = vmatprep.subr.mxu0 0.0
    %8237 = vmatpush1.msra.mxu0 0.0
    %8238 = vmatprep.subr.mxu0 0.0
    %8239 = vmatpush1.msra.mxu0 0.0
    %8240 = vmatprep.subr.mxu0 0.0
    %8241 = vmatpush1.msra.mxu0 0.0
    %8242 = vmatprep.subr.mxu0 0.0
    %8243 = vmatpush1.msra.mxu0 0.0
    %8244 = vmatprep.subr.mxu0 0.0
    %8245 = vmatpush1.msra.mxu0 0.0
    %8246 = vmatprep.subr.mxu0 0.0
    %8247 = vmatpush1.msra.mxu0 0.0
    %8248 = vmatprep.subr.mxu0 0.0
    %8249 = vmatpush1.msra.mxu0 0.0
    %8250 = vmatprep.subr.mxu0 0.0
    %8251 = vmatpush1.msra.mxu0 0.0
    %8252 = vmatprep.subr.mxu0 0.0
    %8253 = vmatpush1.msra.mxu0 0.0
    %8254 = vmatprep.subr.mxu0 0.0
    %8255 = vmatpush1.msra.mxu0 0.0
    %8256 = vmatprep.subr.mxu0 0.0
    %8257 = vmatpush1.msra.mxu0 0.0
    %8258 = vmatprep.subr.mxu0 0.0
    %8259 = vmatpush1.msra.mxu0 0.0
    %8260 = vmatprep.subr.mxu0 0.0
    %8261 = vmatpush1.msra.mxu0 0.0
    %8262 = vmatprep.subr.mxu0 0.0
    %8263 = vmatpush1.msra.mxu0 0.0
    %8264 = vmatprep.subr.mxu0 0.0
    %8265 = vmatpush1.msra.mxu0 0.0
    %8266 = vmatprep.subr.mxu0 0.0
    %8267 = vmatpush1.msra.mxu0 0.0
    %8268 = vmatprep.subr.mxu0 0.0
    %8269 = vmatpush1.msra.mxu0 0.0
    %8270 = vmatprep.mubr.f32.mxu0 0.0
    %8271 = vmatmul.mubr.f32.gmra.mrb[0].mxu0 %v8201
    %v8272 = vpop.f32.mrb[0].mxu0
    %v8273 = vadd.f32 0.0, %v8272
    %v8274 = vpop.f32.mrb[0].mxu0
    %8275 = vmatprep.mubr.f32.mxu0 0.0
    %8276 = vmatmul.mubr.f32.gmra.mrb[0].mxu0 %v8204
    %v8277 = vpop.f32.mrb[0].mxu0
    %v8278 = vadd.f32 0.0, %v8277
    %v8279 = vpop.f32.mrb[0].mxu0
    %8280 = vdwg.mxu0
    %8281 = vst [vmem:[#allocation3] sm:$0xff] %v8273
    %8282 = vst [vmem:[#allocation3 + $0x20] sm:$0xff] %v8278
    %v8283 = vld [vmem:[%s181] sm:$0xff]
    %v8284 = vld [vmem:[%s181 + $0x8] sm:$0xff]
    %v8286 = vsel %vm97, %v8283, 0
    %v8289 = vsel %vm97, %v8284, 0
    %8291 = vmatprep.subr.mxu0 0.0
    %8292 = vmatpush1.msra.mxu0 %v8196
    %8293 = vmatprep.subr.mxu0 0.0
    %8294 = vmatpush1.msra.mxu0 %v8197
    %8295 = vmatprep.subr.mxu0 0.0
    %8296 = vmatpush1.msra.mxu0 0.0
    %8297 = vmatprep.subr.mxu0 0.0
    %8298 = vmatpush1.msra.mxu0 0.0
    %8299 = vmatprep.subr.mxu0 0.0
    %8300 = vmatpush1.msra.mxu0 0.0
    %8301 = vmatprep.subr.mxu0 0.0
    %8302 = vmatpush1.msra.mxu0 0.0
    %8303 = vmatprep.subr.mxu0 0.0
    %8304 = vmatpush1.msra.mxu0 0.0
    %8305 = vmatprep.subr.mxu0 0.0
    %8306 = vmatpush1.msra.mxu0 0.0
    %8307 = vmatprep.subr.mxu0 0.0
    %8308 = vmatpush1.msra.mxu0 0.0
    %8309 = vmatprep.subr.mxu0 0.0
    %8310 = vmatpush1.msra.mxu0 0.0
    %8311 = vmatprep.subr.mxu0 0.0
    %8312 = vmatpush1.msra.mxu0 0.0
    %8313 = vmatprep.subr.mxu0 0.0
    %8314 = vmatpush1.msra.mxu0 0.0
    %8315 = vmatprep.subr.mxu0 0.0
    %8316 = vmatpush1.msra.mxu0 0.0
    %8317 = vmatprep.subr.mxu0 0.0
    %8318 = vmatpush1.msra.mxu0 0.0
    %8319 = vmatprep.subr.mxu0 0.0
    %8320 = vmatpush1.msra.mxu0 0.0
    %8321 = vmatprep.subr.mxu0 0.0
    %8322 = vmatpush1.msra.mxu0 0.0
    %8323 = vmatprep.subr.mxu0 0.0
    %8324 = vmatpush1.msra.mxu0 0.0
    %8325 = vmatprep.subr.mxu0 0.0
    %8326 = vmatpush1.msra.mxu0 0.0
    %8327 = vmatprep.subr.mxu0 0.0
    %8328 = vmatpush1.msra.mxu0 0.0
    %8329 = vmatprep.subr.mxu0 0.0
    %8330 = vmatpush1.msra.mxu0 0.0
    %8331 = vmatprep.subr.mxu0 0.0
    %8332 = vmatpush1.msra.mxu0 0.0
    %8333 = vmatprep.subr.mxu0 0.0
    %8334 = vmatpush1.msra.mxu0 0.0
    %8335 = vmatprep.subr.mxu0 0.0
    %8336 = vmatpush1.msra.mxu0 0.0
    %8337 = vmatprep.subr.mxu0 0.0
    %8338 = vmatpush1.msra.mxu0 0.0
    %8339 = vmatprep.subr.mxu0 0.0
    %8340 = vmatpush1.msra.mxu0 0.0
    %8341 = vmatprep.subr.mxu0 0.0
    %8342 = vmatpush1.msra.mxu0 0.0
    %8343 = vmatprep.subr.mxu0 0.0
    %8344 = vmatpush1.msra.mxu0 0.0
    %8345 = vmatprep.subr.mxu0 0.0
    %8346 = vmatpush1.msra.mxu0 0.0
    %8347 = vmatprep.subr.mxu0 0.0
    %8348 = vmatpush1.msra.mxu0 0.0
    %8349 = vmatprep.subr.mxu0 0.0
    %8350 = vmatpush1.msra.mxu0 0.0
    %8351 = vmatprep.subr.mxu0 0.0
    %8352 = vmatpush1.msra.mxu0 0.0
    %8353 = vmatprep.subr.mxu0 0.0
    %8354 = vmatpush1.msra.mxu0 0.0
    %8355 = vmatprep.mubr.f32.mxu0 0.0
    %8356 = vmatmul.mubr.f32.gmra.mrb[0].mxu0 %v8286
    %v8357 = vpop.f32.mrb[0].mxu0
    %v8358 = vadd.f32 0.0, %v8357
    %v8359 = vpop.f32.mrb[0].mxu0
    %8360 = vmatprep.mubr.f32.mxu0 0.0
    %8361 = vmatmul.mubr.f32.gmra.mrb[0].mxu0 %v8289
    %v8362 = vpop.f32.mrb[0].mxu0
    %v8363 = vadd.f32 0.0, %v8362
    %v8364 = vpop.f32.mrb[0].mxu0
    %8365 = vdwg.mxu0
    %8366 = vst [vmem:[#allocation3 + $0x8] sm:$0xff] %v8358
    %8367 = vst [vmem:[#allocation3 + $0x28] sm:$0xff] %v8363
    %v8368 = vld [vmem:[%s267] sm:$0xff]
    %v8369 = vld [vmem:[%s267 + $0x8] sm:$0xff]
    %v8371 = vsel %vm97, %v8368, 0
    %v8374 = vsel %vm97, %v8369, 0
    %8376 = vmatprep.subr.mxu0 0.0
    %8377 = vmatpush1.msra.mxu0 %v8196
    %8378 = vmatprep.subr.mxu0 0.0
    %8379 = vmatpush1.msra.mxu0 %v8197
    %8380 = vmatprep.subr.mxu0 0.0
    %8381 = vmatpush1.msra.mxu0 0.0
    %8382 = vmatprep.subr.mxu0 0.0
    %8383 = vmatpush1.msra.mxu0 0.0
    %8384 = vmatprep.subr.mxu0 0.0
    %8385 = vmatpush1.msra.mxu0 0.0
    %8386 = vmatprep.subr.mxu0 0.0
    %8387 = vmatpush1.msra.mxu0 0.0
    %8388 = vmatprep.subr.mxu0 0.0
    %8389 = vmatpush1.msra.mxu0 0.0
    %8390 = vmatprep.subr.mxu0 0.0
    %8391 = vmatpush1.msra.mxu0 0.0
    %8392 = vmatprep.subr.mxu0 0.0
    %8393 = vmatpush1.msra.mxu0 0.0
    %8394 = vmatprep.subr.mxu0 0.0
    %8395 = vmatpush1.msra.mxu0 0.0
    %8396 = vmatprep.subr.mxu0 0.0
    %8397 = vmatpush1.msra.mxu0 0.0
    %8398 = vmatprep.subr.mxu0 0.0
    %8399 = vmatpush1.msra.mxu0 0.0
    %8400 = vmatprep.subr.mxu0 0.0
    %8401 = vmatpush1.msra.mxu0 0.0
    %8402 = vmatprep.subr.mxu0 0.0
    %8403 = vmatpush1.msra.mxu0 0.0
    %8404 = vmatprep.subr.mxu0 0.0
    %8405 = vmatpush1.msra.mxu0 0.0
    %8406 = vmatprep.subr.mxu0 0.0
    %8407 = vmatpush1.msra.mxu0 0.0
    %8408 = vmatprep.subr.mxu0 0.0
    %8409 = vmatpush1.msra.mxu0 0.0
    %8410 = vmatprep.subr.mxu0 0.0
    %8411 = vmatpush1.msra.mxu0 0.0
    %8412 = vmatprep.subr.mxu0 0.0
    %8413 = vmatpush1.msra.mxu0 0.0
    %8414 = vmatprep.subr.mxu0 0.0
    %8415 = vmatpush1.msra.mxu0 0.0
    %8416 = vmatprep.subr.mxu0 0.0
    %8417 = vmatpush1.msra.mxu0 0.0
    %8418 = vmatprep.subr.mxu0 0.0
    %8419 = vmatpush1.msra.mxu0 0.0
    %8420 = vmatprep.subr.mxu0 0.0
    %8421 = vmatpush1.msra.mxu0 0.0
    %8422 = vmatprep.subr.mxu0 0.0
    %8423 = vmatpush1.msra.mxu0 0.0
    %8424 = vmatprep.subr.mxu0 0.0
    %8425 = vmatpush1.msra.mxu0 0.0
    %8426 = vmatprep.subr.mxu0 0.0
    %8427 = vmatpush1.msra.mxu0 0.0
    %8428 = vmatprep.subr.mxu0 0.0
    %8429 = vmatpush1.msra.mxu0 0.0
    %8430 = vmatprep.subr.mxu0 0.0
    %8431 = vmatpush1.msra.mxu0 0.0
    %8432 = vmatprep.subr.mxu0 0.0
    %8433 = vmatpush1.msra.mxu0 0.0
    %8434 = vmatprep.subr.mxu0 0.0
    %8435 = vmatpush1.msra.mxu0 0.0
    %8436 = vmatprep.subr.mxu0 0.0
    %8437 = vmatpush1.msra.mxu0 0.0
    %8438 = vmatprep.subr.mxu0 0.0
    %8439 = vmatpush1.msra.mxu0 0.0
    %8440 = vmatprep.mubr.f32.mxu0 0.0
    %8441 = vmatmul.mubr.f32.gmra.mrb[0].mxu0 %v8371
    %v8442 = vpop.f32.mrb[0].mxu0
    %v8443 = vadd.f32 0.0, %v8442
    %v8444 = vpop.f32.mrb[0].mxu0
    %8445 = vmatprep.mubr.f32.mxu0 0.0
    %8446 = vmatmul.mubr.f32.gmra.mrb[0].mxu0 %v8374
    %v8447 = vpop.f32.mrb[0].mxu0
    %v8448 = vadd.f32 0.0, %v8447
    %v8449 = vpop.f32.mrb[0].mxu0
    %8450 = vdwg.mxu0
    %8451 = vst [vmem:[#allocation3 + $0x10] sm:$0xff] %v8443
    %8452 = vst [vmem:[#allocation3 + $0x30] sm:$0xff] %v8448
    %8453 = vst [vmem:[#allocation3 + $0x18] sm:$0xff] %v8196
    %8454 = vst [vmem:[#allocation3 + $0x38] sm:$0xff] %v8197
    %v8455 = vld [vmem:[#allocation3] sm:$0xff]
    %v8456 = vld [vmem:[#allocation3 + $0x8] sm:$0xff]
    %v8457 = vld [vmem:[#allocation3 + $0x10] sm:$0xff]
    %v8458 = vld [vmem:[#allocation3 + $0x18] sm:$0xff]
    %v8459 = vld [vmem:[#allocation3 + $0x20] sm:$0xff]
    %v8460 = vld [vmem:[#allocation3 + $0x28] sm:$0xff]
    %v8461 = vld [vmem:[#allocation3 + $0x30] sm:$0xff]
    %v8462 = vld [vmem:[#allocation3 + $0x38] sm:$0xff]
    %v8463 = vld [vmem:[#allocation10] sm:$0xff]
    %v8464 = vld [vmem:[#allocation10 + $0x8] sm:$0xff]
    %v8465 = vld [vmem:[#allocation10 + $0x10] sm:$0xff]
    %v8466 = vld [vmem:[#allocation10 + $0x18] sm:$0xff]
    %v8467 = vld [vmem:[#allocation10 + $0x20] sm:$0xff]
    %v8468 = vld [vmem:[#allocation10 + $0x28] sm:$0xff]
    %v8469 = vld [vmem:[#allocation10 + $0x30] sm:$0xff]
    %v8470 = vld [vmem:[#allocation10 + $0x38] sm:$0xff]
    %v8471 = vld [vmem:[#allocation10 + $0x40] sm:$0xff]
    %v8472 = vld [vmem:[#allocation10 + $0x48] sm:$0xff]
    %v8473 = vld [vmem:[#allocation10 + $0x50] sm:$0xff]
    %v8474 = vld [vmem:[#allocation10 + $0x58] sm:$0xff]
    %v8475 = vld [vmem:[#allocation10 + $0x60] sm:$0xff]
    %v8476 = vld [vmem:[#allocation10 + $0x68] sm:$0xff]
    %v8477 = vld [vmem:[#allocation10 + $0x70] sm:$0xff]
    %v8478 = vld [vmem:[#allocation10 + $0x78] sm:$0xff]
    %v8479 = vld [vmem:[#allocation10 + $0x80] sm:$0xff]
    %v8480 = vld [vmem:[#allocation10 + $0x88] sm:$0xff]
    %v8481 = vld [vmem:[#allocation10 + $0x90] sm:$0xff]
    %v8482 = vld [vmem:[#allocation10 + $0x98] sm:$0xff]
    %v8483 = vld [vmem:[#allocation10 + $0xa0] sm:$0xff]
    %v8484 = vld [vmem:[#allocation10 + $0xa8] sm:$0xff]
    %v8485 = vld [vmem:[#allocation10 + $0xb0] sm:$0xff]
    %v8486 = vld [vmem:[#allocation10 + $0xb8] sm:$0xff]
    %v8487 = vld [vmem:[#allocation10 + $0xc0] sm:$0xff]
    %v8488 = vld [vmem:[#allocation10 + $0xc8] sm:$0xff]
    %v8489 = vld [vmem:[#allocation10 + $0xd0] sm:$0xff]
    %v8490 = vld [vmem:[#allocation10 + $0xd8] sm:$0xff]
    %v8491 = vld [vmem:[#allocation10 + $0xe0] sm:$0xff]
    %v8492 = vld [vmem:[#allocation10 + $0xe8] sm:$0xff]
    %v8493 = vld [vmem:[#allocation10 + $0xf0] sm:$0xff]
    %v8494 = vld [vmem:[#allocation10 + $0xf8] sm:$0xff]
    %v8495 = vld [vmem:[#allocation10 + $0x100] sm:$0xff]
    %v8496 = vld [vmem:[#allocation10 + $0x108] sm:$0xff]
    %v8497 = vld [vmem:[#allocation10 + $0x110] sm:$0xff]
    %v8498 = vld [vmem:[#allocation10 + $0x118] sm:$0xff]
    %v8499 = vld [vmem:[#allocation10 + $0x120] sm:$0xff]
    %v8500 = vld [vmem:[#allocation10 + $0x128] sm:$0xff]
    %v8501 = vld [vmem:[#allocation10 + $0x130] sm:$0xff]
    %v8502 = vld [vmem:[#allocation10 + $0x138] sm:$0xff]
    %v8503 = vld [vmem:[#allocation10 + $0x140] sm:$0xff]
    %v8504 = vld [vmem:[#allocation10 + $0x148] sm:$0xff]
    %v8505 = vld [vmem:[#allocation10 + $0x150] sm:$0xff]
    %v8506 = vld [vmem:[#allocation10 + $0x158] sm:$0xff]
    %v8507 = vld [vmem:[#allocation10 + $0x160] sm:$0xff]
    %v8508 = vld [vmem:[#allocation10 + $0x168] sm:$0xff]
    %v8509 = vld [vmem:[#allocation10 + $0x170] sm:$0xff]
    %v8510 = vld [vmem:[#allocation10 + $0x178] sm:$0xff]
    %v8511 = vld [vmem:[#allocation10 + $0x180] sm:$0xff]
    %v8512 = vld [vmem:[#allocation10 + $0x188] sm:$0xff]
    %v8513 = vld [vmem:[#allocation10 + $0x190] sm:$0xff]
    %v8514 = vld [vmem:[#allocation10 + $0x198] sm:$0xff]
    %v8515 = vld [vmem:[#allocation10 + $0x1a0] sm:$0xff]
    %v8516 = vld [vmem:[#allocation10 + $0x1a8] sm:$0xff]
    %v8517 = vld [vmem:[#allocation10 + $0x1b0] sm:$0xff]
    %v8518 = vld [vmem:[#allocation10 + $0x1b8] sm:$0xff]
    %v8519 = vld [vmem:[#allocation10 + $0x1c0] sm:$0xff]
    %v8520 = vld [vmem:[#allocation10 + $0x1c8] sm:$0xff]
    %v8521 = vld [vmem:[#allocation10 + $0x1d0] sm:$0xff]
    %v8522 = vld [vmem:[#allocation10 + $0x1d8] sm:$0xff]
    %v8523 = vld [vmem:[#allocation10 + $0x1e0] sm:$0xff]
    %v8524 = vld [vmem:[#allocation10 + $0x1e8] sm:$0xff]
    %v8525 = vld [vmem:[#allocation10 + $0x1f0] sm:$0xff]
    %v8526 = vld [vmem:[#allocation10 + $0x1f8] sm:$0xff]
    %v8527 = vld [vmem:[#allocation10 + $0x200] sm:$0xff]
    %v8528 = vld [vmem:[#allocation10 + $0x208] sm:$0xff]
    %v8529 = vld [vmem:[#allocation10 + $0x210] sm:$0xff]
    %v8530 = vld [vmem:[#allocation10 + $0x218] sm:$0xff]
    %v8531 = vld [vmem:[#allocation10 + $0x220] sm:$0xff]
    %v8532 = vld [vmem:[#allocation10 + $0x228] sm:$0xff]
    %v8533 = vld [vmem:[#allocation10 + $0x230] sm:$0xff]
    %v8534 = vld [vmem:[#allocation10 + $0x238] sm:$0xff]
    %v8535 = vld [vmem:[#allocation10 + $0x240] sm:$0xff]
    %v8536 = vld [vmem:[#allocation10 + $0x248] sm:$0xff]
    %v8537 = vld [vmem:[#allocation10 + $0x250] sm:$0xff]
    %v8538 = vld [vmem:[#allocation10 + $0x258] sm:$0xff]
    %v8539 = vld [vmem:[#allocation10 + $0x260] sm:$0xff]
    %v8540 = vld [vmem:[#allocation10 + $0x268] sm:$0xff]
    %v8541 = vld [vmem:[#allocation10 + $0x270] sm:$0xff]
    %v8542 = vld [vmem:[#allocation10 + $0x278] sm:$0xff]
    %v8543 = vld [vmem:[#allocation10 + $0x280] sm:$0xff]
    %v8544 = vld [vmem:[#allocation10 + $0x288] sm:$0xff]
    %v8545 = vld [vmem:[#allocation10 + $0x290] sm:$0xff]
    %v8546 = vld [vmem:[#allocation10 + $0x298] sm:$0xff]
    %v8547 = vld [vmem:[#allocation10 + $0x2a0] sm:$0xff]
    %v8548 = vld [vmem:[#allocation10 + $0x2a8] sm:$0xff]
    %v8549 = vld [vmem:[#allocation10 + $0x2b0] sm:$0xff]
    %v8550 = vld [vmem:[#allocation10 + $0x2b8] sm:$0xff]
    %v8551 = vld [vmem:[#allocation10 + $0x2c0] sm:$0xff]
    %v8552 = vld [vmem:[#allocation10 + $0x2c8] sm:$0xff]
    %v8553 = vld [vmem:[#allocation10 + $0x2d0] sm:$0xff]
    %v8554 = vld [vmem:[#allocation10 + $0x2d8] sm:$0xff]
    %v8555 = vld [vmem:[#allocation10 + $0x2e0] sm:$0xff]
    %v8556 = vld [vmem:[#allocation10 + $0x2e8] sm:$0xff]
    %v8557 = vld [vmem:[#allocation10 + $0x2f0] sm:$0xff]
    %v8558 = vld [vmem:[#allocation10 + $0x2f8] sm:$0xff]
    %v8559 = vld [vmem:[#allocation10 + $0x300] sm:$0xff]
    %v8560 = vld [vmem:[#allocation10 + $0x308] sm:$0xff]
    %v8561 = vld [vmem:[#allocation10 + $0x310] sm:$0xff]
    %v8562 = vld [vmem:[#allocation10 + $0x318] sm:$0xff]
    %v8563 = vld [vmem:[#allocation10 + $0x320] sm:$0xff]
    %v8564 = vld [vmem:[#allocation10 + $0x328] sm:$0xff]
    %v8565 = vld [vmem:[#allocation10 + $0x330] sm:$0xff]
    %v8566 = vld [vmem:[#allocation10 + $0x338] sm:$0xff]
    %v8567 = vld [vmem:[#allocation10 + $0x340] sm:$0xff]
    %v8568 = vld [vmem:[#allocation10 + $0x348] sm:$0xff]
    %v8569 = vld [vmem:[#allocation10 + $0x350] sm:$0xff]
    %v8570 = vld [vmem:[#allocation10 + $0x358] sm:$0xff]
    %v8571 = vld [vmem:[#allocation10 + $0x360] sm:$0xff]
    %v8572 = vld [vmem:[#allocation10 + $0x368] sm:$0xff]
    %v8573 = vld [vmem:[#allocation10 + $0x370] sm:$0xff]
    %v8574 = vld [vmem:[#allocation10 + $0x378] sm:$0xff]
    %v8575 = vld [vmem:[#allocation10 + $0x380] sm:$0xff]
    %v8576 = vld [vmem:[#allocation10 + $0x388] sm:$0xff]
    %v8577 = vld [vmem:[#allocation10 + $0x390] sm:$0xff]
    %v8578 = vld [vmem:[#allocation10 + $0x398] sm:$0xff]
    %v8579 = vld [vmem:[#allocation10 + $0x3a0] sm:$0xff]
    %v8580 = vld [vmem:[#allocation10 + $0x3a8] sm:$0xff]
    %v8581 = vld [vmem:[#allocation10 + $0x3b0] sm:$0xff]
    %v8582 = vld [vmem:[#allocation10 + $0x3b8] sm:$0xff]
    %v8583 = vld [vmem:[#allocation10 + $0x3c0] sm:$0xff]
    %v8584 = vld [vmem:[#allocation10 + $0x3c8] sm:$0xff]
    %v8585 = vld [vmem:[#allocation10 + $0x3d0] sm:$0xff]
    %v8586 = vld [vmem:[#allocation10 + $0x3d8] sm:$0xff]
    %v8587 = vld [vmem:[#allocation10 + $0x3e0] sm:$0xff]
    %v8588 = vld [vmem:[#allocation10 + $0x3e8] sm:$0xff]
    %v8589 = vld [vmem:[#allocation10 + $0x3f0] sm:$0xff]
    %v8590 = vld [vmem:[#allocation10 + $0x3f8] sm:$0xff]
    %v8591 = vld [vmem:[#allocation10 + $0x400] sm:$0xff]
    %v8592 = vld [vmem:[#allocation10 + $0x408] sm:$0xff]
    %v8593 = vld [vmem:[#allocation10 + $0x410] sm:$0xff]
    %v8594 = vld [vmem:[#allocation10 + $0x418] sm:$0xff]
    %v8595 = vld [vmem:[#allocation10 + $0x420] sm:$0xff]
    %v8596 = vld [vmem:[#allocation10 + $0x428] sm:$0xff]
    %v8597 = vld [vmem:[#allocation10 + $0x430] sm:$0xff]
    %v8598 = vld [vmem:[#allocation10 + $0x438] sm:$0xff]
    %v8599 = vld [vmem:[#allocation10 + $0x440] sm:$0xff]
    %v8600 = vld [vmem:[#allocation10 + $0x448] sm:$0xff]
    %v8601 = vld [vmem:[#allocation10 + $0x450] sm:$0xff]
    %v8602 = vld [vmem:[#allocation10 + $0x458] sm:$0xff]
    %v8603 = vld [vmem:[#allocation10 + $0x460] sm:$0xff]
    %v8604 = vld [vmem:[#allocation10 + $0x468] sm:$0xff]
    %v8605 = vld [vmem:[#allocation10 + $0x470] sm:$0xff]
    %v8606 = vld [vmem:[#allocation10 + $0x478] sm:$0xff]
    %v8607 = vld [vmem:[#allocation10 + $0x480] sm:$0xff]
    %v8608 = vld [vmem:[#allocation10 + $0x488] sm:$0xff]
    %v8609 = vld [vmem:[#allocation10 + $0x490] sm:$0xff]
    %v8610 = vld [vmem:[#allocation10 + $0x498] sm:$0xff]
    %v8611 = vld [vmem:[#allocation10 + $0x4a0] sm:$0xff]
    %v8612 = vld [vmem:[#allocation10 + $0x4a8] sm:$0xff]
    %v8613 = vld [vmem:[#allocation10 + $0x4b0] sm:$0xff]
    %v8614 = vld [vmem:[#allocation10 + $0x4b8] sm:$0xff]
    %v8615 = vld [vmem:[#allocation10 + $0x4c0] sm:$0xff]
    %v8616 = vld [vmem:[#allocation10 + $0x4c8] sm:$0xff]
    %v8617 = vld [vmem:[#allocation10 + $0x4d0] sm:$0xff]
    %v8618 = vld [vmem:[#allocation10 + $0x4d8] sm:$0xff]
    %v8619 = vld [vmem:[#allocation10 + $0x4e0] sm:$0xff]
    %v8620 = vld [vmem:[#allocation10 + $0x4e8] sm:$0xff]
    %v8621 = vld [vmem:[#allocation10 + $0x4f0] sm:$0xff]
    %v8622 = vld [vmem:[#allocation10 + $0x4f8] sm:$0xff]
    %v8623 = vld [vmem:[#allocation10 + $0x500] sm:$0xff]
    %v8624 = vld [vmem:[#allocation10 + $0x508] sm:$0xff]
    %v8625 = vld [vmem:[#allocation10 + $0x510] sm:$0xff]
    %v8626 = vld [vmem:[#allocation10 + $0x518] sm:$0xff]
    %v8627 = vld [vmem:[#allocation10 + $0x520] sm:$0xff]
    %v8628 = vld [vmem:[#allocation10 + $0x528] sm:$0xff]
    %v8629 = vld [vmem:[#allocation10 + $0x530] sm:$0xff]
    %v8630 = vld [vmem:[#allocation10 + $0x538] sm:$0xff]
    %v8631 = vld [vmem:[#allocation10 + $0x540] sm:$0xff]
    %v8632 = vld [vmem:[#allocation10 + $0x548] sm:$0xff]
    %v8633 = vld [vmem:[#allocation10 + $0x550] sm:$0xff]
    %v8634 = vld [vmem:[#allocation10 + $0x558] sm:$0xff]
    %v8635 = vld [vmem:[#allocation10 + $0x560] sm:$0xff]
    %v8636 = vld [vmem:[#allocation10 + $0x568] sm:$0xff]
    %v8637 = vld [vmem:[#allocation10 + $0x570] sm:$0xff]
    %v8638 = vld [vmem:[#allocation10 + $0x578] sm:$0xff]
    %v8639 = vld [vmem:[#allocation10 + $0x580] sm:$0xff]
    %v8640 = vld [vmem:[#allocation10 + $0x588] sm:$0xff]
    %v8641 = vld [vmem:[#allocation10 + $0x590] sm:$0xff]
    %v8642 = vld [vmem:[#allocation10 + $0x598] sm:$0xff]
    %v8643 = vld [vmem:[#allocation10 + $0x5a0] sm:$0xff]
    %v8644 = vld [vmem:[#allocation10 + $0x5a8] sm:$0xff]
    %v8645 = vld [vmem:[#allocation10 + $0x5b0] sm:$0xff]
    %v8646 = vld [vmem:[#allocation10 + $0x5b8] sm:$0xff]
    %v8647 = vld [vmem:[#allocation10 + $0x5c0] sm:$0xff]
    %v8648 = vld [vmem:[#allocation10 + $0x5c8] sm:$0xff]
    %v8649 = vld [vmem:[#allocation10 + $0x5d0] sm:$0xff]
    %v8650 = vld [vmem:[#allocation10 + $0x5d8] sm:$0xff]
    %v8651 = vld [vmem:[#allocation10 + $0x5e0] sm:$0xff]
    %v8652 = vld [vmem:[#allocation10 + $0x5e8] sm:$0xff]
    %v8653 = vld [vmem:[#allocation10 + $0x5f0] sm:$0xff]
    %v8654 = vld [vmem:[#allocation10 + $0x5f8] sm:$0xff]
    %v8655 = vld [vmem:[#allocation9] sm:$0xff]
    %v8656 = vld [vmem:[#allocation9 + $0x8] sm:$0xff]
    %v8657 = vld [vmem:[#allocation9 + $0x10] sm:$0xff]
    %v8658 = vld [vmem:[#allocation9 + $0x18] sm:$0xff]
    %v8659 = vld [vmem:[#allocation9 + $0x20] sm:$0xff]
    %v8660 = vld [vmem:[#allocation9 + $0x28] sm:$0xff]
    %8661 = vmatprep.subr.mxu0 %v8464
    %8662 = vmatpush1.msra.mxu0 %v8463
    %8663 = vmatprep.subr.mxu0 %v8467
    %8664 = vmatpush1.msra.mxu0 %v8466
    %8665 = vmatprep.subr.mxu0 %v8470
    %8666 = vmatpush1.msra.mxu0 %v8469
    %8667 = vmatprep.subr.mxu0 %v8473
    %8668 = vmatpush1.msra.mxu0 %v8472
    %8669 = vmatprep.subr.mxu0 %v8476
    %8670 = vmatpush1.msra.mxu0 %v8475
    %8671 = vmatprep.subr.mxu0 %v8479
    %8672 = vmatpush1.msra.mxu0 %v8478
    %8673 = vmatprep.subr.mxu0 %v8482
    %8674 = vmatpush1.msra.mxu0 %v8481
    %8675 = vmatprep.subr.mxu0 %v8485
    %8676 = vmatpush1.msra.mxu0 %v8484
    %8677 = vmatprep.subr.mxu0 %v8488
    %8678 = vmatpush1.msra.mxu0 %v8487
    %8679 = vmatprep.subr.mxu0 %v8491
    %8680 = vmatpush1.msra.mxu0 %v8490
    %8681 = vmatprep.subr.mxu0 %v8494
    %8682 = vmatpush1.msra.mxu0 %v8493
    %8683 = vmatprep.subr.mxu0 %v8497
    %8684 = vmatpush1.msra.mxu0 %v8496
    %8685 = vmatprep.subr.mxu0 %v8500
    %8686 = vmatpush1.msra.mxu0 %v8499
    %8687 = vmatprep.subr.mxu0 %v8503
    %8688 = vmatpush1.msra.mxu0 %v8502
    %8689 = vmatprep.subr.mxu0 %v8506
    %8690 = vmatpush1.msra.mxu0 %v8505
    %8691 = vmatprep.subr.mxu0 %v8509
    %8692 = vmatpush1.msra.mxu0 %v8508
    %8693 = vmatprep.subr.mxu0 %v8512
    %8694 = vmatpush1.msra.mxu0 %v8511
    %8695 = vmatprep.subr.mxu0 %v8515
    %8696 = vmatpush1.msra.mxu0 %v8514
    %8697 = vmatprep.subr.mxu0 %v8518
    %8698 = vmatpush1.msra.mxu0 %v8517
    %8699 = vmatprep.subr.mxu0 %v8521
    %8700 = vmatpush1.msra.mxu0 %v8520
    %8701 = vmatprep.subr.mxu0 %v8524
    %8702 = vmatpush1.msra.mxu0 %v8523
    %8703 = vmatprep.subr.mxu0 %v8527
    %8704 = vmatpush1.msra.mxu0 %v8526
    %8705 = vmatprep.subr.mxu0 %v8530
    %8706 = vmatpush1.msra.mxu0 %v8529
    %8707 = vmatprep.subr.mxu0 %v8533
    %8708 = vmatpush1.msra.mxu0 %v8532
    %8709 = vmatprep.subr.mxu0 %v8536
    %8710 = vmatpush1.msra.mxu0 %v8535
    %8711 = vmatprep.subr.mxu0 %v8539
    %8712 = vmatpush1.msra.mxu0 %v8538
    %8713 = vmatprep.subr.mxu0 %v8542
    %8714 = vmatpush1.msra.mxu0 %v8541
    %8715 = vmatprep.subr.mxu0 %v8545
    %8716 = vmatpush1.msra.mxu0 %v8544
    %8717 = vmatprep.subr.mxu0 %v8548
    %8718 = vmatpush1.msra.mxu0 %v8547
    %8719 = vmatprep.subr.mxu0 %v8551
    %8720 = vmatpush1.msra.mxu0 %v8550
    %8721 = vmatprep.subr.mxu0 %v8554
    %8722 = vmatpush1.msra.mxu0 %v8553
    %8723 = vmatprep.subr.mxu0 %v8557
    %8724 = vmatpush1.msra.mxu0 %v8556
    %8725 = vmatprep.mubr.f32.mxu0 %v8456
    %8726 = vmatmul.mubr.f32.gmra.mrb[0].mxu0 %v8455
    %v8727 = vpop.f32.mrb[0].mxu0
    %v8728 = vadd.f32 %v8655, %v8727
    %v8729 = vpop.f32.mrb[0].mxu0
    %v8730 = vadd.f32 %v8656, %v8729
    %8731 = vmatprep.mubr.f32.mxu0 %v8460
    %8732 = vmatmul.mubr.f32.gmra.mrb[0].mxu0 %v8459
    %v8733 = vpop.f32.mrb[0].mxu0
    %v8734 = vadd.f32 %v8658, %v8733
    %v8735 = vpop.f32.mrb[0].mxu0
    %v8736 = vadd.f32 %v8659, %v8735
    %8737 = vdwg.mxu0
    %8738 = vmatprep.subr.mxu0 %v8560
    %8739 = vmatpush1.msra.mxu0 %v8559
    %8740 = vmatprep.subr.mxu0 %v8563
    %8741 = vmatpush1.msra.mxu0 %v8562
    %8742 = vmatprep.subr.mxu0 %v8566
    %8743 = vmatpush1.msra.mxu0 %v8565
    %8744 = vmatprep.subr.mxu0 %v8569
    %8745 = vmatpush1.msra.mxu0 %v8568
    %8746 = vmatprep.subr.mxu0 %v8572
    %8747 = vmatpush1.msra.mxu0 %v8571
    %8748 = vmatprep.subr.mxu0 %v8575
    %8749 = vmatpush1.msra.mxu0 %v8574
    %8750 = vmatprep.subr.mxu0 %v8578
    %8751 = vmatpush1.msra.mxu0 %v8577
    %8752 = vmatprep.subr.mxu0 %v8581
    %8753 = vmatpush1.msra.mxu0 %v8580
    %8754 = vmatprep.subr.mxu0 %v8584
    %8755 = vmatpush1.msra.mxu0 %v8583
    %8756 = vmatprep.subr.mxu0 %v8587
    %8757 = vmatpush1.msra.mxu0 %v8586
    %8758 = vmatprep.subr.mxu0 %v8590
    %8759 = vmatpush1.msra.mxu0 %v8589
    %8760 = vmatprep.subr.mxu0 %v8593
    %8761 = vmatpush1.msra.mxu0 %v8592
    %8762 = vmatprep.subr.mxu0 %v8596
    %8763 = vmatpush1.msra.mxu0 %v8595
    %8764 = vmatprep.subr.mxu0 %v8599
    %8765 = vmatpush1.msra.mxu0 %v8598
    %8766 = vmatprep.subr.mxu0 %v8602
    %8767 = vmatpush1.msra.mxu0 %v8601
    %8768 = vmatprep.subr.mxu0 %v8605
    %8769 = vmatpush1.msra.mxu0 %v8604
    %8770 = vmatprep.subr.mxu0 %v8608
    %8771 = vmatpush1.msra.mxu0 %v8607
    %8772 = vmatprep.subr.mxu0 %v8611
    %8773 = vmatpush1.msra.mxu0 %v8610
    %8774 = vmatprep.subr.mxu0 %v8614
    %8775 = vmatpush1.msra.mxu0 %v8613
    %8776 = vmatprep.subr.mxu0 %v8617
    %8777 = vmatpush1.msra.mxu0 %v8616
    %8778 = vmatprep.subr.mxu0 %v8620
    %8779 = vmatpush1.msra.mxu0 %v8619
    %8780 = vmatprep.subr.mxu0 %v8623
    %8781 = vmatpush1.msra.mxu0 %v8622
    %8782 = vmatprep.subr.mxu0 %v8626
    %8783 = vmatpush1.msra.mxu0 %v8625
    %8784 = vmatprep.subr.mxu0 %v8629
    %8785 = vmatpush1.msra.mxu0 %v8628
    %8786 = vmatprep.subr.mxu0 %v8632
    %8787 = vmatpush1.msra.mxu0 %v8631
    %8788 = vmatprep.subr.mxu0 %v8635
    %8789 = vmatpush1.msra.mxu0 %v8634
    %8790 = vmatprep.subr.mxu0 %v8638
    %8791 = vmatpush1.msra.mxu0 %v8637
    %8792 = vmatprep.subr.mxu0 %v8641
    %8793 = vmatpush1.msra.mxu0 %v8640
    %8794 = vmatprep.subr.mxu0 %v8644
    %8795 = vmatpush1.msra.mxu0 %v8643
    %8796 = vmatprep.subr.mxu0 %v8647
    %8797 = vmatpush1.msra.mxu0 %v8646
    %8798 = vmatprep.subr.mxu0 %v8650
    %8799 = vmatpush1.msra.mxu0 %v8649
    %8800 = vmatprep.subr.mxu0 %v8653
    %8801 = vmatpush1.msra.mxu0 %v8652
    %8802 = vmatprep.mubr.f32.mxu0 %v8458
    %8803 = vmatmul.mubr.f32.gmra.mrb[0].mxu0 %v8457
    %v8804 = vpop.f32.mrb[0].mxu0
    %v8805 = vadd.f32 %v8728, %v8804
    %v8806 = vpop.f32.mrb[0].mxu0
    %v8807 = vadd.f32 %v8730, %v8806
    %8808 = vmatprep.mubr.f32.mxu0 %v8462
    %8809 = vmatmul.mubr.f32.gmra.mrb[0].mxu0 %v8461
    %v8810 = vpop.f32.mrb[0].mxu0
    %v8811 = vadd.f32 %v8734, %v8810
    %v8812 = vpop.f32.mrb[0].mxu0
    %v8813 = vadd.f32 %v8736, %v8812
    %8814 = vdwg.mxu0
    %8815 = vmatprep.subr.mxu0 0.0
    %8816 = vmatpush1.msra.mxu0 %v8465
    %8817 = vmatprep.subr.mxu0 0.0
    %8818 = vmatpush1.msra.mxu0 %v8468
    %8819 = vmatprep.subr.mxu0 0.0
    %8820 = vmatpush1.msra.mxu0 %v8471
    %8821 = vmatprep.subr.mxu0 0.0
    %8822 = vmatpush1.msra.mxu0 %v8474
    %8823 = vmatprep.subr.mxu0 0.0
    %8824 = vmatpush1.msra.mxu0 %v8477
    %8825 = vmatprep.subr.mxu0 0.0
    %8826 = vmatpush1.msra.mxu0 %v8480
    %8827 = vmatprep.subr.mxu0 0.0
    %8828 = vmatpush1.msra.mxu0 %v8483
    %8829 = vmatprep.subr.mxu0 0.0
    %8830 = vmatpush1.msra.mxu0 %v8486
    %8831 = vmatprep.subr.mxu0 0.0
    %8832 = vmatpush1.msra.mxu0 %v8489
    %8833 = vmatprep.subr.mxu0 0.0
    %8834 = vmatpush1.msra.mxu0 %v8492
    %8835 = vmatprep.subr.mxu0 0.0
    %8836 = vmatpush1.msra.mxu0 %v8495
    %8837 = vmatprep.subr.mxu0 0.0
    %8838 = vmatpush1.msra.mxu0 %v8498
    %8839 = vmatprep.subr.mxu0 0.0
    %8840 = vmatpush1.msra.mxu0 %v8501
    %8841 = vmatprep.subr.mxu0 0.0
    %8842 = vmatpush1.msra.mxu0 %v8504
    %8843 = vmatprep.subr.mxu0 0.0
    %8844 = vmatpush1.msra.mxu0 %v8507
    %8845 = vmatprep.subr.mxu0 0.0
    %8846 = vmatpush1.msra.mxu0 %v8510
    %8847 = vmatprep.subr.mxu0 0.0
    %8848 = vmatpush1.msra.mxu0 %v8513
    %8849 = vmatprep.subr.mxu0 0.0
    %8850 = vmatpush1.msra.mxu0 %v8516
    %8851 = vmatprep.subr.mxu0 0.0
    %8852 = vmatpush1.msra.mxu0 %v8519
    %8853 = vmatprep.subr.mxu0 0.0
    %8854 = vmatpush1.msra.mxu0 %v8522
    %8855 = vmatprep.subr.mxu0 0.0
    %8856 = vmatpush1.msra.mxu0 %v8525
    %8857 = vmatprep.subr.mxu0 0.0
    %8858 = vmatpush1.msra.mxu0 %v8528
    %8859 = vmatprep.subr.mxu0 0.0
    %8860 = vmatpush1.msra.mxu0 %v8531
    %8861 = vmatprep.subr.mxu0 0.0
    %8862 = vmatpush1.msra.mxu0 %v8534
    %8863 = vmatprep.subr.mxu0 0.0
    %8864 = vmatpush1.msra.mxu0 %v8537
    %8865 = vmatprep.subr.mxu0 0.0
    %8866 = vmatpush1.msra.mxu0 %v8540
    %8867 = vmatprep.subr.mxu0 0.0
    %8868 = vmatpush1.msra.mxu0 %v8543
    %8869 = vmatprep.subr.mxu0 0.0
    %8870 = vmatpush1.msra.mxu0 %v8546
    %8871 = vmatprep.subr.mxu0 0.0
    %8872 = vmatpush1.msra.mxu0 %v8549
    %8873 = vmatprep.subr.mxu0 0.0
    %8874 = vmatpush1.msra.mxu0 %v8552
    %8875 = vmatprep.subr.mxu0 0.0
    %8876 = vmatpush1.msra.mxu0 %v8555
    %8877 = vmatprep.subr.mxu0 0.0
    %8878 = vmatpush1.msra.mxu0 %v8558
    %8879 = vmatprep.mubr.f32.mxu0 %v8456
    %8880 = vmatmul.mubr.f32.gmra.mrb[0].mxu0 %v8455
    %v8881 = vpop.f32.mrb[0].mxu0
    %v8882 = vadd.f32 %v8657, %v8881
    %v8883 = vpop.f32.mrb[0].mxu0
    %8884 = vmatprep.mubr.f32.mxu0 %v8460
    %8885 = vmatmul.mubr.f32.gmra.mrb[0].mxu0 %v8459
    %v8886 = vpop.f32.mrb[0].mxu0
    %v8887 = vadd.f32 %v8660, %v8886
    %v8888 = vpop.f32.mrb[0].mxu0
    %8889 = vdwg.mxu0
    %8890 = vmatprep.subr.mxu0 0.0
    %8891 = vmatpush1.msra.mxu0 %v8561
    %8892 = vmatprep.subr.mxu0 0.0
    %8893 = vmatpush1.msra.mxu0 %v8564
    %8894 = vmatprep.subr.mxu0 0.0
    %8895 = vmatpush1.msra.mxu0 %v8567
    %8896 = vmatprep.subr.mxu0 0.0
    %8897 = vmatpush1.msra.mxu0 %v8570
    %8898 = vmatprep.subr.mxu0 0.0
    %8899 = vmatpush1.msra.mxu0 %v8573
    %8900 = vmatprep.subr.mxu0 0.0
    %8901 = vmatpush1.msra.mxu0 %v8576
    %8902 = vmatprep.subr.mxu0 0.0
    %8903 = vmatpush1.msra.mxu0 %v8579
    %8904 = vmatprep.subr.mxu0 0.0
    %8905 = vmatpush1.msra.mxu0 %v8582
    %8906 = vmatprep.subr.mxu0 0.0
    %8907 = vmatpush1.msra.mxu0 %v8585
    %8908 = vmatprep.subr.mxu0 0.0
    %8909 = vmatpush1.msra.mxu0 %v8588
    %8910 = vmatprep.subr.mxu0 0.0
    %8911 = vmatpush1.msra.mxu0 %v8591
    %8912 = vmatprep.subr.mxu0 0.0
    %8913 = vmatpush1.msra.mxu0 %v8594
    %8914 = vmatprep.subr.mxu0 0.0
    %8915 = vmatpush1.msra.mxu0 %v8597
    %8916 = vmatprep.subr.mxu0 0.0
    %8917 = vmatpush1.msra.mxu0 %v8600
    %8918 = vmatprep.subr.mxu0 0.0
    %8919 = vmatpush1.msra.mxu0 %v8603
    %8920 = vmatprep.subr.mxu0 0.0
    %8921 = vmatpush1.msra.mxu0 %v8606
    %8922 = vmatprep.subr.mxu0 0.0
    %8923 = vmatpush1.msra.mxu0 %v8609
    %8924 = vmatprep.subr.mxu0 0.0
    %8925 = vmatpush1.msra.mxu0 %v8612
    %8926 = vmatprep.subr.mxu0 0.0
    %8927 = vmatpush1.msra.mxu0 %v8615
    %8928 = vmatprep.subr.mxu0 0.0
    %8929 = vmatpush1.msra.mxu0 %v8618
    %8930 = vmatprep.subr.mxu0 0.0
    %8931 = vmatpush1.msra.mxu0 %v8621
    %8932 = vmatprep.subr.mxu0 0.0
    %8933 = vmatpush1.msra.mxu0 %v8624
    %8934 = vmatprep.subr.mxu0 0.0
    %8935 = vmatpush1.msra.mxu0 %v8627
    %8936 = vmatprep.subr.mxu0 0.0
    %8937 = vmatpush1.msra.mxu0 %v8630
    %8938 = vmatprep.subr.mxu0 0.0
    %8939 = vmatpush1.msra.mxu0 %v8633
    %8940 = vmatprep.subr.mxu0 0.0
    %8941 = vmatpush1.msra.mxu0 %v8636
    %8942 = vmatprep.subr.mxu0 0.0
    %8943 = vmatpush1.msra.mxu0 %v8639
    %8944 = vmatprep.subr.mxu0 0.0
    %8945 = vmatpush1.msra.mxu0 %v8642
    %8946 = vmatprep.subr.mxu0 0.0
    %8947 = vmatpush1.msra.mxu0 %v8645
    %8948 = vmatprep.subr.mxu0 0.0
    %8949 = vmatpush1.msra.mxu0 %v8648
    %8950 = vmatprep.subr.mxu0 0.0
    %8951 = vmatpush1.msra.mxu0 %v8651
    %8952 = vmatprep.subr.mxu0 0.0
    %8953 = vmatpush1.msra.mxu0 %v8654
    %8954 = vmatprep.mubr.f32.mxu0 %v8458
    %8955 = vmatmul.mubr.f32.gmra.mrb[0].mxu0 %v8457
    %v8956 = vpop.f32.mrb[0].mxu0
    %v8957 = vadd.f32 %v8882, %v8956
    %v8958 = vpop.f32.mrb[0].mxu0
    %8959 = vmatprep.mubr.f32.mxu0 %v8462
    %8960 = vmatmul.mubr.f32.gmra.mrb[0].mxu0 %v8461
    %v8961 = vpop.f32.mrb[0].mxu0
    %v8962 = vadd.f32 %v8887, %v8961
    %v8963 = vpop.f32.mrb[0].mxu0
    %8964 = vdwg.mxu0
    %v8965 = vxor.u32 %v8805, 2147483648
    %v8966 = vxor.u32 %v8811, 2147483648
    %v8967 = vmul.f32 %v8965, 1.442695
    %v8968 = vpow.pop %v8967
    %v8969 = vmul.f32 %v8966, 1.442695
    %v8970 = vpow.pop %v8969
    %v8971 = vadd.f32 %v8968, 1.0
    %v8972 = vadd.f32 %v8970, 1.0
    %v8973 = vrcp.pop %v8971
    %v8974 = vmul.f32 1.0, %v8973
    %v8975 = vrcp.pop %v8972
    %v8976 = vmul.f32 1.0, %v8975
    %v8977 = vxor.u32 %v8807, 2147483648
    %v8978 = vxor.u32 %v8813, 2147483648
    %v8979 = vmul.f32 %v8977, 1.442695
    %v8980 = vpow.pop %v8979
    %v8981 = vmul.f32 %v8978, 1.442695
    %v8982 = vpow.pop %v8981
    %v8983 = vadd.f32 %v8980, 1.0
    %v8984 = vadd.f32 %v8982, 1.0
    %v8985 = vrcp.pop %v8983
    %v8986 = vmul.f32 1.0, %v8985
    %v8987 = vrcp.pop %v8984
    %v8988 = vmul.f32 1.0, %v8987
    %v8989 = vmul.f32 %v8986, %v8196
    %v8990 = vmul.f32 %v8988, %v8197
    %v8991 = vld [vmem:[#allocation12] sm:$0xff]
    %v8992 = vld [vmem:[#allocation12 + $0x8] sm:$0xff]
    %v8993 = vld [vmem:[#allocation12 + $0x10] sm:$0xff]
    %v8994 = vld [vmem:[#allocation12 + $0x18] sm:$0xff]
    %v8995 = vld [vmem:[#allocation12 + $0x20] sm:$0xff]
    %v8996 = vld [vmem:[#allocation12 + $0x28] sm:$0xff]
    %v8997 = vld [vmem:[#allocation12 + $0x30] sm:$0xff]
    %v8998 = vld [vmem:[#allocation12 + $0x38] sm:$0xff]
    %v8999 = vld [vmem:[#allocation12 + $0x40] sm:$0xff]
    %v9000 = vld [vmem:[#allocation12 + $0x48] sm:$0xff]
    %v9001 = vld [vmem:[#allocation12 + $0x50] sm:$0xff]
    %v9002 = vld [vmem:[#allocation12 + $0x58] sm:$0xff]
    %v9003 = vld [vmem:[#allocation12 + $0x60] sm:$0xff]
    %v9004 = vld [vmem:[#allocation12 + $0x68] sm:$0xff]
    %v9005 = vld [vmem:[#allocation12 + $0x70] sm:$0xff]
    %v9006 = vld [vmem:[#allocation12 + $0x78] sm:$0xff]
    %9007 = vmatprep.subr.mxu0 0.0
    %9008 = vmatpush1.msra.mxu0 %v8991
    %9009 = vmatprep.subr.mxu0 0.0
    %9010 = vmatpush1.msra.mxu0 %v8992
    %9011 = vmatprep.subr.mxu0 0.0
    %9012 = vmatpush1.msra.mxu0 %v8993
    %9013 = vmatprep.subr.mxu0 0.0
    %9014 = vmatpush1.msra.mxu0 %v8994
    %9015 = vmatprep.subr.mxu0 0.0
    %9016 = vmatpush1.msra.mxu0 %v8995
    %9017 = vmatprep.subr.mxu0 0.0
    %9018 = vmatpush1.msra.mxu0 %v8996
    %9019 = vmatprep.subr.mxu0 0.0
    %9020 = vmatpush1.msra.mxu0 %v8997
    %9021 = vmatprep.subr.mxu0 0.0
    %9022 = vmatpush1.msra.mxu0 %v8998
    %9023 = vmatprep.subr.mxu0 0.0
    %9024 = vmatpush1.msra.mxu0 %v8999
    %9025 = vmatprep.subr.mxu0 0.0
    %9026 = vmatpush1.msra.mxu0 %v9000
    %9027 = vmatprep.subr.mxu0 0.0
    %9028 = vmatpush1.msra.mxu0 %v9001
    %9029 = vmatprep.subr.mxu0 0.0
    %9030 = vmatpush1.msra.mxu0 %v9002
    %9031 = vmatprep.subr.mxu0 0.0
    %9032 = vmatpush1.msra.mxu0 %v9003
    %9033 = vmatprep.subr.mxu0 0.0
    %9034 = vmatpush1.msra.mxu0 %v9004
    %9035 = vmatprep.subr.mxu0 0.0
    %9036 = vmatpush1.msra.mxu0 %v9005
    %9037 = vmatprep.subr.mxu0 0.0
    %9038 = vmatpush1.msra.mxu0 %v9006
    %9039 = vmatprep.subr.mxu0 0.0
    %9040 = vmatpush1.msra.mxu0 0.0
    %9041 = vmatprep.subr.mxu0 0.0
    %9042 = vmatpush1.msra.mxu0 0.0
    %9043 = vmatprep.subr.mxu0 0.0
    %9044 = vmatpush1.msra.mxu0 0.0
    %9045 = vmatprep.subr.mxu0 0.0
    %9046 = vmatpush1.msra.mxu0 0.0
    %9047 = vmatprep.subr.mxu0 0.0
    %9048 = vmatpush1.msra.mxu0 0.0
    %9049 = vmatprep.subr.mxu0 0.0
    %9050 = vmatpush1.msra.mxu0 0.0
    %9051 = vmatprep.subr.mxu0 0.0
    %9052 = vmatpush1.msra.mxu0 0.0
    %9053 = vmatprep.subr.mxu0 0.0
    %9054 = vmatpush1.msra.mxu0 0.0
    %9055 = vmatprep.subr.mxu0 0.0
    %9056 = vmatpush1.msra.mxu0 0.0
    %9057 = vmatprep.subr.mxu0 0.0
    %9058 = vmatpush1.msra.mxu0 0.0
    %9059 = vmatprep.subr.mxu0 0.0
    %9060 = vmatpush1.msra.mxu0 0.0
    %9061 = vmatprep.subr.mxu0 0.0
    %9062 = vmatpush1.msra.mxu0 0.0
    %9063 = vmatprep.subr.mxu0 0.0
    %9064 = vmatpush1.msra.mxu0 0.0
    %9065 = vmatprep.subr.mxu0 0.0
    %9066 = vmatpush1.msra.mxu0 0.0
    %9067 = vmatprep.subr.mxu0 0.0
    %9068 = vmatpush1.msra.mxu0 0.0
    %9069 = vmatprep.subr.mxu0 0.0
    %9070 = vmatpush1.msra.mxu0 0.0
    %9071 = vmatprep.mubr.f32.mxu0 0.0
    %9072 = vmatmul.mubr.f32.gmra.mrb[0].mxu0 %v8989
    %v9073 = vpop.f32.mrb[0].mxu0
    %v9074 = vadd.f32 0.0, %v9073
    %v9075 = vpop.f32.mrb[0].mxu0
    %9076 = vmatprep.mubr.f32.mxu0 0.0
    %9077 = vmatmul.mubr.f32.gmra.mrb[0].mxu0 %v8990
    %v9078 = vpop.f32.mrb[0].mxu0
    %v9079 = vadd.f32 0.0, %v9078
    %v9080 = vpop.f32.mrb[0].mxu0
    %9081 = vdwg.mxu0
    %v9082 = vadd.f32 %v8957, %v9074
    %v9083 = vadd.f32 %v8962, %v9079
    %v9084 = vtanh.pop %v9082
    %v9085 = vtanh.pop %v9083
    %v9086 = vsub.f32 1.0, %v8974
    %v9087 = vsub.f32 1.0, %v8976
    %v9088 = vmul.f32 %v9086, %v8196
    %v9089 = vmul.f32 %v9087, %v8197
    %v9090 = vmul.f32 %v8974, %v9084
    %v9091 = vmul.f32 %v8976, %v9085
    %v9092 = vadd.f32 %v9088, %v9090
    %v9093 = vadd.f32 %v9089, %v9091
    %9094 = vst [vmem:[#allocation2] sm:$0xff] %v9092
    %9095 = vst [vmem:[#allocation2 + $0x8] sm:$0xff] %v9093
    %v9096 = vld [vmem:[#allocation2] sm:$0xff]
    %v9097 = vld [vmem:[#allocation2 + $0x8] sm:$0xff]
    %9098 = vst [vmem:[#allocation13] sm:$0xff] %v9096
    %9099 = vst [vmem:[#allocation13 + $0x8] sm:$0xff] %v9097
    // Predicated region
    $region42: #{tpu_custom_call.1} parent=1 // pred_check
      _
    $region43: #{tpu_custom_call.1} parent=1 // pred_check_branch
      %9101 = sbr.rel (0) target = $region45
    $region44: #{tpu_custom_call.1} parent=1 // pred_region
      %s9103 = ssub.s32 256, 256
      %9104 = vsyncadd [#allocation6], %s9103
      %s9105 = sshll.u32 [#allocation13], 4
      %s9106 = int_to_ptr.vmem [resolvable:$true] %s9105
      %9111 = dma.vmem_to_hbm [thread:$0]  %s9106, 256, %s5, [#allocation6], 128, 128, 8
    $region45: #{tpu_custom_call.1} parent=1 // pred_fallthru
      _
    // Predicated region
    $region46: #{tpu_custom_call.1} parent=1 // pred_check
      _
    $region47: #{tpu_custom_call.1} parent=1 // pred_check_branch
      %9113 = sbr.rel (0) target = $region49
    $region48: #{tpu_custom_call.1} parent=1 // pred_region
      %9114 = dma.done [#allocation6], 256
    $region49: #{tpu_custom_call.1} parent=1 // pred_fallthru
      _
    %9115 = vsyncpa [#allocation5], 1
    %9116 = vsyncpa [#allocation8], 1
    %9117 = vsyncpa [#allocation11], 1
    %9118 = vsyncpa [#allocation6], 1

</llo_original>
